<compile_context>
chip_gen: v7x
topology: tpu7x:2x2x1
jax: 0.10.0
libtpu: 0.0.40
codegen_flags: <defaults>
</compile_context>

<pallas_src>
import jax
import jax.numpy as jnp
from jax.experimental import pallas as pl
from jax.experimental.pallas import tpu as pltpu

K = 5          # conv1 kernel size
PAD = 2        # conv1 padding
EPS = 1e-5     # InstanceNorm3d default eps


def _output_transition_kernel(x_ref, w1_ref, b1_ref, w2_ref, b2_ref,
                              out_ref, scores_ref, xp_ref, patches_ref):
    """One batch element per grid step (channel-major compute layout).

    x_ref      : (1, D, H, W, Cin)        unpadded input, channels-last
    w1_ref     : (Cout, K^3 * Cin_pad)    conv1 weights, (tap, cin)-major cols
    b1_ref     : (Cout, 1)
    w2_ref     : (Cout, Cout)             1x1x1 conv as (out, in) matmul
    b2_ref     : (Cout, 1)
    out_ref    : (1, Cout, S)             conv2 logits (lane-dense)
    scores_ref : (1, Cout, S)             channel softmax (lane-dense)
    xp_ref     : VMEM (D+4, H+4, W+4, Cin)    zero-halo padded input scratch
    patches_ref: VMEM (K^3, Cin_pad, S)       im2col patch matrix scratch
    """
    _, D, H, W, Cin = x_ref.shape
    cin_pad = patches_ref.shape[1]
    S = D * H * W

    # ---- stage the padded volume: zero halo + interior copy (no XLA pad) ----
    xp_ref[...] = jnp.zeros_like(xp_ref)
    xp_ref[PAD:PAD + D, PAD:PAD + H, PAD:PAD + W, :] = x_ref[0]

    # Hoisted zero slab used to pad Cin up to a sublane multiple inside taps.
    zpad = (jnp.zeros((cin_pad - Cin, S), jnp.float32)
            if cin_pad > Cin else None)

    # ---- im2col: one channel-major (Cin_pad, S) slab per 5x5x5 tap ----------
    @pl.loop(0, K)
    def _(kd):
        for kh in range(K):            # 25 small static bodies inside the loop
            for kw in range(K):
                tap = (kd * K + kh) * K + kw
                patch = xp_ref[pl.ds(kd, D), kh:kh + H, kw:kw + W, :]
                slab = patch.reshape(S, Cin).T            # (Cin, S)
                if zpad is not None:
                    slab = jnp.concatenate([slab, zpad], axis=0)
                patches_ref[tap] = slab                   # lane-dense store

    # ---- conv1: single deep-contraction MXU matmul --------------------------
    p = patches_ref[...].reshape(K * K * K * cin_pad, S)  # pure leading merge
    y = jnp.dot(w1_ref[...], p,
                preferred_element_type=jnp.float32) + b1_ref[...]   # (Cout, S)

    # ---- InstanceNorm3d (affine=False): per-channel over spatial (lanes) ----
    mean = jnp.mean(y, axis=1, keepdims=True)
    var = jnp.mean((y - mean) ** 2, axis=1, keepdims=True)     # biased var
    y = (y - mean) * jax.lax.rsqrt(var + EPS)

    # ---- ELU (alpha=1), overflow-safe masked branch --------------------------
    y = jnp.where(y > 0, y, jnp.exp(jnp.minimum(y, 0.0)) - 1.0)

    # ---- conv2: 1x1x1 conv == channel matmul ---------------------------------
    z = jnp.dot(w2_ref[...], y,
                preferred_element_type=jnp.float32) + b2_ref[...]   # (Cout, S)
    out_ref[0] = z

    # ---- softmax over channels (sublane axis) --------------------------------
    zmax = jnp.max(z, axis=0, keepdims=True)
    e = jnp.exp(z - zmax)
    denom = jnp.sum(e, axis=0, keepdims=True)
    r = pl.reciprocal(denom, approx=True)
    r = r * (2.0 - denom * r)          # one Newton step keeps f32 accuracy
    scores_ref[0] = e * r


def output_transition(x_ncdhw, w1, b1, w2, b2):
    """x_ncdhw: (N, Cin, D, H, W) float32 (PyTorch layout).

    w1: (5,5,5,Cin,classes), b1: (classes,), w2: (classes, classes) as
    (in, out), b2: (classes,).
    Returns (out NCDHW of shape (N, classes, D, H, W),
             out_scores of shape (N*D*H*W, classes)).
    """
    N, Cin, D, H, W = x_ncdhw.shape
    Cout = b1.shape[0]
    S = D * H * W
    cin_pad = ((Cin + 7) // 8) * 8     # pad Cin to a sublane multiple

    # glue: NCDHW -> NDHWC (spatial zero-pad happens inside the kernel).
    x = jnp.transpose(x_ncdhw, (0, 2, 3, 4, 1)).astype(jnp.float32)

    # weights in matmul-ready, (tap, cin)-major, channel-major-output form.
    w1k = w1.reshape(K * K * K, Cin, Cout).astype(jnp.float32)
    if cin_pad > Cin:
        w1k = jnp.pad(w1k, ((0, 0), (0, cin_pad - Cin), (0, 0)))
    w1_mat = w1k.reshape(K * K * K * cin_pad, Cout).T       # (Cout, K^3*cin_pad)
    b1c = b1.reshape(Cout, 1).astype(jnp.float32)
    w2_mat = w2.T.astype(jnp.float32)                       # (out, in)
    b2c = b2.reshape(Cout, 1).astype(jnp.float32)

    out_cs, scores_cs = pl.pallas_call(
        _output_transition_kernel,
        out_shape=(jax.ShapeDtypeStruct((N, Cout, S), jnp.float32),
                   jax.ShapeDtypeStruct((N, Cout, S), jnp.float32)),
        grid_spec=pltpu.PrefetchScalarGridSpec(
            num_scalar_prefetch=0,
            grid=(N,),
            in_specs=[
                pl.BlockSpec((1, D, H, W, Cin), lambda n: (n, 0, 0, 0, 0)),
                pl.BlockSpec((Cout, K * K * K * cin_pad), lambda n: (0, 0)),
                pl.BlockSpec((Cout, 1), lambda n: (0, 0)),
                pl.BlockSpec((Cout, Cout), lambda n: (0, 0)),
                pl.BlockSpec((Cout, 1), lambda n: (0, 0)),
            ],
            out_specs=[
                pl.BlockSpec((1, Cout, S), lambda n: (n, 0, 0)),
                pl.BlockSpec((1, Cout, S), lambda n: (n, 0, 0)),
            ],
            scratch_shapes=[
                pltpu.VMEM((D + 2 * PAD, H + 2 * PAD, W + 2 * PAD, Cin),
                           jnp.float32),
                pltpu.VMEM((K * K * K, cin_pad, S), jnp.float32),
            ],
        ),
        compiler_params=pltpu.CompilerParams(
            dimension_semantics=("parallel",)),
    )(x, w1_mat, b1c, w2_mat, b2c)

    out = out_cs.reshape(N, Cout, D, H, W)                  # already NCDHW
    out_scores = jnp.transpose(scores_cs, (0, 2, 1)).reshape(N * S, Cout)
    return out, out_scores


def _reference(x_ncdhw, w1, b1, w2, b2):
    """Pure-JAX reference mirroring the PyTorch forward (for validation)."""
    xc = jnp.transpose(x_ncdhw, (0, 2, 3, 4, 1))  # NDHWC
    y = jax.lax.conv_general_dilated(
        xc, w1, window_strides=(1, 1, 1),
        padding=((PAD, PAD),) * 3,
        dimension_numbers=('NDHWC', 'DHWIO', 'NDHWC')) + b1
    mean = jnp.mean(y, axis=(1, 2, 3), keepdims=True)
    var = jnp.mean((y - mean) ** 2, axis=(1, 2, 3), keepdims=True)
    y = (y - mean) / jnp.sqrt(var + EPS)
    y = jnp.where(y > 0, y, jnp.exp(jnp.minimum(y, 0.0)) - 1.0)
    z = y @ w2 + b2
    out = jnp.transpose(z, (0, 4, 1, 2, 3))
    scores = jax.nn.softmax(z.reshape(-1, z.shape[-1]), axis=1)
    return out, scores


if __name__ == "__main__":
    # Small shapes consistent with the module: N=2, in_channels=4, classes=4,
    # spatial volume 8x8x8.
    N, Cin, D, H, W = 2, 4, 8, 8, 8
    classes = 4

    key = jax.random.PRNGKey(0)
    kx, k1, kb1, k2, kb2 = jax.random.split(key, 5)

    x = jax.random.normal(kx, (N, Cin, D, H, W), jnp.float32)
    # Deterministic synthetic parameters (shapes implied by __init__):
    #   conv1: 5x5x5, Cin->classes ; conv2: 1x1x1, classes->classes
    w1 = jax.random.normal(k1, (K, K, K, Cin, classes), jnp.float32) * 0.1
    b1 = jax.random.normal(kb1, (classes,), jnp.float32) * 0.1
    w2 = jax.random.normal(k2, (classes, classes), jnp.float32) * 0.1
    b2 = jax.random.normal(kb2, (classes,), jnp.float32) * 0.1

    out, out_scores = output_transition(x, w1, b1, w2, b2)
    jax.block_until_ready((out, out_scores))

    ref_out, ref_scores = _reference(x, w1, b1, w2, b2)
    assert out.shape == (N, classes, D, H, W)
    assert out_scores.shape == (N * D * H * W, classes)
    assert jnp.allclose(out, ref_out, atol=1e-3, rtol=1e-3)
    assert jnp.allclose(out_scores, ref_scores, atol=1e-3, rtol=1e-3)

    print("KERNEL_OK")
</pallas_src>

<mosaic_0001>
module attributes {stable_mosaic.version = 11 : i64} {
  func.func @_output_transition_kernel(%arg0: i32, %arg1: memref<1x8x8x8x4xf32, #tpu.memory_space<vmem>>, %arg2: memref<4x1000xf32, #tpu.memory_space<vmem>>, %arg3: memref<4x1xf32, #tpu.memory_space<vmem>>, %arg4: memref<4x4xf32, #tpu.memory_space<vmem>>, %arg5: memref<4x1xf32, #tpu.memory_space<vmem>>, %arg6: memref<1x4x512xf32, #tpu.memory_space<vmem>>, %arg7: memref<1x4x512xf32, #tpu.memory_space<vmem>>, %arg8: memref<12x12x12x4xf32, #tpu.memory_space<vmem>>, %arg9: memref<125x8x512xf32, #tpu.memory_space<vmem>>) attributes {dimension_semantics = [#tpu.dimension_semantics<parallel>], iteration_bounds = array<i64: 2>, scalar_prefetch = 0 : i64, scratch_operands = 2 : i64, tpu.core_type = #tpu.core_type<tc>, window_params = [{transform_indices = @transform_0, window_bounds = array<i64: 1, 8, 8, 8, 4>}, {pipeline_mode = #tpu.pipeline_mode<synchronous>, transform_indices = @transform_1, window_bounds = array<i64: 4, 1000>}, {pipeline_mode = #tpu.pipeline_mode<synchronous>, transform_indices = @transform_2, window_bounds = array<i64: 4, 1>}, {pipeline_mode = #tpu.pipeline_mode<synchronous>, transform_indices = @transform_3, window_bounds = array<i64: 4, 4>}, {pipeline_mode = #tpu.pipeline_mode<synchronous>, transform_indices = @transform_4, window_bounds = array<i64: 4, 1>}, {transform_indices = @transform_5, window_bounds = array<i64: 1, 4, 512>}, {transform_indices = @transform_6, window_bounds = array<i64: 1, 4, 512>}]} {
    %cst = arith.constant 0.000000e+00 : f32
    %0 = vector.broadcast %cst : f32 to vector<12x12x12x4xf32>
    %c0 = arith.constant 0 : index
    %c0_0 = arith.constant 0 : index
    %c0_1 = arith.constant 0 : index
    %c0_2 = arith.constant 0 : index
    %1 = vector.load %arg8[%c0, %c0_0, %c0_1, %c0_2] : memref<12x12x12x4xf32, #tpu.memory_space<vmem>>, vector<12x12x12x4xf32>
    tpu.vector_store %arg8[%c0, %c0_0, %c0_1, %c0_2], %0 {strides = array<i32>} : memref<12x12x12x4xf32, #tpu.memory_space<vmem>>, vector<12x12x12x4xf32>,
    %c0_3 = arith.constant 0 : index
    %c0_4 = arith.constant 0 : index
    %c0_5 = arith.constant 0 : index
    %c0_6 = arith.constant 0 : index
    %c0_7 = arith.constant 0 : index
    %2 = vector.load %arg1[%c0_3, %c0_4, %c0_5, %c0_6, %c0_7] : memref<1x8x8x8x4xf32, #tpu.memory_space<vmem>>, vector<1x8x8x8x4xf32>
    %3 = vector.shape_cast %2 : vector<1x8x8x8x4xf32> to vector<8x8x8x4xf32>
    %c2 = arith.constant 2 : index
    %c2_8 = arith.constant 2 : index
    %c2_9 = arith.constant 2 : index
    %c0_10 = arith.constant 0 : index
    %4 = vector.load %arg8[%c2, %c2_8, %c2_9, %c0_10] : memref<12x12x12x4xf32, #tpu.memory_space<vmem>>, vector<8x8x8x4xf32>
    tpu.vector_store %arg8[%c2, %c2_8, %c2_9, %c0_10], %3 {strides = array<i32>} : memref<12x12x12x4xf32, #tpu.memory_space<vmem>>, vector<8x8x8x4xf32>,
    %cst_11 = arith.constant 0.000000e+00 : f32
    %5 = vector.broadcast %cst_11 : f32 to vector<4x512xf32>
    %c0_i32 = arith.constant 0 : i32
    %c5_i32 = arith.constant 5 : i32
    %6 = arith.addi %c0_i32, %c5_i32 : i32
    %c1_i32 = arith.constant 1 : i32
    scf.for %arg10 = %c0_i32 to %6 step %c1_i32  : i32 {
      %c1_i32_43 = arith.constant 1 : i32
      %65 = arith.muli %arg10, %c1_i32_43 : i32
      %c0_i32_44 = arith.constant 0 : i32
      %66 = arith.addi %c0_i32_44, %65 : i32
      %c5_i32_45 = arith.constant 5 : i32
      %67 = arith.muli %66, %c5_i32_45 : i32
      %c0_i32_46 = arith.constant 0 : i32
      %68 = arith.addi %67, %c0_i32_46 : i32
      %c5_i32_47 = arith.constant 5 : i32
      %69 = arith.muli %68, %c5_i32_47 : i32
      %c0_i32_48 = arith.constant 0 : i32
      %70 = arith.addi %69, %c0_i32_48 : i32
      %71 = arith.index_cast %66 : i32 to index
      %c0_49 = arith.constant 0 : index
      %c0_50 = arith.constant 0 : index
      %c0_51 = arith.constant 0 : index
      %72 = vector.load %arg8[%71, %c0_49, %c0_50, %c0_51] : memref<12x12x12x4xf32, #tpu.memory_space<vmem>>, vector<8x8x8x4xf32>
      %73 = vector.shape_cast %72 : vector<8x8x8x4xf32> to vector<512x4xf32>
      %74 = tpu.transpose %73, [1, 0] : vector<512x4xf32> -> vector<4x512xf32>
      %75 = tpu.concatenate %74, %5 in 0 : vector<4x512xf32>, vector<4x512xf32> -> vector<8x512xf32>
      %76 = arith.index_cast %70 : i32 to index
      %c0_52 = arith.constant 0 : index
      %c0_53 = arith.constant 0 : index
      %77 = vector.load %arg9[%76, %c0_52, %c0_53] : memref<125x8x512xf32, #tpu.memory_space<vmem>>, vector<1x8x512xf32>
      %78 = vector.shape_cast %77 : vector<1x8x512xf32> to vector<8x512xf32>
      %79 = vector.shape_cast %75 : vector<8x512xf32> to vector<1x8x512xf32>
      tpu.vector_store %arg9[%76, %c0_52, %c0_53], %79 {strides = array<i32>} : memref<125x8x512xf32, #tpu.memory_space<vmem>>, vector<1x8x512xf32>,
      %c5_i32_54 = arith.constant 5 : i32
      %80 = arith.muli %66, %c5_i32_54 : i32
      %c0_i32_55 = arith.constant 0 : i32
      %81 = arith.addi %80, %c0_i32_55 : i32
      %c5_i32_56 = arith.constant 5 : i32
      %82 = arith.muli %81, %c5_i32_56 : i32
      %c1_i32_57 = arith.constant 1 : i32
      %83 = arith.addi %82, %c1_i32_57 : i32
      %84 = arith.index_cast %66 : i32 to index
      %c0_58 = arith.constant 0 : index
      %c1 = arith.constant 1 : index
      %c0_59 = arith.constant 0 : index
      %85 = vector.load %arg8[%84, %c0_58, %c1, %c0_59] : memref<12x12x12x4xf32, #tpu.memory_space<vmem>>, vector<8x8x8x4xf32>
      %86 = vector.shape_cast %85 : vector<8x8x8x4xf32> to vector<512x4xf32>
      %87 = tpu.transpose %86, [1, 0] : vector<512x4xf32> -> vector<4x512xf32>
      %88 = tpu.concatenate %87, %5 in 0 : vector<4x512xf32>, vector<4x512xf32> -> vector<8x512xf32>
      %89 = arith.index_cast %83 : i32 to index
      %c0_60 = arith.constant 0 : index
      %c0_61 = arith.constant 0 : index
      %90 = vector.load %arg9[%89, %c0_60, %c0_61] : memref<125x8x512xf32, #tpu.memory_space<vmem>>, vector<1x8x512xf32>
      %91 = vector.shape_cast %90 : vector<1x8x512xf32> to vector<8x512xf32>
      %92 = vector.shape_cast %88 : vector<8x512xf32> to vector<1x8x512xf32>
      tpu.vector_store %arg9[%89, %c0_60, %c0_61], %92 {strides = array<i32>} : memref<125x8x512xf32, #tpu.memory_space<vmem>>, vector<1x8x512xf32>,
      %c5_i32_62 = arith.constant 5 : i32
      %93 = arith.muli %66, %c5_i32_62 : i32
      %c0_i32_63 = arith.constant 0 : i32
      %94 = arith.addi %93, %c0_i32_63 : i32
      %c5_i32_64 = arith.constant 5 : i32
      %95 = arith.muli %94, %c5_i32_64 : i32
      %c2_i32 = arith.constant 2 : i32
      %96 = arith.addi %95, %c2_i32 : i32
      %97 = arith.index_cast %66 : i32 to index
      %c0_65 = arith.constant 0 : index
      %c2_66 = arith.constant 2 : index
      %c0_67 = arith.constant 0 : index
      %98 = vector.load %arg8[%97, %c0_65, %c2_66, %c0_67] : memref<12x12x12x4xf32, #tpu.memory_space<vmem>>, vector<8x8x8x4xf32>
      %99 = vector.shape_cast %98 : vector<8x8x8x4xf32> to vector<512x4xf32>
      %100 = tpu.transpose %99, [1, 0] : vector<512x4xf32> -> vector<4x512xf32>
      %101 = tpu.concatenate %100, %5 in 0 : vector<4x512xf32>, vector<4x512xf32> -> vector<8x512xf32>
      %102 = arith.index_cast %96 : i32 to index
      %c0_68 = arith.constant 0 : index
      %c0_69 = arith.constant 0 : index
      %103 = vector.load %arg9[%102, %c0_68, %c0_69] : memref<125x8x512xf32, #tpu.memory_space<vmem>>, vector<1x8x512xf32>
      %104 = vector.shape_cast %103 : vector<1x8x512xf32> to vector<8x512xf32>
      %105 = vector.shape_cast %101 : vector<8x512xf32> to vector<1x8x512xf32>
      tpu.vector_store %arg9[%102, %c0_68, %c0_69], %105 {strides = array<i32>} : memref<125x8x512xf32, #tpu.memory_space<vmem>>, vector<1x8x512xf32>,
      %c5_i32_70 = arith.constant 5 : i32
      %106 = arith.muli %66, %c5_i32_70 : i32
      %c0_i32_71 = arith.constant 0 : i32
      %107 = arith.addi %106, %c0_i32_71 : i32
      %c5_i32_72 = arith.constant 5 : i32
      %108 = arith.muli %107, %c5_i32_72 : i32
      %c3_i32 = arith.constant 3 : i32
      %109 = arith.addi %108, %c3_i32 : i32
      %110 = arith.index_cast %66 : i32 to index
      %c0_73 = arith.constant 0 : index
      %c3 = arith.constant 3 : index
      %c0_74 = arith.constant 0 : index
      %111 = vector.load %arg8[%110, %c0_73, %c3, %c0_74] : memref<12x12x12x4xf32, #tpu.memory_space<vmem>>, vector<8x8x8x4xf32>
      %112 = vector.shape_cast %111 : vector<8x8x8x4xf32> to vector<512x4xf32>
      %113 = tpu.transpose %112, [1, 0] : vector<512x4xf32> -> vector<4x512xf32>
      %114 = tpu.concatenate %113, %5 in 0 : vector<4x512xf32>, vector<4x512xf32> -> vector<8x512xf32>
      %115 = arith.index_cast %109 : i32 to index
      %c0_75 = arith.constant 0 : index
      %c0_76 = arith.constant 0 : index
      %116 = vector.load %arg9[%115, %c0_75, %c0_76] : memref<125x8x512xf32, #tpu.memory_space<vmem>>, vector<1x8x512xf32>
      %117 = vector.shape_cast %116 : vector<1x8x512xf32> to vector<8x512xf32>
      %118 = vector.shape_cast %114 : vector<8x512xf32> to vector<1x8x512xf32>
      tpu.vector_store %arg9[%115, %c0_75, %c0_76], %118 {strides = array<i32>} : memref<125x8x512xf32, #tpu.memory_space<vmem>>, vector<1x8x512xf32>,
      %c5_i32_77 = arith.constant 5 : i32
      %119 = arith.muli %66, %c5_i32_77 : i32
      %c0_i32_78 = arith.constant 0 : i32
      %120 = arith.addi %119, %c0_i32_78 : i32
      %c5_i32_79 = arith.constant 5 : i32
      %121 = arith.muli %120, %c5_i32_79 : i32
      %c4_i32 = arith.constant 4 : i32
      %122 = arith.addi %121, %c4_i32 : i32
      %123 = arith.index_cast %66 : i32 to index
      %c0_80 = arith.constant 0 : index
      %c4 = arith.constant 4 : index
      %c0_81 = arith.constant 0 : index
      %124 = vector.load %arg8[%123, %c0_80, %c4, %c0_81] : memref<12x12x12x4xf32, #tpu.memory_space<vmem>>, vector<8x8x8x4xf32>
      %125 = vector.shape_cast %124 : vector<8x8x8x4xf32> to vector<512x4xf32>
      %126 = tpu.transpose %125, [1, 0] : vector<512x4xf32> -> vector<4x512xf32>
      %127 = tpu.concatenate %126, %5 in 0 : vector<4x512xf32>, vector<4x512xf32> -> vector<8x512xf32>
      %128 = arith.index_cast %122 : i32 to index
      %c0_82 = arith.constant 0 : index
      %c0_83 = arith.constant 0 : index
      %129 = vector.load %arg9[%128, %c0_82, %c0_83] : memref<125x8x512xf32, #tpu.memory_space<vmem>>, vector<1x8x512xf32>
      %130 = vector.shape_cast %129 : vector<1x8x512xf32> to vector<8x512xf32>
      %131 = vector.shape_cast %127 : vector<8x512xf32> to vector<1x8x512xf32>
      tpu.vector_store %arg9[%128, %c0_82, %c0_83], %131 {strides = array<i32>} : memref<125x8x512xf32, #tpu.memory_space<vmem>>, vector<1x8x512xf32>,
      %c5_i32_84 = arith.constant 5 : i32
      %132 = arith.muli %66, %c5_i32_84 : i32
      %c1_i32_85 = arith.constant 1 : i32
      %133 = arith.addi %132, %c1_i32_85 : i32
      %c5_i32_86 = arith.constant 5 : i32
      %134 = arith.muli %133, %c5_i32_86 : i32
      %c0_i32_87 = arith.constant 0 : i32
      %135 = arith.addi %134, %c0_i32_87 : i32
      %136 = arith.index_cast %66 : i32 to index
      %c1_88 = arith.constant 1 : index
      %c0_89 = arith.constant 0 : index
      %c0_90 = arith.constant 0 : index
      %137 = vector.load %arg8[%136, %c1_88, %c0_89, %c0_90] : memref<12x12x12x4xf32, #tpu.memory_space<vmem>>, vector<8x8x8x4xf32>
      %138 = vector.shape_cast %137 : vector<8x8x8x4xf32> to vector<512x4xf32>
      %139 = tpu.transpose %138, [1, 0] : vector<512x4xf32> -> vector<4x512xf32>
      %140 = tpu.concatenate %139, %5 in 0 : vector<4x512xf32>, vector<4x512xf32> -> vector<8x512xf32>
      %141 = arith.index_cast %135 : i32 to index
      %c0_91 = arith.constant 0 : index
      %c0_92 = arith.constant 0 : index
      %142 = vector.load %arg9[%141, %c0_91, %c0_92] : memref<125x8x512xf32, #tpu.memory_space<vmem>>, vector<1x8x512xf32>
      %143 = vector.shape_cast %142 : vector<1x8x512xf32> to vector<8x512xf32>
      %144 = vector.shape_cast %140 : vector<8x512xf32> to vector<1x8x512xf32>
      tpu.vector_store %arg9[%141, %c0_91, %c0_92], %144 {strides = array<i32>} : memref<125x8x512xf32, #tpu.memory_space<vmem>>, vector<1x8x512xf32>,
      %c5_i32_93 = arith.constant 5 : i32
      %145 = arith.muli %66, %c5_i32_93 : i32
      %c1_i32_94 = arith.constant 1 : i32
      %146 = arith.addi %145, %c1_i32_94 : i32
      %c5_i32_95 = arith.constant 5 : i32
      %147 = arith.muli %146, %c5_i32_95 : i32
      %c1_i32_96 = arith.constant 1 : i32
      %148 = arith.addi %147, %c1_i32_96 : i32
      %149 = arith.index_cast %66 : i32 to index
      %c1_97 = arith.constant 1 : index
      %c1_98 = arith.constant 1 : index
      %c0_99 = arith.constant 0 : index
      %150 = vector.load %arg8[%149, %c1_97, %c1_98, %c0_99] : memref<12x12x12x4xf32, #tpu.memory_space<vmem>>, vector<8x8x8x4xf32>
      %151 = vector.shape_cast %150 : vector<8x8x8x4xf32> to vector<512x4xf32>
      %152 = tpu.transpose %151, [1, 0] : vector<512x4xf32> -> vector<4x512xf32>
      %153 = tpu.concatenate %152, %5 in 0 : vector<4x512xf32>, vector<4x512xf32> -> vector<8x512xf32>
      %154 = arith.index_cast %148 : i32 to index
      %c0_100 = arith.constant 0 : index
      %c0_101 = arith.constant 0 : index
      %155 = vector.load %arg9[%154, %c0_100, %c0_101] : memref<125x8x512xf32, #tpu.memory_space<vmem>>, vector<1x8x512xf32>
      %156 = vector.shape_cast %155 : vector<1x8x512xf32> to vector<8x512xf32>
      %157 = vector.shape_cast %153 : vector<8x512xf32> to vector<1x8x512xf32>
      tpu.vector_store %arg9[%154, %c0_100, %c0_101], %157 {strides = array<i32>} : memref<125x8x512xf32, #tpu.memory_space<vmem>>, vector<1x8x512xf32>,
      %c5_i32_102 = arith.constant 5 : i32
      %158 = arith.muli %66, %c5_i32_102 : i32
      %c1_i32_103 = arith.constant 1 : i32
      %159 = arith.addi %158, %c1_i32_103 : i32
      %c5_i32_104 = arith.constant 5 : i32
      %160 = arith.muli %159, %c5_i32_104 : i32
      %c2_i32_105 = arith.constant 2 : i32
      %161 = arith.addi %160, %c2_i32_105 : i32
      %162 = arith.index_cast %66 : i32 to index
      %c1_106 = arith.constant 1 : index
      %c2_107 = arith.constant 2 : index
      %c0_108 = arith.constant 0 : index
      %163 = vector.load %arg8[%162, %c1_106, %c2_107, %c0_108] : memref<12x12x12x4xf32, #tpu.memory_space<vmem>>, vector<8x8x8x4xf32>
      %164 = vector.shape_cast %163 : vector<8x8x8x4xf32> to vector<512x4xf32>
      %165 = tpu.transpose %164, [1, 0] : vector<512x4xf32> -> vector<4x512xf32>
      %166 = tpu.concatenate %165, %5 in 0 : vector<4x512xf32>, vector<4x512xf32> -> vector<8x512xf32>
      %167 = arith.index_cast %161 : i32 to index
      %c0_109 = arith.constant 0 : index
      %c0_110 = arith.constant 0 : index
      %168 = vector.load %arg9[%167, %c0_109, %c0_110] : memref<125x8x512xf32, #tpu.memory_space<vmem>>, vector<1x8x512xf32>
      %169 = vector.shape_cast %168 : vector<1x8x512xf32> to vector<8x512xf32>
      %170 = vector.shape_cast %166 : vector<8x512xf32> to vector<1x8x512xf32>
      tpu.vector_store %arg9[%167, %c0_109, %c0_110], %170 {strides = array<i32>} : memref<125x8x512xf32, #tpu.memory_space<vmem>>, vector<1x8x512xf32>,
      %c5_i32_111 = arith.constant 5 : i32
      %171 = arith.muli %66, %c5_i32_111 : i32
      %c1_i32_112 = arith.constant 1 : i32
      %172 = arith.addi %171, %c1_i32_112 : i32
      %c5_i32_113 = arith.constant 5 : i32
      %173 = arith.muli %172, %c5_i32_113 : i32
      %c3_i32_114 = arith.constant 3 : i32
      %174 = arith.addi %173, %c3_i32_114 : i32
      %175 = arith.index_cast %66 : i32 to index
      %c1_115 = arith.constant 1 : index
      %c3_116 = arith.constant 3 : index
      %c0_117 = arith.constant 0 : index
      %176 = vector.load %arg8[%175, %c1_115, %c3_116, %c0_117] : memref<12x12x12x4xf32, #tpu.memory_space<vmem>>, vector<8x8x8x4xf32>
      %177 = vector.shape_cast %176 : vector<8x8x8x4xf32> to vector<512x4xf32>
      %178 = tpu.transpose %177, [1, 0] : vector<512x4xf32> -> vector<4x512xf32>
      %179 = tpu.concatenate %178, %5 in 0 : vector<4x512xf32>, vector<4x512xf32> -> vector<8x512xf32>
      %180 = arith.index_cast %174 : i32 to index
      %c0_118 = arith.constant 0 : index
      %c0_119 = arith.constant 0 : index
      %181 = vector.load %arg9[%180, %c0_118, %c0_119] : memref<125x8x512xf32, #tpu.memory_space<vmem>>, vector<1x8x512xf32>
      %182 = vector.shape_cast %181 : vector<1x8x512xf32> to vector<8x512xf32>
      %183 = vector.shape_cast %179 : vector<8x512xf32> to vector<1x8x512xf32>
      tpu.vector_store %arg9[%180, %c0_118, %c0_119], %183 {strides = array<i32>} : memref<125x8x512xf32, #tpu.memory_space<vmem>>, vector<1x8x512xf32>,
      %c5_i32_120 = arith.constant 5 : i32
      %184 = arith.muli %66, %c5_i32_120 : i32
      %c1_i32_121 = arith.constant 1 : i32
      %185 = arith.addi %184, %c1_i32_121 : i32
      %c5_i32_122 = arith.constant 5 : i32
      %186 = arith.muli %185, %c5_i32_122 : i32
      %c4_i32_123 = arith.constant 4 : i32
      %187 = arith.addi %186, %c4_i32_123 : i32
      %188 = arith.index_cast %66 : i32 to index
      %c1_124 = arith.constant 1 : index
      %c4_125 = arith.constant 4 : index
      %c0_126 = arith.constant 0 : index
      %189 = vector.load %arg8[%188, %c1_124, %c4_125, %c0_126] : memref<12x12x12x4xf32, #tpu.memory_space<vmem>>, vector<8x8x8x4xf32>
      %190 = vector.shape_cast %189 : vector<8x8x8x4xf32> to vector<512x4xf32>
      %191 = tpu.transpose %190, [1, 0] : vector<512x4xf32> -> vector<4x512xf32>
      %192 = tpu.concatenate %191, %5 in 0 : vector<4x512xf32>, vector<4x512xf32> -> vector<8x512xf32>
      %193 = arith.index_cast %187 : i32 to index
      %c0_127 = arith.constant 0 : index
      %c0_128 = arith.constant 0 : index
      %194 = vector.load %arg9[%193, %c0_127, %c0_128] : memref<125x8x512xf32, #tpu.memory_space<vmem>>, vector<1x8x512xf32>
      %195 = vector.shape_cast %194 : vector<1x8x512xf32> to vector<8x512xf32>
      %196 = vector.shape_cast %192 : vector<8x512xf32> to vector<1x8x512xf32>
      tpu.vector_store %arg9[%193, %c0_127, %c0_128], %196 {strides = array<i32>} : memref<125x8x512xf32, #tpu.memory_space<vmem>>, vector<1x8x512xf32>,
      %c5_i32_129 = arith.constant 5 : i32
      %197 = arith.muli %66, %c5_i32_129 : i32
      %c2_i32_130 = arith.constant 2 : i32
      %198 = arith.addi %197, %c2_i32_130 : i32
      %c5_i32_131 = arith.constant 5 : i32
      %199 = arith.muli %198, %c5_i32_131 : i32
      %c0_i32_132 = arith.constant 0 : i32
      %200 = arith.addi %199, %c0_i32_132 : i32
      %201 = arith.index_cast %66 : i32 to index
      %c2_133 = arith.constant 2 : index
      %c0_134 = arith.constant 0 : index
      %c0_135 = arith.constant 0 : index
      %202 = vector.load %arg8[%201, %c2_133, %c0_134, %c0_135] : memref<12x12x12x4xf32, #tpu.memory_space<vmem>>, vector<8x8x8x4xf32>
      %203 = vector.shape_cast %202 : vector<8x8x8x4xf32> to vector<512x4xf32>
      %204 = tpu.transpose %203, [1, 0] : vector<512x4xf32> -> vector<4x512xf32>
      %205 = tpu.concatenate %204, %5 in 0 : vector<4x512xf32>, vector<4x512xf32> -> vector<8x512xf32>
      %206 = arith.index_cast %200 : i32 to index
      %c0_136 = arith.constant 0 : index
      %c0_137 = arith.constant 0 : index
      %207 = vector.load %arg9[%206, %c0_136, %c0_137] : memref<125x8x512xf32, #tpu.memory_space<vmem>>, vector<1x8x512xf32>
      %208 = vector.shape_cast %207 : vector<1x8x512xf32> to vector<8x512xf32>
      %209 = vector.shape_cast %205 : vector<8x512xf32> to vector<1x8x512xf32>
      tpu.vector_store %arg9[%206, %c0_136, %c0_137], %209 {strides = array<i32>} : memref<125x8x512xf32, #tpu.memory_space<vmem>>, vector<1x8x512xf32>,
      %c5_i32_138 = arith.constant 5 : i32
      %210 = arith.muli %66, %c5_i32_138 : i32
      %c2_i32_139 = arith.constant 2 : i32
      %211 = arith.addi %210, %c2_i32_139 : i32
      %c5_i32_140 = arith.constant 5 : i32
      %212 = arith.muli %211, %c5_i32_140 : i32
      %c1_i32_141 = arith.constant 1 : i32
      %213 = arith.addi %212, %c1_i32_141 : i32
      %214 = arith.index_cast %66 : i32 to index
      %c2_142 = arith.constant 2 : index
      %c1_143 = arith.constant 1 : index
      %c0_144 = arith.constant 0 : index
      %215 = vector.load %arg8[%214, %c2_142, %c1_143, %c0_144] : memref<12x12x12x4xf32, #tpu.memory_space<vmem>>, vector<8x8x8x4xf32>
      %216 = vector.shape_cast %215 : vector<8x8x8x4xf32> to vector<512x4xf32>
      %217 = tpu.transpose %216, [1, 0] : vector<512x4xf32> -> vector<4x512xf32>
      %218 = tpu.concatenate %217, %5 in 0 : vector<4x512xf32>, vector<4x512xf32> -> vector<8x512xf32>
      %219 = arith.index_cast %213 : i32 to index
      %c0_145 = arith.constant 0 : index
      %c0_146 = arith.constant 0 : index
      %220 = vector.load %arg9[%219, %c0_145, %c0_146] : memref<125x8x512xf32, #tpu.memory_space<vmem>>, vector<1x8x512xf32>
      %221 = vector.shape_cast %220 : vector<1x8x512xf32> to vector<8x512xf32>
      %222 = vector.shape_cast %218 : vector<8x512xf32> to vector<1x8x512xf32>
      tpu.vector_store %arg9[%219, %c0_145, %c0_146], %222 {strides = array<i32>} : memref<125x8x512xf32, #tpu.memory_space<vmem>>, vector<1x8x512xf32>,
      %c5_i32_147 = arith.constant 5 : i32
      %223 = arith.muli %66, %c5_i32_147 : i32
      %c2_i32_148 = arith.constant 2 : i32
      %224 = arith.addi %223, %c2_i32_148 : i32
      %c5_i32_149 = arith.constant 5 : i32
      %225 = arith.muli %224, %c5_i32_149 : i32
      %c2_i32_150 = arith.constant 2 : i32
      %226 = arith.addi %225, %c2_i32_150 : i32
      %227 = arith.index_cast %66 : i32 to index
      %c2_151 = arith.constant 2 : index
      %c2_152 = arith.constant 2 : index
      %c0_153 = arith.constant 0 : index
      %228 = vector.load %arg8[%227, %c2_151, %c2_152, %c0_153] : memref<12x12x12x4xf32, #tpu.memory_space<vmem>>, vector<8x8x8x4xf32>
      %229 = vector.shape_cast %228 : vector<8x8x8x4xf32> to vector<512x4xf32>
      %230 = tpu.transpose %229, [1, 0] : vector<512x4xf32> -> vector<4x512xf32>
      %231 = tpu.concatenate %230, %5 in 0 : vector<4x512xf32>, vector<4x512xf32> -> vector<8x512xf32>
      %232 = arith.index_cast %226 : i32 to index
      %c0_154 = arith.constant 0 : index
      %c0_155 = arith.constant 0 : index
      %233 = vector.load %arg9[%232, %c0_154, %c0_155] : memref<125x8x512xf32, #tpu.memory_space<vmem>>, vector<1x8x512xf32>
      %234 = vector.shape_cast %233 : vector<1x8x512xf32> to vector<8x512xf32>
      %235 = vector.shape_cast %231 : vector<8x512xf32> to vector<1x8x512xf32>
      tpu.vector_store %arg9[%232, %c0_154, %c0_155], %235 {strides = array<i32>} : memref<125x8x512xf32, #tpu.memory_space<vmem>>, vector<1x8x512xf32>,
      %c5_i32_156 = arith.constant 5 : i32
      %236 = arith.muli %66, %c5_i32_156 : i32
      %c2_i32_157 = arith.constant 2 : i32
      %237 = arith.addi %236, %c2_i32_157 : i32
      %c5_i32_158 = arith.constant 5 : i32
      %238 = arith.muli %237, %c5_i32_158 : i32
      %c3_i32_159 = arith.constant 3 : i32
      %239 = arith.addi %238, %c3_i32_159 : i32
      %240 = arith.index_cast %66 : i32 to index
      %c2_160 = arith.constant 2 : index
      %c3_161 = arith.constant 3 : index
      %c0_162 = arith.constant 0 : index
      %241 = vector.load %arg8[%240, %c2_160, %c3_161, %c0_162] : memref<12x12x12x4xf32, #tpu.memory_space<vmem>>, vector<8x8x8x4xf32>
      %242 = vector.shape_cast %241 : vector<8x8x8x4xf32> to vector<512x4xf32>
      %243 = tpu.transpose %242, [1, 0] : vector<512x4xf32> -> vector<4x512xf32>
      %244 = tpu.concatenate %243, %5 in 0 : vector<4x512xf32>, vector<4x512xf32> -> vector<8x512xf32>
      %245 = arith.index_cast %239 : i32 to index
      %c0_163 = arith.constant 0 : index
      %c0_164 = arith.constant 0 : index
      %246 = vector.load %arg9[%245, %c0_163, %c0_164] : memref<125x8x512xf32, #tpu.memory_space<vmem>>, vector<1x8x512xf32>
      %247 = vector.shape_cast %246 : vector<1x8x512xf32> to vector<8x512xf32>
      %248 = vector.shape_cast %244 : vector<8x512xf32> to vector<1x8x512xf32>
      tpu.vector_store %arg9[%245, %c0_163, %c0_164], %248 {strides = array<i32>} : memref<125x8x512xf32, #tpu.memory_space<vmem>>, vector<1x8x512xf32>,
      %c5_i32_165 = arith.constant 5 : i32
      %249 = arith.muli %66, %c5_i32_165 : i32
      %c2_i32_166 = arith.constant 2 : i32
      %250 = arith.addi %249, %c2_i32_166 : i32
      %c5_i32_167 = arith.constant 5 : i32
      %251 = arith.muli %250, %c5_i32_167 : i32
      %c4_i32_168 = arith.constant 4 : i32
      %252 = arith.addi %251, %c4_i32_168 : i32
      %253 = arith.index_cast %66 : i32 to index
      %c2_169 = arith.constant 2 : index
      %c4_170 = arith.constant 4 : index
      %c0_171 = arith.constant 0 : index
      %254 = vector.load %arg8[%253, %c2_169, %c4_170, %c0_171] : memref<12x12x12x4xf32, #tpu.memory_space<vmem>>, vector<8x8x8x4xf32>
      %255 = vector.shape_cast %254 : vector<8x8x8x4xf32> to vector<512x4xf32>
      %256 = tpu.transpose %255, [1, 0] : vector<512x4xf32> -> vector<4x512xf32>
      %257 = tpu.concatenate %256, %5 in 0 : vector<4x512xf32>, vector<4x512xf32> -> vector<8x512xf32>
      %258 = arith.index_cast %252 : i32 to index
      %c0_172 = arith.constant 0 : index
      %c0_173 = arith.constant 0 : index
      %259 = vector.load %arg9[%258, %c0_172, %c0_173] : memref<125x8x512xf32, #tpu.memory_space<vmem>>, vector<1x8x512xf32>
      %260 = vector.shape_cast %259 : vector<1x8x512xf32> to vector<8x512xf32>
      %261 = vector.shape_cast %257 : vector<8x512xf32> to vector<1x8x512xf32>
      tpu.vector_store %arg9[%258, %c0_172, %c0_173], %261 {strides = array<i32>} : memref<125x8x512xf32, #tpu.memory_space<vmem>>, vector<1x8x512xf32>,
      %c5_i32_174 = arith.constant 5 : i32
      %262 = arith.muli %66, %c5_i32_174 : i32
      %c3_i32_175 = arith.constant 3 : i32
      %263 = arith.addi %262, %c3_i32_175 : i32
      %c5_i32_176 = arith.constant 5 : i32
      %264 = arith.muli %263, %c5_i32_176 : i32
      %c0_i32_177 = arith.constant 0 : i32
      %265 = arith.addi %264, %c0_i32_177 : i32
      %266 = arith.index_cast %66 : i32 to index
      %c3_178 = arith.constant 3 : index
      %c0_179 = arith.constant 0 : index
      %c0_180 = arith.constant 0 : index
      %267 = vector.load %arg8[%266, %c3_178, %c0_179, %c0_180] : memref<12x12x12x4xf32, #tpu.memory_space<vmem>>, vector<8x8x8x4xf32>
      %268 = vector.shape_cast %267 : vector<8x8x8x4xf32> to vector<512x4xf32>
      %269 = tpu.transpose %268, [1, 0] : vector<512x4xf32> -> vector<4x512xf32>
      %270 = tpu.concatenate %269, %5 in 0 : vector<4x512xf32>, vector<4x512xf32> -> vector<8x512xf32>
      %271 = arith.index_cast %265 : i32 to index
      %c0_181 = arith.constant 0 : index
      %c0_182 = arith.constant 0 : index
      %272 = vector.load %arg9[%271, %c0_181, %c0_182] : memref<125x8x512xf32, #tpu.memory_space<vmem>>, vector<1x8x512xf32>
      %273 = vector.shape_cast %272 : vector<1x8x512xf32> to vector<8x512xf32>
      %274 = vector.shape_cast %270 : vector<8x512xf32> to vector<1x8x512xf32>
      tpu.vector_store %arg9[%271, %c0_181, %c0_182], %274 {strides = array<i32>} : memref<125x8x512xf32, #tpu.memory_space<vmem>>, vector<1x8x512xf32>,
      %c5_i32_183 = arith.constant 5 : i32
      %275 = arith.muli %66, %c5_i32_183 : i32
      %c3_i32_184 = arith.constant 3 : i32
      %276 = arith.addi %275, %c3_i32_184 : i32
      %c5_i32_185 = arith.constant 5 : i32
      %277 = arith.muli %276, %c5_i32_185 : i32
      %c1_i32_186 = arith.constant 1 : i32
      %278 = arith.addi %277, %c1_i32_186 : i32
      %279 = arith.index_cast %66 : i32 to index
      %c3_187 = arith.constant 3 : index
      %c1_188 = arith.constant 1 : index
      %c0_189 = arith.constant 0 : index
      %280 = vector.load %arg8[%279, %c3_187, %c1_188, %c0_189] : memref<12x12x12x4xf32, #tpu.memory_space<vmem>>, vector<8x8x8x4xf32>
      %281 = vector.shape_cast %280 : vector<8x8x8x4xf32> to vector<512x4xf32>
      %282 = tpu.transpose %281, [1, 0] : vector<512x4xf32> -> vector<4x512xf32>
      %283 = tpu.concatenate %282, %5 in 0 : vector<4x512xf32>, vector<4x512xf32> -> vector<8x512xf32>
      %284 = arith.index_cast %278 : i32 to index
      %c0_190 = arith.constant 0 : index
      %c0_191 = arith.constant 0 : index
      %285 = vector.load %arg9[%284, %c0_190, %c0_191] : memref<125x8x512xf32, #tpu.memory_space<vmem>>, vector<1x8x512xf32>
      %286 = vector.shape_cast %285 : vector<1x8x512xf32> to vector<8x512xf32>
      %287 = vector.shape_cast %283 : vector<8x512xf32> to vector<1x8x512xf32>
      tpu.vector_store %arg9[%284, %c0_190, %c0_191], %287 {strides = array<i32>} : memref<125x8x512xf32, #tpu.memory_space<vmem>>, vector<1x8x512xf32>,
      %c5_i32_192 = arith.constant 5 : i32
      %288 = arith.muli %66, %c5_i32_192 : i32
      %c3_i32_193 = arith.constant 3 : i32
      %289 = arith.addi %288, %c3_i32_193 : i32
      %c5_i32_194 = arith.constant 5 : i32
      %290 = arith.muli %289, %c5_i32_194 : i32
      %c2_i32_195 = arith.constant 2 : i32
      %291 = arith.addi %290, %c2_i32_195 : i32
      %292 = arith.index_cast %66 : i32 to index
      %c3_196 = arith.constant 3 : index
      %c2_197 = arith.constant 2 : index
      %c0_198 = arith.constant 0 : index
      %293 = vector.load %arg8[%292, %c3_196, %c2_197, %c0_198] : memref<12x12x12x4xf32, #tpu.memory_space<vmem>>, vector<8x8x8x4xf32>
      %294 = vector.shape_cast %293 : vector<8x8x8x4xf32> to vector<512x4xf32>
      %295 = tpu.transpose %294, [1, 0] : vector<512x4xf32> -> vector<4x512xf32>
      %296 = tpu.concatenate %295, %5 in 0 : vector<4x512xf32>, vector<4x512xf32> -> vector<8x512xf32>
      %297 = arith.index_cast %291 : i32 to index
      %c0_199 = arith.constant 0 : index
      %c0_200 = arith.constant 0 : index
      %298 = vector.load %arg9[%297, %c0_199, %c0_200] : memref<125x8x512xf32, #tpu.memory_space<vmem>>, vector<1x8x512xf32>
      %299 = vector.shape_cast %298 : vector<1x8x512xf32> to vector<8x512xf32>
      %300 = vector.shape_cast %296 : vector<8x512xf32> to vector<1x8x512xf32>
      tpu.vector_store %arg9[%297, %c0_199, %c0_200], %300 {strides = array<i32>} : memref<125x8x512xf32, #tpu.memory_space<vmem>>, vector<1x8x512xf32>,
      %c5_i32_201 = arith.constant 5 : i32
      %301 = arith.muli %66, %c5_i32_201 : i32
      %c3_i32_202 = arith.constant 3 : i32
      %302 = arith.addi %301, %c3_i32_202 : i32
      %c5_i32_203 = arith.constant 5 : i32
      %303 = arith.muli %302, %c5_i32_203 : i32
      %c3_i32_204 = arith.constant 3 : i32
      %304 = arith.addi %303, %c3_i32_204 : i32
      %305 = arith.index_cast %66 : i32 to index
      %c3_205 = arith.constant 3 : index
      %c3_206 = arith.constant 3 : index
      %c0_207 = arith.constant 0 : index
      %306 = vector.load %arg8[%305, %c3_205, %c3_206, %c0_207] : memref<12x12x12x4xf32, #tpu.memory_space<vmem>>, vector<8x8x8x4xf32>
      %307 = vector.shape_cast %306 : vector<8x8x8x4xf32> to vector<512x4xf32>
      %308 = tpu.transpose %307, [1, 0] : vector<512x4xf32> -> vector<4x512xf32>
      %309 = tpu.concatenate %308, %5 in 0 : vector<4x512xf32>, vector<4x512xf32> -> vector<8x512xf32>
      %310 = arith.index_cast %304 : i32 to index
      %c0_208 = arith.constant 0 : index
      %c0_209 = arith.constant 0 : index
      %311 = vector.load %arg9[%310, %c0_208, %c0_209] : memref<125x8x512xf32, #tpu.memory_space<vmem>>, vector<1x8x512xf32>
      %312 = vector.shape_cast %311 : vector<1x8x512xf32> to vector<8x512xf32>
      %313 = vector.shape_cast %309 : vector<8x512xf32> to vector<1x8x512xf32>
      tpu.vector_store %arg9[%310, %c0_208, %c0_209], %313 {strides = array<i32>} : memref<125x8x512xf32, #tpu.memory_space<vmem>>, vector<1x8x512xf32>,
      %c5_i32_210 = arith.constant 5 : i32
      %314 = arith.muli %66, %c5_i32_210 : i32
      %c3_i32_211 = arith.constant 3 : i32
      %315 = arith.addi %314, %c3_i32_211 : i32
      %c5_i32_212 = arith.constant 5 : i32
      %316 = arith.muli %315, %c5_i32_212 : i32
      %c4_i32_213 = arith.constant 4 : i32
      %317 = arith.addi %316, %c4_i32_213 : i32
      %318 = arith.index_cast %66 : i32 to index
      %c3_214 = arith.constant 3 : index
      %c4_215 = arith.constant 4 : index
      %c0_216 = arith.constant 0 : index
      %319 = vector.load %arg8[%318, %c3_214, %c4_215, %c0_216] : memref<12x12x12x4xf32, #tpu.memory_space<vmem>>, vector<8x8x8x4xf32>
      %320 = vector.shape_cast %319 : vector<8x8x8x4xf32> to vector<512x4xf32>
      %321 = tpu.transpose %320, [1, 0] : vector<512x4xf32> -> vector<4x512xf32>
      %322 = tpu.concatenate %321, %5 in 0 : vector<4x512xf32>, vector<4x512xf32> -> vector<8x512xf32>
      %323 = arith.index_cast %317 : i32 to index
      %c0_217 = arith.constant 0 : index
      %c0_218 = arith.constant 0 : index
      %324 = vector.load %arg9[%323, %c0_217, %c0_218] : memref<125x8x512xf32, #tpu.memory_space<vmem>>, vector<1x8x512xf32>
      %325 = vector.shape_cast %324 : vector<1x8x512xf32> to vector<8x512xf32>
      %326 = vector.shape_cast %322 : vector<8x512xf32> to vector<1x8x512xf32>
      tpu.vector_store %arg9[%323, %c0_217, %c0_218], %326 {strides = array<i32>} : memref<125x8x512xf32, #tpu.memory_space<vmem>>, vector<1x8x512xf32>,
      %c5_i32_219 = arith.constant 5 : i32
      %327 = arith.muli %66, %c5_i32_219 : i32
      %c4_i32_220 = arith.constant 4 : i32
      %328 = arith.addi %327, %c4_i32_220 : i32
      %c5_i32_221 = arith.constant 5 : i32
      %329 = arith.muli %328, %c5_i32_221 : i32
      %c0_i32_222 = arith.constant 0 : i32
      %330 = arith.addi %329, %c0_i32_222 : i32
      %331 = arith.index_cast %66 : i32 to index
      %c4_223 = arith.constant 4 : index
      %c0_224 = arith.constant 0 : index
      %c0_225 = arith.constant 0 : index
      %332 = vector.load %arg8[%331, %c4_223, %c0_224, %c0_225] : memref<12x12x12x4xf32, #tpu.memory_space<vmem>>, vector<8x8x8x4xf32>
      %333 = vector.shape_cast %332 : vector<8x8x8x4xf32> to vector<512x4xf32>
      %334 = tpu.transpose %333, [1, 0] : vector<512x4xf32> -> vector<4x512xf32>
      %335 = tpu.concatenate %334, %5 in 0 : vector<4x512xf32>, vector<4x512xf32> -> vector<8x512xf32>
      %336 = arith.index_cast %330 : i32 to index
      %c0_226 = arith.constant 0 : index
      %c0_227 = arith.constant 0 : index
      %337 = vector.load %arg9[%336, %c0_226, %c0_227] : memref<125x8x512xf32, #tpu.memory_space<vmem>>, vector<1x8x512xf32>
      %338 = vector.shape_cast %337 : vector<1x8x512xf32> to vector<8x512xf32>
      %339 = vector.shape_cast %335 : vector<8x512xf32> to vector<1x8x512xf32>
      tpu.vector_store %arg9[%336, %c0_226, %c0_227], %339 {strides = array<i32>} : memref<125x8x512xf32, #tpu.memory_space<vmem>>, vector<1x8x512xf32>,
      %c5_i32_228 = arith.constant 5 : i32
      %340 = arith.muli %66, %c5_i32_228 : i32
      %c4_i32_229 = arith.constant 4 : i32
      %341 = arith.addi %340, %c4_i32_229 : i32
      %c5_i32_230 = arith.constant 5 : i32
      %342 = arith.muli %341, %c5_i32_230 : i32
      %c1_i32_231 = arith.constant 1 : i32
      %343 = arith.addi %342, %c1_i32_231 : i32
      %344 = arith.index_cast %66 : i32 to index
      %c4_232 = arith.constant 4 : index
      %c1_233 = arith.constant 1 : index
      %c0_234 = arith.constant 0 : index
      %345 = vector.load %arg8[%344, %c4_232, %c1_233, %c0_234] : memref<12x12x12x4xf32, #tpu.memory_space<vmem>>, vector<8x8x8x4xf32>
      %346 = vector.shape_cast %345 : vector<8x8x8x4xf32> to vector<512x4xf32>
      %347 = tpu.transpose %346, [1, 0] : vector<512x4xf32> -> vector<4x512xf32>
      %348 = tpu.concatenate %347, %5 in 0 : vector<4x512xf32>, vector<4x512xf32> -> vector<8x512xf32>
      %349 = arith.index_cast %343 : i32 to index
      %c0_235 = arith.constant 0 : index
      %c0_236 = arith.constant 0 : index
      %350 = vector.load %arg9[%349, %c0_235, %c0_236] : memref<125x8x512xf32, #tpu.memory_space<vmem>>, vector<1x8x512xf32>
      %351 = vector.shape_cast %350 : vector<1x8x512xf32> to vector<8x512xf32>
      %352 = vector.shape_cast %348 : vector<8x512xf32> to vector<1x8x512xf32>
      tpu.vector_store %arg9[%349, %c0_235, %c0_236], %352 {strides = array<i32>} : memref<125x8x512xf32, #tpu.memory_space<vmem>>, vector<1x8x512xf32>,
      %c5_i32_237 = arith.constant 5 : i32
      %353 = arith.muli %66, %c5_i32_237 : i32
      %c4_i32_238 = arith.constant 4 : i32
      %354 = arith.addi %353, %c4_i32_238 : i32
      %c5_i32_239 = arith.constant 5 : i32
      %355 = arith.muli %354, %c5_i32_239 : i32
      %c2_i32_240 = arith.constant 2 : i32
      %356 = arith.addi %355, %c2_i32_240 : i32
      %357 = arith.index_cast %66 : i32 to index
      %c4_241 = arith.constant 4 : index
      %c2_242 = arith.constant 2 : index
      %c0_243 = arith.constant 0 : index
      %358 = vector.load %arg8[%357, %c4_241, %c2_242, %c0_243] : memref<12x12x12x4xf32, #tpu.memory_space<vmem>>, vector<8x8x8x4xf32>
      %359 = vector.shape_cast %358 : vector<8x8x8x4xf32> to vector<512x4xf32>
      %360 = tpu.transpose %359, [1, 0] : vector<512x4xf32> -> vector<4x512xf32>
      %361 = tpu.concatenate %360, %5 in 0 : vector<4x512xf32>, vector<4x512xf32> -> vector<8x512xf32>
      %362 = arith.index_cast %356 : i32 to index
      %c0_244 = arith.constant 0 : index
      %c0_245 = arith.constant 0 : index
      %363 = vector.load %arg9[%362, %c0_244, %c0_245] : memref<125x8x512xf32, #tpu.memory_space<vmem>>, vector<1x8x512xf32>
      %364 = vector.shape_cast %363 : vector<1x8x512xf32> to vector<8x512xf32>
      %365 = vector.shape_cast %361 : vector<8x512xf32> to vector<1x8x512xf32>
      tpu.vector_store %arg9[%362, %c0_244, %c0_245], %365 {strides = array<i32>} : memref<125x8x512xf32, #tpu.memory_space<vmem>>, vector<1x8x512xf32>,
      %c5_i32_246 = arith.constant 5 : i32
      %366 = arith.muli %66, %c5_i32_246 : i32
      %c4_i32_247 = arith.constant 4 : i32
      %367 = arith.addi %366, %c4_i32_247 : i32
      %c5_i32_248 = arith.constant 5 : i32
      %368 = arith.muli %367, %c5_i32_248 : i32
      %c3_i32_249 = arith.constant 3 : i32
      %369 = arith.addi %368, %c3_i32_249 : i32
      %370 = arith.index_cast %66 : i32 to index
      %c4_250 = arith.constant 4 : index
      %c3_251 = arith.constant 3 : index
      %c0_252 = arith.constant 0 : index
      %371 = vector.load %arg8[%370, %c4_250, %c3_251, %c0_252] : memref<12x12x12x4xf32, #tpu.memory_space<vmem>>, vector<8x8x8x4xf32>
      %372 = vector.shape_cast %371 : vector<8x8x8x4xf32> to vector<512x4xf32>
      %373 = tpu.transpose %372, [1, 0] : vector<512x4xf32> -> vector<4x512xf32>
      %374 = tpu.concatenate %373, %5 in 0 : vector<4x512xf32>, vector<4x512xf32> -> vector<8x512xf32>
      %375 = arith.index_cast %369 : i32 to index
      %c0_253 = arith.constant 0 : index
      %c0_254 = arith.constant 0 : index
      %376 = vector.load %arg9[%375, %c0_253, %c0_254] : memref<125x8x512xf32, #tpu.memory_space<vmem>>, vector<1x8x512xf32>
      %377 = vector.shape_cast %376 : vector<1x8x512xf32> to vector<8x512xf32>
      %378 = vector.shape_cast %374 : vector<8x512xf32> to vector<1x8x512xf32>
      tpu.vector_store %arg9[%375, %c0_253, %c0_254], %378 {strides = array<i32>} : memref<125x8x512xf32, #tpu.memory_space<vmem>>, vector<1x8x512xf32>,
      %c5_i32_255 = arith.constant 5 : i32
      %379 = arith.muli %66, %c5_i32_255 : i32
      %c4_i32_256 = arith.constant 4 : i32
      %380 = arith.addi %379, %c4_i32_256 : i32
      %c5_i32_257 = arith.constant 5 : i32
      %381 = arith.muli %380, %c5_i32_257 : i32
      %c4_i32_258 = arith.constant 4 : i32
      %382 = arith.addi %381, %c4_i32_258 : i32
      %383 = arith.index_cast %66 : i32 to index
      %c4_259 = arith.constant 4 : index
      %c4_260 = arith.constant 4 : index
      %c0_261 = arith.constant 0 : index
      %384 = vector.load %arg8[%383, %c4_259, %c4_260, %c0_261] : memref<12x12x12x4xf32, #tpu.memory_space<vmem>>, vector<8x8x8x4xf32>
      %385 = vector.shape_cast %384 : vector<8x8x8x4xf32> to vector<512x4xf32>
      %386 = tpu.transpose %385, [1, 0] : vector<512x4xf32> -> vector<4x512xf32>
      %387 = tpu.concatenate %386, %5 in 0 : vector<4x512xf32>, vector<4x512xf32> -> vector<8x512xf32>
      %388 = arith.index_cast %382 : i32 to index
      %c0_262 = arith.constant 0 : index
      %c0_263 = arith.constant 0 : index
      %389 = vector.load %arg9[%388, %c0_262, %c0_263] : memref<125x8x512xf32, #tpu.memory_space<vmem>>, vector<1x8x512xf32>
      %390 = vector.shape_cast %389 : vector<1x8x512xf32> to vector<8x512xf32>
      %391 = vector.shape_cast %387 : vector<8x512xf32> to vector<1x8x512xf32>
      tpu.vector_store %arg9[%388, %c0_262, %c0_263], %391 {strides = array<i32>} : memref<125x8x512xf32, #tpu.memory_space<vmem>>, vector<1x8x512xf32>,
    }
    %c5_i32_12 = arith.constant 5 : i32
    %c0_13 = arith.constant 0 : index
    %c0_14 = arith.constant 0 : index
    %c0_15 = arith.constant 0 : index
    %7 = vector.load %arg9[%c0_13, %c0_14, %c0_15] : memref<125x8x512xf32, #tpu.memory_space<vmem>>, vector<125x8x512xf32>
    %8 = vector.shape_cast %7 : vector<125x8x512xf32> to vector<1000x512xf32>
    %c0_16 = arith.constant 0 : index
    %c0_17 = arith.constant 0 : index
    %9 = vector.load %arg2[%c0_16, %c0_17] : memref<4x1000xf32, #tpu.memory_space<vmem>>, vector<4x1000xf32>
    %cst_18 = arith.constant dense<0.000000e+00> : vector<4x512xf32>
    %10 = tpu.matmul %9, %8, %cst_18 {dimension_numbers = #tpu.dot_dimension_numbers<[1], [0], [0], [1], [0, 0, 1, 1], [], []>} : vector<4x1000xf32>, vector<1000x512xf32>, vector<4x512xf32> -> vector<4x512xf32>
    %c0_19 = arith.constant 0 : index
    %c0_20 = arith.constant 0 : index
    %11 = vector.load %arg3[%c0_19, %c0_20] : memref<4x1xf32, #tpu.memory_space<vmem>>, vector<4x1xf32>
    %12 = vector.broadcast %11 : vector<4x1xf32> to vector<4x512xf32>
    %13 = arith.addf %10, %12 : vector<4x512xf32>
    %cst_21 = arith.constant dense<0.000000e+00> : vector<4xf32>
    %14 = vector.multi_reduction <add>, %13, %cst_21 [1] : vector<4x512xf32> to vector<4xf32>
    %15 = vector.shape_cast %14 : vector<4xf32> to vector<4x1xf32>
    %cst_22 = arith.constant 5.120000e+02 : f32
    %16 = vector.broadcast %cst_22 : f32 to vector<4x1xf32>
    %17 = arith.divf %15, %16 : vector<4x1xf32>
    %18 = vector.broadcast %17 : vector<4x1xf32> to vector<4x512xf32>
    %19 = arith.subf %13, %18 : vector<4x512xf32>
    %20 = arith.mulf %19, %19 : vector<4x512xf32>
    %cst_23 = arith.constant dense<0.000000e+00> : vector<4xf32>
    %21 = vector.multi_reduction <add>, %20, %cst_23 [1] : vector<4x512xf32> to vector<4xf32>
    %22 = vector.shape_cast %21 : vector<4xf32> to vector<4x1xf32>
    %cst_24 = arith.constant 5.120000e+02 : f32
    %23 = vector.broadcast %cst_24 : f32 to vector<4x1xf32>
    %24 = arith.divf %22, %23 : vector<4x1xf32>
    %25 = vector.broadcast %17 : vector<4x1xf32> to vector<4x512xf32>
    %26 = arith.subf %13, %25 : vector<4x512xf32>
    %cst_25 = arith.constant 9.99999974E-6 : f32
    %27 = vector.broadcast %cst_25 : f32 to vector<4x1xf32>
    %28 = arith.addf %24, %27 : vector<4x1xf32>
    %29 = math.rsqrt %28 : vector<4x1xf32>
    %30 = vector.broadcast %29 : vector<4x1xf32> to vector<4x512xf32>
    %31 = arith.mulf %26, %30 : vector<4x512xf32>
    %cst_26 = arith.constant 0.000000e+00 : f32
    %32 = vector.broadcast %cst_26 : f32 to vector<4x512xf32>
    %33 = arith.cmpf ogt, %31, %32 : vector<4x512xf32>
    %cst_27 = arith.constant 0.000000e+00 : f32
    %34 = vector.broadcast %cst_27 : f32 to vector<4x512xf32>
    %35 = arith.minimumf %31, %34 : vector<4x512xf32>
    %36 = math.exp %35 : vector<4x512xf32>
    %cst_28 = arith.constant 1.000000e+00 : f32
    %37 = vector.broadcast %cst_28 : f32 to vector<4x512xf32>
    %38 = arith.subf %36, %37 : vector<4x512xf32>
    %39 = arith.select %33, %31, %38 : vector<4x512xi1>, vector<4x512xf32>
    %c0_29 = arith.constant 0 : index
    %c0_30 = arith.constant 0 : index
    %40 = vector.load %arg4[%c0_29, %c0_30] : memref<4x4xf32, #tpu.memory_space<vmem>>, vector<4x4xf32>
    %cst_31 = arith.constant dense<0.000000e+00> : vector<4x512xf32>
    %41 = tpu.matmul %40, %39, %cst_31 {dimension_numbers = #tpu.dot_dimension_numbers<[1], [0], [0], [1], [0, 0, 1, 1], [], []>} : vector<4x4xf32>, vector<4x512xf32>, vector<4x512xf32> -> vector<4x512xf32>
    %c0_32 = arith.constant 0 : index
    %c0_33 = arith.constant 0 : index
    %42 = vector.load %arg5[%c0_32, %c0_33] : memref<4x1xf32, #tpu.memory_space<vmem>>, vector<4x1xf32>
    %43 = vector.broadcast %42 : vector<4x1xf32> to vector<4x512xf32>
    %44 = arith.addf %41, %43 : vector<4x512xf32>
    %c0_34 = arith.constant 0 : index
    %c0_35 = arith.constant 0 : index
    %c0_36 = arith.constant 0 : index
    %45 = vector.load %arg6[%c0_34, %c0_35, %c0_36] : memref<1x4x512xf32, #tpu.memory_space<vmem>>, vector<1x4x512xf32>
    %46 = vector.shape_cast %45 : vector<1x4x512xf32> to vector<4x512xf32>
    %47 = vector.shape_cast %44 : vector<4x512xf32> to vector<1x4x512xf32>
    tpu.vector_store %arg6[%c0_34, %c0_35, %c0_36], %47 {strides = array<i32>} : memref<1x4x512xf32, #tpu.memory_space<vmem>>, vector<1x4x512xf32>,
    %cst_37 = arith.constant dense<0xFF800000> : vector<512xf32>
    %48 = vector.multi_reduction <maximumf>, %44, %cst_37 [0] : vector<4x512xf32> to vector<512xf32>
    %49 = vector.shape_cast %48 : vector<512xf32> to vector<1x512xf32>
    %50 = vector.broadcast %49 : vector<1x512xf32> to vector<4x512xf32>
    %51 = arith.subf %44, %50 : vector<4x512xf32>
    %52 = math.exp %51 : vector<4x512xf32>
    %cst_38 = arith.constant dense<0.000000e+00> : vector<512xf32>
    %53 = vector.multi_reduction <add>, %52, %cst_38 [0] : vector<4x512xf32> to vector<512xf32>
    %54 = vector.shape_cast %53 : vector<512xf32> to vector<1x512xf32>
    %55 = tpu.reciprocal %54 {approx = true} : vector<1x512xf32> -> vector<1x512xf32>
    %56 = arith.mulf %54, %55 : vector<1x512xf32>
    %cst_39 = arith.constant 2.000000e+00 : f32
    %57 = vector.broadcast %cst_39 : f32 to vector<1x512xf32>
    %58 = arith.subf %57, %56 : vector<1x512xf32>
    %59 = arith.mulf %55, %58 : vector<1x512xf32>
    %60 = vector.broadcast %59 : vector<1x512xf32> to vector<4x512xf32>
    %61 = arith.mulf %52, %60 : vector<4x512xf32>
    %c0_40 = arith.constant 0 : index
    %c0_41 = arith.constant 0 : index
    %c0_42 = arith.constant 0 : index
    %62 = vector.load %arg7[%c0_40, %c0_41, %c0_42] : memref<1x4x512xf32, #tpu.memory_space<vmem>>, vector<1x4x512xf32>
    %63 = vector.shape_cast %62 : vector<1x4x512xf32> to vector<4x512xf32>
    %64 = vector.shape_cast %61 : vector<4x512xf32> to vector<1x4x512xf32>
    tpu.vector_store %arg7[%c0_40, %c0_41, %c0_42], %64 {strides = array<i32>} : memref<1x4x512xf32, #tpu.memory_space<vmem>>, vector<1x4x512xf32>,
    return
  }
  func.func @transform_0(%arg0: i32) -> (i32, i32, i32, i32, i32) {
    %c0_i32 = arith.constant 0 : i32
    %c0_i32_0 = arith.constant 0 : i32
    %c0_i32_1 = arith.constant 0 : i32
    %c0_i32_2 = arith.constant 0 : i32
    %c0_i32_3 = arith.constant 0 : i32
    return %arg0, %c0_i32, %c0_i32_0, %c0_i32_1, %c0_i32_2 : i32, i32, i32, i32, i32
  }
  func.func @transform_1(%arg0: i32) -> (i32, i32) {
    %c0_i32 = arith.constant 0 : i32
    %c0_i32_0 = arith.constant 0 : i32
    %c0_i32_1 = arith.constant 0 : i32
    return %c0_i32, %c0_i32_0 : i32, i32
  }
  func.func @transform_2(%arg0: i32) -> (i32, i32) {
    %c0_i32 = arith.constant 0 : i32
    %c0_i32_0 = arith.constant 0 : i32
    %c0_i32_1 = arith.constant 0 : i32
    return %c0_i32, %c0_i32_0 : i32, i32
  }
  func.func @transform_3(%arg0: i32) -> (i32, i32) {
    %c0_i32 = arith.constant 0 : i32
    %c0_i32_0 = arith.constant 0 : i32
    %c0_i32_1 = arith.constant 0 : i32
    return %c0_i32, %c0_i32_0 : i32, i32
  }
  func.func @transform_4(%arg0: i32) -> (i32, i32) {
    %c0_i32 = arith.constant 0 : i32
    %c0_i32_0 = arith.constant 0 : i32
    %c0_i32_1 = arith.constant 0 : i32
    return %c0_i32, %c0_i32_0 : i32, i32
  }
  func.func @transform_5(%arg0: i32) -> (i32, i32, i32) {
    %c0_i32 = arith.constant 0 : i32
    %c0_i32_0 = arith.constant 0 : i32
    %c0_i32_1 = arith.constant 0 : i32
    return %arg0, %c0_i32, %c0_i32_0 : i32, i32, i32
  }
  func.func @transform_6(%arg0: i32) -> (i32, i32, i32) {
    %c0_i32 = arith.constant 0 : i32
    %c0_i32_0 = arith.constant 0 : i32
    %c0_i32_1 = arith.constant 0 : i32
    return %arg0, %c0_i32, %c0_i32_0 : i32, i32, i32
  }
}

</mosaic_0001>

<llo_original>
// kernel: tpu_custom_call.1
$region0: #{tpu_custom_call.1}
  #allocation0 [shape = 'u32[]', space=smem, size = 0x4, offset = 0x4, fixed_abs, tag = 'smem constant byte address 0x4 - core index']
  #allocation1 [shape = 'u32[144,128]{1,0:T(1,128)}', space=vmem, size = 0x12000, scoped, tag = 'internal scratch']
  #allocation2 [shape = 'f32[12,12,12,4]{3,2,1,0:T(8,128)}', space=vmem, size = 0x120000, scoped, tag = 'scratch operand']
  #allocation3 [shape = 'f32[125,8,512]{2,1,0:T(8,128)}', space=vmem, size = 0x1f4000, scoped, tag = 'scratch operand']
  %s0 = inlined_call_operand.vmem [shape: f32[2,8,8,8,4], index: 0, kind: input, shape index: {}]
  %s1 = inlined_call_operand.vmem [shape: f32[4,1000], index: 1, kind: input, shape index: {}]
  %s2 = inlined_call_operand.vmem [shape: f32[4,1], index: 2, kind: input, shape index: {}]
  %s3 = inlined_call_operand.vmem [shape: f32[4,4], index: 3, kind: input, shape index: {}]
  %s4 = inlined_call_operand.vmem [shape: f32[4,1], index: 4, kind: input, shape index: {}]
  %s5 = inlined_call_operand.hbm [shape: f32[2,4,512], index: 5, kind: output, shape index: {0}]
  %s6 = inlined_call_operand.hbm [shape: f32[2,4,512], index: 6, kind: output, shape index: {1}]
  %7 = xla_tuple %s5, %s6
  %s8 = sld [smem:[#allocation0]]
  $region68: #{tpu_custom_call.1} parent=0
    _
  %s10 = ssub.s32 1, %s8
  %s11 = scalar_select 0, %s10, %s8
  $region1: #{tpu_custom_call.1} parent=0
    #allocation4 [shape = 'u8[16384]{0}', space=vmem, size = 0x4000, scoped, tag = 'output window, operand 0']
    #allocation5 [shape = 's32[2]{0}', space=sflag, size = 0x8, scoped, tag = 'scoped memory for tpu_custom_call.1']
    #allocation6 [shape = 'u8[16384]{0}', space=vmem, size = 0x4000, scoped, tag = 'output window, operand 1']
    #allocation7 [shape = 's32[2]{0}', space=sflag, size = 0x8, scoped, tag = 'scoped memory for tpu_custom_call.1']
    %12 = vsyncpa [#allocation5], 0
    %s13 = scalar_lea.sflag [#allocation5], 1
    %14 = vsyncpa %s13, 0
    %15 = vsyncpa [#allocation7], 0
    %s16 = scalar_lea.sflag [#allocation7], 1
    %17 = vsyncpa %s16, 0
    loop: start=0, step=1, limit=4
    $region2: #{tpu_custom_call.1} parent=1 // loop_pre_header
      _
    $region3: #{tpu_custom_call.1} parent=1 // loop_header
      %s19 = sphi 0, %s23
      %p20 = scmp.ge.s32.totalorder %s19, 4
      %s29 = sphi 0, %s31
      %s32 = sphi 0, %s29
      %s33 = sphi 0, %s32
      %s49 = sphi 0, %s33
      %s53 = sphi 0, %s53
      %s55 = sphi 0, %s53
      %s56 = sphi 0, %s55
      %s70 = sphi 0, %s56
      %s74 = sphi 0, %s74
      %s76 = sphi 0, %s74
      %s77 = sphi 0, %s76
      %s91 = sphi 0, %s77
      %s95 = sphi 0, %s95
      %s97 = sphi 0, %s95
      %s98 = sphi 0, %s97
      %s112 = sphi 0, %s98
      %s116 = sphi 0, %s116
      %s118 = sphi 0, %s116
      %s119 = sphi 0, %s118
      %s133 = sphi 0, %s119
      %s139 = sphi 0, %s141
      %s142 = sphi 0, %s139
      %s143 = sphi 0, %s142
      %s159 = sphi 0, %s143
      %s165 = sphi 0, %s167
      %s168 = sphi 0, %s165
      %s169 = sphi 0, %s168
      %s185 = sphi 0, %s169
    $region4: #{tpu_custom_call.1} parent=1 // loop_header_branch
      %22 = sbr.rel (%p20) target = $region8
    $region5: #{tpu_custom_call.1} parent=1 // loop_body
      %s24 = ssub.s32 %s19, 1
      %s25 = ssub.s32 %s19, 2
      %s26 = sadd.s32 %s19, 1
      %s27 = ssub.s32 %s19, %s26
      %p28 = scmp.eq.s32.totalorder %s27, 0
      %s30 = sadd.s32 %s29, 1
      %s31 = scalar_select %p28, %s29, %s30
      %p34 = pneg %p28
      %p35 = scmp.eq.s32.totalorder %s19, 1
      %p36 = por %p34, %p35
      %p37 = scmp.ne.s32.totalorder %s29, %s32
      %p38 = scmp.eq.s32.totalorder %s19, 0
      %p39 = por %p37, %p38
      %p40 = scmp.ne.s32.totalorder %s29, %s32
      %p41 = scmp.eq.s32.totalorder %s24, 1
      %p42 = por %p40, %p41
      %p43 = scmp.ne.s32.totalorder %s32, %s33
      %p44 = scmp.eq.s32.totalorder %s24, 0
      %p45 = por %p43, %p44
      %p46 = scmp.ne.s32.totalorder %s32, %s33
      %p47 = scmp.eq.s32.totalorder %s25, 1
      %p48 = por %p46, %p47
      %p50 = scmp.ne.s32.totalorder %s33, %s49
      %p51 = scmp.eq.s32.totalorder %s25, 0
      %p52 = por %p50, %p51
      %s54 = sadd.s32 %s53, 1
      %p57 = scmp.eq.s32.totalorder %s19, 1
      %p58 = scmp.ne.s32.totalorder %s53, %s55
      %p59 = scmp.eq.s32.totalorder %s19, 0
      %p60 = por %p58, %p59
      %p61 = scmp.ne.s32.totalorder %s53, %s55
      %p62 = scmp.eq.s32.totalorder %s24, 1
      %p63 = por %p61, %p62
      %p64 = scmp.ne.s32.totalorder %s55, %s56
      %p65 = scmp.eq.s32.totalorder %s24, 0
      %p66 = por %p64, %p65
      %p67 = scmp.ne.s32.totalorder %s55, %s56
      %p68 = scmp.eq.s32.totalorder %s25, 1
      %p69 = por %p67, %p68
      %p71 = scmp.ne.s32.totalorder %s56, %s70
      %p72 = scmp.eq.s32.totalorder %s25, 0
      %p73 = por %p71, %p72
      %s75 = sadd.s32 %s74, 1
      %p78 = scmp.eq.s32.totalorder %s19, 1
      %p79 = scmp.ne.s32.totalorder %s74, %s76
      %p80 = scmp.eq.s32.totalorder %s19, 0
      %p81 = por %p79, %p80
      %p82 = scmp.ne.s32.totalorder %s74, %s76
      %p83 = scmp.eq.s32.totalorder %s24, 1
      %p84 = por %p82, %p83
      %p85 = scmp.ne.s32.totalorder %s76, %s77
      %p86 = scmp.eq.s32.totalorder %s24, 0
      %p87 = por %p85, %p86
      %p88 = scmp.ne.s32.totalorder %s76, %s77
      %p89 = scmp.eq.s32.totalorder %s25, 1
      %p90 = por %p88, %p89
      %p92 = scmp.ne.s32.totalorder %s77, %s91
      %p93 = scmp.eq.s32.totalorder %s25, 0
      %p94 = por %p92, %p93
      %s96 = sadd.s32 %s95, 1
      %p99 = scmp.eq.s32.totalorder %s19, 1
      %p100 = scmp.ne.s32.totalorder %s95, %s97
      %p101 = scmp.eq.s32.totalorder %s19, 0
      %p102 = por %p100, %p101
      %p103 = scmp.ne.s32.totalorder %s95, %s97
      %p104 = scmp.eq.s32.totalorder %s24, 1
      %p105 = por %p103, %p104
      %p106 = scmp.ne.s32.totalorder %s97, %s98
      %p107 = scmp.eq.s32.totalorder %s24, 0
      %p108 = por %p106, %p107
      %p109 = scmp.ne.s32.totalorder %s97, %s98
      %p110 = scmp.eq.s32.totalorder %s25, 1
      %p111 = por %p109, %p110
      %p113 = scmp.ne.s32.totalorder %s98, %s112
      %p114 = scmp.eq.s32.totalorder %s25, 0
      %p115 = por %p113, %p114
      %s117 = sadd.s32 %s116, 1
      %p120 = scmp.eq.s32.totalorder %s19, 1
      %p121 = scmp.ne.s32.totalorder %s116, %s118
      %p122 = scmp.eq.s32.totalorder %s19, 0
      %p123 = por %p121, %p122
      %p124 = scmp.ne.s32.totalorder %s116, %s118
      %p125 = scmp.eq.s32.totalorder %s24, 1
      %p126 = por %p124, %p125
      %p127 = scmp.ne.s32.totalorder %s118, %s119
      %p128 = scmp.eq.s32.totalorder %s24, 0
      %p129 = por %p127, %p128
      %p130 = scmp.ne.s32.totalorder %s118, %s119
      %p131 = scmp.eq.s32.totalorder %s25, 1
      %p132 = por %p130, %p131
      %p134 = scmp.ne.s32.totalorder %s119, %s133
      %p135 = scmp.eq.s32.totalorder %s25, 0
      %p136 = por %p134, %p135
      %s137 = ssub.s32 %s19, %s26
      %p138 = scmp.eq.s32.totalorder %s137, 0
      %s140 = sadd.s32 %s139, 1
      %s141 = scalar_select %p138, %s139, %s140
      %p144 = pneg %p138
      %p145 = scmp.eq.s32.totalorder %s19, 1
      %p146 = por %p144, %p145
      %p147 = scmp.ne.s32.totalorder %s139, %s142
      %p148 = scmp.eq.s32.totalorder %s19, 0
      %p149 = por %p147, %p148
      %p150 = scmp.ne.s32.totalorder %s139, %s142
      %p151 = scmp.eq.s32.totalorder %s24, 1
      %p152 = por %p150, %p151
      %p153 = scmp.ne.s32.totalorder %s142, %s143
      %p154 = scmp.eq.s32.totalorder %s24, 0
      %p155 = por %p153, %p154
      %p156 = scmp.ne.s32.totalorder %s142, %s143
      %p157 = scmp.eq.s32.totalorder %s25, 1
      %p158 = por %p156, %p157
      %p160 = scmp.ne.s32.totalorder %s143, %s159
      %p161 = scmp.eq.s32.totalorder %s25, 0
      %p162 = por %p160, %p161
      %s163 = ssub.s32 %s19, %s26
      %p164 = scmp.eq.s32.totalorder %s163, 0
      %s166 = sadd.s32 %s165, 1
      %s167 = scalar_select %p164, %s165, %s166
      %p170 = pneg %p164
      %p171 = scmp.eq.s32.totalorder %s19, 1
      %p172 = por %p170, %p171
      %p173 = scmp.ne.s32.totalorder %s165, %s168
      %p174 = scmp.eq.s32.totalorder %s19, 0
      %p175 = por %p173, %p174
      %p176 = scmp.ne.s32.totalorder %s165, %s168
      %p177 = scmp.eq.s32.totalorder %s24, 1
      %p178 = por %p176, %p177
      %p179 = scmp.ne.s32.totalorder %s168, %s169
      %p180 = scmp.eq.s32.totalorder %s24, 0
      %p181 = por %p179, %p180
      %p182 = scmp.ne.s32.totalorder %s168, %s169
      %p183 = scmp.eq.s32.totalorder %s25, 1
      %p184 = por %p182, %p183
      %p186 = scmp.ne.s32.totalorder %s169, %s185
      %p187 = scmp.eq.s32.totalorder %s25, 0
      %p188 = por %p186, %p187
      %p189 = scmp.le.s32.totalorder 1, %s19
      %p190 = scmp.lt.s32.totalorder %s19, 3
      %p191 = pnand %p189, %p190
      %p192 = pneg %p191
      // Predicated region
      $region9: #{tpu_custom_call.1} parent=5 // pred_check
        _
      $region10: #{tpu_custom_call.1} parent=5 // pred_check_branch
        %194 = sbr.rel (%p191) target = $region12
      $region11: #{tpu_custom_call.1} parent=5 // pred_region
        %s195 = ssub.s32 %s19, 1
        // Predicated region
        $region13: #{tpu_custom_call.1} parent=11 // pred_check
          %p196 = pneg %p66
        $region14: #{tpu_custom_call.1} parent=11 // pred_check_branch
          %198 = sbr.rel (%p196) target = $region16
        $region15: #{tpu_custom_call.1} parent=11 // pred_region
          _
        $region16: #{tpu_custom_call.1} parent=11 // pred_fallthru
          _
        // Predicated region
        $region17: #{tpu_custom_call.1} parent=11 // pred_check
          %p199 = pneg %p87
        $region18: #{tpu_custom_call.1} parent=11 // pred_check_branch
          %201 = sbr.rel (%p199) target = $region20
        $region19: #{tpu_custom_call.1} parent=11 // pred_region
          _
        $region20: #{tpu_custom_call.1} parent=11 // pred_fallthru
          _
        // Predicated region
        $region21: #{tpu_custom_call.1} parent=11 // pred_check
          %p202 = pneg %p108
        $region22: #{tpu_custom_call.1} parent=11 // pred_check_branch
          %204 = sbr.rel (%p202) target = $region24
        $region23: #{tpu_custom_call.1} parent=11 // pred_region
          _
        $region24: #{tpu_custom_call.1} parent=11 // pred_fallthru
          _
        // Predicated region
        $region25: #{tpu_custom_call.1} parent=11 // pred_check
          %p205 = pneg %p129
        $region26: #{tpu_custom_call.1} parent=11 // pred_check_branch
          %207 = sbr.rel (%p205) target = $region28
        $region27: #{tpu_custom_call.1} parent=11 // pred_region
          _
        $region28: #{tpu_custom_call.1} parent=11 // pred_fallthru
          _
      $region12: #{tpu_custom_call.1} parent=5 // pred_fallthru
        _
      %p208 = scmp.lt.s32.totalorder %s19, 2
      // Predicated region
      $region29: #{tpu_custom_call.1} parent=5 // pred_check
        %p209 = pneg %p208
      $region30: #{tpu_custom_call.1} parent=5 // pred_check_branch
        %211 = sbr.rel (%p209) target = $region32
      $region31: #{tpu_custom_call.1} parent=5 // pred_region
        // Predicated region
        $region33: #{tpu_custom_call.1} parent=31 // pred_check
          %p212 = pneg %p39
        $region34: #{tpu_custom_call.1} parent=31 // pred_check_branch
          %214 = sbr.rel (%p212) target = $region36
        $region35: #{tpu_custom_call.1} parent=31 // pred_region
          %p215 = scmp.lt.s32.totalorder %s19, 1
          %s216 = scalar_select %p215, %s19, 1
          %s217 = smul.addr %s216, 64
          %s218 = smul.addr %s217, 8
          %s219 = scalar_lea.vmem %s0, %s218
        $region36: #{tpu_custom_call.1} parent=31 // pred_fallthru
          _
      $region32: #{tpu_custom_call.1} parent=5 // pred_fallthru
        _
      %p220 = scmp.le.s32.totalorder 1, %s19
      %p221 = scmp.lt.s32.totalorder %s19, 3
      %p222 = pnand %p220, %p221
      %p223 = pneg %p222
      // Predicated region
      $region37: #{tpu_custom_call.1} parent=5 // pred_check
        _
      $region38: #{tpu_custom_call.1} parent=5 // pred_check_branch
        %225 = sbr.rel (%p222) target = $region40
      $region39: #{tpu_custom_call.1} parent=5 // pred_region
        %s226 = ssub.s32 %s19, 1
        %p227 = scmp.lt.s32.totalorder %s24, 1
        %s228 = scalar_select %p227, %s24, 1
        %s229 = smul.addr %s228, 64
        %s230 = smul.addr %s229, 8
        %s231 = scalar_lea.vmem %s0, %s230
        %p232 = pneg %p45
        %p233 = pneg %p42
        %p234 = pneg %p66
        %p235 = pneg %p63
        %p236 = pneg %p87
        %p237 = pneg %p84
        %p238 = pneg %p108
        %p239 = pneg %p105
        %p240 = pneg %p129
        %p241 = pneg %p126
        %p242 = pneg %p155
        %p243 = pneg %p152
        %s244 = sand.u32 %s142, 1
        %s245 = scalar_lea.sflag [#allocation5], %s244
        %s246 = sand.u32 %s142, 1
        %s247 = smul.addr %s246, 16
        %s248 = scalar_lea.vmem [#allocation4], %s247
        %p249 = pneg %p181
        %p250 = pneg %p178
        %s251 = sand.u32 %s168, 1
        %s252 = scalar_lea.sflag [#allocation7], %s251
        %s253 = sand.u32 %s168, 1
        %s254 = smul.addr %s253, 16
        %s255 = scalar_lea.vmem [#allocation6], %s254
        %p256 = scmp.lt.s32.totalorder %s24, 1
        %s257 = scalar_select %p256, %s24, 1
        %s258 = smul.addr %s257, 64
        %s259 = smul.addr %s258, 8
        %s260 = scalar_lea.vmem %s0, %s259
        %vm261 = vcmask 31744
        %262 = vst.msk [vmem:[#allocation2] sm:$0xff] %vm261, 0.0
        %vm263 = vcmask 27648
        %264 = vst.msk [vmem:[#allocation2 + $0x8] sm:$0xf] %vm263, 0.0
        %265 = vst.msk [vmem:[#allocation2 + $0x10] sm:$0xff] %vm261, 0.0
        %266 = vst.msk [vmem:[#allocation2 + $0x18] sm:$0xf] %vm263, 0.0
        %267 = vst.msk [vmem:[#allocation2 + $0x20] sm:$0xff] %vm261, 0.0
        %268 = vst.msk [vmem:[#allocation2 + $0x28] sm:$0xf] %vm263, 0.0
        %269 = vst.msk [vmem:[#allocation2 + $0x30] sm:$0xff] %vm261, 0.0
        %270 = vst.msk [vmem:[#allocation2 + $0x38] sm:$0xf] %vm263, 0.0
        %271 = vst.msk [vmem:[#allocation2 + $0x40] sm:$0xff] %vm261, 0.0
        %272 = vst.msk [vmem:[#allocation2 + $0x48] sm:$0xf] %vm263, 0.0
        %273 = vst.msk [vmem:[#allocation2 + $0x50] sm:$0xff] %vm261, 0.0
        %274 = vst.msk [vmem:[#allocation2 + $0x58] sm:$0xf] %vm263, 0.0
        %275 = vst.msk [vmem:[#allocation2 + $0x60] sm:$0xff] %vm261, 0.0
        %276 = vst.msk [vmem:[#allocation2 + $0x68] sm:$0xf] %vm263, 0.0
        %277 = vst.msk [vmem:[#allocation2 + $0x70] sm:$0xff] %vm261, 0.0
        %278 = vst.msk [vmem:[#allocation2 + $0x78] sm:$0xf] %vm263, 0.0
        %279 = vst.msk [vmem:[#allocation2 + $0x80] sm:$0xff] %vm261, 0.0
        %280 = vst.msk [vmem:[#allocation2 + $0x88] sm:$0xf] %vm263, 0.0
        %281 = vst.msk [vmem:[#allocation2 + $0x90] sm:$0xff] %vm261, 0.0
        %282 = vst.msk [vmem:[#allocation2 + $0x98] sm:$0xf] %vm263, 0.0
        %283 = vst.msk [vmem:[#allocation2 + $0xa0] sm:$0xff] %vm261, 0.0
        %284 = vst.msk [vmem:[#allocation2 + $0xa8] sm:$0xf] %vm263, 0.0
        %285 = vst.msk [vmem:[#allocation2 + $0xb0] sm:$0xff] %vm261, 0.0
        %286 = vst.msk [vmem:[#allocation2 + $0xb8] sm:$0xf] %vm263, 0.0
        %287 = vst.msk [vmem:[#allocation2 + $0xc0] sm:$0xff] %vm261, 0.0
        %288 = vst.msk [vmem:[#allocation2 + $0xc8] sm:$0xf] %vm263, 0.0
        %289 = vst.msk [vmem:[#allocation2 + $0xd0] sm:$0xff] %vm261, 0.0
        %290 = vst.msk [vmem:[#allocation2 + $0xd8] sm:$0xf] %vm263, 0.0
        %291 = vst.msk [vmem:[#allocation2 + $0xe0] sm:$0xff] %vm261, 0.0
        %292 = vst.msk [vmem:[#allocation2 + $0xe8] sm:$0xf] %vm263, 0.0
        %293 = vst.msk [vmem:[#allocation2 + $0xf0] sm:$0xff] %vm261, 0.0
        %294 = vst.msk [vmem:[#allocation2 + $0xf8] sm:$0xf] %vm263, 0.0
        %295 = vst.msk [vmem:[#allocation2 + $0x100] sm:$0xff] %vm261, 0.0
        %296 = vst.msk [vmem:[#allocation2 + $0x108] sm:$0xf] %vm263, 0.0
        %297 = vst.msk [vmem:[#allocation2 + $0x110] sm:$0xff] %vm261, 0.0
        %298 = vst.msk [vmem:[#allocation2 + $0x118] sm:$0xf] %vm263, 0.0
        %299 = vst.msk [vmem:[#allocation2 + $0x120] sm:$0xff] %vm261, 0.0
        %300 = vst.msk [vmem:[#allocation2 + $0x128] sm:$0xf] %vm263, 0.0
        %301 = vst.msk [vmem:[#allocation2 + $0x130] sm:$0xff] %vm261, 0.0
        %302 = vst.msk [vmem:[#allocation2 + $0x138] sm:$0xf] %vm263, 0.0
        %303 = vst.msk [vmem:[#allocation2 + $0x140] sm:$0xff] %vm261, 0.0
        %304 = vst.msk [vmem:[#allocation2 + $0x148] sm:$0xf] %vm263, 0.0
        %305 = vst.msk [vmem:[#allocation2 + $0x150] sm:$0xff] %vm261, 0.0
        %306 = vst.msk [vmem:[#allocation2 + $0x158] sm:$0xf] %vm263, 0.0
        %307 = vst.msk [vmem:[#allocation2 + $0x160] sm:$0xff] %vm261, 0.0
        %308 = vst.msk [vmem:[#allocation2 + $0x168] sm:$0xf] %vm263, 0.0
        %309 = vst.msk [vmem:[#allocation2 + $0x170] sm:$0xff] %vm261, 0.0
        %310 = vst.msk [vmem:[#allocation2 + $0x178] sm:$0xf] %vm263, 0.0
        %311 = vst.msk [vmem:[#allocation2 + $0x180] sm:$0xff] %vm261, 0.0
        %312 = vst.msk [vmem:[#allocation2 + $0x188] sm:$0xf] %vm263, 0.0
        %313 = vst.msk [vmem:[#allocation2 + $0x190] sm:$0xff] %vm261, 0.0
        %314 = vst.msk [vmem:[#allocation2 + $0x198] sm:$0xf] %vm263, 0.0
        %315 = vst.msk [vmem:[#allocation2 + $0x1a0] sm:$0xff] %vm261, 0.0
        %316 = vst.msk [vmem:[#allocation2 + $0x1a8] sm:$0xf] %vm263, 0.0
        %317 = vst.msk [vmem:[#allocation2 + $0x1b0] sm:$0xff] %vm261, 0.0
        %318 = vst.msk [vmem:[#allocation2 + $0x1b8] sm:$0xf] %vm263, 0.0
        %319 = vst.msk [vmem:[#allocation2 + $0x1c0] sm:$0xff] %vm261, 0.0
        %320 = vst.msk [vmem:[#allocation2 + $0x1c8] sm:$0xf] %vm263, 0.0
        %321 = vst.msk [vmem:[#allocation2 + $0x1d0] sm:$0xff] %vm261, 0.0
        %322 = vst.msk [vmem:[#allocation2 + $0x1d8] sm:$0xf] %vm263, 0.0
        %323 = vst.msk [vmem:[#allocation2 + $0x1e0] sm:$0xff] %vm261, 0.0
        %324 = vst.msk [vmem:[#allocation2 + $0x1e8] sm:$0xf] %vm263, 0.0
        %325 = vst.msk [vmem:[#allocation2 + $0x1f0] sm:$0xff] %vm261, 0.0
        %326 = vst.msk [vmem:[#allocation2 + $0x1f8] sm:$0xf] %vm263, 0.0
        %327 = vst.msk [vmem:[#allocation2 + $0x200] sm:$0xff] %vm261, 0.0
        %328 = vst.msk [vmem:[#allocation2 + $0x208] sm:$0xf] %vm263, 0.0
        %329 = vst.msk [vmem:[#allocation2 + $0x210] sm:$0xff] %vm261, 0.0
        %330 = vst.msk [vmem:[#allocation2 + $0x218] sm:$0xf] %vm263, 0.0
        %331 = vst.msk [vmem:[#allocation2 + $0x220] sm:$0xff] %vm261, 0.0
        %332 = vst.msk [vmem:[#allocation2 + $0x228] sm:$0xf] %vm263, 0.0
        %333 = vst.msk [vmem:[#allocation2 + $0x230] sm:$0xff] %vm261, 0.0
        %334 = vst.msk [vmem:[#allocation2 + $0x238] sm:$0xf] %vm263, 0.0
        %335 = vst.msk [vmem:[#allocation2 + $0x240] sm:$0xff] %vm261, 0.0
        %336 = vst.msk [vmem:[#allocation2 + $0x248] sm:$0xf] %vm263, 0.0
        %337 = vst.msk [vmem:[#allocation2 + $0x250] sm:$0xff] %vm261, 0.0
        %338 = vst.msk [vmem:[#allocation2 + $0x258] sm:$0xf] %vm263, 0.0
        %339 = vst.msk [vmem:[#allocation2 + $0x260] sm:$0xff] %vm261, 0.0
        %340 = vst.msk [vmem:[#allocation2 + $0x268] sm:$0xf] %vm263, 0.0
        %341 = vst.msk [vmem:[#allocation2 + $0x270] sm:$0xff] %vm261, 0.0
        %342 = vst.msk [vmem:[#allocation2 + $0x278] sm:$0xf] %vm263, 0.0
        %343 = vst.msk [vmem:[#allocation2 + $0x280] sm:$0xff] %vm261, 0.0
        %344 = vst.msk [vmem:[#allocation2 + $0x288] sm:$0xf] %vm263, 0.0
        %345 = vst.msk [vmem:[#allocation2 + $0x290] sm:$0xff] %vm261, 0.0
        %346 = vst.msk [vmem:[#allocation2 + $0x298] sm:$0xf] %vm263, 0.0
        %347 = vst.msk [vmem:[#allocation2 + $0x2a0] sm:$0xff] %vm261, 0.0
        %348 = vst.msk [vmem:[#allocation2 + $0x2a8] sm:$0xf] %vm263, 0.0
        %349 = vst.msk [vmem:[#allocation2 + $0x2b0] sm:$0xff] %vm261, 0.0
        %350 = vst.msk [vmem:[#allocation2 + $0x2b8] sm:$0xf] %vm263, 0.0
        %351 = vst.msk [vmem:[#allocation2 + $0x2c0] sm:$0xff] %vm261, 0.0
        %352 = vst.msk [vmem:[#allocation2 + $0x2c8] sm:$0xf] %vm263, 0.0
        %353 = vst.msk [vmem:[#allocation2 + $0x2d0] sm:$0xff] %vm261, 0.0
        %354 = vst.msk [vmem:[#allocation2 + $0x2d8] sm:$0xf] %vm263, 0.0
        %355 = vst.msk [vmem:[#allocation2 + $0x2e0] sm:$0xff] %vm261, 0.0
        %356 = vst.msk [vmem:[#allocation2 + $0x2e8] sm:$0xf] %vm263, 0.0
        %357 = vst.msk [vmem:[#allocation2 + $0x2f0] sm:$0xff] %vm261, 0.0
        %358 = vst.msk [vmem:[#allocation2 + $0x2f8] sm:$0xf] %vm263, 0.0
        %359 = vst.msk [vmem:[#allocation2 + $0x300] sm:$0xff] %vm261, 0.0
        %360 = vst.msk [vmem:[#allocation2 + $0x308] sm:$0xf] %vm263, 0.0
        %361 = vst.msk [vmem:[#allocation2 + $0x310] sm:$0xff] %vm261, 0.0
        %362 = vst.msk [vmem:[#allocation2 + $0x318] sm:$0xf] %vm263, 0.0
        %363 = vst.msk [vmem:[#allocation2 + $0x320] sm:$0xff] %vm261, 0.0
        %364 = vst.msk [vmem:[#allocation2 + $0x328] sm:$0xf] %vm263, 0.0
        %365 = vst.msk [vmem:[#allocation2 + $0x330] sm:$0xff] %vm261, 0.0
        %366 = vst.msk [vmem:[#allocation2 + $0x338] sm:$0xf] %vm263, 0.0
        %367 = vst.msk [vmem:[#allocation2 + $0x340] sm:$0xff] %vm261, 0.0
        %368 = vst.msk [vmem:[#allocation2 + $0x348] sm:$0xf] %vm263, 0.0
        %369 = vst.msk [vmem:[#allocation2 + $0x350] sm:$0xff] %vm261, 0.0
        %370 = vst.msk [vmem:[#allocation2 + $0x358] sm:$0xf] %vm263, 0.0
        %371 = vst.msk [vmem:[#allocation2 + $0x360] sm:$0xff] %vm261, 0.0
        %372 = vst.msk [vmem:[#allocation2 + $0x368] sm:$0xf] %vm263, 0.0
        %373 = vst.msk [vmem:[#allocation2 + $0x370] sm:$0xff] %vm261, 0.0
        %374 = vst.msk [vmem:[#allocation2 + $0x378] sm:$0xf] %vm263, 0.0
        %375 = vst.msk [vmem:[#allocation2 + $0x380] sm:$0xff] %vm261, 0.0
        %376 = vst.msk [vmem:[#allocation2 + $0x388] sm:$0xf] %vm263, 0.0
        %377 = vst.msk [vmem:[#allocation2 + $0x390] sm:$0xff] %vm261, 0.0
        %378 = vst.msk [vmem:[#allocation2 + $0x398] sm:$0xf] %vm263, 0.0
        %379 = vst.msk [vmem:[#allocation2 + $0x3a0] sm:$0xff] %vm261, 0.0
        %380 = vst.msk [vmem:[#allocation2 + $0x3a8] sm:$0xf] %vm263, 0.0
        %381 = vst.msk [vmem:[#allocation2 + $0x3b0] sm:$0xff] %vm261, 0.0
        %382 = vst.msk [vmem:[#allocation2 + $0x3b8] sm:$0xf] %vm263, 0.0
        %383 = vst.msk [vmem:[#allocation2 + $0x3c0] sm:$0xff] %vm261, 0.0
        %384 = vst.msk [vmem:[#allocation2 + $0x3c8] sm:$0xf] %vm263, 0.0
        %385 = vst.msk [vmem:[#allocation2 + $0x3d0] sm:$0xff] %vm261, 0.0
        %386 = vst.msk [vmem:[#allocation2 + $0x3d8] sm:$0xf] %vm263, 0.0
        %387 = vst.msk [vmem:[#allocation2 + $0x3e0] sm:$0xff] %vm261, 0.0
        %388 = vst.msk [vmem:[#allocation2 + $0x3e8] sm:$0xf] %vm263, 0.0
        %389 = vst.msk [vmem:[#allocation2 + $0x3f0] sm:$0xff] %vm261, 0.0
        %390 = vst.msk [vmem:[#allocation2 + $0x3f8] sm:$0xf] %vm263, 0.0
        %391 = vst.msk [vmem:[#allocation2 + $0x400] sm:$0xff] %vm261, 0.0
        %392 = vst.msk [vmem:[#allocation2 + $0x408] sm:$0xf] %vm263, 0.0
        %393 = vst.msk [vmem:[#allocation2 + $0x410] sm:$0xff] %vm261, 0.0
        %394 = vst.msk [vmem:[#allocation2 + $0x418] sm:$0xf] %vm263, 0.0
        %395 = vst.msk [vmem:[#allocation2 + $0x420] sm:$0xff] %vm261, 0.0
        %396 = vst.msk [vmem:[#allocation2 + $0x428] sm:$0xf] %vm263, 0.0
        %397 = vst.msk [vmem:[#allocation2 + $0x430] sm:$0xff] %vm261, 0.0
        %398 = vst.msk [vmem:[#allocation2 + $0x438] sm:$0xf] %vm263, 0.0
        %399 = vst.msk [vmem:[#allocation2 + $0x440] sm:$0xff] %vm261, 0.0
        %400 = vst.msk [vmem:[#allocation2 + $0x448] sm:$0xf] %vm263, 0.0
        %401 = vst.msk [vmem:[#allocation2 + $0x450] sm:$0xff] %vm261, 0.0
        %402 = vst.msk [vmem:[#allocation2 + $0x458] sm:$0xf] %vm263, 0.0
        %403 = vst.msk [vmem:[#allocation2 + $0x460] sm:$0xff] %vm261, 0.0
        %404 = vst.msk [vmem:[#allocation2 + $0x468] sm:$0xf] %vm263, 0.0
        %405 = vst.msk [vmem:[#allocation2 + $0x470] sm:$0xff] %vm261, 0.0
        %406 = vst.msk [vmem:[#allocation2 + $0x478] sm:$0xf] %vm263, 0.0
        %407 = vst.msk [vmem:[#allocation2 + $0x480] sm:$0xff] %vm261, 0.0
        %408 = vst.msk [vmem:[#allocation2 + $0x488] sm:$0xf] %vm263, 0.0
        %409 = vst.msk [vmem:[#allocation2 + $0x490] sm:$0xff] %vm261, 0.0
        %410 = vst.msk [vmem:[#allocation2 + $0x498] sm:$0xf] %vm263, 0.0
        %411 = vst.msk [vmem:[#allocation2 + $0x4a0] sm:$0xff] %vm261, 0.0
        %412 = vst.msk [vmem:[#allocation2 + $0x4a8] sm:$0xf] %vm263, 0.0
        %413 = vst.msk [vmem:[#allocation2 + $0x4b0] sm:$0xff] %vm261, 0.0
        %414 = vst.msk [vmem:[#allocation2 + $0x4b8] sm:$0xf] %vm263, 0.0
        %415 = vst.msk [vmem:[#allocation2 + $0x4c0] sm:$0xff] %vm261, 0.0
        %416 = vst.msk [vmem:[#allocation2 + $0x4c8] sm:$0xf] %vm263, 0.0
        %417 = vst.msk [vmem:[#allocation2 + $0x4d0] sm:$0xff] %vm261, 0.0
        %418 = vst.msk [vmem:[#allocation2 + $0x4d8] sm:$0xf] %vm263, 0.0
        %419 = vst.msk [vmem:[#allocation2 + $0x4e0] sm:$0xff] %vm261, 0.0
        %420 = vst.msk [vmem:[#allocation2 + $0x4e8] sm:$0xf] %vm263, 0.0
        %421 = vst.msk [vmem:[#allocation2 + $0x4f0] sm:$0xff] %vm261, 0.0
        %422 = vst.msk [vmem:[#allocation2 + $0x4f8] sm:$0xf] %vm263, 0.0
        %423 = vst.msk [vmem:[#allocation2 + $0x500] sm:$0xff] %vm261, 0.0
        %424 = vst.msk [vmem:[#allocation2 + $0x508] sm:$0xf] %vm263, 0.0
        %425 = vst.msk [vmem:[#allocation2 + $0x510] sm:$0xff] %vm261, 0.0
        %426 = vst.msk [vmem:[#allocation2 + $0x518] sm:$0xf] %vm263, 0.0
        %427 = vst.msk [vmem:[#allocation2 + $0x520] sm:$0xff] %vm261, 0.0
        %428 = vst.msk [vmem:[#allocation2 + $0x528] sm:$0xf] %vm263, 0.0
        %429 = vst.msk [vmem:[#allocation2 + $0x530] sm:$0xff] %vm261, 0.0
        %430 = vst.msk [vmem:[#allocation2 + $0x538] sm:$0xf] %vm263, 0.0
        %431 = vst.msk [vmem:[#allocation2 + $0x540] sm:$0xff] %vm261, 0.0
        %432 = vst.msk [vmem:[#allocation2 + $0x548] sm:$0xf] %vm263, 0.0
        %433 = vst.msk [vmem:[#allocation2 + $0x550] sm:$0xff] %vm261, 0.0
        %434 = vst.msk [vmem:[#allocation2 + $0x558] sm:$0xf] %vm263, 0.0
        %435 = vst.msk [vmem:[#allocation2 + $0x560] sm:$0xff] %vm261, 0.0
        %436 = vst.msk [vmem:[#allocation2 + $0x568] sm:$0xf] %vm263, 0.0
        %437 = vst.msk [vmem:[#allocation2 + $0x570] sm:$0xff] %vm261, 0.0
        %438 = vst.msk [vmem:[#allocation2 + $0x578] sm:$0xf] %vm263, 0.0
        %439 = vst.msk [vmem:[#allocation2 + $0x580] sm:$0xff] %vm261, 0.0
        %440 = vst.msk [vmem:[#allocation2 + $0x588] sm:$0xf] %vm263, 0.0
        %441 = vst.msk [vmem:[#allocation2 + $0x590] sm:$0xff] %vm261, 0.0
        %442 = vst.msk [vmem:[#allocation2 + $0x598] sm:$0xf] %vm263, 0.0
        %443 = vst.msk [vmem:[#allocation2 + $0x5a0] sm:$0xff] %vm261, 0.0
        %444 = vst.msk [vmem:[#allocation2 + $0x5a8] sm:$0xf] %vm263, 0.0
        %445 = vst.msk [vmem:[#allocation2 + $0x5b0] sm:$0xff] %vm261, 0.0
        %446 = vst.msk [vmem:[#allocation2 + $0x5b8] sm:$0xf] %vm263, 0.0
        %447 = vst.msk [vmem:[#allocation2 + $0x5c0] sm:$0xff] %vm261, 0.0
        %448 = vst.msk [vmem:[#allocation2 + $0x5c8] sm:$0xf] %vm263, 0.0
        %449 = vst.msk [vmem:[#allocation2 + $0x5d0] sm:$0xff] %vm261, 0.0
        %450 = vst.msk [vmem:[#allocation2 + $0x5d8] sm:$0xf] %vm263, 0.0
        %451 = vst.msk [vmem:[#allocation2 + $0x5e0] sm:$0xff] %vm261, 0.0
        %452 = vst.msk [vmem:[#allocation2 + $0x5e8] sm:$0xf] %vm263, 0.0
        %453 = vst.msk [vmem:[#allocation2 + $0x5f0] sm:$0xff] %vm261, 0.0
        %454 = vst.msk [vmem:[#allocation2 + $0x5f8] sm:$0xf] %vm263, 0.0
        %455 = vst.msk [vmem:[#allocation2 + $0x600] sm:$0xff] %vm261, 0.0
        %456 = vst.msk [vmem:[#allocation2 + $0x608] sm:$0xf] %vm263, 0.0
        %457 = vst.msk [vmem:[#allocation2 + $0x610] sm:$0xff] %vm261, 0.0
        %458 = vst.msk [vmem:[#allocation2 + $0x618] sm:$0xf] %vm263, 0.0
        %459 = vst.msk [vmem:[#allocation2 + $0x620] sm:$0xff] %vm261, 0.0
        %460 = vst.msk [vmem:[#allocation2 + $0x628] sm:$0xf] %vm263, 0.0
        %461 = vst.msk [vmem:[#allocation2 + $0x630] sm:$0xff] %vm261, 0.0
        %462 = vst.msk [vmem:[#allocation2 + $0x638] sm:$0xf] %vm263, 0.0
        %463 = vst.msk [vmem:[#allocation2 + $0x640] sm:$0xff] %vm261, 0.0
        %464 = vst.msk [vmem:[#allocation2 + $0x648] sm:$0xf] %vm263, 0.0
        %465 = vst.msk [vmem:[#allocation2 + $0x650] sm:$0xff] %vm261, 0.0
        %466 = vst.msk [vmem:[#allocation2 + $0x658] sm:$0xf] %vm263, 0.0
        %467 = vst.msk [vmem:[#allocation2 + $0x660] sm:$0xff] %vm261, 0.0
        %468 = vst.msk [vmem:[#allocation2 + $0x668] sm:$0xf] %vm263, 0.0
        %469 = vst.msk [vmem:[#allocation2 + $0x670] sm:$0xff] %vm261, 0.0
        %470 = vst.msk [vmem:[#allocation2 + $0x678] sm:$0xf] %vm263, 0.0
        %471 = vst.msk [vmem:[#allocation2 + $0x680] sm:$0xff] %vm261, 0.0
        %472 = vst.msk [vmem:[#allocation2 + $0x688] sm:$0xf] %vm263, 0.0
        %473 = vst.msk [vmem:[#allocation2 + $0x690] sm:$0xff] %vm261, 0.0
        %474 = vst.msk [vmem:[#allocation2 + $0x698] sm:$0xf] %vm263, 0.0
        %475 = vst.msk [vmem:[#allocation2 + $0x6a0] sm:$0xff] %vm261, 0.0
        %476 = vst.msk [vmem:[#allocation2 + $0x6a8] sm:$0xf] %vm263, 0.0
        %477 = vst.msk [vmem:[#allocation2 + $0x6b0] sm:$0xff] %vm261, 0.0
        %478 = vst.msk [vmem:[#allocation2 + $0x6b8] sm:$0xf] %vm263, 0.0
        %479 = vst.msk [vmem:[#allocation2 + $0x6c0] sm:$0xff] %vm261, 0.0
        %480 = vst.msk [vmem:[#allocation2 + $0x6c8] sm:$0xf] %vm263, 0.0
        %481 = vst.msk [vmem:[#allocation2 + $0x6d0] sm:$0xff] %vm261, 0.0
        %482 = vst.msk [vmem:[#allocation2 + $0x6d8] sm:$0xf] %vm263, 0.0
        %483 = vst.msk [vmem:[#allocation2 + $0x6e0] sm:$0xff] %vm261, 0.0
        %484 = vst.msk [vmem:[#allocation2 + $0x6e8] sm:$0xf] %vm263, 0.0
        %485 = vst.msk [vmem:[#allocation2 + $0x6f0] sm:$0xff] %vm261, 0.0
        %486 = vst.msk [vmem:[#allocation2 + $0x6f8] sm:$0xf] %vm263, 0.0
        %487 = vst.msk [vmem:[#allocation2 + $0x700] sm:$0xff] %vm261, 0.0
        %488 = vst.msk [vmem:[#allocation2 + $0x708] sm:$0xf] %vm263, 0.0
        %489 = vst.msk [vmem:[#allocation2 + $0x710] sm:$0xff] %vm261, 0.0
        %490 = vst.msk [vmem:[#allocation2 + $0x718] sm:$0xf] %vm263, 0.0
        %491 = vst.msk [vmem:[#allocation2 + $0x720] sm:$0xff] %vm261, 0.0
        %492 = vst.msk [vmem:[#allocation2 + $0x728] sm:$0xf] %vm263, 0.0
        %493 = vst.msk [vmem:[#allocation2 + $0x730] sm:$0xff] %vm261, 0.0
        %494 = vst.msk [vmem:[#allocation2 + $0x738] sm:$0xf] %vm263, 0.0
        %495 = vst.msk [vmem:[#allocation2 + $0x740] sm:$0xff] %vm261, 0.0
        %496 = vst.msk [vmem:[#allocation2 + $0x748] sm:$0xf] %vm263, 0.0
        %497 = vst.msk [vmem:[#allocation2 + $0x750] sm:$0xff] %vm261, 0.0
        %498 = vst.msk [vmem:[#allocation2 + $0x758] sm:$0xf] %vm263, 0.0
        %499 = vst.msk [vmem:[#allocation2 + $0x760] sm:$0xff] %vm261, 0.0
        %500 = vst.msk [vmem:[#allocation2 + $0x768] sm:$0xf] %vm263, 0.0
        %501 = vst.msk [vmem:[#allocation2 + $0x770] sm:$0xff] %vm261, 0.0
        %502 = vst.msk [vmem:[#allocation2 + $0x778] sm:$0xf] %vm263, 0.0
        %503 = vst.msk [vmem:[#allocation2 + $0x780] sm:$0xff] %vm261, 0.0
        %504 = vst.msk [vmem:[#allocation2 + $0x788] sm:$0xf] %vm263, 0.0
        %505 = vst.msk [vmem:[#allocation2 + $0x790] sm:$0xff] %vm261, 0.0
        %506 = vst.msk [vmem:[#allocation2 + $0x798] sm:$0xf] %vm263, 0.0
        %507 = vst.msk [vmem:[#allocation2 + $0x7a0] sm:$0xff] %vm261, 0.0
        %508 = vst.msk [vmem:[#allocation2 + $0x7a8] sm:$0xf] %vm263, 0.0
        %509 = vst.msk [vmem:[#allocation2 + $0x7b0] sm:$0xff] %vm261, 0.0
        %510 = vst.msk [vmem:[#allocation2 + $0x7b8] sm:$0xf] %vm263, 0.0
        %511 = vst.msk [vmem:[#allocation2 + $0x7c0] sm:$0xff] %vm261, 0.0
        %512 = vst.msk [vmem:[#allocation2 + $0x7c8] sm:$0xf] %vm263, 0.0
        %513 = vst.msk [vmem:[#allocation2 + $0x7d0] sm:$0xff] %vm261, 0.0
        %514 = vst.msk [vmem:[#allocation2 + $0x7d8] sm:$0xf] %vm263, 0.0
        %515 = vst.msk [vmem:[#allocation2 + $0x7e0] sm:$0xff] %vm261, 0.0
        %516 = vst.msk [vmem:[#allocation2 + $0x7e8] sm:$0xf] %vm263, 0.0
        %517 = vst.msk [vmem:[#allocation2 + $0x7f0] sm:$0xff] %vm261, 0.0
        %518 = vst.msk [vmem:[#allocation2 + $0x7f8] sm:$0xf] %vm263, 0.0
        %519 = vst.msk [vmem:[#allocation2 + $0x800] sm:$0xff] %vm261, 0.0
        %520 = vst.msk [vmem:[#allocation2 + $0x808] sm:$0xf] %vm263, 0.0
        %521 = vst.msk [vmem:[#allocation2 + $0x810] sm:$0xff] %vm261, 0.0
        %522 = vst.msk [vmem:[#allocation2 + $0x818] sm:$0xf] %vm263, 0.0
        %523 = vst.msk [vmem:[#allocation2 + $0x820] sm:$0xff] %vm261, 0.0
        %524 = vst.msk [vmem:[#allocation2 + $0x828] sm:$0xf] %vm263, 0.0
        %525 = vst.msk [vmem:[#allocation2 + $0x830] sm:$0xff] %vm261, 0.0
        %526 = vst.msk [vmem:[#allocation2 + $0x838] sm:$0xf] %vm263, 0.0
        %527 = vst.msk [vmem:[#allocation2 + $0x840] sm:$0xff] %vm261, 0.0
        %528 = vst.msk [vmem:[#allocation2 + $0x848] sm:$0xf] %vm263, 0.0
        %529 = vst.msk [vmem:[#allocation2 + $0x850] sm:$0xff] %vm261, 0.0
        %530 = vst.msk [vmem:[#allocation2 + $0x858] sm:$0xf] %vm263, 0.0
        %531 = vst.msk [vmem:[#allocation2 + $0x860] sm:$0xff] %vm261, 0.0
        %532 = vst.msk [vmem:[#allocation2 + $0x868] sm:$0xf] %vm263, 0.0
        %533 = vst.msk [vmem:[#allocation2 + $0x870] sm:$0xff] %vm261, 0.0
        %534 = vst.msk [vmem:[#allocation2 + $0x878] sm:$0xf] %vm263, 0.0
        %535 = vst.msk [vmem:[#allocation2 + $0x880] sm:$0xff] %vm261, 0.0
        %536 = vst.msk [vmem:[#allocation2 + $0x888] sm:$0xf] %vm263, 0.0
        %537 = vst.msk [vmem:[#allocation2 + $0x890] sm:$0xff] %vm261, 0.0
        %538 = vst.msk [vmem:[#allocation2 + $0x898] sm:$0xf] %vm263, 0.0
        %539 = vst.msk [vmem:[#allocation2 + $0x8a0] sm:$0xff] %vm261, 0.0
        %540 = vst.msk [vmem:[#allocation2 + $0x8a8] sm:$0xf] %vm263, 0.0
        %541 = vst.msk [vmem:[#allocation2 + $0x8b0] sm:$0xff] %vm261, 0.0
        %542 = vst.msk [vmem:[#allocation2 + $0x8b8] sm:$0xf] %vm263, 0.0
        %543 = vst.msk [vmem:[#allocation2 + $0x8c0] sm:$0xff] %vm261, 0.0
        %544 = vst.msk [vmem:[#allocation2 + $0x8c8] sm:$0xf] %vm263, 0.0
        %545 = vst.msk [vmem:[#allocation2 + $0x8d0] sm:$0xff] %vm261, 0.0
        %546 = vst.msk [vmem:[#allocation2 + $0x8d8] sm:$0xf] %vm263, 0.0
        %547 = vst.msk [vmem:[#allocation2 + $0x8e0] sm:$0xff] %vm261, 0.0
        %548 = vst.msk [vmem:[#allocation2 + $0x8e8] sm:$0xf] %vm263, 0.0
        %549 = vst.msk [vmem:[#allocation2 + $0x8f0] sm:$0xff] %vm261, 0.0
        %550 = vst.msk [vmem:[#allocation2 + $0x8f8] sm:$0xf] %vm263, 0.0
        %v551 = vld [vmem:[%s260] sm:$0xff]
        %v552 = vld [vmem:[%s260 + $0x8] sm:$0xff]
        %v553 = vld [vmem:[%s260 + $0x10] sm:$0xff]
        %v554 = vld [vmem:[%s260 + $0x18] sm:$0xff]
        %v555 = vld [vmem:[%s260 + $0x20] sm:$0xff]
        %v556 = vld [vmem:[%s260 + $0x28] sm:$0xff]
        %v557 = vld [vmem:[%s260 + $0x30] sm:$0xff]
        %v558 = vld [vmem:[%s260 + $0x38] sm:$0xff]
        %v559 = vld [vmem:[%s260 + $0x40] sm:$0xff]
        %v560 = vld [vmem:[%s260 + $0x48] sm:$0xff]
        %v561 = vld [vmem:[%s260 + $0x50] sm:$0xff]
        %v562 = vld [vmem:[%s260 + $0x58] sm:$0xff]
        %v563 = vld [vmem:[%s260 + $0x60] sm:$0xff]
        %v564 = vld [vmem:[%s260 + $0x68] sm:$0xff]
        %v565 = vld [vmem:[%s260 + $0x70] sm:$0xff]
        %v566 = vld [vmem:[%s260 + $0x78] sm:$0xff]
        %v567 = vld [vmem:[%s260 + $0x80] sm:$0xff]
        %v568 = vld [vmem:[%s260 + $0x88] sm:$0xff]
        %v569 = vld [vmem:[%s260 + $0x90] sm:$0xff]
        %v570 = vld [vmem:[%s260 + $0x98] sm:$0xff]
        %v571 = vld [vmem:[%s260 + $0xa0] sm:$0xff]
        %v572 = vld [vmem:[%s260 + $0xa8] sm:$0xff]
        %v573 = vld [vmem:[%s260 + $0xb0] sm:$0xff]
        %v574 = vld [vmem:[%s260 + $0xb8] sm:$0xff]
        %v575 = vld [vmem:[%s260 + $0xc0] sm:$0xff]
        %v576 = vld [vmem:[%s260 + $0xc8] sm:$0xff]
        %v577 = vld [vmem:[%s260 + $0xd0] sm:$0xff]
        %v578 = vld [vmem:[%s260 + $0xd8] sm:$0xff]
        %v579 = vld [vmem:[%s260 + $0xe0] sm:$0xff]
        %v580 = vld [vmem:[%s260 + $0xe8] sm:$0xff]
        %v581 = vld [vmem:[%s260 + $0xf0] sm:$0xff]
        %v582 = vld [vmem:[%s260 + $0xf8] sm:$0xff]
        %v583 = vld [vmem:[%s260 + $0x100] sm:$0xff]
        %v584 = vld [vmem:[%s260 + $0x108] sm:$0xff]
        %v585 = vld [vmem:[%s260 + $0x110] sm:$0xff]
        %v586 = vld [vmem:[%s260 + $0x118] sm:$0xff]
        %v587 = vld [vmem:[%s260 + $0x120] sm:$0xff]
        %v588 = vld [vmem:[%s260 + $0x128] sm:$0xff]
        %v589 = vld [vmem:[%s260 + $0x130] sm:$0xff]
        %v590 = vld [vmem:[%s260 + $0x138] sm:$0xff]
        %v591 = vld [vmem:[%s260 + $0x140] sm:$0xff]
        %v592 = vld [vmem:[%s260 + $0x148] sm:$0xff]
        %v593 = vld [vmem:[%s260 + $0x150] sm:$0xff]
        %v594 = vld [vmem:[%s260 + $0x158] sm:$0xff]
        %v595 = vld [vmem:[%s260 + $0x160] sm:$0xff]
        %v596 = vld [vmem:[%s260 + $0x168] sm:$0xff]
        %v597 = vld [vmem:[%s260 + $0x170] sm:$0xff]
        %v598 = vld [vmem:[%s260 + $0x178] sm:$0xff]
        %v599 = vld [vmem:[%s260 + $0x180] sm:$0xff]
        %v600 = vld [vmem:[%s260 + $0x188] sm:$0xff]
        %v601 = vld [vmem:[%s260 + $0x190] sm:$0xff]
        %v602 = vld [vmem:[%s260 + $0x198] sm:$0xff]
        %v603 = vld [vmem:[%s260 + $0x1a0] sm:$0xff]
        %v604 = vld [vmem:[%s260 + $0x1a8] sm:$0xff]
        %v605 = vld [vmem:[%s260 + $0x1b0] sm:$0xff]
        %v606 = vld [vmem:[%s260 + $0x1b8] sm:$0xff]
        %v607 = vld [vmem:[%s260 + $0x1c0] sm:$0xff]
        %v608 = vld [vmem:[%s260 + $0x1c8] sm:$0xff]
        %v609 = vld [vmem:[%s260 + $0x1d0] sm:$0xff]
        %v610 = vld [vmem:[%s260 + $0x1d8] sm:$0xff]
        %v611 = vld [vmem:[%s260 + $0x1e0] sm:$0xff]
        %v612 = vld [vmem:[%s260 + $0x1e8] sm:$0xff]
        %v613 = vld [vmem:[%s260 + $0x1f0] sm:$0xff]
        %v614 = vld [vmem:[%s260 + $0x1f8] sm:$0xff]
        %s615 = scalar_lea.vmem [#allocation2], 416
        %616 = vst.msk [vmem:[%s615 + $0x2] sm:$0xff] %vm261, %v551
        %617 = vst.msk [vmem:[%s615 + $0x12] sm:$0xff] %vm261, %v552
        %618 = vst.msk [vmem:[%s615 + $0x22] sm:$0xff] %vm261, %v553
        %619 = vst.msk [vmem:[%s615 + $0x32] sm:$0xff] %vm261, %v554
        %620 = vst.msk [vmem:[%s615 + $0x42] sm:$0xff] %vm261, %v555
        %621 = vst.msk [vmem:[%s615 + $0x52] sm:$0xff] %vm261, %v556
        %622 = vst.msk [vmem:[%s615 + $0x62] sm:$0xff] %vm261, %v557
        %623 = vst.msk [vmem:[%s615 + $0x72] sm:$0xff] %vm261, %v558
        %624 = vst.msk [vmem:[%s615 + $0xc2] sm:$0xff] %vm261, %v559
        %625 = vst.msk [vmem:[%s615 + $0xd2] sm:$0xff] %vm261, %v560
        %626 = vst.msk [vmem:[%s615 + $0xe2] sm:$0xff] %vm261, %v561
        %627 = vst.msk [vmem:[%s615 + $0xf2] sm:$0xff] %vm261, %v562
        %628 = vst.msk [vmem:[%s615 + $0x102] sm:$0xff] %vm261, %v563
        %629 = vst.msk [vmem:[%s615 + $0x112] sm:$0xff] %vm261, %v564
        %630 = vst.msk [vmem:[%s615 + $0x122] sm:$0xff] %vm261, %v565
        %631 = vst.msk [vmem:[%s615 + $0x132] sm:$0xff] %vm261, %v566
        %632 = vst.msk [vmem:[%s615 + $0x182] sm:$0xff] %vm261, %v567
        %633 = vst.msk [vmem:[%s615 + $0x192] sm:$0xff] %vm261, %v568
        %634 = vst.msk [vmem:[%s615 + $0x1a2] sm:$0xff] %vm261, %v569
        %635 = vst.msk [vmem:[%s615 + $0x1b2] sm:$0xff] %vm261, %v570
        %636 = vst.msk [vmem:[%s615 + $0x1c2] sm:$0xff] %vm261, %v571
        %637 = vst.msk [vmem:[%s615 + $0x1d2] sm:$0xff] %vm261, %v572
        %638 = vst.msk [vmem:[%s615 + $0x1e2] sm:$0xff] %vm261, %v573
        %639 = vst.msk [vmem:[%s615 + $0x1f2] sm:$0xff] %vm261, %v574
        %640 = vst.msk [vmem:[%s615 + $0x242] sm:$0xff] %vm261, %v575
        %641 = vst.msk [vmem:[%s615 + $0x252] sm:$0xff] %vm261, %v576
        %642 = vst.msk [vmem:[%s615 + $0x262] sm:$0xff] %vm261, %v577
        %643 = vst.msk [vmem:[%s615 + $0x272] sm:$0xff] %vm261, %v578
        %644 = vst.msk [vmem:[%s615 + $0x282] sm:$0xff] %vm261, %v579
        %645 = vst.msk [vmem:[%s615 + $0x292] sm:$0xff] %vm261, %v580
        %646 = vst.msk [vmem:[%s615 + $0x2a2] sm:$0xff] %vm261, %v581
        %647 = vst.msk [vmem:[%s615 + $0x2b2] sm:$0xff] %vm261, %v582
        %648 = vst.msk [vmem:[%s615 + $0x302] sm:$0xff] %vm261, %v583
        %649 = vst.msk [vmem:[%s615 + $0x312] sm:$0xff] %vm261, %v584
        %650 = vst.msk [vmem:[%s615 + $0x322] sm:$0xff] %vm261, %v585
        %651 = vst.msk [vmem:[%s615 + $0x332] sm:$0xff] %vm261, %v586
        %652 = vst.msk [vmem:[%s615 + $0x342] sm:$0xff] %vm261, %v587
        %653 = vst.msk [vmem:[%s615 + $0x352] sm:$0xff] %vm261, %v588
        %654 = vst.msk [vmem:[%s615 + $0x362] sm:$0xff] %vm261, %v589
        %655 = vst.msk [vmem:[%s615 + $0x372] sm:$0xff] %vm261, %v590
        %656 = vst.msk [vmem:[%s615 + $0x3c2] sm:$0xff] %vm261, %v591
        %657 = vst.msk [vmem:[%s615 + $0x3d2] sm:$0xff] %vm261, %v592
        %658 = vst.msk [vmem:[%s615 + $0x3e2] sm:$0xff] %vm261, %v593
        %659 = vst.msk [vmem:[%s615 + $0x3f2] sm:$0xff] %vm261, %v594
        %660 = vst.msk [vmem:[%s615 + $0x402] sm:$0xff] %vm261, %v595
        %661 = vst.msk [vmem:[%s615 + $0x412] sm:$0xff] %vm261, %v596
        %662 = vst.msk [vmem:[%s615 + $0x422] sm:$0xff] %vm261, %v597
        %663 = vst.msk [vmem:[%s615 + $0x432] sm:$0xff] %vm261, %v598
        %664 = vst.msk [vmem:[%s615 + $0x482] sm:$0xff] %vm261, %v599
        %665 = vst.msk [vmem:[%s615 + $0x492] sm:$0xff] %vm261, %v600
        %666 = vst.msk [vmem:[%s615 + $0x4a2] sm:$0xff] %vm261, %v601
        %667 = vst.msk [vmem:[%s615 + $0x4b2] sm:$0xff] %vm261, %v602
        %668 = vst.msk [vmem:[%s615 + $0x4c2] sm:$0xff] %vm261, %v603
        %669 = vst.msk [vmem:[%s615 + $0x4d2] sm:$0xff] %vm261, %v604
        %670 = vst.msk [vmem:[%s615 + $0x4e2] sm:$0xff] %vm261, %v605
        %671 = vst.msk [vmem:[%s615 + $0x4f2] sm:$0xff] %vm261, %v606
        %672 = vst.msk [vmem:[%s615 + $0x542] sm:$0xff] %vm261, %v607
        %673 = vst.msk [vmem:[%s615 + $0x552] sm:$0xff] %vm261, %v608
        %674 = vst.msk [vmem:[%s615 + $0x562] sm:$0xff] %vm261, %v609
        %675 = vst.msk [vmem:[%s615 + $0x572] sm:$0xff] %vm261, %v610
        %676 = vst.msk [vmem:[%s615 + $0x582] sm:$0xff] %vm261, %v611
        %677 = vst.msk [vmem:[%s615 + $0x592] sm:$0xff] %vm261, %v612
        %678 = vst.msk [vmem:[%s615 + $0x5a2] sm:$0xff] %vm261, %v613
        %679 = vst.msk [vmem:[%s615 + $0x5b2] sm:$0xff] %vm261, %v614
        loop: start=0, step=1, limit=5
        $region41: #{tpu_custom_call.1} parent=39 // loop_pre_header
          _
        $region42: #{tpu_custom_call.1} parent=39 // loop_header
          %s681 = sphi 0, %s685
          %p682 = scmp.ge.s32.totalorder %s681, 5
        $region43: #{tpu_custom_call.1} parent=39 // loop_header_branch
          %684 = sbr.rel (%p682) target = $region47
        $region44: #{tpu_custom_call.1} parent=39 // loop_body
          %s686 = smul.u32 %s681, 25
          %s687 = smul.u32 %s681, 192
          %s688 = scalar_lea.vmem [#allocation2], %s687
          %v689 = vld [vmem:[%s688] sm:$0xff]
          %v690 = vld [vmem:[%s688 + $0x10] sm:$0xff]
          %v691 = vld [vmem:[%s688 + $0x20] sm:$0xff]
          %v692 = vld [vmem:[%s688 + $0x30] sm:$0xff]
          %v693 = vld [vmem:[%s688 + $0x40] sm:$0xff]
          %v694 = vld [vmem:[%s688 + $0x50] sm:$0xff]
          %v695 = vld [vmem:[%s688 + $0x60] sm:$0xff]
          %v696 = vld [vmem:[%s688 + $0x70] sm:$0xff]
          %v697 = vld [vmem:[%s688 + $0xc0] sm:$0xff]
          %v698 = vld [vmem:[%s688 + $0xd0] sm:$0xff]
          %v699 = vld [vmem:[%s688 + $0xe0] sm:$0xff]
          %v700 = vld [vmem:[%s688 + $0xf0] sm:$0xff]
          %v701 = vld [vmem:[%s688 + $0x100] sm:$0xff]
          %v702 = vld [vmem:[%s688 + $0x110] sm:$0xff]
          %v703 = vld [vmem:[%s688 + $0x120] sm:$0xff]
          %v704 = vld [vmem:[%s688 + $0x130] sm:$0xff]
          %v705 = vld [vmem:[%s688 + $0x180] sm:$0xff]
          %v706 = vld [vmem:[%s688 + $0x190] sm:$0xff]
          %v707 = vld [vmem:[%s688 + $0x1a0] sm:$0xff]
          %v708 = vld [vmem:[%s688 + $0x1b0] sm:$0xff]
          %v709 = vld [vmem:[%s688 + $0x1c0] sm:$0xff]
          %v710 = vld [vmem:[%s688 + $0x1d0] sm:$0xff]
          %v711 = vld [vmem:[%s688 + $0x1e0] sm:$0xff]
          %v712 = vld [vmem:[%s688 + $0x1f0] sm:$0xff]
          %v713 = vld [vmem:[%s688 + $0x240] sm:$0xff]
          %v714 = vld [vmem:[%s688 + $0x250] sm:$0xff]
          %v715 = vld [vmem:[%s688 + $0x260] sm:$0xff]
          %v716 = vld [vmem:[%s688 + $0x270] sm:$0xff]
          %v717 = vld [vmem:[%s688 + $0x280] sm:$0xff]
          %v718 = vld [vmem:[%s688 + $0x290] sm:$0xff]
          %v719 = vld [vmem:[%s688 + $0x2a0] sm:$0xff]
          %v720 = vld [vmem:[%s688 + $0x2b0] sm:$0xff]
          %v721 = vld [vmem:[%s688 + $0x300] sm:$0xff]
          %v722 = vld [vmem:[%s688 + $0x310] sm:$0xff]
          %v723 = vld [vmem:[%s688 + $0x320] sm:$0xff]
          %v724 = vld [vmem:[%s688 + $0x330] sm:$0xff]
          %v725 = vld [vmem:[%s688 + $0x340] sm:$0xff]
          %v726 = vld [vmem:[%s688 + $0x350] sm:$0xff]
          %v727 = vld [vmem:[%s688 + $0x360] sm:$0xff]
          %v728 = vld [vmem:[%s688 + $0x370] sm:$0xff]
          %v729 = vld [vmem:[%s688 + $0x3c0] sm:$0xff]
          %v730 = vld [vmem:[%s688 + $0x3d0] sm:$0xff]
          %v731 = vld [vmem:[%s688 + $0x3e0] sm:$0xff]
          %v732 = vld [vmem:[%s688 + $0x3f0] sm:$0xff]
          %v733 = vld [vmem:[%s688 + $0x400] sm:$0xff]
          %v734 = vld [vmem:[%s688 + $0x410] sm:$0xff]
          %v735 = vld [vmem:[%s688 + $0x420] sm:$0xff]
          %v736 = vld [vmem:[%s688 + $0x430] sm:$0xff]
          %v737 = vld [vmem:[%s688 + $0x480] sm:$0xff]
          %v738 = vld [vmem:[%s688 + $0x490] sm:$0xff]
          %v739 = vld [vmem:[%s688 + $0x4a0] sm:$0xff]
          %v740 = vld [vmem:[%s688 + $0x4b0] sm:$0xff]
          %v741 = vld [vmem:[%s688 + $0x4c0] sm:$0xff]
          %v742 = vld [vmem:[%s688 + $0x4d0] sm:$0xff]
          %v743 = vld [vmem:[%s688 + $0x4e0] sm:$0xff]
          %v744 = vld [vmem:[%s688 + $0x4f0] sm:$0xff]
          %v745 = vld [vmem:[%s688 + $0x540] sm:$0xff]
          %v746 = vld [vmem:[%s688 + $0x550] sm:$0xff]
          %v747 = vld [vmem:[%s688 + $0x560] sm:$0xff]
          %v748 = vld [vmem:[%s688 + $0x570] sm:$0xff]
          %v749 = vld [vmem:[%s688 + $0x580] sm:$0xff]
          %v750 = vld [vmem:[%s688 + $0x590] sm:$0xff]
          %v751 = vld [vmem:[%s688 + $0x5a0] sm:$0xff]
          %v752 = vld [vmem:[%s688 + $0x5b0] sm:$0xff]
          %753 = vxpose.xlu0.b32.start [1/16] %v689, 128
          %754 = vxpose.xlu0.b32.cont [2/16] %v690, 128
          %755 = vxpose.xlu0.b32.cont [3/16] %v691, 128
          %756 = vxpose.xlu0.b32.cont [4/16] %v692, 128
          %757 = vxpose.xlu0.b32.cont [5/16] %v693, 128
          %758 = vxpose.xlu0.b32.cont [6/16] %v694, 128
          %759 = vxpose.xlu0.b32.cont [7/16] %v695, 128
          %760 = vxpose.xlu0.b32.cont [8/16] %v696, 128
          %761 = vxpose.xlu0.b32.cont [9/16] %v697, 128
          %762 = vxpose.xlu0.b32.cont [10/16] %v698, 128
          %763 = vxpose.xlu0.b32.cont [11/16] %v699, 128
          %764 = vxpose.xlu0.b32.cont [12/16] %v700, 128
          %765 = vxpose.xlu0.b32.cont [13/16] %v701, 128
          %766 = vxpose.xlu0.b32.cont [14/16] %v702, 128
          %767 = vxpose.xlu0.b32.cont [15/16] %v703, 128
          %768 = vxpose.xlu0.b32.end [16/16] %v704, 128
          %v769 = vpop.trf.xlu0
          %v770 = vpop.trf.xlu0
          %v771 = vpop.trf.xlu0
          %v772 = vpop.trf.xlu0
          %v773 = vpop.trf.xlu0
          %v774 = vpop.trf.xlu0
          %v775 = vpop.trf.xlu0
          %v776 = vpop.trf.xlu0
          %v777 = vpop.trf.xlu0
          %v778 = vpop.trf.xlu0
          %v779 = vpop.trf.xlu0
          %v780 = vpop.trf.xlu0
          %v781 = vpop.trf.xlu0
          %v782 = vpop.trf.xlu0
          %v783 = vpop.trf.xlu0
          %v784 = vpop.trf.xlu0
          %785 = vxpose.xlu0.b32.start [1/16] %v705, 128
          %786 = vxpose.xlu0.b32.cont [2/16] %v706, 128
          %787 = vxpose.xlu0.b32.cont [3/16] %v707, 128
          %788 = vxpose.xlu0.b32.cont [4/16] %v708, 128
          %789 = vxpose.xlu0.b32.cont [5/16] %v709, 128
          %790 = vxpose.xlu0.b32.cont [6/16] %v710, 128
          %791 = vxpose.xlu0.b32.cont [7/16] %v711, 128
          %792 = vxpose.xlu0.b32.cont [8/16] %v712, 128
          %793 = vxpose.xlu0.b32.cont [9/16] %v713, 128
          %794 = vxpose.xlu0.b32.cont [10/16] %v714, 128
          %795 = vxpose.xlu0.b32.cont [11/16] %v715, 128
          %796 = vxpose.xlu0.b32.cont [12/16] %v716, 128
          %797 = vxpose.xlu0.b32.cont [13/16] %v717, 128
          %798 = vxpose.xlu0.b32.cont [14/16] %v718, 128
          %799 = vxpose.xlu0.b32.cont [15/16] %v719, 128
          %800 = vxpose.xlu0.b32.end [16/16] %v720, 128
          %v801 = vpop.trf.xlu0
          %v802 = vpop.trf.xlu0
          %v803 = vpop.trf.xlu0
          %v804 = vpop.trf.xlu0
          %v805 = vpop.trf.xlu0
          %v806 = vpop.trf.xlu0
          %v807 = vpop.trf.xlu0
          %v808 = vpop.trf.xlu0
          %v809 = vpop.trf.xlu0
          %v810 = vpop.trf.xlu0
          %v811 = vpop.trf.xlu0
          %v812 = vpop.trf.xlu0
          %v813 = vpop.trf.xlu0
          %v814 = vpop.trf.xlu0
          %v815 = vpop.trf.xlu0
          %v816 = vpop.trf.xlu0
          %817 = vxpose.xlu0.b32.start [1/16] %v721, 128
          %818 = vxpose.xlu0.b32.cont [2/16] %v722, 128
          %819 = vxpose.xlu0.b32.cont [3/16] %v723, 128
          %820 = vxpose.xlu0.b32.cont [4/16] %v724, 128
          %821 = vxpose.xlu0.b32.cont [5/16] %v725, 128
          %822 = vxpose.xlu0.b32.cont [6/16] %v726, 128
          %823 = vxpose.xlu0.b32.cont [7/16] %v727, 128
          %824 = vxpose.xlu0.b32.cont [8/16] %v728, 128
          %825 = vxpose.xlu0.b32.cont [9/16] %v729, 128
          %826 = vxpose.xlu0.b32.cont [10/16] %v730, 128
          %827 = vxpose.xlu0.b32.cont [11/16] %v731, 128
          %828 = vxpose.xlu0.b32.cont [12/16] %v732, 128
          %829 = vxpose.xlu0.b32.cont [13/16] %v733, 128
          %830 = vxpose.xlu0.b32.cont [14/16] %v734, 128
          %831 = vxpose.xlu0.b32.cont [15/16] %v735, 128
          %832 = vxpose.xlu0.b32.end [16/16] %v736, 128
          %v833 = vpop.trf.xlu0
          %v834 = vpop.trf.xlu0
          %v835 = vpop.trf.xlu0
          %v836 = vpop.trf.xlu0
          %v837 = vpop.trf.xlu0
          %v838 = vpop.trf.xlu0
          %v839 = vpop.trf.xlu0
          %v840 = vpop.trf.xlu0
          %v841 = vpop.trf.xlu0
          %v842 = vpop.trf.xlu0
          %v843 = vpop.trf.xlu0
          %v844 = vpop.trf.xlu0
          %v845 = vpop.trf.xlu0
          %v846 = vpop.trf.xlu0
          %v847 = vpop.trf.xlu0
          %v848 = vpop.trf.xlu0
          %849 = vxpose.xlu0.b32.start [1/16] %v737, 128
          %850 = vxpose.xlu0.b32.cont [2/16] %v738, 128
          %851 = vxpose.xlu0.b32.cont [3/16] %v739, 128
          %852 = vxpose.xlu0.b32.cont [4/16] %v740, 128
          %853 = vxpose.xlu0.b32.cont [5/16] %v741, 128
          %854 = vxpose.xlu0.b32.cont [6/16] %v742, 128
          %855 = vxpose.xlu0.b32.cont [7/16] %v743, 128
          %856 = vxpose.xlu0.b32.cont [8/16] %v744, 128
          %857 = vxpose.xlu0.b32.cont [9/16] %v745, 128
          %858 = vxpose.xlu0.b32.cont [10/16] %v746, 128
          %859 = vxpose.xlu0.b32.cont [11/16] %v747, 128
          %860 = vxpose.xlu0.b32.cont [12/16] %v748, 128
          %861 = vxpose.xlu0.b32.cont [13/16] %v749, 128
          %862 = vxpose.xlu0.b32.cont [14/16] %v750, 128
          %863 = vxpose.xlu0.b32.cont [15/16] %v751, 128
          %864 = vxpose.xlu0.b32.end [16/16] %v752, 128
          %v865 = vpop.trf.xlu0
          %v866 = vpop.trf.xlu0
          %v867 = vpop.trf.xlu0
          %v868 = vpop.trf.xlu0
          %v869 = vpop.trf.xlu0
          %v870 = vpop.trf.xlu0
          %v871 = vpop.trf.xlu0
          %v872 = vpop.trf.xlu0
          %v873 = vpop.trf.xlu0
          %v874 = vpop.trf.xlu0
          %v875 = vpop.trf.xlu0
          %v876 = vpop.trf.xlu0
          %v877 = vpop.trf.xlu0
          %v878 = vpop.trf.xlu0
          %v879 = vpop.trf.xlu0
          %v880 = vpop.trf.xlu0
          %vm881 = vcmask 1043456
          %v882 = vsel %vm881, %v769, 0.0
          %v883 = vsel %vm881, %v801, 0.0
          %v884 = vsel %vm881, %v833, 0.0
          %v885 = vsel %vm881, %v865, 0.0
          %s886 = smul.u32 %s686, 4
          %s887 = smul.addr %s886, 8
          %s888 = scalar_lea.vmem [#allocation3], %s887
          %889 = vst [vmem:[%s888] sm:$0xff] %v882
          %890 = vst [vmem:[%s888 + $0x8] sm:$0xff] %v883
          %891 = vst [vmem:[%s888 + $0x10] sm:$0xff] %v884
          %892 = vst [vmem:[%s888 + $0x18] sm:$0xff] %v885
          %s893 = sadd.s32 %s686, 1
          %v894 = vld [vmem:[%s688 + $0x1] sm:$0xff]
          %v895 = vld [vmem:[%s688 + $0x11] sm:$0xff]
          %v896 = vld [vmem:[%s688 + $0x21] sm:$0xff]
          %v897 = vld [vmem:[%s688 + $0x31] sm:$0xff]
          %v898 = vld [vmem:[%s688 + $0x41] sm:$0xff]
          %v899 = vld [vmem:[%s688 + $0x51] sm:$0xff]
          %v900 = vld [vmem:[%s688 + $0x61] sm:$0xff]
          %v901 = vld [vmem:[%s688 + $0x71] sm:$0xff]
          %v902 = vld [vmem:[%s688 + $0xc1] sm:$0xff]
          %v903 = vld [vmem:[%s688 + $0xd1] sm:$0xff]
          %v904 = vld [vmem:[%s688 + $0xe1] sm:$0xff]
          %v905 = vld [vmem:[%s688 + $0xf1] sm:$0xff]
          %v906 = vld [vmem:[%s688 + $0x101] sm:$0xff]
          %v907 = vld [vmem:[%s688 + $0x111] sm:$0xff]
          %v908 = vld [vmem:[%s688 + $0x121] sm:$0xff]
          %v909 = vld [vmem:[%s688 + $0x131] sm:$0xff]
          %v910 = vld [vmem:[%s688 + $0x181] sm:$0xff]
          %v911 = vld [vmem:[%s688 + $0x191] sm:$0xff]
          %v912 = vld [vmem:[%s688 + $0x1a1] sm:$0xff]
          %v913 = vld [vmem:[%s688 + $0x1b1] sm:$0xff]
          %v914 = vld [vmem:[%s688 + $0x1c1] sm:$0xff]
          %v915 = vld [vmem:[%s688 + $0x1d1] sm:$0xff]
          %v916 = vld [vmem:[%s688 + $0x1e1] sm:$0xff]
          %v917 = vld [vmem:[%s688 + $0x1f1] sm:$0xff]
          %v918 = vld [vmem:[%s688 + $0x241] sm:$0xff]
          %v919 = vld [vmem:[%s688 + $0x251] sm:$0xff]
          %v920 = vld [vmem:[%s688 + $0x261] sm:$0xff]
          %v921 = vld [vmem:[%s688 + $0x271] sm:$0xff]
          %v922 = vld [vmem:[%s688 + $0x281] sm:$0xff]
          %v923 = vld [vmem:[%s688 + $0x291] sm:$0xff]
          %v924 = vld [vmem:[%s688 + $0x2a1] sm:$0xff]
          %v925 = vld [vmem:[%s688 + $0x2b1] sm:$0xff]
          %v926 = vld [vmem:[%s688 + $0x301] sm:$0xff]
          %v927 = vld [vmem:[%s688 + $0x311] sm:$0xff]
          %v928 = vld [vmem:[%s688 + $0x321] sm:$0xff]
          %v929 = vld [vmem:[%s688 + $0x331] sm:$0xff]
          %v930 = vld [vmem:[%s688 + $0x341] sm:$0xff]
          %v931 = vld [vmem:[%s688 + $0x351] sm:$0xff]
          %v932 = vld [vmem:[%s688 + $0x361] sm:$0xff]
          %v933 = vld [vmem:[%s688 + $0x371] sm:$0xff]
          %v934 = vld [vmem:[%s688 + $0x3c1] sm:$0xff]
          %v935 = vld [vmem:[%s688 + $0x3d1] sm:$0xff]
          %v936 = vld [vmem:[%s688 + $0x3e1] sm:$0xff]
          %v937 = vld [vmem:[%s688 + $0x3f1] sm:$0xff]
          %v938 = vld [vmem:[%s688 + $0x401] sm:$0xff]
          %v939 = vld [vmem:[%s688 + $0x411] sm:$0xff]
          %v940 = vld [vmem:[%s688 + $0x421] sm:$0xff]
          %v941 = vld [vmem:[%s688 + $0x431] sm:$0xff]
          %v942 = vld [vmem:[%s688 + $0x481] sm:$0xff]
          %v943 = vld [vmem:[%s688 + $0x491] sm:$0xff]
          %v944 = vld [vmem:[%s688 + $0x4a1] sm:$0xff]
          %v945 = vld [vmem:[%s688 + $0x4b1] sm:$0xff]
          %v946 = vld [vmem:[%s688 + $0x4c1] sm:$0xff]
          %v947 = vld [vmem:[%s688 + $0x4d1] sm:$0xff]
          %v948 = vld [vmem:[%s688 + $0x4e1] sm:$0xff]
          %v949 = vld [vmem:[%s688 + $0x4f1] sm:$0xff]
          %v950 = vld [vmem:[%s688 + $0x541] sm:$0xff]
          %v951 = vld [vmem:[%s688 + $0x551] sm:$0xff]
          %v952 = vld [vmem:[%s688 + $0x561] sm:$0xff]
          %v953 = vld [vmem:[%s688 + $0x571] sm:$0xff]
          %v954 = vld [vmem:[%s688 + $0x581] sm:$0xff]
          %v955 = vld [vmem:[%s688 + $0x591] sm:$0xff]
          %v956 = vld [vmem:[%s688 + $0x5a1] sm:$0xff]
          %v957 = vld [vmem:[%s688 + $0x5b1] sm:$0xff]
          %958 = vxpose.xlu0.b32.start [1/16] %v894, 128
          %959 = vxpose.xlu0.b32.cont [2/16] %v895, 128
          %960 = vxpose.xlu0.b32.cont [3/16] %v896, 128
          %961 = vxpose.xlu0.b32.cont [4/16] %v897, 128
          %962 = vxpose.xlu0.b32.cont [5/16] %v898, 128
          %963 = vxpose.xlu0.b32.cont [6/16] %v899, 128
          %964 = vxpose.xlu0.b32.cont [7/16] %v900, 128
          %965 = vxpose.xlu0.b32.cont [8/16] %v901, 128
          %966 = vxpose.xlu0.b32.cont [9/16] %v902, 128
          %967 = vxpose.xlu0.b32.cont [10/16] %v903, 128
          %968 = vxpose.xlu0.b32.cont [11/16] %v904, 128
          %969 = vxpose.xlu0.b32.cont [12/16] %v905, 128
          %970 = vxpose.xlu0.b32.cont [13/16] %v906, 128
          %971 = vxpose.xlu0.b32.cont [14/16] %v907, 128
          %972 = vxpose.xlu0.b32.cont [15/16] %v908, 128
          %973 = vxpose.xlu0.b32.end [16/16] %v909, 128
          %v974 = vpop.trf.xlu0
          %v975 = vpop.trf.xlu0
          %v976 = vpop.trf.xlu0
          %v977 = vpop.trf.xlu0
          %v978 = vpop.trf.xlu0
          %v979 = vpop.trf.xlu0
          %v980 = vpop.trf.xlu0
          %v981 = vpop.trf.xlu0
          %v982 = vpop.trf.xlu0
          %v983 = vpop.trf.xlu0
          %v984 = vpop.trf.xlu0
          %v985 = vpop.trf.xlu0
          %v986 = vpop.trf.xlu0
          %v987 = vpop.trf.xlu0
          %v988 = vpop.trf.xlu0
          %v989 = vpop.trf.xlu0
          %990 = vxpose.xlu0.b32.start [1/16] %v910, 128
          %991 = vxpose.xlu0.b32.cont [2/16] %v911, 128
          %992 = vxpose.xlu0.b32.cont [3/16] %v912, 128
          %993 = vxpose.xlu0.b32.cont [4/16] %v913, 128
          %994 = vxpose.xlu0.b32.cont [5/16] %v914, 128
          %995 = vxpose.xlu0.b32.cont [6/16] %v915, 128
          %996 = vxpose.xlu0.b32.cont [7/16] %v916, 128
          %997 = vxpose.xlu0.b32.cont [8/16] %v917, 128
          %998 = vxpose.xlu0.b32.cont [9/16] %v918, 128
          %999 = vxpose.xlu0.b32.cont [10/16] %v919, 128
          %1000 = vxpose.xlu0.b32.cont [11/16] %v920, 128
          %1001 = vxpose.xlu0.b32.cont [12/16] %v921, 128
          %1002 = vxpose.xlu0.b32.cont [13/16] %v922, 128
          %1003 = vxpose.xlu0.b32.cont [14/16] %v923, 128
          %1004 = vxpose.xlu0.b32.cont [15/16] %v924, 128
          %1005 = vxpose.xlu0.b32.end [16/16] %v925, 128
          %v1006 = vpop.trf.xlu0
          %v1007 = vpop.trf.xlu0
          %v1008 = vpop.trf.xlu0
          %v1009 = vpop.trf.xlu0
          %v1010 = vpop.trf.xlu0
          %v1011 = vpop.trf.xlu0
          %v1012 = vpop.trf.xlu0
          %v1013 = vpop.trf.xlu0
          %v1014 = vpop.trf.xlu0
          %v1015 = vpop.trf.xlu0
          %v1016 = vpop.trf.xlu0
          %v1017 = vpop.trf.xlu0
          %v1018 = vpop.trf.xlu0
          %v1019 = vpop.trf.xlu0
          %v1020 = vpop.trf.xlu0
          %v1021 = vpop.trf.xlu0
          %1022 = vxpose.xlu0.b32.start [1/16] %v926, 128
          %1023 = vxpose.xlu0.b32.cont [2/16] %v927, 128
          %1024 = vxpose.xlu0.b32.cont [3/16] %v928, 128
          %1025 = vxpose.xlu0.b32.cont [4/16] %v929, 128
          %1026 = vxpose.xlu0.b32.cont [5/16] %v930, 128
          %1027 = vxpose.xlu0.b32.cont [6/16] %v931, 128
          %1028 = vxpose.xlu0.b32.cont [7/16] %v932, 128
          %1029 = vxpose.xlu0.b32.cont [8/16] %v933, 128
          %1030 = vxpose.xlu0.b32.cont [9/16] %v934, 128
          %1031 = vxpose.xlu0.b32.cont [10/16] %v935, 128
          %1032 = vxpose.xlu0.b32.cont [11/16] %v936, 128
          %1033 = vxpose.xlu0.b32.cont [12/16] %v937, 128
          %1034 = vxpose.xlu0.b32.cont [13/16] %v938, 128
          %1035 = vxpose.xlu0.b32.cont [14/16] %v939, 128
          %1036 = vxpose.xlu0.b32.cont [15/16] %v940, 128
          %1037 = vxpose.xlu0.b32.end [16/16] %v941, 128
          %v1038 = vpop.trf.xlu0
          %v1039 = vpop.trf.xlu0
          %v1040 = vpop.trf.xlu0
          %v1041 = vpop.trf.xlu0
          %v1042 = vpop.trf.xlu0
          %v1043 = vpop.trf.xlu0
          %v1044 = vpop.trf.xlu0
          %v1045 = vpop.trf.xlu0
          %v1046 = vpop.trf.xlu0
          %v1047 = vpop.trf.xlu0
          %v1048 = vpop.trf.xlu0
          %v1049 = vpop.trf.xlu0
          %v1050 = vpop.trf.xlu0
          %v1051 = vpop.trf.xlu0
          %v1052 = vpop.trf.xlu0
          %v1053 = vpop.trf.xlu0
          %1054 = vxpose.xlu0.b32.start [1/16] %v942, 128
          %1055 = vxpose.xlu0.b32.cont [2/16] %v943, 128
          %1056 = vxpose.xlu0.b32.cont [3/16] %v944, 128
          %1057 = vxpose.xlu0.b32.cont [4/16] %v945, 128
          %1058 = vxpose.xlu0.b32.cont [5/16] %v946, 128
          %1059 = vxpose.xlu0.b32.cont [6/16] %v947, 128
          %1060 = vxpose.xlu0.b32.cont [7/16] %v948, 128
          %1061 = vxpose.xlu0.b32.cont [8/16] %v949, 128
          %1062 = vxpose.xlu0.b32.cont [9/16] %v950, 128
          %1063 = vxpose.xlu0.b32.cont [10/16] %v951, 128
          %1064 = vxpose.xlu0.b32.cont [11/16] %v952, 128
          %1065 = vxpose.xlu0.b32.cont [12/16] %v953, 128
          %1066 = vxpose.xlu0.b32.cont [13/16] %v954, 128
          %1067 = vxpose.xlu0.b32.cont [14/16] %v955, 128
          %1068 = vxpose.xlu0.b32.cont [15/16] %v956, 128
          %1069 = vxpose.xlu0.b32.end [16/16] %v957, 128
          %v1070 = vpop.trf.xlu0
          %v1071 = vpop.trf.xlu0
          %v1072 = vpop.trf.xlu0
          %v1073 = vpop.trf.xlu0
          %v1074 = vpop.trf.xlu0
          %v1075 = vpop.trf.xlu0
          %v1076 = vpop.trf.xlu0
          %v1077 = vpop.trf.xlu0
          %v1078 = vpop.trf.xlu0
          %v1079 = vpop.trf.xlu0
          %v1080 = vpop.trf.xlu0
          %v1081 = vpop.trf.xlu0
          %v1082 = vpop.trf.xlu0
          %v1083 = vpop.trf.xlu0
          %v1084 = vpop.trf.xlu0
          %v1085 = vpop.trf.xlu0
          %v1086 = vsel %vm881, %v974, 0.0
          %v1087 = vsel %vm881, %v1006, 0.0
          %v1088 = vsel %vm881, %v1038, 0.0
          %v1089 = vsel %vm881, %v1070, 0.0
          %s1090 = smul.u32 %s893, 4
          %s1091 = smul.addr %s1090, 8
          %s1092 = scalar_lea.vmem [#allocation3], %s1091
          %1093 = vst [vmem:[%s1092] sm:$0xff] %v1086
          %1094 = vst [vmem:[%s1092 + $0x8] sm:$0xff] %v1087
          %1095 = vst [vmem:[%s1092 + $0x10] sm:$0xff] %v1088
          %1096 = vst [vmem:[%s1092 + $0x18] sm:$0xff] %v1089
          %s1097 = sadd.s32 %s686, 2
          %v1098 = vld [vmem:[%s688 + $0x2] sm:$0xff]
          %v1099 = vld [vmem:[%s688 + $0x12] sm:$0xff]
          %v1100 = vld [vmem:[%s688 + $0x22] sm:$0xff]
          %v1101 = vld [vmem:[%s688 + $0x32] sm:$0xff]
          %v1102 = vld [vmem:[%s688 + $0x42] sm:$0xff]
          %v1103 = vld [vmem:[%s688 + $0x52] sm:$0xff]
          %v1104 = vld [vmem:[%s688 + $0x62] sm:$0xff]
          %v1105 = vld [vmem:[%s688 + $0x72] sm:$0xff]
          %v1106 = vld [vmem:[%s688 + $0xc2] sm:$0xff]
          %v1107 = vld [vmem:[%s688 + $0xd2] sm:$0xff]
          %v1108 = vld [vmem:[%s688 + $0xe2] sm:$0xff]
          %v1109 = vld [vmem:[%s688 + $0xf2] sm:$0xff]
          %v1110 = vld [vmem:[%s688 + $0x102] sm:$0xff]
          %v1111 = vld [vmem:[%s688 + $0x112] sm:$0xff]
          %v1112 = vld [vmem:[%s688 + $0x122] sm:$0xff]
          %v1113 = vld [vmem:[%s688 + $0x132] sm:$0xff]
          %v1114 = vld [vmem:[%s688 + $0x182] sm:$0xff]
          %v1115 = vld [vmem:[%s688 + $0x192] sm:$0xff]
          %v1116 = vld [vmem:[%s688 + $0x1a2] sm:$0xff]
          %v1117 = vld [vmem:[%s688 + $0x1b2] sm:$0xff]
          %v1118 = vld [vmem:[%s688 + $0x1c2] sm:$0xff]
          %v1119 = vld [vmem:[%s688 + $0x1d2] sm:$0xff]
          %v1120 = vld [vmem:[%s688 + $0x1e2] sm:$0xff]
          %v1121 = vld [vmem:[%s688 + $0x1f2] sm:$0xff]
          %v1122 = vld [vmem:[%s688 + $0x242] sm:$0xff]
          %v1123 = vld [vmem:[%s688 + $0x252] sm:$0xff]
          %v1124 = vld [vmem:[%s688 + $0x262] sm:$0xff]
          %v1125 = vld [vmem:[%s688 + $0x272] sm:$0xff]
          %v1126 = vld [vmem:[%s688 + $0x282] sm:$0xff]
          %v1127 = vld [vmem:[%s688 + $0x292] sm:$0xff]
          %v1128 = vld [vmem:[%s688 + $0x2a2] sm:$0xff]
          %v1129 = vld [vmem:[%s688 + $0x2b2] sm:$0xff]
          %v1130 = vld [vmem:[%s688 + $0x302] sm:$0xff]
          %v1131 = vld [vmem:[%s688 + $0x312] sm:$0xff]
          %v1132 = vld [vmem:[%s688 + $0x322] sm:$0xff]
          %v1133 = vld [vmem:[%s688 + $0x332] sm:$0xff]
          %v1134 = vld [vmem:[%s688 + $0x342] sm:$0xff]
          %v1135 = vld [vmem:[%s688 + $0x352] sm:$0xff]
          %v1136 = vld [vmem:[%s688 + $0x362] sm:$0xff]
          %v1137 = vld [vmem:[%s688 + $0x372] sm:$0xff]
          %v1138 = vld [vmem:[%s688 + $0x3c2] sm:$0xff]
          %v1139 = vld [vmem:[%s688 + $0x3d2] sm:$0xff]
          %v1140 = vld [vmem:[%s688 + $0x3e2] sm:$0xff]
          %v1141 = vld [vmem:[%s688 + $0x3f2] sm:$0xff]
          %v1142 = vld [vmem:[%s688 + $0x402] sm:$0xff]
          %v1143 = vld [vmem:[%s688 + $0x412] sm:$0xff]
          %v1144 = vld [vmem:[%s688 + $0x422] sm:$0xff]
          %v1145 = vld [vmem:[%s688 + $0x432] sm:$0xff]
          %v1146 = vld [vmem:[%s688 + $0x482] sm:$0xff]
          %v1147 = vld [vmem:[%s688 + $0x492] sm:$0xff]
          %v1148 = vld [vmem:[%s688 + $0x4a2] sm:$0xff]
          %v1149 = vld [vmem:[%s688 + $0x4b2] sm:$0xff]
          %v1150 = vld [vmem:[%s688 + $0x4c2] sm:$0xff]
          %v1151 = vld [vmem:[%s688 + $0x4d2] sm:$0xff]
          %v1152 = vld [vmem:[%s688 + $0x4e2] sm:$0xff]
          %v1153 = vld [vmem:[%s688 + $0x4f2] sm:$0xff]
          %v1154 = vld [vmem:[%s688 + $0x542] sm:$0xff]
          %v1155 = vld [vmem:[%s688 + $0x552] sm:$0xff]
          %v1156 = vld [vmem:[%s688 + $0x562] sm:$0xff]
          %v1157 = vld [vmem:[%s688 + $0x572] sm:$0xff]
          %v1158 = vld [vmem:[%s688 + $0x582] sm:$0xff]
          %v1159 = vld [vmem:[%s688 + $0x592] sm:$0xff]
          %v1160 = vld [vmem:[%s688 + $0x5a2] sm:$0xff]
          %v1161 = vld [vmem:[%s688 + $0x5b2] sm:$0xff]
          %1162 = vxpose.xlu0.b32.start [1/16] %v1098, 128
          %1163 = vxpose.xlu0.b32.cont [2/16] %v1099, 128
          %1164 = vxpose.xlu0.b32.cont [3/16] %v1100, 128
          %1165 = vxpose.xlu0.b32.cont [4/16] %v1101, 128
          %1166 = vxpose.xlu0.b32.cont [5/16] %v1102, 128
          %1167 = vxpose.xlu0.b32.cont [6/16] %v1103, 128
          %1168 = vxpose.xlu0.b32.cont [7/16] %v1104, 128
          %1169 = vxpose.xlu0.b32.cont [8/16] %v1105, 128
          %1170 = vxpose.xlu0.b32.cont [9/16] %v1106, 128
          %1171 = vxpose.xlu0.b32.cont [10/16] %v1107, 128
          %1172 = vxpose.xlu0.b32.cont [11/16] %v1108, 128
          %1173 = vxpose.xlu0.b32.cont [12/16] %v1109, 128
          %1174 = vxpose.xlu0.b32.cont [13/16] %v1110, 128
          %1175 = vxpose.xlu0.b32.cont [14/16] %v1111, 128
          %1176 = vxpose.xlu0.b32.cont [15/16] %v1112, 128
          %1177 = vxpose.xlu0.b32.end [16/16] %v1113, 128
          %v1178 = vpop.trf.xlu0
          %v1179 = vpop.trf.xlu0
          %v1180 = vpop.trf.xlu0
          %v1181 = vpop.trf.xlu0
          %v1182 = vpop.trf.xlu0
          %v1183 = vpop.trf.xlu0
          %v1184 = vpop.trf.xlu0
          %v1185 = vpop.trf.xlu0
          %v1186 = vpop.trf.xlu0
          %v1187 = vpop.trf.xlu0
          %v1188 = vpop.trf.xlu0
          %v1189 = vpop.trf.xlu0
          %v1190 = vpop.trf.xlu0
          %v1191 = vpop.trf.xlu0
          %v1192 = vpop.trf.xlu0
          %v1193 = vpop.trf.xlu0
          %1194 = vxpose.xlu0.b32.start [1/16] %v1114, 128
          %1195 = vxpose.xlu0.b32.cont [2/16] %v1115, 128
          %1196 = vxpose.xlu0.b32.cont [3/16] %v1116, 128
          %1197 = vxpose.xlu0.b32.cont [4/16] %v1117, 128
          %1198 = vxpose.xlu0.b32.cont [5/16] %v1118, 128
          %1199 = vxpose.xlu0.b32.cont [6/16] %v1119, 128
          %1200 = vxpose.xlu0.b32.cont [7/16] %v1120, 128
          %1201 = vxpose.xlu0.b32.cont [8/16] %v1121, 128
          %1202 = vxpose.xlu0.b32.cont [9/16] %v1122, 128
          %1203 = vxpose.xlu0.b32.cont [10/16] %v1123, 128
          %1204 = vxpose.xlu0.b32.cont [11/16] %v1124, 128
          %1205 = vxpose.xlu0.b32.cont [12/16] %v1125, 128
          %1206 = vxpose.xlu0.b32.cont [13/16] %v1126, 128
          %1207 = vxpose.xlu0.b32.cont [14/16] %v1127, 128
          %1208 = vxpose.xlu0.b32.cont [15/16] %v1128, 128
          %1209 = vxpose.xlu0.b32.end [16/16] %v1129, 128
          %v1210 = vpop.trf.xlu0
          %v1211 = vpop.trf.xlu0
          %v1212 = vpop.trf.xlu0
          %v1213 = vpop.trf.xlu0
          %v1214 = vpop.trf.xlu0
          %v1215 = vpop.trf.xlu0
          %v1216 = vpop.trf.xlu0
          %v1217 = vpop.trf.xlu0
          %v1218 = vpop.trf.xlu0
          %v1219 = vpop.trf.xlu0
          %v1220 = vpop.trf.xlu0
          %v1221 = vpop.trf.xlu0
          %v1222 = vpop.trf.xlu0
          %v1223 = vpop.trf.xlu0
          %v1224 = vpop.trf.xlu0
          %v1225 = vpop.trf.xlu0
          %1226 = vxpose.xlu0.b32.start [1/16] %v1130, 128
          %1227 = vxpose.xlu0.b32.cont [2/16] %v1131, 128
          %1228 = vxpose.xlu0.b32.cont [3/16] %v1132, 128
          %1229 = vxpose.xlu0.b32.cont [4/16] %v1133, 128
          %1230 = vxpose.xlu0.b32.cont [5/16] %v1134, 128
          %1231 = vxpose.xlu0.b32.cont [6/16] %v1135, 128
          %1232 = vxpose.xlu0.b32.cont [7/16] %v1136, 128
          %1233 = vxpose.xlu0.b32.cont [8/16] %v1137, 128
          %1234 = vxpose.xlu0.b32.cont [9/16] %v1138, 128
          %1235 = vxpose.xlu0.b32.cont [10/16] %v1139, 128
          %1236 = vxpose.xlu0.b32.cont [11/16] %v1140, 128
          %1237 = vxpose.xlu0.b32.cont [12/16] %v1141, 128
          %1238 = vxpose.xlu0.b32.cont [13/16] %v1142, 128
          %1239 = vxpose.xlu0.b32.cont [14/16] %v1143, 128
          %1240 = vxpose.xlu0.b32.cont [15/16] %v1144, 128
          %1241 = vxpose.xlu0.b32.end [16/16] %v1145, 128
          %v1242 = vpop.trf.xlu0
          %v1243 = vpop.trf.xlu0
          %v1244 = vpop.trf.xlu0
          %v1245 = vpop.trf.xlu0
          %v1246 = vpop.trf.xlu0
          %v1247 = vpop.trf.xlu0
          %v1248 = vpop.trf.xlu0
          %v1249 = vpop.trf.xlu0
          %v1250 = vpop.trf.xlu0
          %v1251 = vpop.trf.xlu0
          %v1252 = vpop.trf.xlu0
          %v1253 = vpop.trf.xlu0
          %v1254 = vpop.trf.xlu0
          %v1255 = vpop.trf.xlu0
          %v1256 = vpop.trf.xlu0
          %v1257 = vpop.trf.xlu0
          %1258 = vxpose.xlu0.b32.start [1/16] %v1146, 128
          %1259 = vxpose.xlu0.b32.cont [2/16] %v1147, 128
          %1260 = vxpose.xlu0.b32.cont [3/16] %v1148, 128
          %1261 = vxpose.xlu0.b32.cont [4/16] %v1149, 128
          %1262 = vxpose.xlu0.b32.cont [5/16] %v1150, 128
          %1263 = vxpose.xlu0.b32.cont [6/16] %v1151, 128
          %1264 = vxpose.xlu0.b32.cont [7/16] %v1152, 128
          %1265 = vxpose.xlu0.b32.cont [8/16] %v1153, 128
          %1266 = vxpose.xlu0.b32.cont [9/16] %v1154, 128
          %1267 = vxpose.xlu0.b32.cont [10/16] %v1155, 128
          %1268 = vxpose.xlu0.b32.cont [11/16] %v1156, 128
          %1269 = vxpose.xlu0.b32.cont [12/16] %v1157, 128
          %1270 = vxpose.xlu0.b32.cont [13/16] %v1158, 128
          %1271 = vxpose.xlu0.b32.cont [14/16] %v1159, 128
          %1272 = vxpose.xlu0.b32.cont [15/16] %v1160, 128
          %1273 = vxpose.xlu0.b32.end [16/16] %v1161, 128
          %v1274 = vpop.trf.xlu0
          %v1275 = vpop.trf.xlu0
          %v1276 = vpop.trf.xlu0
          %v1277 = vpop.trf.xlu0
          %v1278 = vpop.trf.xlu0
          %v1279 = vpop.trf.xlu0
          %v1280 = vpop.trf.xlu0
          %v1281 = vpop.trf.xlu0
          %v1282 = vpop.trf.xlu0
          %v1283 = vpop.trf.xlu0
          %v1284 = vpop.trf.xlu0
          %v1285 = vpop.trf.xlu0
          %v1286 = vpop.trf.xlu0
          %v1287 = vpop.trf.xlu0
          %v1288 = vpop.trf.xlu0
          %v1289 = vpop.trf.xlu0
          %v1290 = vsel %vm881, %v1178, 0.0
          %v1291 = vsel %vm881, %v1210, 0.0
          %v1292 = vsel %vm881, %v1242, 0.0
          %v1293 = vsel %vm881, %v1274, 0.0
          %s1294 = smul.u32 %s1097, 4
          %s1295 = smul.addr %s1294, 8
          %s1296 = scalar_lea.vmem [#allocation3], %s1295
          %1297 = vst [vmem:[%s1296] sm:$0xff] %v1290
          %1298 = vst [vmem:[%s1296 + $0x8] sm:$0xff] %v1291
          %1299 = vst [vmem:[%s1296 + $0x10] sm:$0xff] %v1292
          %1300 = vst [vmem:[%s1296 + $0x18] sm:$0xff] %v1293
          %s1301 = sadd.s32 %s686, 3
          %v1302 = vld [vmem:[%s688 + $0x3] sm:$0xff]
          %v1303 = vld [vmem:[%s688 + $0x13] sm:$0xff]
          %v1304 = vld [vmem:[%s688 + $0x23] sm:$0xff]
          %v1305 = vld [vmem:[%s688 + $0x33] sm:$0xff]
          %v1306 = vld [vmem:[%s688 + $0x43] sm:$0xff]
          %v1307 = vld [vmem:[%s688 + $0x53] sm:$0xff]
          %v1308 = vld [vmem:[%s688 + $0x63] sm:$0xff]
          %v1309 = vld [vmem:[%s688 + $0x73] sm:$0xff]
          %v1310 = vld [vmem:[%s688 + $0xc3] sm:$0xff]
          %v1311 = vld [vmem:[%s688 + $0xd3] sm:$0xff]
          %v1312 = vld [vmem:[%s688 + $0xe3] sm:$0xff]
          %v1313 = vld [vmem:[%s688 + $0xf3] sm:$0xff]
          %v1314 = vld [vmem:[%s688 + $0x103] sm:$0xff]
          %v1315 = vld [vmem:[%s688 + $0x113] sm:$0xff]
          %v1316 = vld [vmem:[%s688 + $0x123] sm:$0xff]
          %v1317 = vld [vmem:[%s688 + $0x133] sm:$0xff]
          %v1318 = vld [vmem:[%s688 + $0x183] sm:$0xff]
          %v1319 = vld [vmem:[%s688 + $0x193] sm:$0xff]
          %v1320 = vld [vmem:[%s688 + $0x1a3] sm:$0xff]
          %v1321 = vld [vmem:[%s688 + $0x1b3] sm:$0xff]
          %v1322 = vld [vmem:[%s688 + $0x1c3] sm:$0xff]
          %v1323 = vld [vmem:[%s688 + $0x1d3] sm:$0xff]
          %v1324 = vld [vmem:[%s688 + $0x1e3] sm:$0xff]
          %v1325 = vld [vmem:[%s688 + $0x1f3] sm:$0xff]
          %v1326 = vld [vmem:[%s688 + $0x243] sm:$0xff]
          %v1327 = vld [vmem:[%s688 + $0x253] sm:$0xff]
          %v1328 = vld [vmem:[%s688 + $0x263] sm:$0xff]
          %v1329 = vld [vmem:[%s688 + $0x273] sm:$0xff]
          %v1330 = vld [vmem:[%s688 + $0x283] sm:$0xff]
          %v1331 = vld [vmem:[%s688 + $0x293] sm:$0xff]
          %v1332 = vld [vmem:[%s688 + $0x2a3] sm:$0xff]
          %v1333 = vld [vmem:[%s688 + $0x2b3] sm:$0xff]
          %v1334 = vld [vmem:[%s688 + $0x303] sm:$0xff]
          %v1335 = vld [vmem:[%s688 + $0x313] sm:$0xff]
          %v1336 = vld [vmem:[%s688 + $0x323] sm:$0xff]
          %v1337 = vld [vmem:[%s688 + $0x333] sm:$0xff]
          %v1338 = vld [vmem:[%s688 + $0x343] sm:$0xff]
          %v1339 = vld [vmem:[%s688 + $0x353] sm:$0xff]
          %v1340 = vld [vmem:[%s688 + $0x363] sm:$0xff]
          %v1341 = vld [vmem:[%s688 + $0x373] sm:$0xff]
          %v1342 = vld [vmem:[%s688 + $0x3c3] sm:$0xff]
          %v1343 = vld [vmem:[%s688 + $0x3d3] sm:$0xff]
          %v1344 = vld [vmem:[%s688 + $0x3e3] sm:$0xff]
          %v1345 = vld [vmem:[%s688 + $0x3f3] sm:$0xff]
          %v1346 = vld [vmem:[%s688 + $0x403] sm:$0xff]
          %v1347 = vld [vmem:[%s688 + $0x413] sm:$0xff]
          %v1348 = vld [vmem:[%s688 + $0x423] sm:$0xff]
          %v1349 = vld [vmem:[%s688 + $0x433] sm:$0xff]
          %v1350 = vld [vmem:[%s688 + $0x483] sm:$0xff]
          %v1351 = vld [vmem:[%s688 + $0x493] sm:$0xff]
          %v1352 = vld [vmem:[%s688 + $0x4a3] sm:$0xff]
          %v1353 = vld [vmem:[%s688 + $0x4b3] sm:$0xff]
          %v1354 = vld [vmem:[%s688 + $0x4c3] sm:$0xff]
          %v1355 = vld [vmem:[%s688 + $0x4d3] sm:$0xff]
          %v1356 = vld [vmem:[%s688 + $0x4e3] sm:$0xff]
          %v1357 = vld [vmem:[%s688 + $0x4f3] sm:$0xff]
          %v1358 = vld [vmem:[%s688 + $0x543] sm:$0xff]
          %v1359 = vld [vmem:[%s688 + $0x553] sm:$0xff]
          %v1360 = vld [vmem:[%s688 + $0x563] sm:$0xff]
          %v1361 = vld [vmem:[%s688 + $0x573] sm:$0xff]
          %v1362 = vld [vmem:[%s688 + $0x583] sm:$0xff]
          %v1363 = vld [vmem:[%s688 + $0x593] sm:$0xff]
          %v1364 = vld [vmem:[%s688 + $0x5a3] sm:$0xff]
          %v1365 = vld [vmem:[%s688 + $0x5b3] sm:$0xff]
          %1366 = vxpose.xlu0.b32.start [1/16] %v1302, 128
          %1367 = vxpose.xlu0.b32.cont [2/16] %v1303, 128
          %1368 = vxpose.xlu0.b32.cont [3/16] %v1304, 128
          %1369 = vxpose.xlu0.b32.cont [4/16] %v1305, 128
          %1370 = vxpose.xlu0.b32.cont [5/16] %v1306, 128
          %1371 = vxpose.xlu0.b32.cont [6/16] %v1307, 128
          %1372 = vxpose.xlu0.b32.cont [7/16] %v1308, 128
          %1373 = vxpose.xlu0.b32.cont [8/16] %v1309, 128
          %1374 = vxpose.xlu0.b32.cont [9/16] %v1310, 128
          %1375 = vxpose.xlu0.b32.cont [10/16] %v1311, 128
          %1376 = vxpose.xlu0.b32.cont [11/16] %v1312, 128
          %1377 = vxpose.xlu0.b32.cont [12/16] %v1313, 128
          %1378 = vxpose.xlu0.b32.cont [13/16] %v1314, 128
          %1379 = vxpose.xlu0.b32.cont [14/16] %v1315, 128
          %1380 = vxpose.xlu0.b32.cont [15/16] %v1316, 128
          %1381 = vxpose.xlu0.b32.end [16/16] %v1317, 128
          %v1382 = vpop.trf.xlu0
          %v1383 = vpop.trf.xlu0
          %v1384 = vpop.trf.xlu0
          %v1385 = vpop.trf.xlu0
          %v1386 = vpop.trf.xlu0
          %v1387 = vpop.trf.xlu0
          %v1388 = vpop.trf.xlu0
          %v1389 = vpop.trf.xlu0
          %v1390 = vpop.trf.xlu0
          %v1391 = vpop.trf.xlu0
          %v1392 = vpop.trf.xlu0
          %v1393 = vpop.trf.xlu0
          %v1394 = vpop.trf.xlu0
          %v1395 = vpop.trf.xlu0
          %v1396 = vpop.trf.xlu0
          %v1397 = vpop.trf.xlu0
          %1398 = vxpose.xlu0.b32.start [1/16] %v1318, 128
          %1399 = vxpose.xlu0.b32.cont [2/16] %v1319, 128
          %1400 = vxpose.xlu0.b32.cont [3/16] %v1320, 128
          %1401 = vxpose.xlu0.b32.cont [4/16] %v1321, 128
          %1402 = vxpose.xlu0.b32.cont [5/16] %v1322, 128
          %1403 = vxpose.xlu0.b32.cont [6/16] %v1323, 128
          %1404 = vxpose.xlu0.b32.cont [7/16] %v1324, 128
          %1405 = vxpose.xlu0.b32.cont [8/16] %v1325, 128
          %1406 = vxpose.xlu0.b32.cont [9/16] %v1326, 128
          %1407 = vxpose.xlu0.b32.cont [10/16] %v1327, 128
          %1408 = vxpose.xlu0.b32.cont [11/16] %v1328, 128
          %1409 = vxpose.xlu0.b32.cont [12/16] %v1329, 128
          %1410 = vxpose.xlu0.b32.cont [13/16] %v1330, 128
          %1411 = vxpose.xlu0.b32.cont [14/16] %v1331, 128
          %1412 = vxpose.xlu0.b32.cont [15/16] %v1332, 128
          %1413 = vxpose.xlu0.b32.end [16/16] %v1333, 128
          %v1414 = vpop.trf.xlu0
          %v1415 = vpop.trf.xlu0
          %v1416 = vpop.trf.xlu0
          %v1417 = vpop.trf.xlu0
          %v1418 = vpop.trf.xlu0
          %v1419 = vpop.trf.xlu0
          %v1420 = vpop.trf.xlu0
          %v1421 = vpop.trf.xlu0
          %v1422 = vpop.trf.xlu0
          %v1423 = vpop.trf.xlu0
          %v1424 = vpop.trf.xlu0
          %v1425 = vpop.trf.xlu0
          %v1426 = vpop.trf.xlu0
          %v1427 = vpop.trf.xlu0
          %v1428 = vpop.trf.xlu0
          %v1429 = vpop.trf.xlu0
          %1430 = vxpose.xlu0.b32.start [1/16] %v1334, 128
          %1431 = vxpose.xlu0.b32.cont [2/16] %v1335, 128
          %1432 = vxpose.xlu0.b32.cont [3/16] %v1336, 128
          %1433 = vxpose.xlu0.b32.cont [4/16] %v1337, 128
          %1434 = vxpose.xlu0.b32.cont [5/16] %v1338, 128
          %1435 = vxpose.xlu0.b32.cont [6/16] %v1339, 128
          %1436 = vxpose.xlu0.b32.cont [7/16] %v1340, 128
          %1437 = vxpose.xlu0.b32.cont [8/16] %v1341, 128
          %1438 = vxpose.xlu0.b32.cont [9/16] %v1342, 128
          %1439 = vxpose.xlu0.b32.cont [10/16] %v1343, 128
          %1440 = vxpose.xlu0.b32.cont [11/16] %v1344, 128
          %1441 = vxpose.xlu0.b32.cont [12/16] %v1345, 128
          %1442 = vxpose.xlu0.b32.cont [13/16] %v1346, 128
          %1443 = vxpose.xlu0.b32.cont [14/16] %v1347, 128
          %1444 = vxpose.xlu0.b32.cont [15/16] %v1348, 128
          %1445 = vxpose.xlu0.b32.end [16/16] %v1349, 128
          %v1446 = vpop.trf.xlu0
          %v1447 = vpop.trf.xlu0
          %v1448 = vpop.trf.xlu0
          %v1449 = vpop.trf.xlu0
          %v1450 = vpop.trf.xlu0
          %v1451 = vpop.trf.xlu0
          %v1452 = vpop.trf.xlu0
          %v1453 = vpop.trf.xlu0
          %v1454 = vpop.trf.xlu0
          %v1455 = vpop.trf.xlu0
          %v1456 = vpop.trf.xlu0
          %v1457 = vpop.trf.xlu0
          %v1458 = vpop.trf.xlu0
          %v1459 = vpop.trf.xlu0
          %v1460 = vpop.trf.xlu0
          %v1461 = vpop.trf.xlu0
          %1462 = vxpose.xlu0.b32.start [1/16] %v1350, 128
          %1463 = vxpose.xlu0.b32.cont [2/16] %v1351, 128
          %1464 = vxpose.xlu0.b32.cont [3/16] %v1352, 128
          %1465 = vxpose.xlu0.b32.cont [4/16] %v1353, 128
          %1466 = vxpose.xlu0.b32.cont [5/16] %v1354, 128
          %1467 = vxpose.xlu0.b32.cont [6/16] %v1355, 128
          %1468 = vxpose.xlu0.b32.cont [7/16] %v1356, 128
          %1469 = vxpose.xlu0.b32.cont [8/16] %v1357, 128
          %1470 = vxpose.xlu0.b32.cont [9/16] %v1358, 128
          %1471 = vxpose.xlu0.b32.cont [10/16] %v1359, 128
          %1472 = vxpose.xlu0.b32.cont [11/16] %v1360, 128
          %1473 = vxpose.xlu0.b32.cont [12/16] %v1361, 128
          %1474 = vxpose.xlu0.b32.cont [13/16] %v1362, 128
          %1475 = vxpose.xlu0.b32.cont [14/16] %v1363, 128
          %1476 = vxpose.xlu0.b32.cont [15/16] %v1364, 128
          %1477 = vxpose.xlu0.b32.end [16/16] %v1365, 128
          %v1478 = vpop.trf.xlu0
          %v1479 = vpop.trf.xlu0
          %v1480 = vpop.trf.xlu0
          %v1481 = vpop.trf.xlu0
          %v1482 = vpop.trf.xlu0
          %v1483 = vpop.trf.xlu0
          %v1484 = vpop.trf.xlu0
          %v1485 = vpop.trf.xlu0
          %v1486 = vpop.trf.xlu0
          %v1487 = vpop.trf.xlu0
          %v1488 = vpop.trf.xlu0
          %v1489 = vpop.trf.xlu0
          %v1490 = vpop.trf.xlu0
          %v1491 = vpop.trf.xlu0
          %v1492 = vpop.trf.xlu0
          %v1493 = vpop.trf.xlu0
          %v1494 = vsel %vm881, %v1382, 0.0
          %v1495 = vsel %vm881, %v1414, 0.0
          %v1496 = vsel %vm881, %v1446, 0.0
          %v1497 = vsel %vm881, %v1478, 0.0
          %s1498 = smul.u32 %s1301, 4
          %s1499 = smul.addr %s1498, 8
          %s1500 = scalar_lea.vmem [#allocation3], %s1499
          %1501 = vst [vmem:[%s1500] sm:$0xff] %v1494
          %1502 = vst [vmem:[%s1500 + $0x8] sm:$0xff] %v1495
          %1503 = vst [vmem:[%s1500 + $0x10] sm:$0xff] %v1496
          %1504 = vst [vmem:[%s1500 + $0x18] sm:$0xff] %v1497
          %s1505 = sadd.s32 %s686, 4
          %v1506 = vld [vmem:[%s688 + $0x4] sm:$0xff]
          %v1507 = vld [vmem:[%s688 + $0x14] sm:$0xff]
          %v1508 = vld [vmem:[%s688 + $0x24] sm:$0xff]
          %v1509 = vld [vmem:[%s688 + $0x34] sm:$0xff]
          %v1510 = vld [vmem:[%s688 + $0x44] sm:$0xff]
          %v1511 = vld [vmem:[%s688 + $0x54] sm:$0xff]
          %v1512 = vld [vmem:[%s688 + $0x64] sm:$0xff]
          %v1513 = vld [vmem:[%s688 + $0x74] sm:$0xff]
          %v1514 = vld [vmem:[%s688 + $0xc4] sm:$0xff]
          %v1515 = vld [vmem:[%s688 + $0xd4] sm:$0xff]
          %v1516 = vld [vmem:[%s688 + $0xe4] sm:$0xff]
          %v1517 = vld [vmem:[%s688 + $0xf4] sm:$0xff]
          %v1518 = vld [vmem:[%s688 + $0x104] sm:$0xff]
          %v1519 = vld [vmem:[%s688 + $0x114] sm:$0xff]
          %v1520 = vld [vmem:[%s688 + $0x124] sm:$0xff]
          %v1521 = vld [vmem:[%s688 + $0x134] sm:$0xff]
          %v1522 = vld [vmem:[%s688 + $0x184] sm:$0xff]
          %v1523 = vld [vmem:[%s688 + $0x194] sm:$0xff]
          %v1524 = vld [vmem:[%s688 + $0x1a4] sm:$0xff]
          %v1525 = vld [vmem:[%s688 + $0x1b4] sm:$0xff]
          %v1526 = vld [vmem:[%s688 + $0x1c4] sm:$0xff]
          %v1527 = vld [vmem:[%s688 + $0x1d4] sm:$0xff]
          %v1528 = vld [vmem:[%s688 + $0x1e4] sm:$0xff]
          %v1529 = vld [vmem:[%s688 + $0x1f4] sm:$0xff]
          %v1530 = vld [vmem:[%s688 + $0x244] sm:$0xff]
          %v1531 = vld [vmem:[%s688 + $0x254] sm:$0xff]
          %v1532 = vld [vmem:[%s688 + $0x264] sm:$0xff]
          %v1533 = vld [vmem:[%s688 + $0x274] sm:$0xff]
          %v1534 = vld [vmem:[%s688 + $0x284] sm:$0xff]
          %v1535 = vld [vmem:[%s688 + $0x294] sm:$0xff]
          %v1536 = vld [vmem:[%s688 + $0x2a4] sm:$0xff]
          %v1537 = vld [vmem:[%s688 + $0x2b4] sm:$0xff]
          %v1538 = vld [vmem:[%s688 + $0x304] sm:$0xff]
          %v1539 = vld [vmem:[%s688 + $0x314] sm:$0xff]
          %v1540 = vld [vmem:[%s688 + $0x324] sm:$0xff]
          %v1541 = vld [vmem:[%s688 + $0x334] sm:$0xff]
          %v1542 = vld [vmem:[%s688 + $0x344] sm:$0xff]
          %v1543 = vld [vmem:[%s688 + $0x354] sm:$0xff]
          %v1544 = vld [vmem:[%s688 + $0x364] sm:$0xff]
          %v1545 = vld [vmem:[%s688 + $0x374] sm:$0xff]
          %v1546 = vld [vmem:[%s688 + $0x3c4] sm:$0xff]
          %v1547 = vld [vmem:[%s688 + $0x3d4] sm:$0xff]
          %v1548 = vld [vmem:[%s688 + $0x3e4] sm:$0xff]
          %v1549 = vld [vmem:[%s688 + $0x3f4] sm:$0xff]
          %v1550 = vld [vmem:[%s688 + $0x404] sm:$0xff]
          %v1551 = vld [vmem:[%s688 + $0x414] sm:$0xff]
          %v1552 = vld [vmem:[%s688 + $0x424] sm:$0xff]
          %v1553 = vld [vmem:[%s688 + $0x434] sm:$0xff]
          %v1554 = vld [vmem:[%s688 + $0x484] sm:$0xff]
          %v1555 = vld [vmem:[%s688 + $0x494] sm:$0xff]
          %v1556 = vld [vmem:[%s688 + $0x4a4] sm:$0xff]
          %v1557 = vld [vmem:[%s688 + $0x4b4] sm:$0xff]
          %v1558 = vld [vmem:[%s688 + $0x4c4] sm:$0xff]
          %v1559 = vld [vmem:[%s688 + $0x4d4] sm:$0xff]
          %v1560 = vld [vmem:[%s688 + $0x4e4] sm:$0xff]
          %v1561 = vld [vmem:[%s688 + $0x4f4] sm:$0xff]
          %v1562 = vld [vmem:[%s688 + $0x544] sm:$0xff]
          %v1563 = vld [vmem:[%s688 + $0x554] sm:$0xff]
          %v1564 = vld [vmem:[%s688 + $0x564] sm:$0xff]
          %v1565 = vld [vmem:[%s688 + $0x574] sm:$0xff]
          %v1566 = vld [vmem:[%s688 + $0x584] sm:$0xff]
          %v1567 = vld [vmem:[%s688 + $0x594] sm:$0xff]
          %v1568 = vld [vmem:[%s688 + $0x5a4] sm:$0xff]
          %v1569 = vld [vmem:[%s688 + $0x5b4] sm:$0xff]
          %1570 = vxpose.xlu0.b32.start [1/16] %v1506, 128
          %1571 = vxpose.xlu0.b32.cont [2/16] %v1507, 128
          %1572 = vxpose.xlu0.b32.cont [3/16] %v1508, 128
          %1573 = vxpose.xlu0.b32.cont [4/16] %v1509, 128
          %1574 = vxpose.xlu0.b32.cont [5/16] %v1510, 128
          %1575 = vxpose.xlu0.b32.cont [6/16] %v1511, 128
          %1576 = vxpose.xlu0.b32.cont [7/16] %v1512, 128
          %1577 = vxpose.xlu0.b32.cont [8/16] %v1513, 128
          %1578 = vxpose.xlu0.b32.cont [9/16] %v1514, 128
          %1579 = vxpose.xlu0.b32.cont [10/16] %v1515, 128
          %1580 = vxpose.xlu0.b32.cont [11/16] %v1516, 128
          %1581 = vxpose.xlu0.b32.cont [12/16] %v1517, 128
          %1582 = vxpose.xlu0.b32.cont [13/16] %v1518, 128
          %1583 = vxpose.xlu0.b32.cont [14/16] %v1519, 128
          %1584 = vxpose.xlu0.b32.cont [15/16] %v1520, 128
          %1585 = vxpose.xlu0.b32.end [16/16] %v1521, 128
          %v1586 = vpop.trf.xlu0
          %v1587 = vpop.trf.xlu0
          %v1588 = vpop.trf.xlu0
          %v1589 = vpop.trf.xlu0
          %v1590 = vpop.trf.xlu0
          %v1591 = vpop.trf.xlu0
          %v1592 = vpop.trf.xlu0
          %v1593 = vpop.trf.xlu0
          %v1594 = vpop.trf.xlu0
          %v1595 = vpop.trf.xlu0
          %v1596 = vpop.trf.xlu0
          %v1597 = vpop.trf.xlu0
          %v1598 = vpop.trf.xlu0
          %v1599 = vpop.trf.xlu0
          %v1600 = vpop.trf.xlu0
          %v1601 = vpop.trf.xlu0
          %1602 = vxpose.xlu0.b32.start [1/16] %v1522, 128
          %1603 = vxpose.xlu0.b32.cont [2/16] %v1523, 128
          %1604 = vxpose.xlu0.b32.cont [3/16] %v1524, 128
          %1605 = vxpose.xlu0.b32.cont [4/16] %v1525, 128
          %1606 = vxpose.xlu0.b32.cont [5/16] %v1526, 128
          %1607 = vxpose.xlu0.b32.cont [6/16] %v1527, 128
          %1608 = vxpose.xlu0.b32.cont [7/16] %v1528, 128
          %1609 = vxpose.xlu0.b32.cont [8/16] %v1529, 128
          %1610 = vxpose.xlu0.b32.cont [9/16] %v1530, 128
          %1611 = vxpose.xlu0.b32.cont [10/16] %v1531, 128
          %1612 = vxpose.xlu0.b32.cont [11/16] %v1532, 128
          %1613 = vxpose.xlu0.b32.cont [12/16] %v1533, 128
          %1614 = vxpose.xlu0.b32.cont [13/16] %v1534, 128
          %1615 = vxpose.xlu0.b32.cont [14/16] %v1535, 128
          %1616 = vxpose.xlu0.b32.cont [15/16] %v1536, 128
          %1617 = vxpose.xlu0.b32.end [16/16] %v1537, 128
          %v1618 = vpop.trf.xlu0
          %v1619 = vpop.trf.xlu0
          %v1620 = vpop.trf.xlu0
          %v1621 = vpop.trf.xlu0
          %v1622 = vpop.trf.xlu0
          %v1623 = vpop.trf.xlu0
          %v1624 = vpop.trf.xlu0
          %v1625 = vpop.trf.xlu0
          %v1626 = vpop.trf.xlu0
          %v1627 = vpop.trf.xlu0
          %v1628 = vpop.trf.xlu0
          %v1629 = vpop.trf.xlu0
          %v1630 = vpop.trf.xlu0
          %v1631 = vpop.trf.xlu0
          %v1632 = vpop.trf.xlu0
          %v1633 = vpop.trf.xlu0
          %1634 = vxpose.xlu0.b32.start [1/16] %v1538, 128
          %1635 = vxpose.xlu0.b32.cont [2/16] %v1539, 128
          %1636 = vxpose.xlu0.b32.cont [3/16] %v1540, 128
          %1637 = vxpose.xlu0.b32.cont [4/16] %v1541, 128
          %1638 = vxpose.xlu0.b32.cont [5/16] %v1542, 128
          %1639 = vxpose.xlu0.b32.cont [6/16] %v1543, 128
          %1640 = vxpose.xlu0.b32.cont [7/16] %v1544, 128
          %1641 = vxpose.xlu0.b32.cont [8/16] %v1545, 128
          %1642 = vxpose.xlu0.b32.cont [9/16] %v1546, 128
          %1643 = vxpose.xlu0.b32.cont [10/16] %v1547, 128
          %1644 = vxpose.xlu0.b32.cont [11/16] %v1548, 128
          %1645 = vxpose.xlu0.b32.cont [12/16] %v1549, 128
          %1646 = vxpose.xlu0.b32.cont [13/16] %v1550, 128
          %1647 = vxpose.xlu0.b32.cont [14/16] %v1551, 128
          %1648 = vxpose.xlu0.b32.cont [15/16] %v1552, 128
          %1649 = vxpose.xlu0.b32.end [16/16] %v1553, 128
          %v1650 = vpop.trf.xlu0
          %v1651 = vpop.trf.xlu0
          %v1652 = vpop.trf.xlu0
          %v1653 = vpop.trf.xlu0
          %v1654 = vpop.trf.xlu0
          %v1655 = vpop.trf.xlu0
          %v1656 = vpop.trf.xlu0
          %v1657 = vpop.trf.xlu0
          %v1658 = vpop.trf.xlu0
          %v1659 = vpop.trf.xlu0
          %v1660 = vpop.trf.xlu0
          %v1661 = vpop.trf.xlu0
          %v1662 = vpop.trf.xlu0
          %v1663 = vpop.trf.xlu0
          %v1664 = vpop.trf.xlu0
          %v1665 = vpop.trf.xlu0
          %1666 = vxpose.xlu0.b32.start [1/16] %v1554, 128
          %1667 = vxpose.xlu0.b32.cont [2/16] %v1555, 128
          %1668 = vxpose.xlu0.b32.cont [3/16] %v1556, 128
          %1669 = vxpose.xlu0.b32.cont [4/16] %v1557, 128
          %1670 = vxpose.xlu0.b32.cont [5/16] %v1558, 128
          %1671 = vxpose.xlu0.b32.cont [6/16] %v1559, 128
          %1672 = vxpose.xlu0.b32.cont [7/16] %v1560, 128
          %1673 = vxpose.xlu0.b32.cont [8/16] %v1561, 128
          %1674 = vxpose.xlu0.b32.cont [9/16] %v1562, 128
          %1675 = vxpose.xlu0.b32.cont [10/16] %v1563, 128
          %1676 = vxpose.xlu0.b32.cont [11/16] %v1564, 128
          %1677 = vxpose.xlu0.b32.cont [12/16] %v1565, 128
          %1678 = vxpose.xlu0.b32.cont [13/16] %v1566, 128
          %1679 = vxpose.xlu0.b32.cont [14/16] %v1567, 128
          %1680 = vxpose.xlu0.b32.cont [15/16] %v1568, 128
          %1681 = vxpose.xlu0.b32.end [16/16] %v1569, 128
          %v1682 = vpop.trf.xlu0
          %v1683 = vpop.trf.xlu0
          %v1684 = vpop.trf.xlu0
          %v1685 = vpop.trf.xlu0
          %v1686 = vpop.trf.xlu0
          %v1687 = vpop.trf.xlu0
          %v1688 = vpop.trf.xlu0
          %v1689 = vpop.trf.xlu0
          %v1690 = vpop.trf.xlu0
          %v1691 = vpop.trf.xlu0
          %v1692 = vpop.trf.xlu0
          %v1693 = vpop.trf.xlu0
          %v1694 = vpop.trf.xlu0
          %v1695 = vpop.trf.xlu0
          %v1696 = vpop.trf.xlu0
          %v1697 = vpop.trf.xlu0
          %v1698 = vsel %vm881, %v1586, 0.0
          %v1699 = vsel %vm881, %v1618, 0.0
          %v1700 = vsel %vm881, %v1650, 0.0
          %v1701 = vsel %vm881, %v1682, 0.0
          %s1702 = smul.u32 %s1505, 4
          %s1703 = smul.addr %s1702, 8
          %s1704 = scalar_lea.vmem [#allocation3], %s1703
          %1705 = vst [vmem:[%s1704] sm:$0xff] %v1698
          %1706 = vst [vmem:[%s1704 + $0x8] sm:$0xff] %v1699
          %1707 = vst [vmem:[%s1704 + $0x10] sm:$0xff] %v1700
          %1708 = vst [vmem:[%s1704 + $0x18] sm:$0xff] %v1701
          %s1709 = smul.u32 %s681, 5
          %s1710 = sadd.s32 %s1709, 1
          %s1711 = smul.u32 %s1710, 5
          %s1712 = sadd.s32 16, %s687
          %s1713 = scalar_lea.vmem [#allocation2], %s1712
          %v1714 = vld [vmem:[%s1713] sm:$0xff]
          %v1715 = vld [vmem:[%s1713 + $0x10] sm:$0xff]
          %v1716 = vld [vmem:[%s1713 + $0x20] sm:$0xff]
          %v1717 = vld [vmem:[%s1713 + $0x30] sm:$0xff]
          %v1718 = vld [vmem:[%s1713 + $0x40] sm:$0xff]
          %v1719 = vld [vmem:[%s1713 + $0x50] sm:$0xff]
          %v1720 = vld [vmem:[%s1713 + $0x60] sm:$0xff]
          %v1721 = vld [vmem:[%s1713 + $0x70] sm:$0xff]
          %v1722 = vld [vmem:[%s1713 + $0xc0] sm:$0xff]
          %v1723 = vld [vmem:[%s1713 + $0xd0] sm:$0xff]
          %v1724 = vld [vmem:[%s1713 + $0xe0] sm:$0xff]
          %v1725 = vld [vmem:[%s1713 + $0xf0] sm:$0xff]
          %v1726 = vld [vmem:[%s1713 + $0x100] sm:$0xff]
          %v1727 = vld [vmem:[%s1713 + $0x110] sm:$0xff]
          %v1728 = vld [vmem:[%s1713 + $0x120] sm:$0xff]
          %v1729 = vld [vmem:[%s1713 + $0x130] sm:$0xff]
          %v1730 = vld [vmem:[%s1713 + $0x180] sm:$0xff]
          %v1731 = vld [vmem:[%s1713 + $0x190] sm:$0xff]
          %v1732 = vld [vmem:[%s1713 + $0x1a0] sm:$0xff]
          %v1733 = vld [vmem:[%s1713 + $0x1b0] sm:$0xff]
          %v1734 = vld [vmem:[%s1713 + $0x1c0] sm:$0xff]
          %v1735 = vld [vmem:[%s1713 + $0x1d0] sm:$0xff]
          %v1736 = vld [vmem:[%s1713 + $0x1e0] sm:$0xff]
          %v1737 = vld [vmem:[%s1713 + $0x1f0] sm:$0xff]
          %v1738 = vld [vmem:[%s1713 + $0x240] sm:$0xff]
          %v1739 = vld [vmem:[%s1713 + $0x250] sm:$0xff]
          %v1740 = vld [vmem:[%s1713 + $0x260] sm:$0xff]
          %v1741 = vld [vmem:[%s1713 + $0x270] sm:$0xff]
          %v1742 = vld [vmem:[%s1713 + $0x280] sm:$0xff]
          %v1743 = vld [vmem:[%s1713 + $0x290] sm:$0xff]
          %v1744 = vld [vmem:[%s1713 + $0x2a0] sm:$0xff]
          %v1745 = vld [vmem:[%s1713 + $0x2b0] sm:$0xff]
          %v1746 = vld [vmem:[%s1713 + $0x300] sm:$0xff]
          %v1747 = vld [vmem:[%s1713 + $0x310] sm:$0xff]
          %v1748 = vld [vmem:[%s1713 + $0x320] sm:$0xff]
          %v1749 = vld [vmem:[%s1713 + $0x330] sm:$0xff]
          %v1750 = vld [vmem:[%s1713 + $0x340] sm:$0xff]
          %v1751 = vld [vmem:[%s1713 + $0x350] sm:$0xff]
          %v1752 = vld [vmem:[%s1713 + $0x360] sm:$0xff]
          %v1753 = vld [vmem:[%s1713 + $0x370] sm:$0xff]
          %v1754 = vld [vmem:[%s1713 + $0x3c0] sm:$0xff]
          %v1755 = vld [vmem:[%s1713 + $0x3d0] sm:$0xff]
          %v1756 = vld [vmem:[%s1713 + $0x3e0] sm:$0xff]
          %v1757 = vld [vmem:[%s1713 + $0x3f0] sm:$0xff]
          %v1758 = vld [vmem:[%s1713 + $0x400] sm:$0xff]
          %v1759 = vld [vmem:[%s1713 + $0x410] sm:$0xff]
          %v1760 = vld [vmem:[%s1713 + $0x420] sm:$0xff]
          %v1761 = vld [vmem:[%s1713 + $0x430] sm:$0xff]
          %v1762 = vld [vmem:[%s1713 + $0x480] sm:$0xff]
          %v1763 = vld [vmem:[%s1713 + $0x490] sm:$0xff]
          %v1764 = vld [vmem:[%s1713 + $0x4a0] sm:$0xff]
          %v1765 = vld [vmem:[%s1713 + $0x4b0] sm:$0xff]
          %v1766 = vld [vmem:[%s1713 + $0x4c0] sm:$0xff]
          %v1767 = vld [vmem:[%s1713 + $0x4d0] sm:$0xff]
          %v1768 = vld [vmem:[%s1713 + $0x4e0] sm:$0xff]
          %v1769 = vld [vmem:[%s1713 + $0x4f0] sm:$0xff]
          %v1770 = vld [vmem:[%s1713 + $0x540] sm:$0xff]
          %v1771 = vld [vmem:[%s1713 + $0x550] sm:$0xff]
          %v1772 = vld [vmem:[%s1713 + $0x560] sm:$0xff]
          %v1773 = vld [vmem:[%s1713 + $0x570] sm:$0xff]
          %v1774 = vld [vmem:[%s1713 + $0x580] sm:$0xff]
          %v1775 = vld [vmem:[%s1713 + $0x590] sm:$0xff]
          %v1776 = vld [vmem:[%s1713 + $0x5a0] sm:$0xff]
          %v1777 = vld [vmem:[%s1713 + $0x5b0] sm:$0xff]
          %1778 = vxpose.xlu0.b32.start [1/16] %v1714, 128
          %1779 = vxpose.xlu0.b32.cont [2/16] %v1715, 128
          %1780 = vxpose.xlu0.b32.cont [3/16] %v1716, 128
          %1781 = vxpose.xlu0.b32.cont [4/16] %v1717, 128
          %1782 = vxpose.xlu0.b32.cont [5/16] %v1718, 128
          %1783 = vxpose.xlu0.b32.cont [6/16] %v1719, 128
          %1784 = vxpose.xlu0.b32.cont [7/16] %v1720, 128
          %1785 = vxpose.xlu0.b32.cont [8/16] %v1721, 128
          %1786 = vxpose.xlu0.b32.cont [9/16] %v1722, 128
          %1787 = vxpose.xlu0.b32.cont [10/16] %v1723, 128
          %1788 = vxpose.xlu0.b32.cont [11/16] %v1724, 128
          %1789 = vxpose.xlu0.b32.cont [12/16] %v1725, 128
          %1790 = vxpose.xlu0.b32.cont [13/16] %v1726, 128
          %1791 = vxpose.xlu0.b32.cont [14/16] %v1727, 128
          %1792 = vxpose.xlu0.b32.cont [15/16] %v1728, 128
          %1793 = vxpose.xlu0.b32.end [16/16] %v1729, 128
          %v1794 = vpop.trf.xlu0
          %v1795 = vpop.trf.xlu0
          %v1796 = vpop.trf.xlu0
          %v1797 = vpop.trf.xlu0
          %v1798 = vpop.trf.xlu0
          %v1799 = vpop.trf.xlu0
          %v1800 = vpop.trf.xlu0
          %v1801 = vpop.trf.xlu0
          %v1802 = vpop.trf.xlu0
          %v1803 = vpop.trf.xlu0
          %v1804 = vpop.trf.xlu0
          %v1805 = vpop.trf.xlu0
          %v1806 = vpop.trf.xlu0
          %v1807 = vpop.trf.xlu0
          %v1808 = vpop.trf.xlu0
          %v1809 = vpop.trf.xlu0
          %1810 = vxpose.xlu0.b32.start [1/16] %v1730, 128
          %1811 = vxpose.xlu0.b32.cont [2/16] %v1731, 128
          %1812 = vxpose.xlu0.b32.cont [3/16] %v1732, 128
          %1813 = vxpose.xlu0.b32.cont [4/16] %v1733, 128
          %1814 = vxpose.xlu0.b32.cont [5/16] %v1734, 128
          %1815 = vxpose.xlu0.b32.cont [6/16] %v1735, 128
          %1816 = vxpose.xlu0.b32.cont [7/16] %v1736, 128
          %1817 = vxpose.xlu0.b32.cont [8/16] %v1737, 128
          %1818 = vxpose.xlu0.b32.cont [9/16] %v1738, 128
          %1819 = vxpose.xlu0.b32.cont [10/16] %v1739, 128
          %1820 = vxpose.xlu0.b32.cont [11/16] %v1740, 128
          %1821 = vxpose.xlu0.b32.cont [12/16] %v1741, 128
          %1822 = vxpose.xlu0.b32.cont [13/16] %v1742, 128
          %1823 = vxpose.xlu0.b32.cont [14/16] %v1743, 128
          %1824 = vxpose.xlu0.b32.cont [15/16] %v1744, 128
          %1825 = vxpose.xlu0.b32.end [16/16] %v1745, 128
          %v1826 = vpop.trf.xlu0
          %v1827 = vpop.trf.xlu0
          %v1828 = vpop.trf.xlu0
          %v1829 = vpop.trf.xlu0
          %v1830 = vpop.trf.xlu0
          %v1831 = vpop.trf.xlu0
          %v1832 = vpop.trf.xlu0
          %v1833 = vpop.trf.xlu0
          %v1834 = vpop.trf.xlu0
          %v1835 = vpop.trf.xlu0
          %v1836 = vpop.trf.xlu0
          %v1837 = vpop.trf.xlu0
          %v1838 = vpop.trf.xlu0
          %v1839 = vpop.trf.xlu0
          %v1840 = vpop.trf.xlu0
          %v1841 = vpop.trf.xlu0
          %1842 = vxpose.xlu0.b32.start [1/16] %v1746, 128
          %1843 = vxpose.xlu0.b32.cont [2/16] %v1747, 128
          %1844 = vxpose.xlu0.b32.cont [3/16] %v1748, 128
          %1845 = vxpose.xlu0.b32.cont [4/16] %v1749, 128
          %1846 = vxpose.xlu0.b32.cont [5/16] %v1750, 128
          %1847 = vxpose.xlu0.b32.cont [6/16] %v1751, 128
          %1848 = vxpose.xlu0.b32.cont [7/16] %v1752, 128
          %1849 = vxpose.xlu0.b32.cont [8/16] %v1753, 128
          %1850 = vxpose.xlu0.b32.cont [9/16] %v1754, 128
          %1851 = vxpose.xlu0.b32.cont [10/16] %v1755, 128
          %1852 = vxpose.xlu0.b32.cont [11/16] %v1756, 128
          %1853 = vxpose.xlu0.b32.cont [12/16] %v1757, 128
          %1854 = vxpose.xlu0.b32.cont [13/16] %v1758, 128
          %1855 = vxpose.xlu0.b32.cont [14/16] %v1759, 128
          %1856 = vxpose.xlu0.b32.cont [15/16] %v1760, 128
          %1857 = vxpose.xlu0.b32.end [16/16] %v1761, 128
          %v1858 = vpop.trf.xlu0
          %v1859 = vpop.trf.xlu0
          %v1860 = vpop.trf.xlu0
          %v1861 = vpop.trf.xlu0
          %v1862 = vpop.trf.xlu0
          %v1863 = vpop.trf.xlu0
          %v1864 = vpop.trf.xlu0
          %v1865 = vpop.trf.xlu0
          %v1866 = vpop.trf.xlu0
          %v1867 = vpop.trf.xlu0
          %v1868 = vpop.trf.xlu0
          %v1869 = vpop.trf.xlu0
          %v1870 = vpop.trf.xlu0
          %v1871 = vpop.trf.xlu0
          %v1872 = vpop.trf.xlu0
          %v1873 = vpop.trf.xlu0
          %1874 = vxpose.xlu0.b32.start [1/16] %v1762, 128
          %1875 = vxpose.xlu0.b32.cont [2/16] %v1763, 128
          %1876 = vxpose.xlu0.b32.cont [3/16] %v1764, 128
          %1877 = vxpose.xlu0.b32.cont [4/16] %v1765, 128
          %1878 = vxpose.xlu0.b32.cont [5/16] %v1766, 128
          %1879 = vxpose.xlu0.b32.cont [6/16] %v1767, 128
          %1880 = vxpose.xlu0.b32.cont [7/16] %v1768, 128
          %1881 = vxpose.xlu0.b32.cont [8/16] %v1769, 128
          %1882 = vxpose.xlu0.b32.cont [9/16] %v1770, 128
          %1883 = vxpose.xlu0.b32.cont [10/16] %v1771, 128
          %1884 = vxpose.xlu0.b32.cont [11/16] %v1772, 128
          %1885 = vxpose.xlu0.b32.cont [12/16] %v1773, 128
          %1886 = vxpose.xlu0.b32.cont [13/16] %v1774, 128
          %1887 = vxpose.xlu0.b32.cont [14/16] %v1775, 128
          %1888 = vxpose.xlu0.b32.cont [15/16] %v1776, 128
          %1889 = vxpose.xlu0.b32.end [16/16] %v1777, 128
          %v1890 = vpop.trf.xlu0
          %v1891 = vpop.trf.xlu0
          %v1892 = vpop.trf.xlu0
          %v1893 = vpop.trf.xlu0
          %v1894 = vpop.trf.xlu0
          %v1895 = vpop.trf.xlu0
          %v1896 = vpop.trf.xlu0
          %v1897 = vpop.trf.xlu0
          %v1898 = vpop.trf.xlu0
          %v1899 = vpop.trf.xlu0
          %v1900 = vpop.trf.xlu0
          %v1901 = vpop.trf.xlu0
          %v1902 = vpop.trf.xlu0
          %v1903 = vpop.trf.xlu0
          %v1904 = vpop.trf.xlu0
          %v1905 = vpop.trf.xlu0
          %v1906 = vsel %vm881, %v1794, 0.0
          %v1907 = vsel %vm881, %v1826, 0.0
          %v1908 = vsel %vm881, %v1858, 0.0
          %v1909 = vsel %vm881, %v1890, 0.0
          %s1910 = smul.u32 %s1711, 4
          %s1911 = smul.addr %s1910, 8
          %s1912 = scalar_lea.vmem [#allocation3], %s1911
          %1913 = vst [vmem:[%s1912] sm:$0xff] %v1906
          %1914 = vst [vmem:[%s1912 + $0x8] sm:$0xff] %v1907
          %1915 = vst [vmem:[%s1912 + $0x10] sm:$0xff] %v1908
          %1916 = vst [vmem:[%s1912 + $0x18] sm:$0xff] %v1909
          %s1917 = sadd.s32 %s1711, 1
          %v1918 = vld [vmem:[%s1713 + $0x1] sm:$0xff]
          %v1919 = vld [vmem:[%s1713 + $0x11] sm:$0xff]
          %v1920 = vld [vmem:[%s1713 + $0x21] sm:$0xff]
          %v1921 = vld [vmem:[%s1713 + $0x31] sm:$0xff]
          %v1922 = vld [vmem:[%s1713 + $0x41] sm:$0xff]
          %v1923 = vld [vmem:[%s1713 + $0x51] sm:$0xff]
          %v1924 = vld [vmem:[%s1713 + $0x61] sm:$0xff]
          %v1925 = vld [vmem:[%s1713 + $0x71] sm:$0xff]
          %v1926 = vld [vmem:[%s1713 + $0xc1] sm:$0xff]
          %v1927 = vld [vmem:[%s1713 + $0xd1] sm:$0xff]
          %v1928 = vld [vmem:[%s1713 + $0xe1] sm:$0xff]
          %v1929 = vld [vmem:[%s1713 + $0xf1] sm:$0xff]
          %v1930 = vld [vmem:[%s1713 + $0x101] sm:$0xff]
          %v1931 = vld [vmem:[%s1713 + $0x111] sm:$0xff]
          %v1932 = vld [vmem:[%s1713 + $0x121] sm:$0xff]
          %v1933 = vld [vmem:[%s1713 + $0x131] sm:$0xff]
          %v1934 = vld [vmem:[%s1713 + $0x181] sm:$0xff]
          %v1935 = vld [vmem:[%s1713 + $0x191] sm:$0xff]
          %v1936 = vld [vmem:[%s1713 + $0x1a1] sm:$0xff]
          %v1937 = vld [vmem:[%s1713 + $0x1b1] sm:$0xff]
          %v1938 = vld [vmem:[%s1713 + $0x1c1] sm:$0xff]
          %v1939 = vld [vmem:[%s1713 + $0x1d1] sm:$0xff]
          %v1940 = vld [vmem:[%s1713 + $0x1e1] sm:$0xff]
          %v1941 = vld [vmem:[%s1713 + $0x1f1] sm:$0xff]
          %v1942 = vld [vmem:[%s1713 + $0x241] sm:$0xff]
          %v1943 = vld [vmem:[%s1713 + $0x251] sm:$0xff]
          %v1944 = vld [vmem:[%s1713 + $0x261] sm:$0xff]
          %v1945 = vld [vmem:[%s1713 + $0x271] sm:$0xff]
          %v1946 = vld [vmem:[%s1713 + $0x281] sm:$0xff]
          %v1947 = vld [vmem:[%s1713 + $0x291] sm:$0xff]
          %v1948 = vld [vmem:[%s1713 + $0x2a1] sm:$0xff]
          %v1949 = vld [vmem:[%s1713 + $0x2b1] sm:$0xff]
          %v1950 = vld [vmem:[%s1713 + $0x301] sm:$0xff]
          %v1951 = vld [vmem:[%s1713 + $0x311] sm:$0xff]
          %v1952 = vld [vmem:[%s1713 + $0x321] sm:$0xff]
          %v1953 = vld [vmem:[%s1713 + $0x331] sm:$0xff]
          %v1954 = vld [vmem:[%s1713 + $0x341] sm:$0xff]
          %v1955 = vld [vmem:[%s1713 + $0x351] sm:$0xff]
          %v1956 = vld [vmem:[%s1713 + $0x361] sm:$0xff]
          %v1957 = vld [vmem:[%s1713 + $0x371] sm:$0xff]
          %v1958 = vld [vmem:[%s1713 + $0x3c1] sm:$0xff]
          %v1959 = vld [vmem:[%s1713 + $0x3d1] sm:$0xff]
          %v1960 = vld [vmem:[%s1713 + $0x3e1] sm:$0xff]
          %v1961 = vld [vmem:[%s1713 + $0x3f1] sm:$0xff]
          %v1962 = vld [vmem:[%s1713 + $0x401] sm:$0xff]
          %v1963 = vld [vmem:[%s1713 + $0x411] sm:$0xff]
          %v1964 = vld [vmem:[%s1713 + $0x421] sm:$0xff]
          %v1965 = vld [vmem:[%s1713 + $0x431] sm:$0xff]
          %v1966 = vld [vmem:[%s1713 + $0x481] sm:$0xff]
          %v1967 = vld [vmem:[%s1713 + $0x491] sm:$0xff]
          %v1968 = vld [vmem:[%s1713 + $0x4a1] sm:$0xff]
          %v1969 = vld [vmem:[%s1713 + $0x4b1] sm:$0xff]
          %v1970 = vld [vmem:[%s1713 + $0x4c1] sm:$0xff]
          %v1971 = vld [vmem:[%s1713 + $0x4d1] sm:$0xff]
          %v1972 = vld [vmem:[%s1713 + $0x4e1] sm:$0xff]
          %v1973 = vld [vmem:[%s1713 + $0x4f1] sm:$0xff]
          %v1974 = vld [vmem:[%s1713 + $0x541] sm:$0xff]
          %v1975 = vld [vmem:[%s1713 + $0x551] sm:$0xff]
          %v1976 = vld [vmem:[%s1713 + $0x561] sm:$0xff]
          %v1977 = vld [vmem:[%s1713 + $0x571] sm:$0xff]
          %v1978 = vld [vmem:[%s1713 + $0x581] sm:$0xff]
          %v1979 = vld [vmem:[%s1713 + $0x591] sm:$0xff]
          %v1980 = vld [vmem:[%s1713 + $0x5a1] sm:$0xff]
          %v1981 = vld [vmem:[%s1713 + $0x5b1] sm:$0xff]
          %1982 = vxpose.xlu0.b32.start [1/16] %v1918, 128
          %1983 = vxpose.xlu0.b32.cont [2/16] %v1919, 128
          %1984 = vxpose.xlu0.b32.cont [3/16] %v1920, 128
          %1985 = vxpose.xlu0.b32.cont [4/16] %v1921, 128
          %1986 = vxpose.xlu0.b32.cont [5/16] %v1922, 128
          %1987 = vxpose.xlu0.b32.cont [6/16] %v1923, 128
          %1988 = vxpose.xlu0.b32.cont [7/16] %v1924, 128
          %1989 = vxpose.xlu0.b32.cont [8/16] %v1925, 128
          %1990 = vxpose.xlu0.b32.cont [9/16] %v1926, 128
          %1991 = vxpose.xlu0.b32.cont [10/16] %v1927, 128
          %1992 = vxpose.xlu0.b32.cont [11/16] %v1928, 128
          %1993 = vxpose.xlu0.b32.cont [12/16] %v1929, 128
          %1994 = vxpose.xlu0.b32.cont [13/16] %v1930, 128
          %1995 = vxpose.xlu0.b32.cont [14/16] %v1931, 128
          %1996 = vxpose.xlu0.b32.cont [15/16] %v1932, 128
          %1997 = vxpose.xlu0.b32.end [16/16] %v1933, 128
          %v1998 = vpop.trf.xlu0
          %v1999 = vpop.trf.xlu0
          %v2000 = vpop.trf.xlu0
          %v2001 = vpop.trf.xlu0
          %v2002 = vpop.trf.xlu0
          %v2003 = vpop.trf.xlu0
          %v2004 = vpop.trf.xlu0
          %v2005 = vpop.trf.xlu0
          %v2006 = vpop.trf.xlu0
          %v2007 = vpop.trf.xlu0
          %v2008 = vpop.trf.xlu0
          %v2009 = vpop.trf.xlu0
          %v2010 = vpop.trf.xlu0
          %v2011 = vpop.trf.xlu0
          %v2012 = vpop.trf.xlu0
          %v2013 = vpop.trf.xlu0
          %2014 = vxpose.xlu0.b32.start [1/16] %v1934, 128
          %2015 = vxpose.xlu0.b32.cont [2/16] %v1935, 128
          %2016 = vxpose.xlu0.b32.cont [3/16] %v1936, 128
          %2017 = vxpose.xlu0.b32.cont [4/16] %v1937, 128
          %2018 = vxpose.xlu0.b32.cont [5/16] %v1938, 128
          %2019 = vxpose.xlu0.b32.cont [6/16] %v1939, 128
          %2020 = vxpose.xlu0.b32.cont [7/16] %v1940, 128
          %2021 = vxpose.xlu0.b32.cont [8/16] %v1941, 128
          %2022 = vxpose.xlu0.b32.cont [9/16] %v1942, 128
          %2023 = vxpose.xlu0.b32.cont [10/16] %v1943, 128
          %2024 = vxpose.xlu0.b32.cont [11/16] %v1944, 128
          %2025 = vxpose.xlu0.b32.cont [12/16] %v1945, 128
          %2026 = vxpose.xlu0.b32.cont [13/16] %v1946, 128
          %2027 = vxpose.xlu0.b32.cont [14/16] %v1947, 128
          %2028 = vxpose.xlu0.b32.cont [15/16] %v1948, 128
          %2029 = vxpose.xlu0.b32.end [16/16] %v1949, 128
          %v2030 = vpop.trf.xlu0
          %v2031 = vpop.trf.xlu0
          %v2032 = vpop.trf.xlu0
          %v2033 = vpop.trf.xlu0
          %v2034 = vpop.trf.xlu0
          %v2035 = vpop.trf.xlu0
          %v2036 = vpop.trf.xlu0
          %v2037 = vpop.trf.xlu0
          %v2038 = vpop.trf.xlu0
          %v2039 = vpop.trf.xlu0
          %v2040 = vpop.trf.xlu0
          %v2041 = vpop.trf.xlu0
          %v2042 = vpop.trf.xlu0
          %v2043 = vpop.trf.xlu0
          %v2044 = vpop.trf.xlu0
          %v2045 = vpop.trf.xlu0
          %2046 = vxpose.xlu0.b32.start [1/16] %v1950, 128
          %2047 = vxpose.xlu0.b32.cont [2/16] %v1951, 128
          %2048 = vxpose.xlu0.b32.cont [3/16] %v1952, 128
          %2049 = vxpose.xlu0.b32.cont [4/16] %v1953, 128
          %2050 = vxpose.xlu0.b32.cont [5/16] %v1954, 128
          %2051 = vxpose.xlu0.b32.cont [6/16] %v1955, 128
          %2052 = vxpose.xlu0.b32.cont [7/16] %v1956, 128
          %2053 = vxpose.xlu0.b32.cont [8/16] %v1957, 128
          %2054 = vxpose.xlu0.b32.cont [9/16] %v1958, 128
          %2055 = vxpose.xlu0.b32.cont [10/16] %v1959, 128
          %2056 = vxpose.xlu0.b32.cont [11/16] %v1960, 128
          %2057 = vxpose.xlu0.b32.cont [12/16] %v1961, 128
          %2058 = vxpose.xlu0.b32.cont [13/16] %v1962, 128
          %2059 = vxpose.xlu0.b32.cont [14/16] %v1963, 128
          %2060 = vxpose.xlu0.b32.cont [15/16] %v1964, 128
          %2061 = vxpose.xlu0.b32.end [16/16] %v1965, 128
          %v2062 = vpop.trf.xlu0
          %v2063 = vpop.trf.xlu0
          %v2064 = vpop.trf.xlu0
          %v2065 = vpop.trf.xlu0
          %v2066 = vpop.trf.xlu0
          %v2067 = vpop.trf.xlu0
          %v2068 = vpop.trf.xlu0
          %v2069 = vpop.trf.xlu0
          %v2070 = vpop.trf.xlu0
          %v2071 = vpop.trf.xlu0
          %v2072 = vpop.trf.xlu0
          %v2073 = vpop.trf.xlu0
          %v2074 = vpop.trf.xlu0
          %v2075 = vpop.trf.xlu0
          %v2076 = vpop.trf.xlu0
          %v2077 = vpop.trf.xlu0
          %2078 = vxpose.xlu0.b32.start [1/16] %v1966, 128
          %2079 = vxpose.xlu0.b32.cont [2/16] %v1967, 128
          %2080 = vxpose.xlu0.b32.cont [3/16] %v1968, 128
          %2081 = vxpose.xlu0.b32.cont [4/16] %v1969, 128
          %2082 = vxpose.xlu0.b32.cont [5/16] %v1970, 128
          %2083 = vxpose.xlu0.b32.cont [6/16] %v1971, 128
          %2084 = vxpose.xlu0.b32.cont [7/16] %v1972, 128
          %2085 = vxpose.xlu0.b32.cont [8/16] %v1973, 128
          %2086 = vxpose.xlu0.b32.cont [9/16] %v1974, 128
          %2087 = vxpose.xlu0.b32.cont [10/16] %v1975, 128
          %2088 = vxpose.xlu0.b32.cont [11/16] %v1976, 128
          %2089 = vxpose.xlu0.b32.cont [12/16] %v1977, 128
          %2090 = vxpose.xlu0.b32.cont [13/16] %v1978, 128
          %2091 = vxpose.xlu0.b32.cont [14/16] %v1979, 128
          %2092 = vxpose.xlu0.b32.cont [15/16] %v1980, 128
          %2093 = vxpose.xlu0.b32.end [16/16] %v1981, 128
          %v2094 = vpop.trf.xlu0
          %v2095 = vpop.trf.xlu0
          %v2096 = vpop.trf.xlu0
          %v2097 = vpop.trf.xlu0
          %v2098 = vpop.trf.xlu0
          %v2099 = vpop.trf.xlu0
          %v2100 = vpop.trf.xlu0
          %v2101 = vpop.trf.xlu0
          %v2102 = vpop.trf.xlu0
          %v2103 = vpop.trf.xlu0
          %v2104 = vpop.trf.xlu0
          %v2105 = vpop.trf.xlu0
          %v2106 = vpop.trf.xlu0
          %v2107 = vpop.trf.xlu0
          %v2108 = vpop.trf.xlu0
          %v2109 = vpop.trf.xlu0
          %v2110 = vsel %vm881, %v1998, 0.0
          %v2111 = vsel %vm881, %v2030, 0.0
          %v2112 = vsel %vm881, %v2062, 0.0
          %v2113 = vsel %vm881, %v2094, 0.0
          %s2114 = smul.u32 %s1917, 4
          %s2115 = smul.addr %s2114, 8
          %s2116 = scalar_lea.vmem [#allocation3], %s2115
          %2117 = vst [vmem:[%s2116] sm:$0xff] %v2110
          %2118 = vst [vmem:[%s2116 + $0x8] sm:$0xff] %v2111
          %2119 = vst [vmem:[%s2116 + $0x10] sm:$0xff] %v2112
          %2120 = vst [vmem:[%s2116 + $0x18] sm:$0xff] %v2113
          %s2121 = sadd.s32 %s1711, 2
          %v2122 = vld [vmem:[%s1713 + $0x2] sm:$0xff]
          %v2123 = vld [vmem:[%s1713 + $0x12] sm:$0xff]
          %v2124 = vld [vmem:[%s1713 + $0x22] sm:$0xff]
          %v2125 = vld [vmem:[%s1713 + $0x32] sm:$0xff]
          %v2126 = vld [vmem:[%s1713 + $0x42] sm:$0xff]
          %v2127 = vld [vmem:[%s1713 + $0x52] sm:$0xff]
          %v2128 = vld [vmem:[%s1713 + $0x62] sm:$0xff]
          %v2129 = vld [vmem:[%s1713 + $0x72] sm:$0xff]
          %v2130 = vld [vmem:[%s1713 + $0xc2] sm:$0xff]
          %v2131 = vld [vmem:[%s1713 + $0xd2] sm:$0xff]
          %v2132 = vld [vmem:[%s1713 + $0xe2] sm:$0xff]
          %v2133 = vld [vmem:[%s1713 + $0xf2] sm:$0xff]
          %v2134 = vld [vmem:[%s1713 + $0x102] sm:$0xff]
          %v2135 = vld [vmem:[%s1713 + $0x112] sm:$0xff]
          %v2136 = vld [vmem:[%s1713 + $0x122] sm:$0xff]
          %v2137 = vld [vmem:[%s1713 + $0x132] sm:$0xff]
          %v2138 = vld [vmem:[%s1713 + $0x182] sm:$0xff]
          %v2139 = vld [vmem:[%s1713 + $0x192] sm:$0xff]
          %v2140 = vld [vmem:[%s1713 + $0x1a2] sm:$0xff]
          %v2141 = vld [vmem:[%s1713 + $0x1b2] sm:$0xff]
          %v2142 = vld [vmem:[%s1713 + $0x1c2] sm:$0xff]
          %v2143 = vld [vmem:[%s1713 + $0x1d2] sm:$0xff]
          %v2144 = vld [vmem:[%s1713 + $0x1e2] sm:$0xff]
          %v2145 = vld [vmem:[%s1713 + $0x1f2] sm:$0xff]
          %v2146 = vld [vmem:[%s1713 + $0x242] sm:$0xff]
          %v2147 = vld [vmem:[%s1713 + $0x252] sm:$0xff]
          %v2148 = vld [vmem:[%s1713 + $0x262] sm:$0xff]
          %v2149 = vld [vmem:[%s1713 + $0x272] sm:$0xff]
          %v2150 = vld [vmem:[%s1713 + $0x282] sm:$0xff]
          %v2151 = vld [vmem:[%s1713 + $0x292] sm:$0xff]
          %v2152 = vld [vmem:[%s1713 + $0x2a2] sm:$0xff]
          %v2153 = vld [vmem:[%s1713 + $0x2b2] sm:$0xff]
          %v2154 = vld [vmem:[%s1713 + $0x302] sm:$0xff]
          %v2155 = vld [vmem:[%s1713 + $0x312] sm:$0xff]
          %v2156 = vld [vmem:[%s1713 + $0x322] sm:$0xff]
          %v2157 = vld [vmem:[%s1713 + $0x332] sm:$0xff]
          %v2158 = vld [vmem:[%s1713 + $0x342] sm:$0xff]
          %v2159 = vld [vmem:[%s1713 + $0x352] sm:$0xff]
          %v2160 = vld [vmem:[%s1713 + $0x362] sm:$0xff]
          %v2161 = vld [vmem:[%s1713 + $0x372] sm:$0xff]
          %v2162 = vld [vmem:[%s1713 + $0x3c2] sm:$0xff]
          %v2163 = vld [vmem:[%s1713 + $0x3d2] sm:$0xff]
          %v2164 = vld [vmem:[%s1713 + $0x3e2] sm:$0xff]
          %v2165 = vld [vmem:[%s1713 + $0x3f2] sm:$0xff]
          %v2166 = vld [vmem:[%s1713 + $0x402] sm:$0xff]
          %v2167 = vld [vmem:[%s1713 + $0x412] sm:$0xff]
          %v2168 = vld [vmem:[%s1713 + $0x422] sm:$0xff]
          %v2169 = vld [vmem:[%s1713 + $0x432] sm:$0xff]
          %v2170 = vld [vmem:[%s1713 + $0x482] sm:$0xff]
          %v2171 = vld [vmem:[%s1713 + $0x492] sm:$0xff]
          %v2172 = vld [vmem:[%s1713 + $0x4a2] sm:$0xff]
          %v2173 = vld [vmem:[%s1713 + $0x4b2] sm:$0xff]
          %v2174 = vld [vmem:[%s1713 + $0x4c2] sm:$0xff]
          %v2175 = vld [vmem:[%s1713 + $0x4d2] sm:$0xff]
          %v2176 = vld [vmem:[%s1713 + $0x4e2] sm:$0xff]
          %v2177 = vld [vmem:[%s1713 + $0x4f2] sm:$0xff]
          %v2178 = vld [vmem:[%s1713 + $0x542] sm:$0xff]
          %v2179 = vld [vmem:[%s1713 + $0x552] sm:$0xff]
          %v2180 = vld [vmem:[%s1713 + $0x562] sm:$0xff]
          %v2181 = vld [vmem:[%s1713 + $0x572] sm:$0xff]
          %v2182 = vld [vmem:[%s1713 + $0x582] sm:$0xff]
          %v2183 = vld [vmem:[%s1713 + $0x592] sm:$0xff]
          %v2184 = vld [vmem:[%s1713 + $0x5a2] sm:$0xff]
          %v2185 = vld [vmem:[%s1713 + $0x5b2] sm:$0xff]
          %2186 = vxpose.xlu0.b32.start [1/16] %v2122, 128
          %2187 = vxpose.xlu0.b32.cont [2/16] %v2123, 128
          %2188 = vxpose.xlu0.b32.cont [3/16] %v2124, 128
          %2189 = vxpose.xlu0.b32.cont [4/16] %v2125, 128
          %2190 = vxpose.xlu0.b32.cont [5/16] %v2126, 128
          %2191 = vxpose.xlu0.b32.cont [6/16] %v2127, 128
          %2192 = vxpose.xlu0.b32.cont [7/16] %v2128, 128
          %2193 = vxpose.xlu0.b32.cont [8/16] %v2129, 128
          %2194 = vxpose.xlu0.b32.cont [9/16] %v2130, 128
          %2195 = vxpose.xlu0.b32.cont [10/16] %v2131, 128
          %2196 = vxpose.xlu0.b32.cont [11/16] %v2132, 128
          %2197 = vxpose.xlu0.b32.cont [12/16] %v2133, 128
          %2198 = vxpose.xlu0.b32.cont [13/16] %v2134, 128
          %2199 = vxpose.xlu0.b32.cont [14/16] %v2135, 128
          %2200 = vxpose.xlu0.b32.cont [15/16] %v2136, 128
          %2201 = vxpose.xlu0.b32.end [16/16] %v2137, 128
          %v2202 = vpop.trf.xlu0
          %v2203 = vpop.trf.xlu0
          %v2204 = vpop.trf.xlu0
          %v2205 = vpop.trf.xlu0
          %v2206 = vpop.trf.xlu0
          %v2207 = vpop.trf.xlu0
          %v2208 = vpop.trf.xlu0
          %v2209 = vpop.trf.xlu0
          %v2210 = vpop.trf.xlu0
          %v2211 = vpop.trf.xlu0
          %v2212 = vpop.trf.xlu0
          %v2213 = vpop.trf.xlu0
          %v2214 = vpop.trf.xlu0
          %v2215 = vpop.trf.xlu0
          %v2216 = vpop.trf.xlu0
          %v2217 = vpop.trf.xlu0
          %2218 = vxpose.xlu0.b32.start [1/16] %v2138, 128
          %2219 = vxpose.xlu0.b32.cont [2/16] %v2139, 128
          %2220 = vxpose.xlu0.b32.cont [3/16] %v2140, 128
          %2221 = vxpose.xlu0.b32.cont [4/16] %v2141, 128
          %2222 = vxpose.xlu0.b32.cont [5/16] %v2142, 128
          %2223 = vxpose.xlu0.b32.cont [6/16] %v2143, 128
          %2224 = vxpose.xlu0.b32.cont [7/16] %v2144, 128
          %2225 = vxpose.xlu0.b32.cont [8/16] %v2145, 128
          %2226 = vxpose.xlu0.b32.cont [9/16] %v2146, 128
          %2227 = vxpose.xlu0.b32.cont [10/16] %v2147, 128
          %2228 = vxpose.xlu0.b32.cont [11/16] %v2148, 128
          %2229 = vxpose.xlu0.b32.cont [12/16] %v2149, 128
          %2230 = vxpose.xlu0.b32.cont [13/16] %v2150, 128
          %2231 = vxpose.xlu0.b32.cont [14/16] %v2151, 128
          %2232 = vxpose.xlu0.b32.cont [15/16] %v2152, 128
          %2233 = vxpose.xlu0.b32.end [16/16] %v2153, 128
          %v2234 = vpop.trf.xlu0
          %v2235 = vpop.trf.xlu0
          %v2236 = vpop.trf.xlu0
          %v2237 = vpop.trf.xlu0
          %v2238 = vpop.trf.xlu0
          %v2239 = vpop.trf.xlu0
          %v2240 = vpop.trf.xlu0
          %v2241 = vpop.trf.xlu0
          %v2242 = vpop.trf.xlu0
          %v2243 = vpop.trf.xlu0
          %v2244 = vpop.trf.xlu0
          %v2245 = vpop.trf.xlu0
          %v2246 = vpop.trf.xlu0
          %v2247 = vpop.trf.xlu0
          %v2248 = vpop.trf.xlu0
          %v2249 = vpop.trf.xlu0
          %2250 = vxpose.xlu0.b32.start [1/16] %v2154, 128
          %2251 = vxpose.xlu0.b32.cont [2/16] %v2155, 128
          %2252 = vxpose.xlu0.b32.cont [3/16] %v2156, 128
          %2253 = vxpose.xlu0.b32.cont [4/16] %v2157, 128
          %2254 = vxpose.xlu0.b32.cont [5/16] %v2158, 128
          %2255 = vxpose.xlu0.b32.cont [6/16] %v2159, 128
          %2256 = vxpose.xlu0.b32.cont [7/16] %v2160, 128
          %2257 = vxpose.xlu0.b32.cont [8/16] %v2161, 128
          %2258 = vxpose.xlu0.b32.cont [9/16] %v2162, 128
          %2259 = vxpose.xlu0.b32.cont [10/16] %v2163, 128
          %2260 = vxpose.xlu0.b32.cont [11/16] %v2164, 128
          %2261 = vxpose.xlu0.b32.cont [12/16] %v2165, 128
          %2262 = vxpose.xlu0.b32.cont [13/16] %v2166, 128
          %2263 = vxpose.xlu0.b32.cont [14/16] %v2167, 128
          %2264 = vxpose.xlu0.b32.cont [15/16] %v2168, 128
          %2265 = vxpose.xlu0.b32.end [16/16] %v2169, 128
          %v2266 = vpop.trf.xlu0
          %v2267 = vpop.trf.xlu0
          %v2268 = vpop.trf.xlu0
          %v2269 = vpop.trf.xlu0
          %v2270 = vpop.trf.xlu0
          %v2271 = vpop.trf.xlu0
          %v2272 = vpop.trf.xlu0
          %v2273 = vpop.trf.xlu0
          %v2274 = vpop.trf.xlu0
          %v2275 = vpop.trf.xlu0
          %v2276 = vpop.trf.xlu0
          %v2277 = vpop.trf.xlu0
          %v2278 = vpop.trf.xlu0
          %v2279 = vpop.trf.xlu0
          %v2280 = vpop.trf.xlu0
          %v2281 = vpop.trf.xlu0
          %2282 = vxpose.xlu0.b32.start [1/16] %v2170, 128
          %2283 = vxpose.xlu0.b32.cont [2/16] %v2171, 128
          %2284 = vxpose.xlu0.b32.cont [3/16] %v2172, 128
          %2285 = vxpose.xlu0.b32.cont [4/16] %v2173, 128
          %2286 = vxpose.xlu0.b32.cont [5/16] %v2174, 128
          %2287 = vxpose.xlu0.b32.cont [6/16] %v2175, 128
          %2288 = vxpose.xlu0.b32.cont [7/16] %v2176, 128
          %2289 = vxpose.xlu0.b32.cont [8/16] %v2177, 128
          %2290 = vxpose.xlu0.b32.cont [9/16] %v2178, 128
          %2291 = vxpose.xlu0.b32.cont [10/16] %v2179, 128
          %2292 = vxpose.xlu0.b32.cont [11/16] %v2180, 128
          %2293 = vxpose.xlu0.b32.cont [12/16] %v2181, 128
          %2294 = vxpose.xlu0.b32.cont [13/16] %v2182, 128
          %2295 = vxpose.xlu0.b32.cont [14/16] %v2183, 128
          %2296 = vxpose.xlu0.b32.cont [15/16] %v2184, 128
          %2297 = vxpose.xlu0.b32.end [16/16] %v2185, 128
          %v2298 = vpop.trf.xlu0
          %v2299 = vpop.trf.xlu0
          %v2300 = vpop.trf.xlu0
          %v2301 = vpop.trf.xlu0
          %v2302 = vpop.trf.xlu0
          %v2303 = vpop.trf.xlu0
          %v2304 = vpop.trf.xlu0
          %v2305 = vpop.trf.xlu0
          %v2306 = vpop.trf.xlu0
          %v2307 = vpop.trf.xlu0
          %v2308 = vpop.trf.xlu0
          %v2309 = vpop.trf.xlu0
          %v2310 = vpop.trf.xlu0
          %v2311 = vpop.trf.xlu0
          %v2312 = vpop.trf.xlu0
          %v2313 = vpop.trf.xlu0
          %v2314 = vsel %vm881, %v2202, 0.0
          %v2315 = vsel %vm881, %v2234, 0.0
          %v2316 = vsel %vm881, %v2266, 0.0
          %v2317 = vsel %vm881, %v2298, 0.0
          %s2318 = smul.u32 %s2121, 4
          %s2319 = smul.addr %s2318, 8
          %s2320 = scalar_lea.vmem [#allocation3], %s2319
          %2321 = vst [vmem:[%s2320] sm:$0xff] %v2314
          %2322 = vst [vmem:[%s2320 + $0x8] sm:$0xff] %v2315
          %2323 = vst [vmem:[%s2320 + $0x10] sm:$0xff] %v2316
          %2324 = vst [vmem:[%s2320 + $0x18] sm:$0xff] %v2317
          %s2325 = sadd.s32 %s1711, 3
          %v2326 = vld [vmem:[%s1713 + $0x3] sm:$0xff]
          %v2327 = vld [vmem:[%s1713 + $0x13] sm:$0xff]
          %v2328 = vld [vmem:[%s1713 + $0x23] sm:$0xff]
          %v2329 = vld [vmem:[%s1713 + $0x33] sm:$0xff]
          %v2330 = vld [vmem:[%s1713 + $0x43] sm:$0xff]
          %v2331 = vld [vmem:[%s1713 + $0x53] sm:$0xff]
          %v2332 = vld [vmem:[%s1713 + $0x63] sm:$0xff]
          %v2333 = vld [vmem:[%s1713 + $0x73] sm:$0xff]
          %v2334 = vld [vmem:[%s1713 + $0xc3] sm:$0xff]
          %v2335 = vld [vmem:[%s1713 + $0xd3] sm:$0xff]
          %v2336 = vld [vmem:[%s1713 + $0xe3] sm:$0xff]
          %v2337 = vld [vmem:[%s1713 + $0xf3] sm:$0xff]
          %v2338 = vld [vmem:[%s1713 + $0x103] sm:$0xff]
          %v2339 = vld [vmem:[%s1713 + $0x113] sm:$0xff]
          %v2340 = vld [vmem:[%s1713 + $0x123] sm:$0xff]
          %v2341 = vld [vmem:[%s1713 + $0x133] sm:$0xff]
          %v2342 = vld [vmem:[%s1713 + $0x183] sm:$0xff]
          %v2343 = vld [vmem:[%s1713 + $0x193] sm:$0xff]
          %v2344 = vld [vmem:[%s1713 + $0x1a3] sm:$0xff]
          %v2345 = vld [vmem:[%s1713 + $0x1b3] sm:$0xff]
          %v2346 = vld [vmem:[%s1713 + $0x1c3] sm:$0xff]
          %v2347 = vld [vmem:[%s1713 + $0x1d3] sm:$0xff]
          %v2348 = vld [vmem:[%s1713 + $0x1e3] sm:$0xff]
          %v2349 = vld [vmem:[%s1713 + $0x1f3] sm:$0xff]
          %v2350 = vld [vmem:[%s1713 + $0x243] sm:$0xff]
          %v2351 = vld [vmem:[%s1713 + $0x253] sm:$0xff]
          %v2352 = vld [vmem:[%s1713 + $0x263] sm:$0xff]
          %v2353 = vld [vmem:[%s1713 + $0x273] sm:$0xff]
          %v2354 = vld [vmem:[%s1713 + $0x283] sm:$0xff]
          %v2355 = vld [vmem:[%s1713 + $0x293] sm:$0xff]
          %v2356 = vld [vmem:[%s1713 + $0x2a3] sm:$0xff]
          %v2357 = vld [vmem:[%s1713 + $0x2b3] sm:$0xff]
          %v2358 = vld [vmem:[%s1713 + $0x303] sm:$0xff]
          %v2359 = vld [vmem:[%s1713 + $0x313] sm:$0xff]
          %v2360 = vld [vmem:[%s1713 + $0x323] sm:$0xff]
          %v2361 = vld [vmem:[%s1713 + $0x333] sm:$0xff]
          %v2362 = vld [vmem:[%s1713 + $0x343] sm:$0xff]
          %v2363 = vld [vmem:[%s1713 + $0x353] sm:$0xff]
          %v2364 = vld [vmem:[%s1713 + $0x363] sm:$0xff]
          %v2365 = vld [vmem:[%s1713 + $0x373] sm:$0xff]
          %v2366 = vld [vmem:[%s1713 + $0x3c3] sm:$0xff]
          %v2367 = vld [vmem:[%s1713 + $0x3d3] sm:$0xff]
          %v2368 = vld [vmem:[%s1713 + $0x3e3] sm:$0xff]
          %v2369 = vld [vmem:[%s1713 + $0x3f3] sm:$0xff]
          %v2370 = vld [vmem:[%s1713 + $0x403] sm:$0xff]
          %v2371 = vld [vmem:[%s1713 + $0x413] sm:$0xff]
          %v2372 = vld [vmem:[%s1713 + $0x423] sm:$0xff]
          %v2373 = vld [vmem:[%s1713 + $0x433] sm:$0xff]
          %v2374 = vld [vmem:[%s1713 + $0x483] sm:$0xff]
          %v2375 = vld [vmem:[%s1713 + $0x493] sm:$0xff]
          %v2376 = vld [vmem:[%s1713 + $0x4a3] sm:$0xff]
          %v2377 = vld [vmem:[%s1713 + $0x4b3] sm:$0xff]
          %v2378 = vld [vmem:[%s1713 + $0x4c3] sm:$0xff]
          %v2379 = vld [vmem:[%s1713 + $0x4d3] sm:$0xff]
          %v2380 = vld [vmem:[%s1713 + $0x4e3] sm:$0xff]
          %v2381 = vld [vmem:[%s1713 + $0x4f3] sm:$0xff]
          %v2382 = vld [vmem:[%s1713 + $0x543] sm:$0xff]
          %v2383 = vld [vmem:[%s1713 + $0x553] sm:$0xff]
          %v2384 = vld [vmem:[%s1713 + $0x563] sm:$0xff]
          %v2385 = vld [vmem:[%s1713 + $0x573] sm:$0xff]
          %v2386 = vld [vmem:[%s1713 + $0x583] sm:$0xff]
          %v2387 = vld [vmem:[%s1713 + $0x593] sm:$0xff]
          %v2388 = vld [vmem:[%s1713 + $0x5a3] sm:$0xff]
          %v2389 = vld [vmem:[%s1713 + $0x5b3] sm:$0xff]
          %2390 = vxpose.xlu0.b32.start [1/16] %v2326, 128
          %2391 = vxpose.xlu0.b32.cont [2/16] %v2327, 128
          %2392 = vxpose.xlu0.b32.cont [3/16] %v2328, 128
          %2393 = vxpose.xlu0.b32.cont [4/16] %v2329, 128
          %2394 = vxpose.xlu0.b32.cont [5/16] %v2330, 128
          %2395 = vxpose.xlu0.b32.cont [6/16] %v2331, 128
          %2396 = vxpose.xlu0.b32.cont [7/16] %v2332, 128
          %2397 = vxpose.xlu0.b32.cont [8/16] %v2333, 128
          %2398 = vxpose.xlu0.b32.cont [9/16] %v2334, 128
          %2399 = vxpose.xlu0.b32.cont [10/16] %v2335, 128
          %2400 = vxpose.xlu0.b32.cont [11/16] %v2336, 128
          %2401 = vxpose.xlu0.b32.cont [12/16] %v2337, 128
          %2402 = vxpose.xlu0.b32.cont [13/16] %v2338, 128
          %2403 = vxpose.xlu0.b32.cont [14/16] %v2339, 128
          %2404 = vxpose.xlu0.b32.cont [15/16] %v2340, 128
          %2405 = vxpose.xlu0.b32.end [16/16] %v2341, 128
          %v2406 = vpop.trf.xlu0
          %v2407 = vpop.trf.xlu0
          %v2408 = vpop.trf.xlu0
          %v2409 = vpop.trf.xlu0
          %v2410 = vpop.trf.xlu0
          %v2411 = vpop.trf.xlu0
          %v2412 = vpop.trf.xlu0
          %v2413 = vpop.trf.xlu0
          %v2414 = vpop.trf.xlu0
          %v2415 = vpop.trf.xlu0
          %v2416 = vpop.trf.xlu0
          %v2417 = vpop.trf.xlu0
          %v2418 = vpop.trf.xlu0
          %v2419 = vpop.trf.xlu0
          %v2420 = vpop.trf.xlu0
          %v2421 = vpop.trf.xlu0
          %2422 = vxpose.xlu0.b32.start [1/16] %v2342, 128
          %2423 = vxpose.xlu0.b32.cont [2/16] %v2343, 128
          %2424 = vxpose.xlu0.b32.cont [3/16] %v2344, 128
          %2425 = vxpose.xlu0.b32.cont [4/16] %v2345, 128
          %2426 = vxpose.xlu0.b32.cont [5/16] %v2346, 128
          %2427 = vxpose.xlu0.b32.cont [6/16] %v2347, 128
          %2428 = vxpose.xlu0.b32.cont [7/16] %v2348, 128
          %2429 = vxpose.xlu0.b32.cont [8/16] %v2349, 128
          %2430 = vxpose.xlu0.b32.cont [9/16] %v2350, 128
          %2431 = vxpose.xlu0.b32.cont [10/16] %v2351, 128
          %2432 = vxpose.xlu0.b32.cont [11/16] %v2352, 128
          %2433 = vxpose.xlu0.b32.cont [12/16] %v2353, 128
          %2434 = vxpose.xlu0.b32.cont [13/16] %v2354, 128
          %2435 = vxpose.xlu0.b32.cont [14/16] %v2355, 128
          %2436 = vxpose.xlu0.b32.cont [15/16] %v2356, 128
          %2437 = vxpose.xlu0.b32.end [16/16] %v2357, 128
          %v2438 = vpop.trf.xlu0
          %v2439 = vpop.trf.xlu0
          %v2440 = vpop.trf.xlu0
          %v2441 = vpop.trf.xlu0
          %v2442 = vpop.trf.xlu0
          %v2443 = vpop.trf.xlu0
          %v2444 = vpop.trf.xlu0
          %v2445 = vpop.trf.xlu0
          %v2446 = vpop.trf.xlu0
          %v2447 = vpop.trf.xlu0
          %v2448 = vpop.trf.xlu0
          %v2449 = vpop.trf.xlu0
          %v2450 = vpop.trf.xlu0
          %v2451 = vpop.trf.xlu0
          %v2452 = vpop.trf.xlu0
          %v2453 = vpop.trf.xlu0
          %2454 = vxpose.xlu0.b32.start [1/16] %v2358, 128
          %2455 = vxpose.xlu0.b32.cont [2/16] %v2359, 128
          %2456 = vxpose.xlu0.b32.cont [3/16] %v2360, 128
          %2457 = vxpose.xlu0.b32.cont [4/16] %v2361, 128
          %2458 = vxpose.xlu0.b32.cont [5/16] %v2362, 128
          %2459 = vxpose.xlu0.b32.cont [6/16] %v2363, 128
          %2460 = vxpose.xlu0.b32.cont [7/16] %v2364, 128
          %2461 = vxpose.xlu0.b32.cont [8/16] %v2365, 128
          %2462 = vxpose.xlu0.b32.cont [9/16] %v2366, 128
          %2463 = vxpose.xlu0.b32.cont [10/16] %v2367, 128
          %2464 = vxpose.xlu0.b32.cont [11/16] %v2368, 128
          %2465 = vxpose.xlu0.b32.cont [12/16] %v2369, 128
          %2466 = vxpose.xlu0.b32.cont [13/16] %v2370, 128
          %2467 = vxpose.xlu0.b32.cont [14/16] %v2371, 128
          %2468 = vxpose.xlu0.b32.cont [15/16] %v2372, 128
          %2469 = vxpose.xlu0.b32.end [16/16] %v2373, 128
          %v2470 = vpop.trf.xlu0
          %v2471 = vpop.trf.xlu0
          %v2472 = vpop.trf.xlu0
          %v2473 = vpop.trf.xlu0
          %v2474 = vpop.trf.xlu0
          %v2475 = vpop.trf.xlu0
          %v2476 = vpop.trf.xlu0
          %v2477 = vpop.trf.xlu0
          %v2478 = vpop.trf.xlu0
          %v2479 = vpop.trf.xlu0
          %v2480 = vpop.trf.xlu0
          %v2481 = vpop.trf.xlu0
          %v2482 = vpop.trf.xlu0
          %v2483 = vpop.trf.xlu0
          %v2484 = vpop.trf.xlu0
          %v2485 = vpop.trf.xlu0
          %2486 = vxpose.xlu0.b32.start [1/16] %v2374, 128
          %2487 = vxpose.xlu0.b32.cont [2/16] %v2375, 128
          %2488 = vxpose.xlu0.b32.cont [3/16] %v2376, 128
          %2489 = vxpose.xlu0.b32.cont [4/16] %v2377, 128
          %2490 = vxpose.xlu0.b32.cont [5/16] %v2378, 128
          %2491 = vxpose.xlu0.b32.cont [6/16] %v2379, 128
          %2492 = vxpose.xlu0.b32.cont [7/16] %v2380, 128
          %2493 = vxpose.xlu0.b32.cont [8/16] %v2381, 128
          %2494 = vxpose.xlu0.b32.cont [9/16] %v2382, 128
          %2495 = vxpose.xlu0.b32.cont [10/16] %v2383, 128
          %2496 = vxpose.xlu0.b32.cont [11/16] %v2384, 128
          %2497 = vxpose.xlu0.b32.cont [12/16] %v2385, 128
          %2498 = vxpose.xlu0.b32.cont [13/16] %v2386, 128
          %2499 = vxpose.xlu0.b32.cont [14/16] %v2387, 128
          %2500 = vxpose.xlu0.b32.cont [15/16] %v2388, 128
          %2501 = vxpose.xlu0.b32.end [16/16] %v2389, 128
          %v2502 = vpop.trf.xlu0
          %v2503 = vpop.trf.xlu0
          %v2504 = vpop.trf.xlu0
          %v2505 = vpop.trf.xlu0
          %v2506 = vpop.trf.xlu0
          %v2507 = vpop.trf.xlu0
          %v2508 = vpop.trf.xlu0
          %v2509 = vpop.trf.xlu0
          %v2510 = vpop.trf.xlu0
          %v2511 = vpop.trf.xlu0
          %v2512 = vpop.trf.xlu0
          %v2513 = vpop.trf.xlu0
          %v2514 = vpop.trf.xlu0
          %v2515 = vpop.trf.xlu0
          %v2516 = vpop.trf.xlu0
          %v2517 = vpop.trf.xlu0
          %v2518 = vsel %vm881, %v2406, 0.0
          %v2519 = vsel %vm881, %v2438, 0.0
          %v2520 = vsel %vm881, %v2470, 0.0
          %v2521 = vsel %vm881, %v2502, 0.0
          %s2522 = smul.u32 %s2325, 4
          %s2523 = smul.addr %s2522, 8
          %s2524 = scalar_lea.vmem [#allocation3], %s2523
          %2525 = vst [vmem:[%s2524] sm:$0xff] %v2518
          %2526 = vst [vmem:[%s2524 + $0x8] sm:$0xff] %v2519
          %2527 = vst [vmem:[%s2524 + $0x10] sm:$0xff] %v2520
          %2528 = vst [vmem:[%s2524 + $0x18] sm:$0xff] %v2521
          %s2529 = sadd.s32 %s1711, 4
          %v2530 = vld [vmem:[%s1713 + $0x4] sm:$0xff]
          %v2531 = vld [vmem:[%s1713 + $0x14] sm:$0xff]
          %v2532 = vld [vmem:[%s1713 + $0x24] sm:$0xff]
          %v2533 = vld [vmem:[%s1713 + $0x34] sm:$0xff]
          %v2534 = vld [vmem:[%s1713 + $0x44] sm:$0xff]
          %v2535 = vld [vmem:[%s1713 + $0x54] sm:$0xff]
          %v2536 = vld [vmem:[%s1713 + $0x64] sm:$0xff]
          %v2537 = vld [vmem:[%s1713 + $0x74] sm:$0xff]
          %v2538 = vld [vmem:[%s1713 + $0xc4] sm:$0xff]
          %v2539 = vld [vmem:[%s1713 + $0xd4] sm:$0xff]
          %v2540 = vld [vmem:[%s1713 + $0xe4] sm:$0xff]
          %v2541 = vld [vmem:[%s1713 + $0xf4] sm:$0xff]
          %v2542 = vld [vmem:[%s1713 + $0x104] sm:$0xff]
          %v2543 = vld [vmem:[%s1713 + $0x114] sm:$0xff]
          %v2544 = vld [vmem:[%s1713 + $0x124] sm:$0xff]
          %v2545 = vld [vmem:[%s1713 + $0x134] sm:$0xff]
          %v2546 = vld [vmem:[%s1713 + $0x184] sm:$0xff]
          %v2547 = vld [vmem:[%s1713 + $0x194] sm:$0xff]
          %v2548 = vld [vmem:[%s1713 + $0x1a4] sm:$0xff]
          %v2549 = vld [vmem:[%s1713 + $0x1b4] sm:$0xff]
          %v2550 = vld [vmem:[%s1713 + $0x1c4] sm:$0xff]
          %v2551 = vld [vmem:[%s1713 + $0x1d4] sm:$0xff]
          %v2552 = vld [vmem:[%s1713 + $0x1e4] sm:$0xff]
          %v2553 = vld [vmem:[%s1713 + $0x1f4] sm:$0xff]
          %v2554 = vld [vmem:[%s1713 + $0x244] sm:$0xff]
          %v2555 = vld [vmem:[%s1713 + $0x254] sm:$0xff]
          %v2556 = vld [vmem:[%s1713 + $0x264] sm:$0xff]
          %v2557 = vld [vmem:[%s1713 + $0x274] sm:$0xff]
          %v2558 = vld [vmem:[%s1713 + $0x284] sm:$0xff]
          %v2559 = vld [vmem:[%s1713 + $0x294] sm:$0xff]
          %v2560 = vld [vmem:[%s1713 + $0x2a4] sm:$0xff]
          %v2561 = vld [vmem:[%s1713 + $0x2b4] sm:$0xff]
          %v2562 = vld [vmem:[%s1713 + $0x304] sm:$0xff]
          %v2563 = vld [vmem:[%s1713 + $0x314] sm:$0xff]
          %v2564 = vld [vmem:[%s1713 + $0x324] sm:$0xff]
          %v2565 = vld [vmem:[%s1713 + $0x334] sm:$0xff]
          %v2566 = vld [vmem:[%s1713 + $0x344] sm:$0xff]
          %v2567 = vld [vmem:[%s1713 + $0x354] sm:$0xff]
          %v2568 = vld [vmem:[%s1713 + $0x364] sm:$0xff]
          %v2569 = vld [vmem:[%s1713 + $0x374] sm:$0xff]
          %v2570 = vld [vmem:[%s1713 + $0x3c4] sm:$0xff]
          %v2571 = vld [vmem:[%s1713 + $0x3d4] sm:$0xff]
          %v2572 = vld [vmem:[%s1713 + $0x3e4] sm:$0xff]
          %v2573 = vld [vmem:[%s1713 + $0x3f4] sm:$0xff]
          %v2574 = vld [vmem:[%s1713 + $0x404] sm:$0xff]
          %v2575 = vld [vmem:[%s1713 + $0x414] sm:$0xff]
          %v2576 = vld [vmem:[%s1713 + $0x424] sm:$0xff]
          %v2577 = vld [vmem:[%s1713 + $0x434] sm:$0xff]
          %v2578 = vld [vmem:[%s1713 + $0x484] sm:$0xff]
          %v2579 = vld [vmem:[%s1713 + $0x494] sm:$0xff]
          %v2580 = vld [vmem:[%s1713 + $0x4a4] sm:$0xff]
          %v2581 = vld [vmem:[%s1713 + $0x4b4] sm:$0xff]
          %v2582 = vld [vmem:[%s1713 + $0x4c4] sm:$0xff]
          %v2583 = vld [vmem:[%s1713 + $0x4d4] sm:$0xff]
          %v2584 = vld [vmem:[%s1713 + $0x4e4] sm:$0xff]
          %v2585 = vld [vmem:[%s1713 + $0x4f4] sm:$0xff]
          %v2586 = vld [vmem:[%s1713 + $0x544] sm:$0xff]
          %v2587 = vld [vmem:[%s1713 + $0x554] sm:$0xff]
          %v2588 = vld [vmem:[%s1713 + $0x564] sm:$0xff]
          %v2589 = vld [vmem:[%s1713 + $0x574] sm:$0xff]
          %v2590 = vld [vmem:[%s1713 + $0x584] sm:$0xff]
          %v2591 = vld [vmem:[%s1713 + $0x594] sm:$0xff]
          %v2592 = vld [vmem:[%s1713 + $0x5a4] sm:$0xff]
          %v2593 = vld [vmem:[%s1713 + $0x5b4] sm:$0xff]
          %2594 = vxpose.xlu0.b32.start [1/16] %v2530, 128
          %2595 = vxpose.xlu0.b32.cont [2/16] %v2531, 128
          %2596 = vxpose.xlu0.b32.cont [3/16] %v2532, 128
          %2597 = vxpose.xlu0.b32.cont [4/16] %v2533, 128
          %2598 = vxpose.xlu0.b32.cont [5/16] %v2534, 128
          %2599 = vxpose.xlu0.b32.cont [6/16] %v2535, 128
          %2600 = vxpose.xlu0.b32.cont [7/16] %v2536, 128
          %2601 = vxpose.xlu0.b32.cont [8/16] %v2537, 128
          %2602 = vxpose.xlu0.b32.cont [9/16] %v2538, 128
          %2603 = vxpose.xlu0.b32.cont [10/16] %v2539, 128
          %2604 = vxpose.xlu0.b32.cont [11/16] %v2540, 128
          %2605 = vxpose.xlu0.b32.cont [12/16] %v2541, 128
          %2606 = vxpose.xlu0.b32.cont [13/16] %v2542, 128
          %2607 = vxpose.xlu0.b32.cont [14/16] %v2543, 128
          %2608 = vxpose.xlu0.b32.cont [15/16] %v2544, 128
          %2609 = vxpose.xlu0.b32.end [16/16] %v2545, 128
          %v2610 = vpop.trf.xlu0
          %v2611 = vpop.trf.xlu0
          %v2612 = vpop.trf.xlu0
          %v2613 = vpop.trf.xlu0
          %v2614 = vpop.trf.xlu0
          %v2615 = vpop.trf.xlu0
          %v2616 = vpop.trf.xlu0
          %v2617 = vpop.trf.xlu0
          %v2618 = vpop.trf.xlu0
          %v2619 = vpop.trf.xlu0
          %v2620 = vpop.trf.xlu0
          %v2621 = vpop.trf.xlu0
          %v2622 = vpop.trf.xlu0
          %v2623 = vpop.trf.xlu0
          %v2624 = vpop.trf.xlu0
          %v2625 = vpop.trf.xlu0
          %2626 = vxpose.xlu0.b32.start [1/16] %v2546, 128
          %2627 = vxpose.xlu0.b32.cont [2/16] %v2547, 128
          %2628 = vxpose.xlu0.b32.cont [3/16] %v2548, 128
          %2629 = vxpose.xlu0.b32.cont [4/16] %v2549, 128
          %2630 = vxpose.xlu0.b32.cont [5/16] %v2550, 128
          %2631 = vxpose.xlu0.b32.cont [6/16] %v2551, 128
          %2632 = vxpose.xlu0.b32.cont [7/16] %v2552, 128
          %2633 = vxpose.xlu0.b32.cont [8/16] %v2553, 128
          %2634 = vxpose.xlu0.b32.cont [9/16] %v2554, 128
          %2635 = vxpose.xlu0.b32.cont [10/16] %v2555, 128
          %2636 = vxpose.xlu0.b32.cont [11/16] %v2556, 128
          %2637 = vxpose.xlu0.b32.cont [12/16] %v2557, 128
          %2638 = vxpose.xlu0.b32.cont [13/16] %v2558, 128
          %2639 = vxpose.xlu0.b32.cont [14/16] %v2559, 128
          %2640 = vxpose.xlu0.b32.cont [15/16] %v2560, 128
          %2641 = vxpose.xlu0.b32.end [16/16] %v2561, 128
          %v2642 = vpop.trf.xlu0
          %v2643 = vpop.trf.xlu0
          %v2644 = vpop.trf.xlu0
          %v2645 = vpop.trf.xlu0
          %v2646 = vpop.trf.xlu0
          %v2647 = vpop.trf.xlu0
          %v2648 = vpop.trf.xlu0
          %v2649 = vpop.trf.xlu0
          %v2650 = vpop.trf.xlu0
          %v2651 = vpop.trf.xlu0
          %v2652 = vpop.trf.xlu0
          %v2653 = vpop.trf.xlu0
          %v2654 = vpop.trf.xlu0
          %v2655 = vpop.trf.xlu0
          %v2656 = vpop.trf.xlu0
          %v2657 = vpop.trf.xlu0
          %2658 = vxpose.xlu0.b32.start [1/16] %v2562, 128
          %2659 = vxpose.xlu0.b32.cont [2/16] %v2563, 128
          %2660 = vxpose.xlu0.b32.cont [3/16] %v2564, 128
          %2661 = vxpose.xlu0.b32.cont [4/16] %v2565, 128
          %2662 = vxpose.xlu0.b32.cont [5/16] %v2566, 128
          %2663 = vxpose.xlu0.b32.cont [6/16] %v2567, 128
          %2664 = vxpose.xlu0.b32.cont [7/16] %v2568, 128
          %2665 = vxpose.xlu0.b32.cont [8/16] %v2569, 128
          %2666 = vxpose.xlu0.b32.cont [9/16] %v2570, 128
          %2667 = vxpose.xlu0.b32.cont [10/16] %v2571, 128
          %2668 = vxpose.xlu0.b32.cont [11/16] %v2572, 128
          %2669 = vxpose.xlu0.b32.cont [12/16] %v2573, 128
          %2670 = vxpose.xlu0.b32.cont [13/16] %v2574, 128
          %2671 = vxpose.xlu0.b32.cont [14/16] %v2575, 128
          %2672 = vxpose.xlu0.b32.cont [15/16] %v2576, 128
          %2673 = vxpose.xlu0.b32.end [16/16] %v2577, 128
          %v2674 = vpop.trf.xlu0
          %v2675 = vpop.trf.xlu0
          %v2676 = vpop.trf.xlu0
          %v2677 = vpop.trf.xlu0
          %v2678 = vpop.trf.xlu0
          %v2679 = vpop.trf.xlu0
          %v2680 = vpop.trf.xlu0
          %v2681 = vpop.trf.xlu0
          %v2682 = vpop.trf.xlu0
          %v2683 = vpop.trf.xlu0
          %v2684 = vpop.trf.xlu0
          %v2685 = vpop.trf.xlu0
          %v2686 = vpop.trf.xlu0
          %v2687 = vpop.trf.xlu0
          %v2688 = vpop.trf.xlu0
          %v2689 = vpop.trf.xlu0
          %2690 = vxpose.xlu0.b32.start [1/16] %v2578, 128
          %2691 = vxpose.xlu0.b32.cont [2/16] %v2579, 128
          %2692 = vxpose.xlu0.b32.cont [3/16] %v2580, 128
          %2693 = vxpose.xlu0.b32.cont [4/16] %v2581, 128
          %2694 = vxpose.xlu0.b32.cont [5/16] %v2582, 128
          %2695 = vxpose.xlu0.b32.cont [6/16] %v2583, 128
          %2696 = vxpose.xlu0.b32.cont [7/16] %v2584, 128
          %2697 = vxpose.xlu0.b32.cont [8/16] %v2585, 128
          %2698 = vxpose.xlu0.b32.cont [9/16] %v2586, 128
          %2699 = vxpose.xlu0.b32.cont [10/16] %v2587, 128
          %2700 = vxpose.xlu0.b32.cont [11/16] %v2588, 128
          %2701 = vxpose.xlu0.b32.cont [12/16] %v2589, 128
          %2702 = vxpose.xlu0.b32.cont [13/16] %v2590, 128
          %2703 = vxpose.xlu0.b32.cont [14/16] %v2591, 128
          %2704 = vxpose.xlu0.b32.cont [15/16] %v2592, 128
          %2705 = vxpose.xlu0.b32.end [16/16] %v2593, 128
          %v2706 = vpop.trf.xlu0
          %v2707 = vpop.trf.xlu0
          %v2708 = vpop.trf.xlu0
          %v2709 = vpop.trf.xlu0
          %v2710 = vpop.trf.xlu0
          %v2711 = vpop.trf.xlu0
          %v2712 = vpop.trf.xlu0
          %v2713 = vpop.trf.xlu0
          %v2714 = vpop.trf.xlu0
          %v2715 = vpop.trf.xlu0
          %v2716 = vpop.trf.xlu0
          %v2717 = vpop.trf.xlu0
          %v2718 = vpop.trf.xlu0
          %v2719 = vpop.trf.xlu0
          %v2720 = vpop.trf.xlu0
          %v2721 = vpop.trf.xlu0
          %v2722 = vsel %vm881, %v2610, 0.0
          %v2723 = vsel %vm881, %v2642, 0.0
          %v2724 = vsel %vm881, %v2674, 0.0
          %v2725 = vsel %vm881, %v2706, 0.0
          %s2726 = smul.u32 %s2529, 4
          %s2727 = smul.addr %s2726, 8
          %s2728 = scalar_lea.vmem [#allocation3], %s2727
          %2729 = vst [vmem:[%s2728] sm:$0xff] %v2722
          %2730 = vst [vmem:[%s2728 + $0x8] sm:$0xff] %v2723
          %2731 = vst [vmem:[%s2728 + $0x10] sm:$0xff] %v2724
          %2732 = vst [vmem:[%s2728 + $0x18] sm:$0xff] %v2725
          %s2733 = sadd.s32 %s1709, 2
          %s2734 = smul.u32 %s2733, 5
          %s2735 = sadd.s32 32, %s687
          %s2736 = scalar_lea.vmem [#allocation2], %s2735
          %v2737 = vld [vmem:[%s2736] sm:$0xff]
          %v2738 = vld [vmem:[%s2736 + $0x10] sm:$0xff]
          %v2739 = vld [vmem:[%s2736 + $0x20] sm:$0xff]
          %v2740 = vld [vmem:[%s2736 + $0x30] sm:$0xff]
          %v2741 = vld [vmem:[%s2736 + $0x40] sm:$0xff]
          %v2742 = vld [vmem:[%s2736 + $0x50] sm:$0xff]
          %v2743 = vld [vmem:[%s2736 + $0x60] sm:$0xff]
          %v2744 = vld [vmem:[%s2736 + $0x70] sm:$0xff]
          %v2745 = vld [vmem:[%s2736 + $0xc0] sm:$0xff]
          %v2746 = vld [vmem:[%s2736 + $0xd0] sm:$0xff]
          %v2747 = vld [vmem:[%s2736 + $0xe0] sm:$0xff]
          %v2748 = vld [vmem:[%s2736 + $0xf0] sm:$0xff]
          %v2749 = vld [vmem:[%s2736 + $0x100] sm:$0xff]
          %v2750 = vld [vmem:[%s2736 + $0x110] sm:$0xff]
          %v2751 = vld [vmem:[%s2736 + $0x120] sm:$0xff]
          %v2752 = vld [vmem:[%s2736 + $0x130] sm:$0xff]
          %v2753 = vld [vmem:[%s2736 + $0x180] sm:$0xff]
          %v2754 = vld [vmem:[%s2736 + $0x190] sm:$0xff]
          %v2755 = vld [vmem:[%s2736 + $0x1a0] sm:$0xff]
          %v2756 = vld [vmem:[%s2736 + $0x1b0] sm:$0xff]
          %v2757 = vld [vmem:[%s2736 + $0x1c0] sm:$0xff]
          %v2758 = vld [vmem:[%s2736 + $0x1d0] sm:$0xff]
          %v2759 = vld [vmem:[%s2736 + $0x1e0] sm:$0xff]
          %v2760 = vld [vmem:[%s2736 + $0x1f0] sm:$0xff]
          %v2761 = vld [vmem:[%s2736 + $0x240] sm:$0xff]
          %v2762 = vld [vmem:[%s2736 + $0x250] sm:$0xff]
          %v2763 = vld [vmem:[%s2736 + $0x260] sm:$0xff]
          %v2764 = vld [vmem:[%s2736 + $0x270] sm:$0xff]
          %v2765 = vld [vmem:[%s2736 + $0x280] sm:$0xff]
          %v2766 = vld [vmem:[%s2736 + $0x290] sm:$0xff]
          %v2767 = vld [vmem:[%s2736 + $0x2a0] sm:$0xff]
          %v2768 = vld [vmem:[%s2736 + $0x2b0] sm:$0xff]
          %v2769 = vld [vmem:[%s2736 + $0x300] sm:$0xff]
          %v2770 = vld [vmem:[%s2736 + $0x310] sm:$0xff]
          %v2771 = vld [vmem:[%s2736 + $0x320] sm:$0xff]
          %v2772 = vld [vmem:[%s2736 + $0x330] sm:$0xff]
          %v2773 = vld [vmem:[%s2736 + $0x340] sm:$0xff]
          %v2774 = vld [vmem:[%s2736 + $0x350] sm:$0xff]
          %v2775 = vld [vmem:[%s2736 + $0x360] sm:$0xff]
          %v2776 = vld [vmem:[%s2736 + $0x370] sm:$0xff]
          %v2777 = vld [vmem:[%s2736 + $0x3c0] sm:$0xff]
          %v2778 = vld [vmem:[%s2736 + $0x3d0] sm:$0xff]
          %v2779 = vld [vmem:[%s2736 + $0x3e0] sm:$0xff]
          %v2780 = vld [vmem:[%s2736 + $0x3f0] sm:$0xff]
          %v2781 = vld [vmem:[%s2736 + $0x400] sm:$0xff]
          %v2782 = vld [vmem:[%s2736 + $0x410] sm:$0xff]
          %v2783 = vld [vmem:[%s2736 + $0x420] sm:$0xff]
          %v2784 = vld [vmem:[%s2736 + $0x430] sm:$0xff]
          %v2785 = vld [vmem:[%s2736 + $0x480] sm:$0xff]
          %v2786 = vld [vmem:[%s2736 + $0x490] sm:$0xff]
          %v2787 = vld [vmem:[%s2736 + $0x4a0] sm:$0xff]
          %v2788 = vld [vmem:[%s2736 + $0x4b0] sm:$0xff]
          %v2789 = vld [vmem:[%s2736 + $0x4c0] sm:$0xff]
          %v2790 = vld [vmem:[%s2736 + $0x4d0] sm:$0xff]
          %v2791 = vld [vmem:[%s2736 + $0x4e0] sm:$0xff]
          %v2792 = vld [vmem:[%s2736 + $0x4f0] sm:$0xff]
          %v2793 = vld [vmem:[%s2736 + $0x540] sm:$0xff]
          %v2794 = vld [vmem:[%s2736 + $0x550] sm:$0xff]
          %v2795 = vld [vmem:[%s2736 + $0x560] sm:$0xff]
          %v2796 = vld [vmem:[%s2736 + $0x570] sm:$0xff]
          %v2797 = vld [vmem:[%s2736 + $0x580] sm:$0xff]
          %v2798 = vld [vmem:[%s2736 + $0x590] sm:$0xff]
          %v2799 = vld [vmem:[%s2736 + $0x5a0] sm:$0xff]
          %v2800 = vld [vmem:[%s2736 + $0x5b0] sm:$0xff]
          %2801 = vxpose.xlu0.b32.start [1/16] %v2737, 128
          %2802 = vxpose.xlu0.b32.cont [2/16] %v2738, 128
          %2803 = vxpose.xlu0.b32.cont [3/16] %v2739, 128
          %2804 = vxpose.xlu0.b32.cont [4/16] %v2740, 128
          %2805 = vxpose.xlu0.b32.cont [5/16] %v2741, 128
          %2806 = vxpose.xlu0.b32.cont [6/16] %v2742, 128
          %2807 = vxpose.xlu0.b32.cont [7/16] %v2743, 128
          %2808 = vxpose.xlu0.b32.cont [8/16] %v2744, 128
          %2809 = vxpose.xlu0.b32.cont [9/16] %v2745, 128
          %2810 = vxpose.xlu0.b32.cont [10/16] %v2746, 128
          %2811 = vxpose.xlu0.b32.cont [11/16] %v2747, 128
          %2812 = vxpose.xlu0.b32.cont [12/16] %v2748, 128
          %2813 = vxpose.xlu0.b32.cont [13/16] %v2749, 128
          %2814 = vxpose.xlu0.b32.cont [14/16] %v2750, 128
          %2815 = vxpose.xlu0.b32.cont [15/16] %v2751, 128
          %2816 = vxpose.xlu0.b32.end [16/16] %v2752, 128
          %v2817 = vpop.trf.xlu0
          %v2818 = vpop.trf.xlu0
          %v2819 = vpop.trf.xlu0
          %v2820 = vpop.trf.xlu0
          %v2821 = vpop.trf.xlu0
          %v2822 = vpop.trf.xlu0
          %v2823 = vpop.trf.xlu0
          %v2824 = vpop.trf.xlu0
          %v2825 = vpop.trf.xlu0
          %v2826 = vpop.trf.xlu0
          %v2827 = vpop.trf.xlu0
          %v2828 = vpop.trf.xlu0
          %v2829 = vpop.trf.xlu0
          %v2830 = vpop.trf.xlu0
          %v2831 = vpop.trf.xlu0
          %v2832 = vpop.trf.xlu0
          %2833 = vxpose.xlu0.b32.start [1/16] %v2753, 128
          %2834 = vxpose.xlu0.b32.cont [2/16] %v2754, 128
          %2835 = vxpose.xlu0.b32.cont [3/16] %v2755, 128
          %2836 = vxpose.xlu0.b32.cont [4/16] %v2756, 128
          %2837 = vxpose.xlu0.b32.cont [5/16] %v2757, 128
          %2838 = vxpose.xlu0.b32.cont [6/16] %v2758, 128
          %2839 = vxpose.xlu0.b32.cont [7/16] %v2759, 128
          %2840 = vxpose.xlu0.b32.cont [8/16] %v2760, 128
          %2841 = vxpose.xlu0.b32.cont [9/16] %v2761, 128
          %2842 = vxpose.xlu0.b32.cont [10/16] %v2762, 128
          %2843 = vxpose.xlu0.b32.cont [11/16] %v2763, 128
          %2844 = vxpose.xlu0.b32.cont [12/16] %v2764, 128
          %2845 = vxpose.xlu0.b32.cont [13/16] %v2765, 128
          %2846 = vxpose.xlu0.b32.cont [14/16] %v2766, 128
          %2847 = vxpose.xlu0.b32.cont [15/16] %v2767, 128
          %2848 = vxpose.xlu0.b32.end [16/16] %v2768, 128
          %v2849 = vpop.trf.xlu0
          %v2850 = vpop.trf.xlu0
          %v2851 = vpop.trf.xlu0
          %v2852 = vpop.trf.xlu0
          %v2853 = vpop.trf.xlu0
          %v2854 = vpop.trf.xlu0
          %v2855 = vpop.trf.xlu0
          %v2856 = vpop.trf.xlu0
          %v2857 = vpop.trf.xlu0
          %v2858 = vpop.trf.xlu0
          %v2859 = vpop.trf.xlu0
          %v2860 = vpop.trf.xlu0
          %v2861 = vpop.trf.xlu0
          %v2862 = vpop.trf.xlu0
          %v2863 = vpop.trf.xlu0
          %v2864 = vpop.trf.xlu0
          %2865 = vxpose.xlu0.b32.start [1/16] %v2769, 128
          %2866 = vxpose.xlu0.b32.cont [2/16] %v2770, 128
          %2867 = vxpose.xlu0.b32.cont [3/16] %v2771, 128
          %2868 = vxpose.xlu0.b32.cont [4/16] %v2772, 128
          %2869 = vxpose.xlu0.b32.cont [5/16] %v2773, 128
          %2870 = vxpose.xlu0.b32.cont [6/16] %v2774, 128
          %2871 = vxpose.xlu0.b32.cont [7/16] %v2775, 128
          %2872 = vxpose.xlu0.b32.cont [8/16] %v2776, 128
          %2873 = vxpose.xlu0.b32.cont [9/16] %v2777, 128
          %2874 = vxpose.xlu0.b32.cont [10/16] %v2778, 128
          %2875 = vxpose.xlu0.b32.cont [11/16] %v2779, 128
          %2876 = vxpose.xlu0.b32.cont [12/16] %v2780, 128
          %2877 = vxpose.xlu0.b32.cont [13/16] %v2781, 128
          %2878 = vxpose.xlu0.b32.cont [14/16] %v2782, 128
          %2879 = vxpose.xlu0.b32.cont [15/16] %v2783, 128
          %2880 = vxpose.xlu0.b32.end [16/16] %v2784, 128
          %v2881 = vpop.trf.xlu0
          %v2882 = vpop.trf.xlu0
          %v2883 = vpop.trf.xlu0
          %v2884 = vpop.trf.xlu0
          %v2885 = vpop.trf.xlu0
          %v2886 = vpop.trf.xlu0
          %v2887 = vpop.trf.xlu0
          %v2888 = vpop.trf.xlu0
          %v2889 = vpop.trf.xlu0
          %v2890 = vpop.trf.xlu0
          %v2891 = vpop.trf.xlu0
          %v2892 = vpop.trf.xlu0
          %v2893 = vpop.trf.xlu0
          %v2894 = vpop.trf.xlu0
          %v2895 = vpop.trf.xlu0
          %v2896 = vpop.trf.xlu0
          %2897 = vxpose.xlu0.b32.start [1/16] %v2785, 128
          %2898 = vxpose.xlu0.b32.cont [2/16] %v2786, 128
          %2899 = vxpose.xlu0.b32.cont [3/16] %v2787, 128
          %2900 = vxpose.xlu0.b32.cont [4/16] %v2788, 128
          %2901 = vxpose.xlu0.b32.cont [5/16] %v2789, 128
          %2902 = vxpose.xlu0.b32.cont [6/16] %v2790, 128
          %2903 = vxpose.xlu0.b32.cont [7/16] %v2791, 128
          %2904 = vxpose.xlu0.b32.cont [8/16] %v2792, 128
          %2905 = vxpose.xlu0.b32.cont [9/16] %v2793, 128
          %2906 = vxpose.xlu0.b32.cont [10/16] %v2794, 128
          %2907 = vxpose.xlu0.b32.cont [11/16] %v2795, 128
          %2908 = vxpose.xlu0.b32.cont [12/16] %v2796, 128
          %2909 = vxpose.xlu0.b32.cont [13/16] %v2797, 128
          %2910 = vxpose.xlu0.b32.cont [14/16] %v2798, 128
          %2911 = vxpose.xlu0.b32.cont [15/16] %v2799, 128
          %2912 = vxpose.xlu0.b32.end [16/16] %v2800, 128
          %v2913 = vpop.trf.xlu0
          %v2914 = vpop.trf.xlu0
          %v2915 = vpop.trf.xlu0
          %v2916 = vpop.trf.xlu0
          %v2917 = vpop.trf.xlu0
          %v2918 = vpop.trf.xlu0
          %v2919 = vpop.trf.xlu0
          %v2920 = vpop.trf.xlu0
          %v2921 = vpop.trf.xlu0
          %v2922 = vpop.trf.xlu0
          %v2923 = vpop.trf.xlu0
          %v2924 = vpop.trf.xlu0
          %v2925 = vpop.trf.xlu0
          %v2926 = vpop.trf.xlu0
          %v2927 = vpop.trf.xlu0
          %v2928 = vpop.trf.xlu0
          %v2929 = vsel %vm881, %v2817, 0.0
          %v2930 = vsel %vm881, %v2849, 0.0
          %v2931 = vsel %vm881, %v2881, 0.0
          %v2932 = vsel %vm881, %v2913, 0.0
          %s2933 = smul.u32 %s2734, 4
          %s2934 = smul.addr %s2933, 8
          %s2935 = scalar_lea.vmem [#allocation3], %s2934
          %2936 = vst [vmem:[%s2935] sm:$0xff] %v2929
          %2937 = vst [vmem:[%s2935 + $0x8] sm:$0xff] %v2930
          %2938 = vst [vmem:[%s2935 + $0x10] sm:$0xff] %v2931
          %2939 = vst [vmem:[%s2935 + $0x18] sm:$0xff] %v2932
          %s2940 = sadd.s32 %s2734, 1
          %v2941 = vld [vmem:[%s2736 + $0x1] sm:$0xff]
          %v2942 = vld [vmem:[%s2736 + $0x11] sm:$0xff]
          %v2943 = vld [vmem:[%s2736 + $0x21] sm:$0xff]
          %v2944 = vld [vmem:[%s2736 + $0x31] sm:$0xff]
          %v2945 = vld [vmem:[%s2736 + $0x41] sm:$0xff]
          %v2946 = vld [vmem:[%s2736 + $0x51] sm:$0xff]
          %v2947 = vld [vmem:[%s2736 + $0x61] sm:$0xff]
          %v2948 = vld [vmem:[%s2736 + $0x71] sm:$0xff]
          %v2949 = vld [vmem:[%s2736 + $0xc1] sm:$0xff]
          %v2950 = vld [vmem:[%s2736 + $0xd1] sm:$0xff]
          %v2951 = vld [vmem:[%s2736 + $0xe1] sm:$0xff]
          %v2952 = vld [vmem:[%s2736 + $0xf1] sm:$0xff]
          %v2953 = vld [vmem:[%s2736 + $0x101] sm:$0xff]
          %v2954 = vld [vmem:[%s2736 + $0x111] sm:$0xff]
          %v2955 = vld [vmem:[%s2736 + $0x121] sm:$0xff]
          %v2956 = vld [vmem:[%s2736 + $0x131] sm:$0xff]
          %v2957 = vld [vmem:[%s2736 + $0x181] sm:$0xff]
          %v2958 = vld [vmem:[%s2736 + $0x191] sm:$0xff]
          %v2959 = vld [vmem:[%s2736 + $0x1a1] sm:$0xff]
          %v2960 = vld [vmem:[%s2736 + $0x1b1] sm:$0xff]
          %v2961 = vld [vmem:[%s2736 + $0x1c1] sm:$0xff]
          %v2962 = vld [vmem:[%s2736 + $0x1d1] sm:$0xff]
          %v2963 = vld [vmem:[%s2736 + $0x1e1] sm:$0xff]
          %v2964 = vld [vmem:[%s2736 + $0x1f1] sm:$0xff]
          %v2965 = vld [vmem:[%s2736 + $0x241] sm:$0xff]
          %v2966 = vld [vmem:[%s2736 + $0x251] sm:$0xff]
          %v2967 = vld [vmem:[%s2736 + $0x261] sm:$0xff]
          %v2968 = vld [vmem:[%s2736 + $0x271] sm:$0xff]
          %v2969 = vld [vmem:[%s2736 + $0x281] sm:$0xff]
          %v2970 = vld [vmem:[%s2736 + $0x291] sm:$0xff]
          %v2971 = vld [vmem:[%s2736 + $0x2a1] sm:$0xff]
          %v2972 = vld [vmem:[%s2736 + $0x2b1] sm:$0xff]
          %v2973 = vld [vmem:[%s2736 + $0x301] sm:$0xff]
          %v2974 = vld [vmem:[%s2736 + $0x311] sm:$0xff]
          %v2975 = vld [vmem:[%s2736 + $0x321] sm:$0xff]
          %v2976 = vld [vmem:[%s2736 + $0x331] sm:$0xff]
          %v2977 = vld [vmem:[%s2736 + $0x341] sm:$0xff]
          %v2978 = vld [vmem:[%s2736 + $0x351] sm:$0xff]
          %v2979 = vld [vmem:[%s2736 + $0x361] sm:$0xff]
          %v2980 = vld [vmem:[%s2736 + $0x371] sm:$0xff]
          %v2981 = vld [vmem:[%s2736 + $0x3c1] sm:$0xff]
          %v2982 = vld [vmem:[%s2736 + $0x3d1] sm:$0xff]
          %v2983 = vld [vmem:[%s2736 + $0x3e1] sm:$0xff]
          %v2984 = vld [vmem:[%s2736 + $0x3f1] sm:$0xff]
          %v2985 = vld [vmem:[%s2736 + $0x401] sm:$0xff]
          %v2986 = vld [vmem:[%s2736 + $0x411] sm:$0xff]
          %v2987 = vld [vmem:[%s2736 + $0x421] sm:$0xff]
          %v2988 = vld [vmem:[%s2736 + $0x431] sm:$0xff]
          %v2989 = vld [vmem:[%s2736 + $0x481] sm:$0xff]
          %v2990 = vld [vmem:[%s2736 + $0x491] sm:$0xff]
          %v2991 = vld [vmem:[%s2736 + $0x4a1] sm:$0xff]
          %v2992 = vld [vmem:[%s2736 + $0x4b1] sm:$0xff]
          %v2993 = vld [vmem:[%s2736 + $0x4c1] sm:$0xff]
          %v2994 = vld [vmem:[%s2736 + $0x4d1] sm:$0xff]
          %v2995 = vld [vmem:[%s2736 + $0x4e1] sm:$0xff]
          %v2996 = vld [vmem:[%s2736 + $0x4f1] sm:$0xff]
          %v2997 = vld [vmem:[%s2736 + $0x541] sm:$0xff]
          %v2998 = vld [vmem:[%s2736 + $0x551] sm:$0xff]
          %v2999 = vld [vmem:[%s2736 + $0x561] sm:$0xff]
          %v3000 = vld [vmem:[%s2736 + $0x571] sm:$0xff]
          %v3001 = vld [vmem:[%s2736 + $0x581] sm:$0xff]
          %v3002 = vld [vmem:[%s2736 + $0x591] sm:$0xff]
          %v3003 = vld [vmem:[%s2736 + $0x5a1] sm:$0xff]
          %v3004 = vld [vmem:[%s2736 + $0x5b1] sm:$0xff]
          %3005 = vxpose.xlu0.b32.start [1/16] %v2941, 128
          %3006 = vxpose.xlu0.b32.cont [2/16] %v2942, 128
          %3007 = vxpose.xlu0.b32.cont [3/16] %v2943, 128
          %3008 = vxpose.xlu0.b32.cont [4/16] %v2944, 128
          %3009 = vxpose.xlu0.b32.cont [5/16] %v2945, 128
          %3010 = vxpose.xlu0.b32.cont [6/16] %v2946, 128
          %3011 = vxpose.xlu0.b32.cont [7/16] %v2947, 128
          %3012 = vxpose.xlu0.b32.cont [8/16] %v2948, 128
          %3013 = vxpose.xlu0.b32.cont [9/16] %v2949, 128
          %3014 = vxpose.xlu0.b32.cont [10/16] %v2950, 128
          %3015 = vxpose.xlu0.b32.cont [11/16] %v2951, 128
          %3016 = vxpose.xlu0.b32.cont [12/16] %v2952, 128
          %3017 = vxpose.xlu0.b32.cont [13/16] %v2953, 128
          %3018 = vxpose.xlu0.b32.cont [14/16] %v2954, 128
          %3019 = vxpose.xlu0.b32.cont [15/16] %v2955, 128
          %3020 = vxpose.xlu0.b32.end [16/16] %v2956, 128
          %v3021 = vpop.trf.xlu0
          %v3022 = vpop.trf.xlu0
          %v3023 = vpop.trf.xlu0
          %v3024 = vpop.trf.xlu0
          %v3025 = vpop.trf.xlu0
          %v3026 = vpop.trf.xlu0
          %v3027 = vpop.trf.xlu0
          %v3028 = vpop.trf.xlu0
          %v3029 = vpop.trf.xlu0
          %v3030 = vpop.trf.xlu0
          %v3031 = vpop.trf.xlu0
          %v3032 = vpop.trf.xlu0
          %v3033 = vpop.trf.xlu0
          %v3034 = vpop.trf.xlu0
          %v3035 = vpop.trf.xlu0
          %v3036 = vpop.trf.xlu0
          %3037 = vxpose.xlu0.b32.start [1/16] %v2957, 128
          %3038 = vxpose.xlu0.b32.cont [2/16] %v2958, 128
          %3039 = vxpose.xlu0.b32.cont [3/16] %v2959, 128
          %3040 = vxpose.xlu0.b32.cont [4/16] %v2960, 128
          %3041 = vxpose.xlu0.b32.cont [5/16] %v2961, 128
          %3042 = vxpose.xlu0.b32.cont [6/16] %v2962, 128
          %3043 = vxpose.xlu0.b32.cont [7/16] %v2963, 128
          %3044 = vxpose.xlu0.b32.cont [8/16] %v2964, 128
          %3045 = vxpose.xlu0.b32.cont [9/16] %v2965, 128
          %3046 = vxpose.xlu0.b32.cont [10/16] %v2966, 128
          %3047 = vxpose.xlu0.b32.cont [11/16] %v2967, 128
          %3048 = vxpose.xlu0.b32.cont [12/16] %v2968, 128
          %3049 = vxpose.xlu0.b32.cont [13/16] %v2969, 128
          %3050 = vxpose.xlu0.b32.cont [14/16] %v2970, 128
          %3051 = vxpose.xlu0.b32.cont [15/16] %v2971, 128
          %3052 = vxpose.xlu0.b32.end [16/16] %v2972, 128
          %v3053 = vpop.trf.xlu0
          %v3054 = vpop.trf.xlu0
          %v3055 = vpop.trf.xlu0
          %v3056 = vpop.trf.xlu0
          %v3057 = vpop.trf.xlu0
          %v3058 = vpop.trf.xlu0
          %v3059 = vpop.trf.xlu0
          %v3060 = vpop.trf.xlu0
          %v3061 = vpop.trf.xlu0
          %v3062 = vpop.trf.xlu0
          %v3063 = vpop.trf.xlu0
          %v3064 = vpop.trf.xlu0
          %v3065 = vpop.trf.xlu0
          %v3066 = vpop.trf.xlu0
          %v3067 = vpop.trf.xlu0
          %v3068 = vpop.trf.xlu0
          %3069 = vxpose.xlu0.b32.start [1/16] %v2973, 128
          %3070 = vxpose.xlu0.b32.cont [2/16] %v2974, 128
          %3071 = vxpose.xlu0.b32.cont [3/16] %v2975, 128
          %3072 = vxpose.xlu0.b32.cont [4/16] %v2976, 128
          %3073 = vxpose.xlu0.b32.cont [5/16] %v2977, 128
          %3074 = vxpose.xlu0.b32.cont [6/16] %v2978, 128
          %3075 = vxpose.xlu0.b32.cont [7/16] %v2979, 128
          %3076 = vxpose.xlu0.b32.cont [8/16] %v2980, 128
          %3077 = vxpose.xlu0.b32.cont [9/16] %v2981, 128
          %3078 = vxpose.xlu0.b32.cont [10/16] %v2982, 128
          %3079 = vxpose.xlu0.b32.cont [11/16] %v2983, 128
          %3080 = vxpose.xlu0.b32.cont [12/16] %v2984, 128
          %3081 = vxpose.xlu0.b32.cont [13/16] %v2985, 128
          %3082 = vxpose.xlu0.b32.cont [14/16] %v2986, 128
          %3083 = vxpose.xlu0.b32.cont [15/16] %v2987, 128
          %3084 = vxpose.xlu0.b32.end [16/16] %v2988, 128
          %v3085 = vpop.trf.xlu0
          %v3086 = vpop.trf.xlu0
          %v3087 = vpop.trf.xlu0
          %v3088 = vpop.trf.xlu0
          %v3089 = vpop.trf.xlu0
          %v3090 = vpop.trf.xlu0
          %v3091 = vpop.trf.xlu0
          %v3092 = vpop.trf.xlu0
          %v3093 = vpop.trf.xlu0
          %v3094 = vpop.trf.xlu0
          %v3095 = vpop.trf.xlu0
          %v3096 = vpop.trf.xlu0
          %v3097 = vpop.trf.xlu0
          %v3098 = vpop.trf.xlu0
          %v3099 = vpop.trf.xlu0
          %v3100 = vpop.trf.xlu0
          %3101 = vxpose.xlu0.b32.start [1/16] %v2989, 128
          %3102 = vxpose.xlu0.b32.cont [2/16] %v2990, 128
          %3103 = vxpose.xlu0.b32.cont [3/16] %v2991, 128
          %3104 = vxpose.xlu0.b32.cont [4/16] %v2992, 128
          %3105 = vxpose.xlu0.b32.cont [5/16] %v2993, 128
          %3106 = vxpose.xlu0.b32.cont [6/16] %v2994, 128
          %3107 = vxpose.xlu0.b32.cont [7/16] %v2995, 128
          %3108 = vxpose.xlu0.b32.cont [8/16] %v2996, 128
          %3109 = vxpose.xlu0.b32.cont [9/16] %v2997, 128
          %3110 = vxpose.xlu0.b32.cont [10/16] %v2998, 128
          %3111 = vxpose.xlu0.b32.cont [11/16] %v2999, 128
          %3112 = vxpose.xlu0.b32.cont [12/16] %v3000, 128
          %3113 = vxpose.xlu0.b32.cont [13/16] %v3001, 128
          %3114 = vxpose.xlu0.b32.cont [14/16] %v3002, 128
          %3115 = vxpose.xlu0.b32.cont [15/16] %v3003, 128
          %3116 = vxpose.xlu0.b32.end [16/16] %v3004, 128
          %v3117 = vpop.trf.xlu0
          %v3118 = vpop.trf.xlu0
          %v3119 = vpop.trf.xlu0
          %v3120 = vpop.trf.xlu0
          %v3121 = vpop.trf.xlu0
          %v3122 = vpop.trf.xlu0
          %v3123 = vpop.trf.xlu0
          %v3124 = vpop.trf.xlu0
          %v3125 = vpop.trf.xlu0
          %v3126 = vpop.trf.xlu0
          %v3127 = vpop.trf.xlu0
          %v3128 = vpop.trf.xlu0
          %v3129 = vpop.trf.xlu0
          %v3130 = vpop.trf.xlu0
          %v3131 = vpop.trf.xlu0
          %v3132 = vpop.trf.xlu0
          %v3133 = vsel %vm881, %v3021, 0.0
          %v3134 = vsel %vm881, %v3053, 0.0
          %v3135 = vsel %vm881, %v3085, 0.0
          %v3136 = vsel %vm881, %v3117, 0.0
          %s3137 = smul.u32 %s2940, 4
          %s3138 = smul.addr %s3137, 8
          %s3139 = scalar_lea.vmem [#allocation3], %s3138
          %3140 = vst [vmem:[%s3139] sm:$0xff] %v3133
          %3141 = vst [vmem:[%s3139 + $0x8] sm:$0xff] %v3134
          %3142 = vst [vmem:[%s3139 + $0x10] sm:$0xff] %v3135
          %3143 = vst [vmem:[%s3139 + $0x18] sm:$0xff] %v3136
          %s3144 = sadd.s32 %s2734, 2
          %v3145 = vld [vmem:[%s2736 + $0x2] sm:$0xff]
          %v3146 = vld [vmem:[%s2736 + $0x12] sm:$0xff]
          %v3147 = vld [vmem:[%s2736 + $0x22] sm:$0xff]
          %v3148 = vld [vmem:[%s2736 + $0x32] sm:$0xff]
          %v3149 = vld [vmem:[%s2736 + $0x42] sm:$0xff]
          %v3150 = vld [vmem:[%s2736 + $0x52] sm:$0xff]
          %v3151 = vld [vmem:[%s2736 + $0x62] sm:$0xff]
          %v3152 = vld [vmem:[%s2736 + $0x72] sm:$0xff]
          %v3153 = vld [vmem:[%s2736 + $0xc2] sm:$0xff]
          %v3154 = vld [vmem:[%s2736 + $0xd2] sm:$0xff]
          %v3155 = vld [vmem:[%s2736 + $0xe2] sm:$0xff]
          %v3156 = vld [vmem:[%s2736 + $0xf2] sm:$0xff]
          %v3157 = vld [vmem:[%s2736 + $0x102] sm:$0xff]
          %v3158 = vld [vmem:[%s2736 + $0x112] sm:$0xff]
          %v3159 = vld [vmem:[%s2736 + $0x122] sm:$0xff]
          %v3160 = vld [vmem:[%s2736 + $0x132] sm:$0xff]
          %v3161 = vld [vmem:[%s2736 + $0x182] sm:$0xff]
          %v3162 = vld [vmem:[%s2736 + $0x192] sm:$0xff]
          %v3163 = vld [vmem:[%s2736 + $0x1a2] sm:$0xff]
          %v3164 = vld [vmem:[%s2736 + $0x1b2] sm:$0xff]
          %v3165 = vld [vmem:[%s2736 + $0x1c2] sm:$0xff]
          %v3166 = vld [vmem:[%s2736 + $0x1d2] sm:$0xff]
          %v3167 = vld [vmem:[%s2736 + $0x1e2] sm:$0xff]
          %v3168 = vld [vmem:[%s2736 + $0x1f2] sm:$0xff]
          %v3169 = vld [vmem:[%s2736 + $0x242] sm:$0xff]
          %v3170 = vld [vmem:[%s2736 + $0x252] sm:$0xff]
          %v3171 = vld [vmem:[%s2736 + $0x262] sm:$0xff]
          %v3172 = vld [vmem:[%s2736 + $0x272] sm:$0xff]
          %v3173 = vld [vmem:[%s2736 + $0x282] sm:$0xff]
          %v3174 = vld [vmem:[%s2736 + $0x292] sm:$0xff]
          %v3175 = vld [vmem:[%s2736 + $0x2a2] sm:$0xff]
          %v3176 = vld [vmem:[%s2736 + $0x2b2] sm:$0xff]
          %v3177 = vld [vmem:[%s2736 + $0x302] sm:$0xff]
          %v3178 = vld [vmem:[%s2736 + $0x312] sm:$0xff]
          %v3179 = vld [vmem:[%s2736 + $0x322] sm:$0xff]
          %v3180 = vld [vmem:[%s2736 + $0x332] sm:$0xff]
          %v3181 = vld [vmem:[%s2736 + $0x342] sm:$0xff]
          %v3182 = vld [vmem:[%s2736 + $0x352] sm:$0xff]
          %v3183 = vld [vmem:[%s2736 + $0x362] sm:$0xff]
          %v3184 = vld [vmem:[%s2736 + $0x372] sm:$0xff]
          %v3185 = vld [vmem:[%s2736 + $0x3c2] sm:$0xff]
          %v3186 = vld [vmem:[%s2736 + $0x3d2] sm:$0xff]
          %v3187 = vld [vmem:[%s2736 + $0x3e2] sm:$0xff]
          %v3188 = vld [vmem:[%s2736 + $0x3f2] sm:$0xff]
          %v3189 = vld [vmem:[%s2736 + $0x402] sm:$0xff]
          %v3190 = vld [vmem:[%s2736 + $0x412] sm:$0xff]
          %v3191 = vld [vmem:[%s2736 + $0x422] sm:$0xff]
          %v3192 = vld [vmem:[%s2736 + $0x432] sm:$0xff]
          %v3193 = vld [vmem:[%s2736 + $0x482] sm:$0xff]
          %v3194 = vld [vmem:[%s2736 + $0x492] sm:$0xff]
          %v3195 = vld [vmem:[%s2736 + $0x4a2] sm:$0xff]
          %v3196 = vld [vmem:[%s2736 + $0x4b2] sm:$0xff]
          %v3197 = vld [vmem:[%s2736 + $0x4c2] sm:$0xff]
          %v3198 = vld [vmem:[%s2736 + $0x4d2] sm:$0xff]
          %v3199 = vld [vmem:[%s2736 + $0x4e2] sm:$0xff]
          %v3200 = vld [vmem:[%s2736 + $0x4f2] sm:$0xff]
          %v3201 = vld [vmem:[%s2736 + $0x542] sm:$0xff]
          %v3202 = vld [vmem:[%s2736 + $0x552] sm:$0xff]
          %v3203 = vld [vmem:[%s2736 + $0x562] sm:$0xff]
          %v3204 = vld [vmem:[%s2736 + $0x572] sm:$0xff]
          %v3205 = vld [vmem:[%s2736 + $0x582] sm:$0xff]
          %v3206 = vld [vmem:[%s2736 + $0x592] sm:$0xff]
          %v3207 = vld [vmem:[%s2736 + $0x5a2] sm:$0xff]
          %v3208 = vld [vmem:[%s2736 + $0x5b2] sm:$0xff]
          %3209 = vxpose.xlu0.b32.start [1/16] %v3145, 128
          %3210 = vxpose.xlu0.b32.cont [2/16] %v3146, 128
          %3211 = vxpose.xlu0.b32.cont [3/16] %v3147, 128
          %3212 = vxpose.xlu0.b32.cont [4/16] %v3148, 128
          %3213 = vxpose.xlu0.b32.cont [5/16] %v3149, 128
          %3214 = vxpose.xlu0.b32.cont [6/16] %v3150, 128
          %3215 = vxpose.xlu0.b32.cont [7/16] %v3151, 128
          %3216 = vxpose.xlu0.b32.cont [8/16] %v3152, 128
          %3217 = vxpose.xlu0.b32.cont [9/16] %v3153, 128
          %3218 = vxpose.xlu0.b32.cont [10/16] %v3154, 128
          %3219 = vxpose.xlu0.b32.cont [11/16] %v3155, 128
          %3220 = vxpose.xlu0.b32.cont [12/16] %v3156, 128
          %3221 = vxpose.xlu0.b32.cont [13/16] %v3157, 128
          %3222 = vxpose.xlu0.b32.cont [14/16] %v3158, 128
          %3223 = vxpose.xlu0.b32.cont [15/16] %v3159, 128
          %3224 = vxpose.xlu0.b32.end [16/16] %v3160, 128
          %v3225 = vpop.trf.xlu0
          %v3226 = vpop.trf.xlu0
          %v3227 = vpop.trf.xlu0
          %v3228 = vpop.trf.xlu0
          %v3229 = vpop.trf.xlu0
          %v3230 = vpop.trf.xlu0
          %v3231 = vpop.trf.xlu0
          %v3232 = vpop.trf.xlu0
          %v3233 = vpop.trf.xlu0
          %v3234 = vpop.trf.xlu0
          %v3235 = vpop.trf.xlu0
          %v3236 = vpop.trf.xlu0
          %v3237 = vpop.trf.xlu0
          %v3238 = vpop.trf.xlu0
          %v3239 = vpop.trf.xlu0
          %v3240 = vpop.trf.xlu0
          %3241 = vxpose.xlu0.b32.start [1/16] %v3161, 128
          %3242 = vxpose.xlu0.b32.cont [2/16] %v3162, 128
          %3243 = vxpose.xlu0.b32.cont [3/16] %v3163, 128
          %3244 = vxpose.xlu0.b32.cont [4/16] %v3164, 128
          %3245 = vxpose.xlu0.b32.cont [5/16] %v3165, 128
          %3246 = vxpose.xlu0.b32.cont [6/16] %v3166, 128
          %3247 = vxpose.xlu0.b32.cont [7/16] %v3167, 128
          %3248 = vxpose.xlu0.b32.cont [8/16] %v3168, 128
          %3249 = vxpose.xlu0.b32.cont [9/16] %v3169, 128
          %3250 = vxpose.xlu0.b32.cont [10/16] %v3170, 128
          %3251 = vxpose.xlu0.b32.cont [11/16] %v3171, 128
          %3252 = vxpose.xlu0.b32.cont [12/16] %v3172, 128
          %3253 = vxpose.xlu0.b32.cont [13/16] %v3173, 128
          %3254 = vxpose.xlu0.b32.cont [14/16] %v3174, 128
          %3255 = vxpose.xlu0.b32.cont [15/16] %v3175, 128
          %3256 = vxpose.xlu0.b32.end [16/16] %v3176, 128
          %v3257 = vpop.trf.xlu0
          %v3258 = vpop.trf.xlu0
          %v3259 = vpop.trf.xlu0
          %v3260 = vpop.trf.xlu0
          %v3261 = vpop.trf.xlu0
          %v3262 = vpop.trf.xlu0
          %v3263 = vpop.trf.xlu0
          %v3264 = vpop.trf.xlu0
          %v3265 = vpop.trf.xlu0
          %v3266 = vpop.trf.xlu0
          %v3267 = vpop.trf.xlu0
          %v3268 = vpop.trf.xlu0
          %v3269 = vpop.trf.xlu0
          %v3270 = vpop.trf.xlu0
          %v3271 = vpop.trf.xlu0
          %v3272 = vpop.trf.xlu0
          %3273 = vxpose.xlu0.b32.start [1/16] %v3177, 128
          %3274 = vxpose.xlu0.b32.cont [2/16] %v3178, 128
          %3275 = vxpose.xlu0.b32.cont [3/16] %v3179, 128
          %3276 = vxpose.xlu0.b32.cont [4/16] %v3180, 128
          %3277 = vxpose.xlu0.b32.cont [5/16] %v3181, 128
          %3278 = vxpose.xlu0.b32.cont [6/16] %v3182, 128
          %3279 = vxpose.xlu0.b32.cont [7/16] %v3183, 128
          %3280 = vxpose.xlu0.b32.cont [8/16] %v3184, 128
          %3281 = vxpose.xlu0.b32.cont [9/16] %v3185, 128
          %3282 = vxpose.xlu0.b32.cont [10/16] %v3186, 128
          %3283 = vxpose.xlu0.b32.cont [11/16] %v3187, 128
          %3284 = vxpose.xlu0.b32.cont [12/16] %v3188, 128
          %3285 = vxpose.xlu0.b32.cont [13/16] %v3189, 128
          %3286 = vxpose.xlu0.b32.cont [14/16] %v3190, 128
          %3287 = vxpose.xlu0.b32.cont [15/16] %v3191, 128
          %3288 = vxpose.xlu0.b32.end [16/16] %v3192, 128
          %v3289 = vpop.trf.xlu0
          %v3290 = vpop.trf.xlu0
          %v3291 = vpop.trf.xlu0
          %v3292 = vpop.trf.xlu0
          %v3293 = vpop.trf.xlu0
          %v3294 = vpop.trf.xlu0
          %v3295 = vpop.trf.xlu0
          %v3296 = vpop.trf.xlu0
          %v3297 = vpop.trf.xlu0
          %v3298 = vpop.trf.xlu0
          %v3299 = vpop.trf.xlu0
          %v3300 = vpop.trf.xlu0
          %v3301 = vpop.trf.xlu0
          %v3302 = vpop.trf.xlu0
          %v3303 = vpop.trf.xlu0
          %v3304 = vpop.trf.xlu0
          %3305 = vxpose.xlu0.b32.start [1/16] %v3193, 128
          %3306 = vxpose.xlu0.b32.cont [2/16] %v3194, 128
          %3307 = vxpose.xlu0.b32.cont [3/16] %v3195, 128
          %3308 = vxpose.xlu0.b32.cont [4/16] %v3196, 128
          %3309 = vxpose.xlu0.b32.cont [5/16] %v3197, 128
          %3310 = vxpose.xlu0.b32.cont [6/16] %v3198, 128
          %3311 = vxpose.xlu0.b32.cont [7/16] %v3199, 128
          %3312 = vxpose.xlu0.b32.cont [8/16] %v3200, 128
          %3313 = vxpose.xlu0.b32.cont [9/16] %v3201, 128
          %3314 = vxpose.xlu0.b32.cont [10/16] %v3202, 128
          %3315 = vxpose.xlu0.b32.cont [11/16] %v3203, 128
          %3316 = vxpose.xlu0.b32.cont [12/16] %v3204, 128
          %3317 = vxpose.xlu0.b32.cont [13/16] %v3205, 128
          %3318 = vxpose.xlu0.b32.cont [14/16] %v3206, 128
          %3319 = vxpose.xlu0.b32.cont [15/16] %v3207, 128
          %3320 = vxpose.xlu0.b32.end [16/16] %v3208, 128
          %v3321 = vpop.trf.xlu0
          %v3322 = vpop.trf.xlu0
          %v3323 = vpop.trf.xlu0
          %v3324 = vpop.trf.xlu0
          %v3325 = vpop.trf.xlu0
          %v3326 = vpop.trf.xlu0
          %v3327 = vpop.trf.xlu0
          %v3328 = vpop.trf.xlu0
          %v3329 = vpop.trf.xlu0
          %v3330 = vpop.trf.xlu0
          %v3331 = vpop.trf.xlu0
          %v3332 = vpop.trf.xlu0
          %v3333 = vpop.trf.xlu0
          %v3334 = vpop.trf.xlu0
          %v3335 = vpop.trf.xlu0
          %v3336 = vpop.trf.xlu0
          %v3337 = vsel %vm881, %v3225, 0.0
          %v3338 = vsel %vm881, %v3257, 0.0
          %v3339 = vsel %vm881, %v3289, 0.0
          %v3340 = vsel %vm881, %v3321, 0.0
          %s3341 = smul.u32 %s3144, 4
          %s3342 = smul.addr %s3341, 8
          %s3343 = scalar_lea.vmem [#allocation3], %s3342
          %3344 = vst [vmem:[%s3343] sm:$0xff] %v3337
          %3345 = vst [vmem:[%s3343 + $0x8] sm:$0xff] %v3338
          %3346 = vst [vmem:[%s3343 + $0x10] sm:$0xff] %v3339
          %3347 = vst [vmem:[%s3343 + $0x18] sm:$0xff] %v3340
          %s3348 = sadd.s32 %s2734, 3
          %v3349 = vld [vmem:[%s2736 + $0x3] sm:$0xff]
          %v3350 = vld [vmem:[%s2736 + $0x13] sm:$0xff]
          %v3351 = vld [vmem:[%s2736 + $0x23] sm:$0xff]
          %v3352 = vld [vmem:[%s2736 + $0x33] sm:$0xff]
          %v3353 = vld [vmem:[%s2736 + $0x43] sm:$0xff]
          %v3354 = vld [vmem:[%s2736 + $0x53] sm:$0xff]
          %v3355 = vld [vmem:[%s2736 + $0x63] sm:$0xff]
          %v3356 = vld [vmem:[%s2736 + $0x73] sm:$0xff]
          %v3357 = vld [vmem:[%s2736 + $0xc3] sm:$0xff]
          %v3358 = vld [vmem:[%s2736 + $0xd3] sm:$0xff]
          %v3359 = vld [vmem:[%s2736 + $0xe3] sm:$0xff]
          %v3360 = vld [vmem:[%s2736 + $0xf3] sm:$0xff]
          %v3361 = vld [vmem:[%s2736 + $0x103] sm:$0xff]
          %v3362 = vld [vmem:[%s2736 + $0x113] sm:$0xff]
          %v3363 = vld [vmem:[%s2736 + $0x123] sm:$0xff]
          %v3364 = vld [vmem:[%s2736 + $0x133] sm:$0xff]
          %v3365 = vld [vmem:[%s2736 + $0x183] sm:$0xff]
          %v3366 = vld [vmem:[%s2736 + $0x193] sm:$0xff]
          %v3367 = vld [vmem:[%s2736 + $0x1a3] sm:$0xff]
          %v3368 = vld [vmem:[%s2736 + $0x1b3] sm:$0xff]
          %v3369 = vld [vmem:[%s2736 + $0x1c3] sm:$0xff]
          %v3370 = vld [vmem:[%s2736 + $0x1d3] sm:$0xff]
          %v3371 = vld [vmem:[%s2736 + $0x1e3] sm:$0xff]
          %v3372 = vld [vmem:[%s2736 + $0x1f3] sm:$0xff]
          %v3373 = vld [vmem:[%s2736 + $0x243] sm:$0xff]
          %v3374 = vld [vmem:[%s2736 + $0x253] sm:$0xff]
          %v3375 = vld [vmem:[%s2736 + $0x263] sm:$0xff]
          %v3376 = vld [vmem:[%s2736 + $0x273] sm:$0xff]
          %v3377 = vld [vmem:[%s2736 + $0x283] sm:$0xff]
          %v3378 = vld [vmem:[%s2736 + $0x293] sm:$0xff]
          %v3379 = vld [vmem:[%s2736 + $0x2a3] sm:$0xff]
          %v3380 = vld [vmem:[%s2736 + $0x2b3] sm:$0xff]
          %v3381 = vld [vmem:[%s2736 + $0x303] sm:$0xff]
          %v3382 = vld [vmem:[%s2736 + $0x313] sm:$0xff]
          %v3383 = vld [vmem:[%s2736 + $0x323] sm:$0xff]
          %v3384 = vld [vmem:[%s2736 + $0x333] sm:$0xff]
          %v3385 = vld [vmem:[%s2736 + $0x343] sm:$0xff]
          %v3386 = vld [vmem:[%s2736 + $0x353] sm:$0xff]
          %v3387 = vld [vmem:[%s2736 + $0x363] sm:$0xff]
          %v3388 = vld [vmem:[%s2736 + $0x373] sm:$0xff]
          %v3389 = vld [vmem:[%s2736 + $0x3c3] sm:$0xff]
          %v3390 = vld [vmem:[%s2736 + $0x3d3] sm:$0xff]
          %v3391 = vld [vmem:[%s2736 + $0x3e3] sm:$0xff]
          %v3392 = vld [vmem:[%s2736 + $0x3f3] sm:$0xff]
          %v3393 = vld [vmem:[%s2736 + $0x403] sm:$0xff]
          %v3394 = vld [vmem:[%s2736 + $0x413] sm:$0xff]
          %v3395 = vld [vmem:[%s2736 + $0x423] sm:$0xff]
          %v3396 = vld [vmem:[%s2736 + $0x433] sm:$0xff]
          %v3397 = vld [vmem:[%s2736 + $0x483] sm:$0xff]
          %v3398 = vld [vmem:[%s2736 + $0x493] sm:$0xff]
          %v3399 = vld [vmem:[%s2736 + $0x4a3] sm:$0xff]
          %v3400 = vld [vmem:[%s2736 + $0x4b3] sm:$0xff]
          %v3401 = vld [vmem:[%s2736 + $0x4c3] sm:$0xff]
          %v3402 = vld [vmem:[%s2736 + $0x4d3] sm:$0xff]
          %v3403 = vld [vmem:[%s2736 + $0x4e3] sm:$0xff]
          %v3404 = vld [vmem:[%s2736 + $0x4f3] sm:$0xff]
          %v3405 = vld [vmem:[%s2736 + $0x543] sm:$0xff]
          %v3406 = vld [vmem:[%s2736 + $0x553] sm:$0xff]
          %v3407 = vld [vmem:[%s2736 + $0x563] sm:$0xff]
          %v3408 = vld [vmem:[%s2736 + $0x573] sm:$0xff]
          %v3409 = vld [vmem:[%s2736 + $0x583] sm:$0xff]
          %v3410 = vld [vmem:[%s2736 + $0x593] sm:$0xff]
          %v3411 = vld [vmem:[%s2736 + $0x5a3] sm:$0xff]
          %v3412 = vld [vmem:[%s2736 + $0x5b3] sm:$0xff]
          %3413 = vxpose.xlu0.b32.start [1/16] %v3349, 128
          %3414 = vxpose.xlu0.b32.cont [2/16] %v3350, 128
          %3415 = vxpose.xlu0.b32.cont [3/16] %v3351, 128
          %3416 = vxpose.xlu0.b32.cont [4/16] %v3352, 128
          %3417 = vxpose.xlu0.b32.cont [5/16] %v3353, 128
          %3418 = vxpose.xlu0.b32.cont [6/16] %v3354, 128
          %3419 = vxpose.xlu0.b32.cont [7/16] %v3355, 128
          %3420 = vxpose.xlu0.b32.cont [8/16] %v3356, 128
          %3421 = vxpose.xlu0.b32.cont [9/16] %v3357, 128
          %3422 = vxpose.xlu0.b32.cont [10/16] %v3358, 128
          %3423 = vxpose.xlu0.b32.cont [11/16] %v3359, 128
          %3424 = vxpose.xlu0.b32.cont [12/16] %v3360, 128
          %3425 = vxpose.xlu0.b32.cont [13/16] %v3361, 128
          %3426 = vxpose.xlu0.b32.cont [14/16] %v3362, 128
          %3427 = vxpose.xlu0.b32.cont [15/16] %v3363, 128
          %3428 = vxpose.xlu0.b32.end [16/16] %v3364, 128
          %v3429 = vpop.trf.xlu0
          %v3430 = vpop.trf.xlu0
          %v3431 = vpop.trf.xlu0
          %v3432 = vpop.trf.xlu0
          %v3433 = vpop.trf.xlu0
          %v3434 = vpop.trf.xlu0
          %v3435 = vpop.trf.xlu0
          %v3436 = vpop.trf.xlu0
          %v3437 = vpop.trf.xlu0
          %v3438 = vpop.trf.xlu0
          %v3439 = vpop.trf.xlu0
          %v3440 = vpop.trf.xlu0
          %v3441 = vpop.trf.xlu0
          %v3442 = vpop.trf.xlu0
          %v3443 = vpop.trf.xlu0
          %v3444 = vpop.trf.xlu0
          %3445 = vxpose.xlu0.b32.start [1/16] %v3365, 128
          %3446 = vxpose.xlu0.b32.cont [2/16] %v3366, 128
          %3447 = vxpose.xlu0.b32.cont [3/16] %v3367, 128
          %3448 = vxpose.xlu0.b32.cont [4/16] %v3368, 128
          %3449 = vxpose.xlu0.b32.cont [5/16] %v3369, 128
          %3450 = vxpose.xlu0.b32.cont [6/16] %v3370, 128
          %3451 = vxpose.xlu0.b32.cont [7/16] %v3371, 128
          %3452 = vxpose.xlu0.b32.cont [8/16] %v3372, 128
          %3453 = vxpose.xlu0.b32.cont [9/16] %v3373, 128
          %3454 = vxpose.xlu0.b32.cont [10/16] %v3374, 128
          %3455 = vxpose.xlu0.b32.cont [11/16] %v3375, 128
          %3456 = vxpose.xlu0.b32.cont [12/16] %v3376, 128
          %3457 = vxpose.xlu0.b32.cont [13/16] %v3377, 128
          %3458 = vxpose.xlu0.b32.cont [14/16] %v3378, 128
          %3459 = vxpose.xlu0.b32.cont [15/16] %v3379, 128
          %3460 = vxpose.xlu0.b32.end [16/16] %v3380, 128
          %v3461 = vpop.trf.xlu0
          %v3462 = vpop.trf.xlu0
          %v3463 = vpop.trf.xlu0
          %v3464 = vpop.trf.xlu0
          %v3465 = vpop.trf.xlu0
          %v3466 = vpop.trf.xlu0
          %v3467 = vpop.trf.xlu0
          %v3468 = vpop.trf.xlu0
          %v3469 = vpop.trf.xlu0
          %v3470 = vpop.trf.xlu0
          %v3471 = vpop.trf.xlu0
          %v3472 = vpop.trf.xlu0
          %v3473 = vpop.trf.xlu0
          %v3474 = vpop.trf.xlu0
          %v3475 = vpop.trf.xlu0
          %v3476 = vpop.trf.xlu0
          %3477 = vxpose.xlu0.b32.start [1/16] %v3381, 128
          %3478 = vxpose.xlu0.b32.cont [2/16] %v3382, 128
          %3479 = vxpose.xlu0.b32.cont [3/16] %v3383, 128
          %3480 = vxpose.xlu0.b32.cont [4/16] %v3384, 128
          %3481 = vxpose.xlu0.b32.cont [5/16] %v3385, 128
          %3482 = vxpose.xlu0.b32.cont [6/16] %v3386, 128
          %3483 = vxpose.xlu0.b32.cont [7/16] %v3387, 128
          %3484 = vxpose.xlu0.b32.cont [8/16] %v3388, 128
          %3485 = vxpose.xlu0.b32.cont [9/16] %v3389, 128
          %3486 = vxpose.xlu0.b32.cont [10/16] %v3390, 128
          %3487 = vxpose.xlu0.b32.cont [11/16] %v3391, 128
          %3488 = vxpose.xlu0.b32.cont [12/16] %v3392, 128
          %3489 = vxpose.xlu0.b32.cont [13/16] %v3393, 128
          %3490 = vxpose.xlu0.b32.cont [14/16] %v3394, 128
          %3491 = vxpose.xlu0.b32.cont [15/16] %v3395, 128
          %3492 = vxpose.xlu0.b32.end [16/16] %v3396, 128
          %v3493 = vpop.trf.xlu0
          %v3494 = vpop.trf.xlu0
          %v3495 = vpop.trf.xlu0
          %v3496 = vpop.trf.xlu0
          %v3497 = vpop.trf.xlu0
          %v3498 = vpop.trf.xlu0
          %v3499 = vpop.trf.xlu0
          %v3500 = vpop.trf.xlu0
          %v3501 = vpop.trf.xlu0
          %v3502 = vpop.trf.xlu0
          %v3503 = vpop.trf.xlu0
          %v3504 = vpop.trf.xlu0
          %v3505 = vpop.trf.xlu0
          %v3506 = vpop.trf.xlu0
          %v3507 = vpop.trf.xlu0
          %v3508 = vpop.trf.xlu0
          %3509 = vxpose.xlu0.b32.start [1/16] %v3397, 128
          %3510 = vxpose.xlu0.b32.cont [2/16] %v3398, 128
          %3511 = vxpose.xlu0.b32.cont [3/16] %v3399, 128
          %3512 = vxpose.xlu0.b32.cont [4/16] %v3400, 128
          %3513 = vxpose.xlu0.b32.cont [5/16] %v3401, 128
          %3514 = vxpose.xlu0.b32.cont [6/16] %v3402, 128
          %3515 = vxpose.xlu0.b32.cont [7/16] %v3403, 128
          %3516 = vxpose.xlu0.b32.cont [8/16] %v3404, 128
          %3517 = vxpose.xlu0.b32.cont [9/16] %v3405, 128
          %3518 = vxpose.xlu0.b32.cont [10/16] %v3406, 128
          %3519 = vxpose.xlu0.b32.cont [11/16] %v3407, 128
          %3520 = vxpose.xlu0.b32.cont [12/16] %v3408, 128
          %3521 = vxpose.xlu0.b32.cont [13/16] %v3409, 128
          %3522 = vxpose.xlu0.b32.cont [14/16] %v3410, 128
          %3523 = vxpose.xlu0.b32.cont [15/16] %v3411, 128
          %3524 = vxpose.xlu0.b32.end [16/16] %v3412, 128
          %v3525 = vpop.trf.xlu0
          %v3526 = vpop.trf.xlu0
          %v3527 = vpop.trf.xlu0
          %v3528 = vpop.trf.xlu0
          %v3529 = vpop.trf.xlu0
          %v3530 = vpop.trf.xlu0
          %v3531 = vpop.trf.xlu0
          %v3532 = vpop.trf.xlu0
          %v3533 = vpop.trf.xlu0
          %v3534 = vpop.trf.xlu0
          %v3535 = vpop.trf.xlu0
          %v3536 = vpop.trf.xlu0
          %v3537 = vpop.trf.xlu0
          %v3538 = vpop.trf.xlu0
          %v3539 = vpop.trf.xlu0
          %v3540 = vpop.trf.xlu0
          %v3541 = vsel %vm881, %v3429, 0.0
          %v3542 = vsel %vm881, %v3461, 0.0
          %v3543 = vsel %vm881, %v3493, 0.0
          %v3544 = vsel %vm881, %v3525, 0.0
          %s3545 = smul.u32 %s3348, 4
          %s3546 = smul.addr %s3545, 8
          %s3547 = scalar_lea.vmem [#allocation3], %s3546
          %3548 = vst [vmem:[%s3547] sm:$0xff] %v3541
          %3549 = vst [vmem:[%s3547 + $0x8] sm:$0xff] %v3542
          %3550 = vst [vmem:[%s3547 + $0x10] sm:$0xff] %v3543
          %3551 = vst [vmem:[%s3547 + $0x18] sm:$0xff] %v3544
          %s3552 = sadd.s32 %s2734, 4
          %v3553 = vld [vmem:[%s2736 + $0x4] sm:$0xff]
          %v3554 = vld [vmem:[%s2736 + $0x14] sm:$0xff]
          %v3555 = vld [vmem:[%s2736 + $0x24] sm:$0xff]
          %v3556 = vld [vmem:[%s2736 + $0x34] sm:$0xff]
          %v3557 = vld [vmem:[%s2736 + $0x44] sm:$0xff]
          %v3558 = vld [vmem:[%s2736 + $0x54] sm:$0xff]
          %v3559 = vld [vmem:[%s2736 + $0x64] sm:$0xff]
          %v3560 = vld [vmem:[%s2736 + $0x74] sm:$0xff]
          %v3561 = vld [vmem:[%s2736 + $0xc4] sm:$0xff]
          %v3562 = vld [vmem:[%s2736 + $0xd4] sm:$0xff]
          %v3563 = vld [vmem:[%s2736 + $0xe4] sm:$0xff]
          %v3564 = vld [vmem:[%s2736 + $0xf4] sm:$0xff]
          %v3565 = vld [vmem:[%s2736 + $0x104] sm:$0xff]
          %v3566 = vld [vmem:[%s2736 + $0x114] sm:$0xff]
          %v3567 = vld [vmem:[%s2736 + $0x124] sm:$0xff]
          %v3568 = vld [vmem:[%s2736 + $0x134] sm:$0xff]
          %v3569 = vld [vmem:[%s2736 + $0x184] sm:$0xff]
          %v3570 = vld [vmem:[%s2736 + $0x194] sm:$0xff]
          %v3571 = vld [vmem:[%s2736 + $0x1a4] sm:$0xff]
          %v3572 = vld [vmem:[%s2736 + $0x1b4] sm:$0xff]
          %v3573 = vld [vmem:[%s2736 + $0x1c4] sm:$0xff]
          %v3574 = vld [vmem:[%s2736 + $0x1d4] sm:$0xff]
          %v3575 = vld [vmem:[%s2736 + $0x1e4] sm:$0xff]
          %v3576 = vld [vmem:[%s2736 + $0x1f4] sm:$0xff]
          %v3577 = vld [vmem:[%s2736 + $0x244] sm:$0xff]
          %v3578 = vld [vmem:[%s2736 + $0x254] sm:$0xff]
          %v3579 = vld [vmem:[%s2736 + $0x264] sm:$0xff]
          %v3580 = vld [vmem:[%s2736 + $0x274] sm:$0xff]
          %v3581 = vld [vmem:[%s2736 + $0x284] sm:$0xff]
          %v3582 = vld [vmem:[%s2736 + $0x294] sm:$0xff]
          %v3583 = vld [vmem:[%s2736 + $0x2a4] sm:$0xff]
          %v3584 = vld [vmem:[%s2736 + $0x2b4] sm:$0xff]
          %v3585 = vld [vmem:[%s2736 + $0x304] sm:$0xff]
          %v3586 = vld [vmem:[%s2736 + $0x314] sm:$0xff]
          %v3587 = vld [vmem:[%s2736 + $0x324] sm:$0xff]
          %v3588 = vld [vmem:[%s2736 + $0x334] sm:$0xff]
          %v3589 = vld [vmem:[%s2736 + $0x344] sm:$0xff]
          %v3590 = vld [vmem:[%s2736 + $0x354] sm:$0xff]
          %v3591 = vld [vmem:[%s2736 + $0x364] sm:$0xff]
          %v3592 = vld [vmem:[%s2736 + $0x374] sm:$0xff]
          %v3593 = vld [vmem:[%s2736 + $0x3c4] sm:$0xff]
          %v3594 = vld [vmem:[%s2736 + $0x3d4] sm:$0xff]
          %v3595 = vld [vmem:[%s2736 + $0x3e4] sm:$0xff]
          %v3596 = vld [vmem:[%s2736 + $0x3f4] sm:$0xff]
          %v3597 = vld [vmem:[%s2736 + $0x404] sm:$0xff]
          %v3598 = vld [vmem:[%s2736 + $0x414] sm:$0xff]
          %v3599 = vld [vmem:[%s2736 + $0x424] sm:$0xff]
          %v3600 = vld [vmem:[%s2736 + $0x434] sm:$0xff]
          %v3601 = vld [vmem:[%s2736 + $0x484] sm:$0xff]
          %v3602 = vld [vmem:[%s2736 + $0x494] sm:$0xff]
          %v3603 = vld [vmem:[%s2736 + $0x4a4] sm:$0xff]
          %v3604 = vld [vmem:[%s2736 + $0x4b4] sm:$0xff]
          %v3605 = vld [vmem:[%s2736 + $0x4c4] sm:$0xff]
          %v3606 = vld [vmem:[%s2736 + $0x4d4] sm:$0xff]
          %v3607 = vld [vmem:[%s2736 + $0x4e4] sm:$0xff]
          %v3608 = vld [vmem:[%s2736 + $0x4f4] sm:$0xff]
          %v3609 = vld [vmem:[%s2736 + $0x544] sm:$0xff]
          %v3610 = vld [vmem:[%s2736 + $0x554] sm:$0xff]
          %v3611 = vld [vmem:[%s2736 + $0x564] sm:$0xff]
          %v3612 = vld [vmem:[%s2736 + $0x574] sm:$0xff]
          %v3613 = vld [vmem:[%s2736 + $0x584] sm:$0xff]
          %v3614 = vld [vmem:[%s2736 + $0x594] sm:$0xff]
          %v3615 = vld [vmem:[%s2736 + $0x5a4] sm:$0xff]
          %v3616 = vld [vmem:[%s2736 + $0x5b4] sm:$0xff]
          %3617 = vxpose.xlu0.b32.start [1/16] %v3553, 128
          %3618 = vxpose.xlu0.b32.cont [2/16] %v3554, 128
          %3619 = vxpose.xlu0.b32.cont [3/16] %v3555, 128
          %3620 = vxpose.xlu0.b32.cont [4/16] %v3556, 128
          %3621 = vxpose.xlu0.b32.cont [5/16] %v3557, 128
          %3622 = vxpose.xlu0.b32.cont [6/16] %v3558, 128
          %3623 = vxpose.xlu0.b32.cont [7/16] %v3559, 128
          %3624 = vxpose.xlu0.b32.cont [8/16] %v3560, 128
          %3625 = vxpose.xlu0.b32.cont [9/16] %v3561, 128
          %3626 = vxpose.xlu0.b32.cont [10/16] %v3562, 128
          %3627 = vxpose.xlu0.b32.cont [11/16] %v3563, 128
          %3628 = vxpose.xlu0.b32.cont [12/16] %v3564, 128
          %3629 = vxpose.xlu0.b32.cont [13/16] %v3565, 128
          %3630 = vxpose.xlu0.b32.cont [14/16] %v3566, 128
          %3631 = vxpose.xlu0.b32.cont [15/16] %v3567, 128
          %3632 = vxpose.xlu0.b32.end [16/16] %v3568, 128
          %v3633 = vpop.trf.xlu0
          %v3634 = vpop.trf.xlu0
          %v3635 = vpop.trf.xlu0
          %v3636 = vpop.trf.xlu0
          %v3637 = vpop.trf.xlu0
          %v3638 = vpop.trf.xlu0
          %v3639 = vpop.trf.xlu0
          %v3640 = vpop.trf.xlu0
          %v3641 = vpop.trf.xlu0
          %v3642 = vpop.trf.xlu0
          %v3643 = vpop.trf.xlu0
          %v3644 = vpop.trf.xlu0
          %v3645 = vpop.trf.xlu0
          %v3646 = vpop.trf.xlu0
          %v3647 = vpop.trf.xlu0
          %v3648 = vpop.trf.xlu0
          %3649 = vxpose.xlu0.b32.start [1/16] %v3569, 128
          %3650 = vxpose.xlu0.b32.cont [2/16] %v3570, 128
          %3651 = vxpose.xlu0.b32.cont [3/16] %v3571, 128
          %3652 = vxpose.xlu0.b32.cont [4/16] %v3572, 128
          %3653 = vxpose.xlu0.b32.cont [5/16] %v3573, 128
          %3654 = vxpose.xlu0.b32.cont [6/16] %v3574, 128
          %3655 = vxpose.xlu0.b32.cont [7/16] %v3575, 128
          %3656 = vxpose.xlu0.b32.cont [8/16] %v3576, 128
          %3657 = vxpose.xlu0.b32.cont [9/16] %v3577, 128
          %3658 = vxpose.xlu0.b32.cont [10/16] %v3578, 128
          %3659 = vxpose.xlu0.b32.cont [11/16] %v3579, 128
          %3660 = vxpose.xlu0.b32.cont [12/16] %v3580, 128
          %3661 = vxpose.xlu0.b32.cont [13/16] %v3581, 128
          %3662 = vxpose.xlu0.b32.cont [14/16] %v3582, 128
          %3663 = vxpose.xlu0.b32.cont [15/16] %v3583, 128
          %3664 = vxpose.xlu0.b32.end [16/16] %v3584, 128
          %v3665 = vpop.trf.xlu0
          %v3666 = vpop.trf.xlu0
          %v3667 = vpop.trf.xlu0
          %v3668 = vpop.trf.xlu0
          %v3669 = vpop.trf.xlu0
          %v3670 = vpop.trf.xlu0
          %v3671 = vpop.trf.xlu0
          %v3672 = vpop.trf.xlu0
          %v3673 = vpop.trf.xlu0
          %v3674 = vpop.trf.xlu0
          %v3675 = vpop.trf.xlu0
          %v3676 = vpop.trf.xlu0
          %v3677 = vpop.trf.xlu0
          %v3678 = vpop.trf.xlu0
          %v3679 = vpop.trf.xlu0
          %v3680 = vpop.trf.xlu0
          %3681 = vxpose.xlu0.b32.start [1/16] %v3585, 128
          %3682 = vxpose.xlu0.b32.cont [2/16] %v3586, 128
          %3683 = vxpose.xlu0.b32.cont [3/16] %v3587, 128
          %3684 = vxpose.xlu0.b32.cont [4/16] %v3588, 128
          %3685 = vxpose.xlu0.b32.cont [5/16] %v3589, 128
          %3686 = vxpose.xlu0.b32.cont [6/16] %v3590, 128
          %3687 = vxpose.xlu0.b32.cont [7/16] %v3591, 128
          %3688 = vxpose.xlu0.b32.cont [8/16] %v3592, 128
          %3689 = vxpose.xlu0.b32.cont [9/16] %v3593, 128
          %3690 = vxpose.xlu0.b32.cont [10/16] %v3594, 128
          %3691 = vxpose.xlu0.b32.cont [11/16] %v3595, 128
          %3692 = vxpose.xlu0.b32.cont [12/16] %v3596, 128
          %3693 = vxpose.xlu0.b32.cont [13/16] %v3597, 128
          %3694 = vxpose.xlu0.b32.cont [14/16] %v3598, 128
          %3695 = vxpose.xlu0.b32.cont [15/16] %v3599, 128
          %3696 = vxpose.xlu0.b32.end [16/16] %v3600, 128
          %v3697 = vpop.trf.xlu0
          %v3698 = vpop.trf.xlu0
          %v3699 = vpop.trf.xlu0
          %v3700 = vpop.trf.xlu0
          %v3701 = vpop.trf.xlu0
          %v3702 = vpop.trf.xlu0
          %v3703 = vpop.trf.xlu0
          %v3704 = vpop.trf.xlu0
          %v3705 = vpop.trf.xlu0
          %v3706 = vpop.trf.xlu0
          %v3707 = vpop.trf.xlu0
          %v3708 = vpop.trf.xlu0
          %v3709 = vpop.trf.xlu0
          %v3710 = vpop.trf.xlu0
          %v3711 = vpop.trf.xlu0
          %v3712 = vpop.trf.xlu0
          %3713 = vxpose.xlu0.b32.start [1/16] %v3601, 128
          %3714 = vxpose.xlu0.b32.cont [2/16] %v3602, 128
          %3715 = vxpose.xlu0.b32.cont [3/16] %v3603, 128
          %3716 = vxpose.xlu0.b32.cont [4/16] %v3604, 128
          %3717 = vxpose.xlu0.b32.cont [5/16] %v3605, 128
          %3718 = vxpose.xlu0.b32.cont [6/16] %v3606, 128
          %3719 = vxpose.xlu0.b32.cont [7/16] %v3607, 128
          %3720 = vxpose.xlu0.b32.cont [8/16] %v3608, 128
          %3721 = vxpose.xlu0.b32.cont [9/16] %v3609, 128
          %3722 = vxpose.xlu0.b32.cont [10/16] %v3610, 128
          %3723 = vxpose.xlu0.b32.cont [11/16] %v3611, 128
          %3724 = vxpose.xlu0.b32.cont [12/16] %v3612, 128
          %3725 = vxpose.xlu0.b32.cont [13/16] %v3613, 128
          %3726 = vxpose.xlu0.b32.cont [14/16] %v3614, 128
          %3727 = vxpose.xlu0.b32.cont [15/16] %v3615, 128
          %3728 = vxpose.xlu0.b32.end [16/16] %v3616, 128
          %v3729 = vpop.trf.xlu0
          %v3730 = vpop.trf.xlu0
          %v3731 = vpop.trf.xlu0
          %v3732 = vpop.trf.xlu0
          %v3733 = vpop.trf.xlu0
          %v3734 = vpop.trf.xlu0
          %v3735 = vpop.trf.xlu0
          %v3736 = vpop.trf.xlu0
          %v3737 = vpop.trf.xlu0
          %v3738 = vpop.trf.xlu0
          %v3739 = vpop.trf.xlu0
          %v3740 = vpop.trf.xlu0
          %v3741 = vpop.trf.xlu0
          %v3742 = vpop.trf.xlu0
          %v3743 = vpop.trf.xlu0
          %v3744 = vpop.trf.xlu0
          %v3745 = vsel %vm881, %v3633, 0.0
          %v3746 = vsel %vm881, %v3665, 0.0
          %v3747 = vsel %vm881, %v3697, 0.0
          %v3748 = vsel %vm881, %v3729, 0.0
          %s3749 = smul.u32 %s3552, 4
          %s3750 = smul.addr %s3749, 8
          %s3751 = scalar_lea.vmem [#allocation3], %s3750
          %3752 = vst [vmem:[%s3751] sm:$0xff] %v3745
          %3753 = vst [vmem:[%s3751 + $0x8] sm:$0xff] %v3746
          %3754 = vst [vmem:[%s3751 + $0x10] sm:$0xff] %v3747
          %3755 = vst [vmem:[%s3751 + $0x18] sm:$0xff] %v3748
          %s3756 = sadd.s32 %s1709, 3
          %s3757 = smul.u32 %s3756, 5
          %s3758 = sadd.s32 48, %s687
          %s3759 = scalar_lea.vmem [#allocation2], %s3758
          %v3760 = vld [vmem:[%s3759] sm:$0xff]
          %v3761 = vld [vmem:[%s3759 + $0x10] sm:$0xff]
          %v3762 = vld [vmem:[%s3759 + $0x20] sm:$0xff]
          %v3763 = vld [vmem:[%s3759 + $0x30] sm:$0xff]
          %v3764 = vld [vmem:[%s3759 + $0x40] sm:$0xff]
          %v3765 = vld [vmem:[%s3759 + $0x50] sm:$0xff]
          %v3766 = vld [vmem:[%s3759 + $0x60] sm:$0xff]
          %v3767 = vld [vmem:[%s3759 + $0x70] sm:$0xff]
          %v3768 = vld [vmem:[%s3759 + $0xc0] sm:$0xff]
          %v3769 = vld [vmem:[%s3759 + $0xd0] sm:$0xff]
          %v3770 = vld [vmem:[%s3759 + $0xe0] sm:$0xff]
          %v3771 = vld [vmem:[%s3759 + $0xf0] sm:$0xff]
          %v3772 = vld [vmem:[%s3759 + $0x100] sm:$0xff]
          %v3773 = vld [vmem:[%s3759 + $0x110] sm:$0xff]
          %v3774 = vld [vmem:[%s3759 + $0x120] sm:$0xff]
          %v3775 = vld [vmem:[%s3759 + $0x130] sm:$0xff]
          %v3776 = vld [vmem:[%s3759 + $0x180] sm:$0xff]
          %v3777 = vld [vmem:[%s3759 + $0x190] sm:$0xff]
          %v3778 = vld [vmem:[%s3759 + $0x1a0] sm:$0xff]
          %v3779 = vld [vmem:[%s3759 + $0x1b0] sm:$0xff]
          %v3780 = vld [vmem:[%s3759 + $0x1c0] sm:$0xff]
          %v3781 = vld [vmem:[%s3759 + $0x1d0] sm:$0xff]
          %v3782 = vld [vmem:[%s3759 + $0x1e0] sm:$0xff]
          %v3783 = vld [vmem:[%s3759 + $0x1f0] sm:$0xff]
          %v3784 = vld [vmem:[%s3759 + $0x240] sm:$0xff]
          %v3785 = vld [vmem:[%s3759 + $0x250] sm:$0xff]
          %v3786 = vld [vmem:[%s3759 + $0x260] sm:$0xff]
          %v3787 = vld [vmem:[%s3759 + $0x270] sm:$0xff]
          %v3788 = vld [vmem:[%s3759 + $0x280] sm:$0xff]
          %v3789 = vld [vmem:[%s3759 + $0x290] sm:$0xff]
          %v3790 = vld [vmem:[%s3759 + $0x2a0] sm:$0xff]
          %v3791 = vld [vmem:[%s3759 + $0x2b0] sm:$0xff]
          %v3792 = vld [vmem:[%s3759 + $0x300] sm:$0xff]
          %v3793 = vld [vmem:[%s3759 + $0x310] sm:$0xff]
          %v3794 = vld [vmem:[%s3759 + $0x320] sm:$0xff]
          %v3795 = vld [vmem:[%s3759 + $0x330] sm:$0xff]
          %v3796 = vld [vmem:[%s3759 + $0x340] sm:$0xff]
          %v3797 = vld [vmem:[%s3759 + $0x350] sm:$0xff]
          %v3798 = vld [vmem:[%s3759 + $0x360] sm:$0xff]
          %v3799 = vld [vmem:[%s3759 + $0x370] sm:$0xff]
          %v3800 = vld [vmem:[%s3759 + $0x3c0] sm:$0xff]
          %v3801 = vld [vmem:[%s3759 + $0x3d0] sm:$0xff]
          %v3802 = vld [vmem:[%s3759 + $0x3e0] sm:$0xff]
          %v3803 = vld [vmem:[%s3759 + $0x3f0] sm:$0xff]
          %v3804 = vld [vmem:[%s3759 + $0x400] sm:$0xff]
          %v3805 = vld [vmem:[%s3759 + $0x410] sm:$0xff]
          %v3806 = vld [vmem:[%s3759 + $0x420] sm:$0xff]
          %v3807 = vld [vmem:[%s3759 + $0x430] sm:$0xff]
          %v3808 = vld [vmem:[%s3759 + $0x480] sm:$0xff]
          %v3809 = vld [vmem:[%s3759 + $0x490] sm:$0xff]
          %v3810 = vld [vmem:[%s3759 + $0x4a0] sm:$0xff]
          %v3811 = vld [vmem:[%s3759 + $0x4b0] sm:$0xff]
          %v3812 = vld [vmem:[%s3759 + $0x4c0] sm:$0xff]
          %v3813 = vld [vmem:[%s3759 + $0x4d0] sm:$0xff]
          %v3814 = vld [vmem:[%s3759 + $0x4e0] sm:$0xff]
          %v3815 = vld [vmem:[%s3759 + $0x4f0] sm:$0xff]
          %v3816 = vld [vmem:[%s3759 + $0x540] sm:$0xff]
          %v3817 = vld [vmem:[%s3759 + $0x550] sm:$0xff]
          %v3818 = vld [vmem:[%s3759 + $0x560] sm:$0xff]
          %v3819 = vld [vmem:[%s3759 + $0x570] sm:$0xff]
          %v3820 = vld [vmem:[%s3759 + $0x580] sm:$0xff]
          %v3821 = vld [vmem:[%s3759 + $0x590] sm:$0xff]
          %v3822 = vld [vmem:[%s3759 + $0x5a0] sm:$0xff]
          %v3823 = vld [vmem:[%s3759 + $0x5b0] sm:$0xff]
          %3824 = vxpose.xlu0.b32.start [1/16] %v3760, 128
          %3825 = vxpose.xlu0.b32.cont [2/16] %v3761, 128
          %3826 = vxpose.xlu0.b32.cont [3/16] %v3762, 128
          %3827 = vxpose.xlu0.b32.cont [4/16] %v3763, 128
          %3828 = vxpose.xlu0.b32.cont [5/16] %v3764, 128
          %3829 = vxpose.xlu0.b32.cont [6/16] %v3765, 128
          %3830 = vxpose.xlu0.b32.cont [7/16] %v3766, 128
          %3831 = vxpose.xlu0.b32.cont [8/16] %v3767, 128
          %3832 = vxpose.xlu0.b32.cont [9/16] %v3768, 128
          %3833 = vxpose.xlu0.b32.cont [10/16] %v3769, 128
          %3834 = vxpose.xlu0.b32.cont [11/16] %v3770, 128
          %3835 = vxpose.xlu0.b32.cont [12/16] %v3771, 128
          %3836 = vxpose.xlu0.b32.cont [13/16] %v3772, 128
          %3837 = vxpose.xlu0.b32.cont [14/16] %v3773, 128
          %3838 = vxpose.xlu0.b32.cont [15/16] %v3774, 128
          %3839 = vxpose.xlu0.b32.end [16/16] %v3775, 128
          %v3840 = vpop.trf.xlu0
          %v3841 = vpop.trf.xlu0
          %v3842 = vpop.trf.xlu0
          %v3843 = vpop.trf.xlu0
          %v3844 = vpop.trf.xlu0
          %v3845 = vpop.trf.xlu0
          %v3846 = vpop.trf.xlu0
          %v3847 = vpop.trf.xlu0
          %v3848 = vpop.trf.xlu0
          %v3849 = vpop.trf.xlu0
          %v3850 = vpop.trf.xlu0
          %v3851 = vpop.trf.xlu0
          %v3852 = vpop.trf.xlu0
          %v3853 = vpop.trf.xlu0
          %v3854 = vpop.trf.xlu0
          %v3855 = vpop.trf.xlu0
          %3856 = vxpose.xlu0.b32.start [1/16] %v3776, 128
          %3857 = vxpose.xlu0.b32.cont [2/16] %v3777, 128
          %3858 = vxpose.xlu0.b32.cont [3/16] %v3778, 128
          %3859 = vxpose.xlu0.b32.cont [4/16] %v3779, 128
          %3860 = vxpose.xlu0.b32.cont [5/16] %v3780, 128
          %3861 = vxpose.xlu0.b32.cont [6/16] %v3781, 128
          %3862 = vxpose.xlu0.b32.cont [7/16] %v3782, 128
          %3863 = vxpose.xlu0.b32.cont [8/16] %v3783, 128
          %3864 = vxpose.xlu0.b32.cont [9/16] %v3784, 128
          %3865 = vxpose.xlu0.b32.cont [10/16] %v3785, 128
          %3866 = vxpose.xlu0.b32.cont [11/16] %v3786, 128
          %3867 = vxpose.xlu0.b32.cont [12/16] %v3787, 128
          %3868 = vxpose.xlu0.b32.cont [13/16] %v3788, 128
          %3869 = vxpose.xlu0.b32.cont [14/16] %v3789, 128
          %3870 = vxpose.xlu0.b32.cont [15/16] %v3790, 128
          %3871 = vxpose.xlu0.b32.end [16/16] %v3791, 128
          %v3872 = vpop.trf.xlu0
          %v3873 = vpop.trf.xlu0
          %v3874 = vpop.trf.xlu0
          %v3875 = vpop.trf.xlu0
          %v3876 = vpop.trf.xlu0
          %v3877 = vpop.trf.xlu0
          %v3878 = vpop.trf.xlu0
          %v3879 = vpop.trf.xlu0
          %v3880 = vpop.trf.xlu0
          %v3881 = vpop.trf.xlu0
          %v3882 = vpop.trf.xlu0
          %v3883 = vpop.trf.xlu0
          %v3884 = vpop.trf.xlu0
          %v3885 = vpop.trf.xlu0
          %v3886 = vpop.trf.xlu0
          %v3887 = vpop.trf.xlu0
          %3888 = vxpose.xlu0.b32.start [1/16] %v3792, 128
          %3889 = vxpose.xlu0.b32.cont [2/16] %v3793, 128
          %3890 = vxpose.xlu0.b32.cont [3/16] %v3794, 128
          %3891 = vxpose.xlu0.b32.cont [4/16] %v3795, 128
          %3892 = vxpose.xlu0.b32.cont [5/16] %v3796, 128
          %3893 = vxpose.xlu0.b32.cont [6/16] %v3797, 128
          %3894 = vxpose.xlu0.b32.cont [7/16] %v3798, 128
          %3895 = vxpose.xlu0.b32.cont [8/16] %v3799, 128
          %3896 = vxpose.xlu0.b32.cont [9/16] %v3800, 128
          %3897 = vxpose.xlu0.b32.cont [10/16] %v3801, 128
          %3898 = vxpose.xlu0.b32.cont [11/16] %v3802, 128
          %3899 = vxpose.xlu0.b32.cont [12/16] %v3803, 128
          %3900 = vxpose.xlu0.b32.cont [13/16] %v3804, 128
          %3901 = vxpose.xlu0.b32.cont [14/16] %v3805, 128
          %3902 = vxpose.xlu0.b32.cont [15/16] %v3806, 128
          %3903 = vxpose.xlu0.b32.end [16/16] %v3807, 128
          %v3904 = vpop.trf.xlu0
          %v3905 = vpop.trf.xlu0
          %v3906 = vpop.trf.xlu0
          %v3907 = vpop.trf.xlu0
          %v3908 = vpop.trf.xlu0
          %v3909 = vpop.trf.xlu0
          %v3910 = vpop.trf.xlu0
          %v3911 = vpop.trf.xlu0
          %v3912 = vpop.trf.xlu0
          %v3913 = vpop.trf.xlu0
          %v3914 = vpop.trf.xlu0
          %v3915 = vpop.trf.xlu0
          %v3916 = vpop.trf.xlu0
          %v3917 = vpop.trf.xlu0
          %v3918 = vpop.trf.xlu0
          %v3919 = vpop.trf.xlu0
          %3920 = vxpose.xlu0.b32.start [1/16] %v3808, 128
          %3921 = vxpose.xlu0.b32.cont [2/16] %v3809, 128
          %3922 = vxpose.xlu0.b32.cont [3/16] %v3810, 128
          %3923 = vxpose.xlu0.b32.cont [4/16] %v3811, 128
          %3924 = vxpose.xlu0.b32.cont [5/16] %v3812, 128
          %3925 = vxpose.xlu0.b32.cont [6/16] %v3813, 128
          %3926 = vxpose.xlu0.b32.cont [7/16] %v3814, 128
          %3927 = vxpose.xlu0.b32.cont [8/16] %v3815, 128
          %3928 = vxpose.xlu0.b32.cont [9/16] %v3816, 128
          %3929 = vxpose.xlu0.b32.cont [10/16] %v3817, 128
          %3930 = vxpose.xlu0.b32.cont [11/16] %v3818, 128
          %3931 = vxpose.xlu0.b32.cont [12/16] %v3819, 128
          %3932 = vxpose.xlu0.b32.cont [13/16] %v3820, 128
          %3933 = vxpose.xlu0.b32.cont [14/16] %v3821, 128
          %3934 = vxpose.xlu0.b32.cont [15/16] %v3822, 128
          %3935 = vxpose.xlu0.b32.end [16/16] %v3823, 128
          %v3936 = vpop.trf.xlu0
          %v3937 = vpop.trf.xlu0
          %v3938 = vpop.trf.xlu0
          %v3939 = vpop.trf.xlu0
          %v3940 = vpop.trf.xlu0
          %v3941 = vpop.trf.xlu0
          %v3942 = vpop.trf.xlu0
          %v3943 = vpop.trf.xlu0
          %v3944 = vpop.trf.xlu0
          %v3945 = vpop.trf.xlu0
          %v3946 = vpop.trf.xlu0
          %v3947 = vpop.trf.xlu0
          %v3948 = vpop.trf.xlu0
          %v3949 = vpop.trf.xlu0
          %v3950 = vpop.trf.xlu0
          %v3951 = vpop.trf.xlu0
          %v3952 = vsel %vm881, %v3840, 0.0
          %v3953 = vsel %vm881, %v3872, 0.0
          %v3954 = vsel %vm881, %v3904, 0.0
          %v3955 = vsel %vm881, %v3936, 0.0
          %s3956 = smul.u32 %s3757, 4
          %s3957 = smul.addr %s3956, 8
          %s3958 = scalar_lea.vmem [#allocation3], %s3957
          %3959 = vst [vmem:[%s3958] sm:$0xff] %v3952
          %3960 = vst [vmem:[%s3958 + $0x8] sm:$0xff] %v3953
          %3961 = vst [vmem:[%s3958 + $0x10] sm:$0xff] %v3954
          %3962 = vst [vmem:[%s3958 + $0x18] sm:$0xff] %v3955
          %s3963 = sadd.s32 %s3757, 1
          %v3964 = vld [vmem:[%s3759 + $0x1] sm:$0xff]
          %v3965 = vld [vmem:[%s3759 + $0x11] sm:$0xff]
          %v3966 = vld [vmem:[%s3759 + $0x21] sm:$0xff]
          %v3967 = vld [vmem:[%s3759 + $0x31] sm:$0xff]
          %v3968 = vld [vmem:[%s3759 + $0x41] sm:$0xff]
          %v3969 = vld [vmem:[%s3759 + $0x51] sm:$0xff]
          %v3970 = vld [vmem:[%s3759 + $0x61] sm:$0xff]
          %v3971 = vld [vmem:[%s3759 + $0x71] sm:$0xff]
          %v3972 = vld [vmem:[%s3759 + $0xc1] sm:$0xff]
          %v3973 = vld [vmem:[%s3759 + $0xd1] sm:$0xff]
          %v3974 = vld [vmem:[%s3759 + $0xe1] sm:$0xff]
          %v3975 = vld [vmem:[%s3759 + $0xf1] sm:$0xff]
          %v3976 = vld [vmem:[%s3759 + $0x101] sm:$0xff]
          %v3977 = vld [vmem:[%s3759 + $0x111] sm:$0xff]
          %v3978 = vld [vmem:[%s3759 + $0x121] sm:$0xff]
          %v3979 = vld [vmem:[%s3759 + $0x131] sm:$0xff]
          %v3980 = vld [vmem:[%s3759 + $0x181] sm:$0xff]
          %v3981 = vld [vmem:[%s3759 + $0x191] sm:$0xff]
          %v3982 = vld [vmem:[%s3759 + $0x1a1] sm:$0xff]
          %v3983 = vld [vmem:[%s3759 + $0x1b1] sm:$0xff]
          %v3984 = vld [vmem:[%s3759 + $0x1c1] sm:$0xff]
          %v3985 = vld [vmem:[%s3759 + $0x1d1] sm:$0xff]
          %v3986 = vld [vmem:[%s3759 + $0x1e1] sm:$0xff]
          %v3987 = vld [vmem:[%s3759 + $0x1f1] sm:$0xff]
          %v3988 = vld [vmem:[%s3759 + $0x241] sm:$0xff]
          %v3989 = vld [vmem:[%s3759 + $0x251] sm:$0xff]
          %v3990 = vld [vmem:[%s3759 + $0x261] sm:$0xff]
          %v3991 = vld [vmem:[%s3759 + $0x271] sm:$0xff]
          %v3992 = vld [vmem:[%s3759 + $0x281] sm:$0xff]
          %v3993 = vld [vmem:[%s3759 + $0x291] sm:$0xff]
          %v3994 = vld [vmem:[%s3759 + $0x2a1] sm:$0xff]
          %v3995 = vld [vmem:[%s3759 + $0x2b1] sm:$0xff]
          %v3996 = vld [vmem:[%s3759 + $0x301] sm:$0xff]
          %v3997 = vld [vmem:[%s3759 + $0x311] sm:$0xff]
          %v3998 = vld [vmem:[%s3759 + $0x321] sm:$0xff]
          %v3999 = vld [vmem:[%s3759 + $0x331] sm:$0xff]
          %v4000 = vld [vmem:[%s3759 + $0x341] sm:$0xff]
          %v4001 = vld [vmem:[%s3759 + $0x351] sm:$0xff]
          %v4002 = vld [vmem:[%s3759 + $0x361] sm:$0xff]
          %v4003 = vld [vmem:[%s3759 + $0x371] sm:$0xff]
          %v4004 = vld [vmem:[%s3759 + $0x3c1] sm:$0xff]
          %v4005 = vld [vmem:[%s3759 + $0x3d1] sm:$0xff]
          %v4006 = vld [vmem:[%s3759 + $0x3e1] sm:$0xff]
          %v4007 = vld [vmem:[%s3759 + $0x3f1] sm:$0xff]
          %v4008 = vld [vmem:[%s3759 + $0x401] sm:$0xff]
          %v4009 = vld [vmem:[%s3759 + $0x411] sm:$0xff]
          %v4010 = vld [vmem:[%s3759 + $0x421] sm:$0xff]
          %v4011 = vld [vmem:[%s3759 + $0x431] sm:$0xff]
          %v4012 = vld [vmem:[%s3759 + $0x481] sm:$0xff]
          %v4013 = vld [vmem:[%s3759 + $0x491] sm:$0xff]
          %v4014 = vld [vmem:[%s3759 + $0x4a1] sm:$0xff]
          %v4015 = vld [vmem:[%s3759 + $0x4b1] sm:$0xff]
          %v4016 = vld [vmem:[%s3759 + $0x4c1] sm:$0xff]
          %v4017 = vld [vmem:[%s3759 + $0x4d1] sm:$0xff]
          %v4018 = vld [vmem:[%s3759 + $0x4e1] sm:$0xff]
          %v4019 = vld [vmem:[%s3759 + $0x4f1] sm:$0xff]
          %v4020 = vld [vmem:[%s3759 + $0x541] sm:$0xff]
          %v4021 = vld [vmem:[%s3759 + $0x551] sm:$0xff]
          %v4022 = vld [vmem:[%s3759 + $0x561] sm:$0xff]
          %v4023 = vld [vmem:[%s3759 + $0x571] sm:$0xff]
          %v4024 = vld [vmem:[%s3759 + $0x581] sm:$0xff]
          %v4025 = vld [vmem:[%s3759 + $0x591] sm:$0xff]
          %v4026 = vld [vmem:[%s3759 + $0x5a1] sm:$0xff]
          %v4027 = vld [vmem:[%s3759 + $0x5b1] sm:$0xff]
          %4028 = vxpose.xlu0.b32.start [1/16] %v3964, 128
          %4029 = vxpose.xlu0.b32.cont [2/16] %v3965, 128
          %4030 = vxpose.xlu0.b32.cont [3/16] %v3966, 128
          %4031 = vxpose.xlu0.b32.cont [4/16] %v3967, 128
          %4032 = vxpose.xlu0.b32.cont [5/16] %v3968, 128
          %4033 = vxpose.xlu0.b32.cont [6/16] %v3969, 128
          %4034 = vxpose.xlu0.b32.cont [7/16] %v3970, 128
          %4035 = vxpose.xlu0.b32.cont [8/16] %v3971, 128
          %4036 = vxpose.xlu0.b32.cont [9/16] %v3972, 128
          %4037 = vxpose.xlu0.b32.cont [10/16] %v3973, 128
          %4038 = vxpose.xlu0.b32.cont [11/16] %v3974, 128
          %4039 = vxpose.xlu0.b32.cont [12/16] %v3975, 128
          %4040 = vxpose.xlu0.b32.cont [13/16] %v3976, 128
          %4041 = vxpose.xlu0.b32.cont [14/16] %v3977, 128
          %4042 = vxpose.xlu0.b32.cont [15/16] %v3978, 128
          %4043 = vxpose.xlu0.b32.end [16/16] %v3979, 128
          %v4044 = vpop.trf.xlu0
          %v4045 = vpop.trf.xlu0
          %v4046 = vpop.trf.xlu0
          %v4047 = vpop.trf.xlu0
          %v4048 = vpop.trf.xlu0
          %v4049 = vpop.trf.xlu0
          %v4050 = vpop.trf.xlu0
          %v4051 = vpop.trf.xlu0
          %v4052 = vpop.trf.xlu0
          %v4053 = vpop.trf.xlu0
          %v4054 = vpop.trf.xlu0
          %v4055 = vpop.trf.xlu0
          %v4056 = vpop.trf.xlu0
          %v4057 = vpop.trf.xlu0
          %v4058 = vpop.trf.xlu0
          %v4059 = vpop.trf.xlu0
          %4060 = vxpose.xlu0.b32.start [1/16] %v3980, 128
          %4061 = vxpose.xlu0.b32.cont [2/16] %v3981, 128
          %4062 = vxpose.xlu0.b32.cont [3/16] %v3982, 128
          %4063 = vxpose.xlu0.b32.cont [4/16] %v3983, 128
          %4064 = vxpose.xlu0.b32.cont [5/16] %v3984, 128
          %4065 = vxpose.xlu0.b32.cont [6/16] %v3985, 128
          %4066 = vxpose.xlu0.b32.cont [7/16] %v3986, 128
          %4067 = vxpose.xlu0.b32.cont [8/16] %v3987, 128
          %4068 = vxpose.xlu0.b32.cont [9/16] %v3988, 128
          %4069 = vxpose.xlu0.b32.cont [10/16] %v3989, 128
          %4070 = vxpose.xlu0.b32.cont [11/16] %v3990, 128
          %4071 = vxpose.xlu0.b32.cont [12/16] %v3991, 128
          %4072 = vxpose.xlu0.b32.cont [13/16] %v3992, 128
          %4073 = vxpose.xlu0.b32.cont [14/16] %v3993, 128
          %4074 = vxpose.xlu0.b32.cont [15/16] %v3994, 128
          %4075 = vxpose.xlu0.b32.end [16/16] %v3995, 128
          %v4076 = vpop.trf.xlu0
          %v4077 = vpop.trf.xlu0
          %v4078 = vpop.trf.xlu0
          %v4079 = vpop.trf.xlu0
          %v4080 = vpop.trf.xlu0
          %v4081 = vpop.trf.xlu0
          %v4082 = vpop.trf.xlu0
          %v4083 = vpop.trf.xlu0
          %v4084 = vpop.trf.xlu0
          %v4085 = vpop.trf.xlu0
          %v4086 = vpop.trf.xlu0
          %v4087 = vpop.trf.xlu0
          %v4088 = vpop.trf.xlu0
          %v4089 = vpop.trf.xlu0
          %v4090 = vpop.trf.xlu0
          %v4091 = vpop.trf.xlu0
          %4092 = vxpose.xlu0.b32.start [1/16] %v3996, 128
          %4093 = vxpose.xlu0.b32.cont [2/16] %v3997, 128
          %4094 = vxpose.xlu0.b32.cont [3/16] %v3998, 128
          %4095 = vxpose.xlu0.b32.cont [4/16] %v3999, 128
          %4096 = vxpose.xlu0.b32.cont [5/16] %v4000, 128
          %4097 = vxpose.xlu0.b32.cont [6/16] %v4001, 128
          %4098 = vxpose.xlu0.b32.cont [7/16] %v4002, 128
          %4099 = vxpose.xlu0.b32.cont [8/16] %v4003, 128
          %4100 = vxpose.xlu0.b32.cont [9/16] %v4004, 128
          %4101 = vxpose.xlu0.b32.cont [10/16] %v4005, 128
          %4102 = vxpose.xlu0.b32.cont [11/16] %v4006, 128
          %4103 = vxpose.xlu0.b32.cont [12/16] %v4007, 128
          %4104 = vxpose.xlu0.b32.cont [13/16] %v4008, 128
          %4105 = vxpose.xlu0.b32.cont [14/16] %v4009, 128
          %4106 = vxpose.xlu0.b32.cont [15/16] %v4010, 128
          %4107 = vxpose.xlu0.b32.end [16/16] %v4011, 128
          %v4108 = vpop.trf.xlu0
          %v4109 = vpop.trf.xlu0
          %v4110 = vpop.trf.xlu0
          %v4111 = vpop.trf.xlu0
          %v4112 = vpop.trf.xlu0
          %v4113 = vpop.trf.xlu0
          %v4114 = vpop.trf.xlu0
          %v4115 = vpop.trf.xlu0
          %v4116 = vpop.trf.xlu0
          %v4117 = vpop.trf.xlu0
          %v4118 = vpop.trf.xlu0
          %v4119 = vpop.trf.xlu0
          %v4120 = vpop.trf.xlu0
          %v4121 = vpop.trf.xlu0
          %v4122 = vpop.trf.xlu0
          %v4123 = vpop.trf.xlu0
          %4124 = vxpose.xlu0.b32.start [1/16] %v4012, 128
          %4125 = vxpose.xlu0.b32.cont [2/16] %v4013, 128
          %4126 = vxpose.xlu0.b32.cont [3/16] %v4014, 128
          %4127 = vxpose.xlu0.b32.cont [4/16] %v4015, 128
          %4128 = vxpose.xlu0.b32.cont [5/16] %v4016, 128
          %4129 = vxpose.xlu0.b32.cont [6/16] %v4017, 128
          %4130 = vxpose.xlu0.b32.cont [7/16] %v4018, 128
          %4131 = vxpose.xlu0.b32.cont [8/16] %v4019, 128
          %4132 = vxpose.xlu0.b32.cont [9/16] %v4020, 128
          %4133 = vxpose.xlu0.b32.cont [10/16] %v4021, 128
          %4134 = vxpose.xlu0.b32.cont [11/16] %v4022, 128
          %4135 = vxpose.xlu0.b32.cont [12/16] %v4023, 128
          %4136 = vxpose.xlu0.b32.cont [13/16] %v4024, 128
          %4137 = vxpose.xlu0.b32.cont [14/16] %v4025, 128
          %4138 = vxpose.xlu0.b32.cont [15/16] %v4026, 128
          %4139 = vxpose.xlu0.b32.end [16/16] %v4027, 128
          %v4140 = vpop.trf.xlu0
          %v4141 = vpop.trf.xlu0
          %v4142 = vpop.trf.xlu0
          %v4143 = vpop.trf.xlu0
          %v4144 = vpop.trf.xlu0
          %v4145 = vpop.trf.xlu0
          %v4146 = vpop.trf.xlu0
          %v4147 = vpop.trf.xlu0
          %v4148 = vpop.trf.xlu0
          %v4149 = vpop.trf.xlu0
          %v4150 = vpop.trf.xlu0
          %v4151 = vpop.trf.xlu0
          %v4152 = vpop.trf.xlu0
          %v4153 = vpop.trf.xlu0
          %v4154 = vpop.trf.xlu0
          %v4155 = vpop.trf.xlu0
          %v4156 = vsel %vm881, %v4044, 0.0
          %v4157 = vsel %vm881, %v4076, 0.0
          %v4158 = vsel %vm881, %v4108, 0.0
          %v4159 = vsel %vm881, %v4140, 0.0
          %s4160 = smul.u32 %s3963, 4
          %s4161 = smul.addr %s4160, 8
          %s4162 = scalar_lea.vmem [#allocation3], %s4161
          %4163 = vst [vmem:[%s4162] sm:$0xff] %v4156
          %4164 = vst [vmem:[%s4162 + $0x8] sm:$0xff] %v4157
          %4165 = vst [vmem:[%s4162 + $0x10] sm:$0xff] %v4158
          %4166 = vst [vmem:[%s4162 + $0x18] sm:$0xff] %v4159
          %s4167 = sadd.s32 %s3757, 2
          %v4168 = vld [vmem:[%s3759 + $0x2] sm:$0xff]
          %v4169 = vld [vmem:[%s3759 + $0x12] sm:$0xff]
          %v4170 = vld [vmem:[%s3759 + $0x22] sm:$0xff]
          %v4171 = vld [vmem:[%s3759 + $0x32] sm:$0xff]
          %v4172 = vld [vmem:[%s3759 + $0x42] sm:$0xff]
          %v4173 = vld [vmem:[%s3759 + $0x52] sm:$0xff]
          %v4174 = vld [vmem:[%s3759 + $0x62] sm:$0xff]
          %v4175 = vld [vmem:[%s3759 + $0x72] sm:$0xff]
          %v4176 = vld [vmem:[%s3759 + $0xc2] sm:$0xff]
          %v4177 = vld [vmem:[%s3759 + $0xd2] sm:$0xff]
          %v4178 = vld [vmem:[%s3759 + $0xe2] sm:$0xff]
          %v4179 = vld [vmem:[%s3759 + $0xf2] sm:$0xff]
          %v4180 = vld [vmem:[%s3759 + $0x102] sm:$0xff]
          %v4181 = vld [vmem:[%s3759 + $0x112] sm:$0xff]
          %v4182 = vld [vmem:[%s3759 + $0x122] sm:$0xff]
          %v4183 = vld [vmem:[%s3759 + $0x132] sm:$0xff]
          %v4184 = vld [vmem:[%s3759 + $0x182] sm:$0xff]
          %v4185 = vld [vmem:[%s3759 + $0x192] sm:$0xff]
          %v4186 = vld [vmem:[%s3759 + $0x1a2] sm:$0xff]
          %v4187 = vld [vmem:[%s3759 + $0x1b2] sm:$0xff]
          %v4188 = vld [vmem:[%s3759 + $0x1c2] sm:$0xff]
          %v4189 = vld [vmem:[%s3759 + $0x1d2] sm:$0xff]
          %v4190 = vld [vmem:[%s3759 + $0x1e2] sm:$0xff]
          %v4191 = vld [vmem:[%s3759 + $0x1f2] sm:$0xff]
          %v4192 = vld [vmem:[%s3759 + $0x242] sm:$0xff]
          %v4193 = vld [vmem:[%s3759 + $0x252] sm:$0xff]
          %v4194 = vld [vmem:[%s3759 + $0x262] sm:$0xff]
          %v4195 = vld [vmem:[%s3759 + $0x272] sm:$0xff]
          %v4196 = vld [vmem:[%s3759 + $0x282] sm:$0xff]
          %v4197 = vld [vmem:[%s3759 + $0x292] sm:$0xff]
          %v4198 = vld [vmem:[%s3759 + $0x2a2] sm:$0xff]
          %v4199 = vld [vmem:[%s3759 + $0x2b2] sm:$0xff]
          %v4200 = vld [vmem:[%s3759 + $0x302] sm:$0xff]
          %v4201 = vld [vmem:[%s3759 + $0x312] sm:$0xff]
          %v4202 = vld [vmem:[%s3759 + $0x322] sm:$0xff]
          %v4203 = vld [vmem:[%s3759 + $0x332] sm:$0xff]
          %v4204 = vld [vmem:[%s3759 + $0x342] sm:$0xff]
          %v4205 = vld [vmem:[%s3759 + $0x352] sm:$0xff]
          %v4206 = vld [vmem:[%s3759 + $0x362] sm:$0xff]
          %v4207 = vld [vmem:[%s3759 + $0x372] sm:$0xff]
          %v4208 = vld [vmem:[%s3759 + $0x3c2] sm:$0xff]
          %v4209 = vld [vmem:[%s3759 + $0x3d2] sm:$0xff]
          %v4210 = vld [vmem:[%s3759 + $0x3e2] sm:$0xff]
          %v4211 = vld [vmem:[%s3759 + $0x3f2] sm:$0xff]
          %v4212 = vld [vmem:[%s3759 + $0x402] sm:$0xff]
          %v4213 = vld [vmem:[%s3759 + $0x412] sm:$0xff]
          %v4214 = vld [vmem:[%s3759 + $0x422] sm:$0xff]
          %v4215 = vld [vmem:[%s3759 + $0x432] sm:$0xff]
          %v4216 = vld [vmem:[%s3759 + $0x482] sm:$0xff]
          %v4217 = vld [vmem:[%s3759 + $0x492] sm:$0xff]
          %v4218 = vld [vmem:[%s3759 + $0x4a2] sm:$0xff]
          %v4219 = vld [vmem:[%s3759 + $0x4b2] sm:$0xff]
          %v4220 = vld [vmem:[%s3759 + $0x4c2] sm:$0xff]
          %v4221 = vld [vmem:[%s3759 + $0x4d2] sm:$0xff]
          %v4222 = vld [vmem:[%s3759 + $0x4e2] sm:$0xff]
          %v4223 = vld [vmem:[%s3759 + $0x4f2] sm:$0xff]
          %v4224 = vld [vmem:[%s3759 + $0x542] sm:$0xff]
          %v4225 = vld [vmem:[%s3759 + $0x552] sm:$0xff]
          %v4226 = vld [vmem:[%s3759 + $0x562] sm:$0xff]
          %v4227 = vld [vmem:[%s3759 + $0x572] sm:$0xff]
          %v4228 = vld [vmem:[%s3759 + $0x582] sm:$0xff]
          %v4229 = vld [vmem:[%s3759 + $0x592] sm:$0xff]
          %v4230 = vld [vmem:[%s3759 + $0x5a2] sm:$0xff]
          %v4231 = vld [vmem:[%s3759 + $0x5b2] sm:$0xff]
          %4232 = vxpose.xlu0.b32.start [1/16] %v4168, 128
          %4233 = vxpose.xlu0.b32.cont [2/16] %v4169, 128
          %4234 = vxpose.xlu0.b32.cont [3/16] %v4170, 128
          %4235 = vxpose.xlu0.b32.cont [4/16] %v4171, 128
          %4236 = vxpose.xlu0.b32.cont [5/16] %v4172, 128
          %4237 = vxpose.xlu0.b32.cont [6/16] %v4173, 128
          %4238 = vxpose.xlu0.b32.cont [7/16] %v4174, 128
          %4239 = vxpose.xlu0.b32.cont [8/16] %v4175, 128
          %4240 = vxpose.xlu0.b32.cont [9/16] %v4176, 128
          %4241 = vxpose.xlu0.b32.cont [10/16] %v4177, 128
          %4242 = vxpose.xlu0.b32.cont [11/16] %v4178, 128
          %4243 = vxpose.xlu0.b32.cont [12/16] %v4179, 128
          %4244 = vxpose.xlu0.b32.cont [13/16] %v4180, 128
          %4245 = vxpose.xlu0.b32.cont [14/16] %v4181, 128
          %4246 = vxpose.xlu0.b32.cont [15/16] %v4182, 128
          %4247 = vxpose.xlu0.b32.end [16/16] %v4183, 128
          %v4248 = vpop.trf.xlu0
          %v4249 = vpop.trf.xlu0
          %v4250 = vpop.trf.xlu0
          %v4251 = vpop.trf.xlu0
          %v4252 = vpop.trf.xlu0
          %v4253 = vpop.trf.xlu0
          %v4254 = vpop.trf.xlu0
          %v4255 = vpop.trf.xlu0
          %v4256 = vpop.trf.xlu0
          %v4257 = vpop.trf.xlu0
          %v4258 = vpop.trf.xlu0
          %v4259 = vpop.trf.xlu0
          %v4260 = vpop.trf.xlu0
          %v4261 = vpop.trf.xlu0
          %v4262 = vpop.trf.xlu0
          %v4263 = vpop.trf.xlu0
          %4264 = vxpose.xlu0.b32.start [1/16] %v4184, 128
          %4265 = vxpose.xlu0.b32.cont [2/16] %v4185, 128
          %4266 = vxpose.xlu0.b32.cont [3/16] %v4186, 128
          %4267 = vxpose.xlu0.b32.cont [4/16] %v4187, 128
          %4268 = vxpose.xlu0.b32.cont [5/16] %v4188, 128
          %4269 = vxpose.xlu0.b32.cont [6/16] %v4189, 128
          %4270 = vxpose.xlu0.b32.cont [7/16] %v4190, 128
          %4271 = vxpose.xlu0.b32.cont [8/16] %v4191, 128
          %4272 = vxpose.xlu0.b32.cont [9/16] %v4192, 128
          %4273 = vxpose.xlu0.b32.cont [10/16] %v4193, 128
          %4274 = vxpose.xlu0.b32.cont [11/16] %v4194, 128
          %4275 = vxpose.xlu0.b32.cont [12/16] %v4195, 128
          %4276 = vxpose.xlu0.b32.cont [13/16] %v4196, 128
          %4277 = vxpose.xlu0.b32.cont [14/16] %v4197, 128
          %4278 = vxpose.xlu0.b32.cont [15/16] %v4198, 128
          %4279 = vxpose.xlu0.b32.end [16/16] %v4199, 128
          %v4280 = vpop.trf.xlu0
          %v4281 = vpop.trf.xlu0
          %v4282 = vpop.trf.xlu0
          %v4283 = vpop.trf.xlu0
          %v4284 = vpop.trf.xlu0
          %v4285 = vpop.trf.xlu0
          %v4286 = vpop.trf.xlu0
          %v4287 = vpop.trf.xlu0
          %v4288 = vpop.trf.xlu0
          %v4289 = vpop.trf.xlu0
          %v4290 = vpop.trf.xlu0
          %v4291 = vpop.trf.xlu0
          %v4292 = vpop.trf.xlu0
          %v4293 = vpop.trf.xlu0
          %v4294 = vpop.trf.xlu0
          %v4295 = vpop.trf.xlu0
          %4296 = vxpose.xlu0.b32.start [1/16] %v4200, 128
          %4297 = vxpose.xlu0.b32.cont [2/16] %v4201, 128
          %4298 = vxpose.xlu0.b32.cont [3/16] %v4202, 128
          %4299 = vxpose.xlu0.b32.cont [4/16] %v4203, 128
          %4300 = vxpose.xlu0.b32.cont [5/16] %v4204, 128
          %4301 = vxpose.xlu0.b32.cont [6/16] %v4205, 128
          %4302 = vxpose.xlu0.b32.cont [7/16] %v4206, 128
          %4303 = vxpose.xlu0.b32.cont [8/16] %v4207, 128
          %4304 = vxpose.xlu0.b32.cont [9/16] %v4208, 128
          %4305 = vxpose.xlu0.b32.cont [10/16] %v4209, 128
          %4306 = vxpose.xlu0.b32.cont [11/16] %v4210, 128
          %4307 = vxpose.xlu0.b32.cont [12/16] %v4211, 128
          %4308 = vxpose.xlu0.b32.cont [13/16] %v4212, 128
          %4309 = vxpose.xlu0.b32.cont [14/16] %v4213, 128
          %4310 = vxpose.xlu0.b32.cont [15/16] %v4214, 128
          %4311 = vxpose.xlu0.b32.end [16/16] %v4215, 128
          %v4312 = vpop.trf.xlu0
          %v4313 = vpop.trf.xlu0
          %v4314 = vpop.trf.xlu0
          %v4315 = vpop.trf.xlu0
          %v4316 = vpop.trf.xlu0
          %v4317 = vpop.trf.xlu0
          %v4318 = vpop.trf.xlu0
          %v4319 = vpop.trf.xlu0
          %v4320 = vpop.trf.xlu0
          %v4321 = vpop.trf.xlu0
          %v4322 = vpop.trf.xlu0
          %v4323 = vpop.trf.xlu0
          %v4324 = vpop.trf.xlu0
          %v4325 = vpop.trf.xlu0
          %v4326 = vpop.trf.xlu0
          %v4327 = vpop.trf.xlu0
          %4328 = vxpose.xlu0.b32.start [1/16] %v4216, 128
          %4329 = vxpose.xlu0.b32.cont [2/16] %v4217, 128
          %4330 = vxpose.xlu0.b32.cont [3/16] %v4218, 128
          %4331 = vxpose.xlu0.b32.cont [4/16] %v4219, 128
          %4332 = vxpose.xlu0.b32.cont [5/16] %v4220, 128
          %4333 = vxpose.xlu0.b32.cont [6/16] %v4221, 128
          %4334 = vxpose.xlu0.b32.cont [7/16] %v4222, 128
          %4335 = vxpose.xlu0.b32.cont [8/16] %v4223, 128
          %4336 = vxpose.xlu0.b32.cont [9/16] %v4224, 128
          %4337 = vxpose.xlu0.b32.cont [10/16] %v4225, 128
          %4338 = vxpose.xlu0.b32.cont [11/16] %v4226, 128
          %4339 = vxpose.xlu0.b32.cont [12/16] %v4227, 128
          %4340 = vxpose.xlu0.b32.cont [13/16] %v4228, 128
          %4341 = vxpose.xlu0.b32.cont [14/16] %v4229, 128
          %4342 = vxpose.xlu0.b32.cont [15/16] %v4230, 128
          %4343 = vxpose.xlu0.b32.end [16/16] %v4231, 128
          %v4344 = vpop.trf.xlu0
          %v4345 = vpop.trf.xlu0
          %v4346 = vpop.trf.xlu0
          %v4347 = vpop.trf.xlu0
          %v4348 = vpop.trf.xlu0
          %v4349 = vpop.trf.xlu0
          %v4350 = vpop.trf.xlu0
          %v4351 = vpop.trf.xlu0
          %v4352 = vpop.trf.xlu0
          %v4353 = vpop.trf.xlu0
          %v4354 = vpop.trf.xlu0
          %v4355 = vpop.trf.xlu0
          %v4356 = vpop.trf.xlu0
          %v4357 = vpop.trf.xlu0
          %v4358 = vpop.trf.xlu0
          %v4359 = vpop.trf.xlu0
          %v4360 = vsel %vm881, %v4248, 0.0
          %v4361 = vsel %vm881, %v4280, 0.0
          %v4362 = vsel %vm881, %v4312, 0.0
          %v4363 = vsel %vm881, %v4344, 0.0
          %s4364 = smul.u32 %s4167, 4
          %s4365 = smul.addr %s4364, 8
          %s4366 = scalar_lea.vmem [#allocation3], %s4365
          %4367 = vst [vmem:[%s4366] sm:$0xff] %v4360
          %4368 = vst [vmem:[%s4366 + $0x8] sm:$0xff] %v4361
          %4369 = vst [vmem:[%s4366 + $0x10] sm:$0xff] %v4362
          %4370 = vst [vmem:[%s4366 + $0x18] sm:$0xff] %v4363
          %s4371 = sadd.s32 %s3757, 3
          %v4372 = vld [vmem:[%s3759 + $0x3] sm:$0xff]
          %v4373 = vld [vmem:[%s3759 + $0x13] sm:$0xff]
          %v4374 = vld [vmem:[%s3759 + $0x23] sm:$0xff]
          %v4375 = vld [vmem:[%s3759 + $0x33] sm:$0xff]
          %v4376 = vld [vmem:[%s3759 + $0x43] sm:$0xff]
          %v4377 = vld [vmem:[%s3759 + $0x53] sm:$0xff]
          %v4378 = vld [vmem:[%s3759 + $0x63] sm:$0xff]
          %v4379 = vld [vmem:[%s3759 + $0x73] sm:$0xff]
          %v4380 = vld [vmem:[%s3759 + $0xc3] sm:$0xff]
          %v4381 = vld [vmem:[%s3759 + $0xd3] sm:$0xff]
          %v4382 = vld [vmem:[%s3759 + $0xe3] sm:$0xff]
          %v4383 = vld [vmem:[%s3759 + $0xf3] sm:$0xff]
          %v4384 = vld [vmem:[%s3759 + $0x103] sm:$0xff]
          %v4385 = vld [vmem:[%s3759 + $0x113] sm:$0xff]
          %v4386 = vld [vmem:[%s3759 + $0x123] sm:$0xff]
          %v4387 = vld [vmem:[%s3759 + $0x133] sm:$0xff]
          %v4388 = vld [vmem:[%s3759 + $0x183] sm:$0xff]
          %v4389 = vld [vmem:[%s3759 + $0x193] sm:$0xff]
          %v4390 = vld [vmem:[%s3759 + $0x1a3] sm:$0xff]
          %v4391 = vld [vmem:[%s3759 + $0x1b3] sm:$0xff]
          %v4392 = vld [vmem:[%s3759 + $0x1c3] sm:$0xff]
          %v4393 = vld [vmem:[%s3759 + $0x1d3] sm:$0xff]
          %v4394 = vld [vmem:[%s3759 + $0x1e3] sm:$0xff]
          %v4395 = vld [vmem:[%s3759 + $0x1f3] sm:$0xff]
          %v4396 = vld [vmem:[%s3759 + $0x243] sm:$0xff]
          %v4397 = vld [vmem:[%s3759 + $0x253] sm:$0xff]
          %v4398 = vld [vmem:[%s3759 + $0x263] sm:$0xff]
          %v4399 = vld [vmem:[%s3759 + $0x273] sm:$0xff]
          %v4400 = vld [vmem:[%s3759 + $0x283] sm:$0xff]
          %v4401 = vld [vmem:[%s3759 + $0x293] sm:$0xff]
          %v4402 = vld [vmem:[%s3759 + $0x2a3] sm:$0xff]
          %v4403 = vld [vmem:[%s3759 + $0x2b3] sm:$0xff]
          %v4404 = vld [vmem:[%s3759 + $0x303] sm:$0xff]
          %v4405 = vld [vmem:[%s3759 + $0x313] sm:$0xff]
          %v4406 = vld [vmem:[%s3759 + $0x323] sm:$0xff]
          %v4407 = vld [vmem:[%s3759 + $0x333] sm:$0xff]
          %v4408 = vld [vmem:[%s3759 + $0x343] sm:$0xff]
          %v4409 = vld [vmem:[%s3759 + $0x353] sm:$0xff]
          %v4410 = vld [vmem:[%s3759 + $0x363] sm:$0xff]
          %v4411 = vld [vmem:[%s3759 + $0x373] sm:$0xff]
          %v4412 = vld [vmem:[%s3759 + $0x3c3] sm:$0xff]
          %v4413 = vld [vmem:[%s3759 + $0x3d3] sm:$0xff]
          %v4414 = vld [vmem:[%s3759 + $0x3e3] sm:$0xff]
          %v4415 = vld [vmem:[%s3759 + $0x3f3] sm:$0xff]
          %v4416 = vld [vmem:[%s3759 + $0x403] sm:$0xff]
          %v4417 = vld [vmem:[%s3759 + $0x413] sm:$0xff]
          %v4418 = vld [vmem:[%s3759 + $0x423] sm:$0xff]
          %v4419 = vld [vmem:[%s3759 + $0x433] sm:$0xff]
          %v4420 = vld [vmem:[%s3759 + $0x483] sm:$0xff]
          %v4421 = vld [vmem:[%s3759 + $0x493] sm:$0xff]
          %v4422 = vld [vmem:[%s3759 + $0x4a3] sm:$0xff]
          %v4423 = vld [vmem:[%s3759 + $0x4b3] sm:$0xff]
          %v4424 = vld [vmem:[%s3759 + $0x4c3] sm:$0xff]
          %v4425 = vld [vmem:[%s3759 + $0x4d3] sm:$0xff]
          %v4426 = vld [vmem:[%s3759 + $0x4e3] sm:$0xff]
          %v4427 = vld [vmem:[%s3759 + $0x4f3] sm:$0xff]
          %v4428 = vld [vmem:[%s3759 + $0x543] sm:$0xff]
          %v4429 = vld [vmem:[%s3759 + $0x553] sm:$0xff]
          %v4430 = vld [vmem:[%s3759 + $0x563] sm:$0xff]
          %v4431 = vld [vmem:[%s3759 + $0x573] sm:$0xff]
          %v4432 = vld [vmem:[%s3759 + $0x583] sm:$0xff]
          %v4433 = vld [vmem:[%s3759 + $0x593] sm:$0xff]
          %v4434 = vld [vmem:[%s3759 + $0x5a3] sm:$0xff]
          %v4435 = vld [vmem:[%s3759 + $0x5b3] sm:$0xff]
          %4436 = vxpose.xlu0.b32.start [1/16] %v4372, 128
          %4437 = vxpose.xlu0.b32.cont [2/16] %v4373, 128
          %4438 = vxpose.xlu0.b32.cont [3/16] %v4374, 128
          %4439 = vxpose.xlu0.b32.cont [4/16] %v4375, 128
          %4440 = vxpose.xlu0.b32.cont [5/16] %v4376, 128
          %4441 = vxpose.xlu0.b32.cont [6/16] %v4377, 128
          %4442 = vxpose.xlu0.b32.cont [7/16] %v4378, 128
          %4443 = vxpose.xlu0.b32.cont [8/16] %v4379, 128
          %4444 = vxpose.xlu0.b32.cont [9/16] %v4380, 128
          %4445 = vxpose.xlu0.b32.cont [10/16] %v4381, 128
          %4446 = vxpose.xlu0.b32.cont [11/16] %v4382, 128
          %4447 = vxpose.xlu0.b32.cont [12/16] %v4383, 128
          %4448 = vxpose.xlu0.b32.cont [13/16] %v4384, 128
          %4449 = vxpose.xlu0.b32.cont [14/16] %v4385, 128
          %4450 = vxpose.xlu0.b32.cont [15/16] %v4386, 128
          %4451 = vxpose.xlu0.b32.end [16/16] %v4387, 128
          %v4452 = vpop.trf.xlu0
          %v4453 = vpop.trf.xlu0
          %v4454 = vpop.trf.xlu0
          %v4455 = vpop.trf.xlu0
          %v4456 = vpop.trf.xlu0
          %v4457 = vpop.trf.xlu0
          %v4458 = vpop.trf.xlu0
          %v4459 = vpop.trf.xlu0
          %v4460 = vpop.trf.xlu0
          %v4461 = vpop.trf.xlu0
          %v4462 = vpop.trf.xlu0
          %v4463 = vpop.trf.xlu0
          %v4464 = vpop.trf.xlu0
          %v4465 = vpop.trf.xlu0
          %v4466 = vpop.trf.xlu0
          %v4467 = vpop.trf.xlu0
          %4468 = vxpose.xlu0.b32.start [1/16] %v4388, 128
          %4469 = vxpose.xlu0.b32.cont [2/16] %v4389, 128
          %4470 = vxpose.xlu0.b32.cont [3/16] %v4390, 128
          %4471 = vxpose.xlu0.b32.cont [4/16] %v4391, 128
          %4472 = vxpose.xlu0.b32.cont [5/16] %v4392, 128
          %4473 = vxpose.xlu0.b32.cont [6/16] %v4393, 128
          %4474 = vxpose.xlu0.b32.cont [7/16] %v4394, 128
          %4475 = vxpose.xlu0.b32.cont [8/16] %v4395, 128
          %4476 = vxpose.xlu0.b32.cont [9/16] %v4396, 128
          %4477 = vxpose.xlu0.b32.cont [10/16] %v4397, 128
          %4478 = vxpose.xlu0.b32.cont [11/16] %v4398, 128
          %4479 = vxpose.xlu0.b32.cont [12/16] %v4399, 128
          %4480 = vxpose.xlu0.b32.cont [13/16] %v4400, 128
          %4481 = vxpose.xlu0.b32.cont [14/16] %v4401, 128
          %4482 = vxpose.xlu0.b32.cont [15/16] %v4402, 128
          %4483 = vxpose.xlu0.b32.end [16/16] %v4403, 128
          %v4484 = vpop.trf.xlu0
          %v4485 = vpop.trf.xlu0
          %v4486 = vpop.trf.xlu0
          %v4487 = vpop.trf.xlu0
          %v4488 = vpop.trf.xlu0
          %v4489 = vpop.trf.xlu0
          %v4490 = vpop.trf.xlu0
          %v4491 = vpop.trf.xlu0
          %v4492 = vpop.trf.xlu0
          %v4493 = vpop.trf.xlu0
          %v4494 = vpop.trf.xlu0
          %v4495 = vpop.trf.xlu0
          %v4496 = vpop.trf.xlu0
          %v4497 = vpop.trf.xlu0
          %v4498 = vpop.trf.xlu0
          %v4499 = vpop.trf.xlu0
          %4500 = vxpose.xlu0.b32.start [1/16] %v4404, 128
          %4501 = vxpose.xlu0.b32.cont [2/16] %v4405, 128
          %4502 = vxpose.xlu0.b32.cont [3/16] %v4406, 128
          %4503 = vxpose.xlu0.b32.cont [4/16] %v4407, 128
          %4504 = vxpose.xlu0.b32.cont [5/16] %v4408, 128
          %4505 = vxpose.xlu0.b32.cont [6/16] %v4409, 128
          %4506 = vxpose.xlu0.b32.cont [7/16] %v4410, 128
          %4507 = vxpose.xlu0.b32.cont [8/16] %v4411, 128
          %4508 = vxpose.xlu0.b32.cont [9/16] %v4412, 128
          %4509 = vxpose.xlu0.b32.cont [10/16] %v4413, 128
          %4510 = vxpose.xlu0.b32.cont [11/16] %v4414, 128
          %4511 = vxpose.xlu0.b32.cont [12/16] %v4415, 128
          %4512 = vxpose.xlu0.b32.cont [13/16] %v4416, 128
          %4513 = vxpose.xlu0.b32.cont [14/16] %v4417, 128
          %4514 = vxpose.xlu0.b32.cont [15/16] %v4418, 128
          %4515 = vxpose.xlu0.b32.end [16/16] %v4419, 128
          %v4516 = vpop.trf.xlu0
          %v4517 = vpop.trf.xlu0
          %v4518 = vpop.trf.xlu0
          %v4519 = vpop.trf.xlu0
          %v4520 = vpop.trf.xlu0
          %v4521 = vpop.trf.xlu0
          %v4522 = vpop.trf.xlu0
          %v4523 = vpop.trf.xlu0
          %v4524 = vpop.trf.xlu0
          %v4525 = vpop.trf.xlu0
          %v4526 = vpop.trf.xlu0
          %v4527 = vpop.trf.xlu0
          %v4528 = vpop.trf.xlu0
          %v4529 = vpop.trf.xlu0
          %v4530 = vpop.trf.xlu0
          %v4531 = vpop.trf.xlu0
          %4532 = vxpose.xlu0.b32.start [1/16] %v4420, 128
          %4533 = vxpose.xlu0.b32.cont [2/16] %v4421, 128
          %4534 = vxpose.xlu0.b32.cont [3/16] %v4422, 128
          %4535 = vxpose.xlu0.b32.cont [4/16] %v4423, 128
          %4536 = vxpose.xlu0.b32.cont [5/16] %v4424, 128
          %4537 = vxpose.xlu0.b32.cont [6/16] %v4425, 128
          %4538 = vxpose.xlu0.b32.cont [7/16] %v4426, 128
          %4539 = vxpose.xlu0.b32.cont [8/16] %v4427, 128
          %4540 = vxpose.xlu0.b32.cont [9/16] %v4428, 128
          %4541 = vxpose.xlu0.b32.cont [10/16] %v4429, 128
          %4542 = vxpose.xlu0.b32.cont [11/16] %v4430, 128
          %4543 = vxpose.xlu0.b32.cont [12/16] %v4431, 128
          %4544 = vxpose.xlu0.b32.cont [13/16] %v4432, 128
          %4545 = vxpose.xlu0.b32.cont [14/16] %v4433, 128
          %4546 = vxpose.xlu0.b32.cont [15/16] %v4434, 128
          %4547 = vxpose.xlu0.b32.end [16/16] %v4435, 128
          %v4548 = vpop.trf.xlu0
          %v4549 = vpop.trf.xlu0
          %v4550 = vpop.trf.xlu0
          %v4551 = vpop.trf.xlu0
          %v4552 = vpop.trf.xlu0
          %v4553 = vpop.trf.xlu0
          %v4554 = vpop.trf.xlu0
          %v4555 = vpop.trf.xlu0
          %v4556 = vpop.trf.xlu0
          %v4557 = vpop.trf.xlu0
          %v4558 = vpop.trf.xlu0
          %v4559 = vpop.trf.xlu0
          %v4560 = vpop.trf.xlu0
          %v4561 = vpop.trf.xlu0
          %v4562 = vpop.trf.xlu0
          %v4563 = vpop.trf.xlu0
          %v4564 = vsel %vm881, %v4452, 0.0
          %v4565 = vsel %vm881, %v4484, 0.0
          %v4566 = vsel %vm881, %v4516, 0.0
          %v4567 = vsel %vm881, %v4548, 0.0
          %s4568 = smul.u32 %s4371, 4
          %s4569 = smul.addr %s4568, 8
          %s4570 = scalar_lea.vmem [#allocation3], %s4569
          %4571 = vst [vmem:[%s4570] sm:$0xff] %v4564
          %4572 = vst [vmem:[%s4570 + $0x8] sm:$0xff] %v4565
          %4573 = vst [vmem:[%s4570 + $0x10] sm:$0xff] %v4566
          %4574 = vst [vmem:[%s4570 + $0x18] sm:$0xff] %v4567
          %s4575 = sadd.s32 %s3757, 4
          %v4576 = vld [vmem:[%s3759 + $0x4] sm:$0xff]
          %v4577 = vld [vmem:[%s3759 + $0x14] sm:$0xff]
          %v4578 = vld [vmem:[%s3759 + $0x24] sm:$0xff]
          %v4579 = vld [vmem:[%s3759 + $0x34] sm:$0xff]
          %v4580 = vld [vmem:[%s3759 + $0x44] sm:$0xff]
          %v4581 = vld [vmem:[%s3759 + $0x54] sm:$0xff]
          %v4582 = vld [vmem:[%s3759 + $0x64] sm:$0xff]
          %v4583 = vld [vmem:[%s3759 + $0x74] sm:$0xff]
          %v4584 = vld [vmem:[%s3759 + $0xc4] sm:$0xff]
          %v4585 = vld [vmem:[%s3759 + $0xd4] sm:$0xff]
          %v4586 = vld [vmem:[%s3759 + $0xe4] sm:$0xff]
          %v4587 = vld [vmem:[%s3759 + $0xf4] sm:$0xff]
          %v4588 = vld [vmem:[%s3759 + $0x104] sm:$0xff]
          %v4589 = vld [vmem:[%s3759 + $0x114] sm:$0xff]
          %v4590 = vld [vmem:[%s3759 + $0x124] sm:$0xff]
          %v4591 = vld [vmem:[%s3759 + $0x134] sm:$0xff]
          %v4592 = vld [vmem:[%s3759 + $0x184] sm:$0xff]
          %v4593 = vld [vmem:[%s3759 + $0x194] sm:$0xff]
          %v4594 = vld [vmem:[%s3759 + $0x1a4] sm:$0xff]
          %v4595 = vld [vmem:[%s3759 + $0x1b4] sm:$0xff]
          %v4596 = vld [vmem:[%s3759 + $0x1c4] sm:$0xff]
          %v4597 = vld [vmem:[%s3759 + $0x1d4] sm:$0xff]
          %v4598 = vld [vmem:[%s3759 + $0x1e4] sm:$0xff]
          %v4599 = vld [vmem:[%s3759 + $0x1f4] sm:$0xff]
          %v4600 = vld [vmem:[%s3759 + $0x244] sm:$0xff]
          %v4601 = vld [vmem:[%s3759 + $0x254] sm:$0xff]
          %v4602 = vld [vmem:[%s3759 + $0x264] sm:$0xff]
          %v4603 = vld [vmem:[%s3759 + $0x274] sm:$0xff]
          %v4604 = vld [vmem:[%s3759 + $0x284] sm:$0xff]
          %v4605 = vld [vmem:[%s3759 + $0x294] sm:$0xff]
          %v4606 = vld [vmem:[%s3759 + $0x2a4] sm:$0xff]
          %v4607 = vld [vmem:[%s3759 + $0x2b4] sm:$0xff]
          %v4608 = vld [vmem:[%s3759 + $0x304] sm:$0xff]
          %v4609 = vld [vmem:[%s3759 + $0x314] sm:$0xff]
          %v4610 = vld [vmem:[%s3759 + $0x324] sm:$0xff]
          %v4611 = vld [vmem:[%s3759 + $0x334] sm:$0xff]
          %v4612 = vld [vmem:[%s3759 + $0x344] sm:$0xff]
          %v4613 = vld [vmem:[%s3759 + $0x354] sm:$0xff]
          %v4614 = vld [vmem:[%s3759 + $0x364] sm:$0xff]
          %v4615 = vld [vmem:[%s3759 + $0x374] sm:$0xff]
          %v4616 = vld [vmem:[%s3759 + $0x3c4] sm:$0xff]
          %v4617 = vld [vmem:[%s3759 + $0x3d4] sm:$0xff]
          %v4618 = vld [vmem:[%s3759 + $0x3e4] sm:$0xff]
          %v4619 = vld [vmem:[%s3759 + $0x3f4] sm:$0xff]
          %v4620 = vld [vmem:[%s3759 + $0x404] sm:$0xff]
          %v4621 = vld [vmem:[%s3759 + $0x414] sm:$0xff]
          %v4622 = vld [vmem:[%s3759 + $0x424] sm:$0xff]
          %v4623 = vld [vmem:[%s3759 + $0x434] sm:$0xff]
          %v4624 = vld [vmem:[%s3759 + $0x484] sm:$0xff]
          %v4625 = vld [vmem:[%s3759 + $0x494] sm:$0xff]
          %v4626 = vld [vmem:[%s3759 + $0x4a4] sm:$0xff]
          %v4627 = vld [vmem:[%s3759 + $0x4b4] sm:$0xff]
          %v4628 = vld [vmem:[%s3759 + $0x4c4] sm:$0xff]
          %v4629 = vld [vmem:[%s3759 + $0x4d4] sm:$0xff]
          %v4630 = vld [vmem:[%s3759 + $0x4e4] sm:$0xff]
          %v4631 = vld [vmem:[%s3759 + $0x4f4] sm:$0xff]
          %v4632 = vld [vmem:[%s3759 + $0x544] sm:$0xff]
          %v4633 = vld [vmem:[%s3759 + $0x554] sm:$0xff]
          %v4634 = vld [vmem:[%s3759 + $0x564] sm:$0xff]
          %v4635 = vld [vmem:[%s3759 + $0x574] sm:$0xff]
          %v4636 = vld [vmem:[%s3759 + $0x584] sm:$0xff]
          %v4637 = vld [vmem:[%s3759 + $0x594] sm:$0xff]
          %v4638 = vld [vmem:[%s3759 + $0x5a4] sm:$0xff]
          %v4639 = vld [vmem:[%s3759 + $0x5b4] sm:$0xff]
          %4640 = vxpose.xlu0.b32.start [1/16] %v4576, 128
          %4641 = vxpose.xlu0.b32.cont [2/16] %v4577, 128
          %4642 = vxpose.xlu0.b32.cont [3/16] %v4578, 128
          %4643 = vxpose.xlu0.b32.cont [4/16] %v4579, 128
          %4644 = vxpose.xlu0.b32.cont [5/16] %v4580, 128
          %4645 = vxpose.xlu0.b32.cont [6/16] %v4581, 128
          %4646 = vxpose.xlu0.b32.cont [7/16] %v4582, 128
          %4647 = vxpose.xlu0.b32.cont [8/16] %v4583, 128
          %4648 = vxpose.xlu0.b32.cont [9/16] %v4584, 128
          %4649 = vxpose.xlu0.b32.cont [10/16] %v4585, 128
          %4650 = vxpose.xlu0.b32.cont [11/16] %v4586, 128
          %4651 = vxpose.xlu0.b32.cont [12/16] %v4587, 128
          %4652 = vxpose.xlu0.b32.cont [13/16] %v4588, 128
          %4653 = vxpose.xlu0.b32.cont [14/16] %v4589, 128
          %4654 = vxpose.xlu0.b32.cont [15/16] %v4590, 128
          %4655 = vxpose.xlu0.b32.end [16/16] %v4591, 128
          %v4656 = vpop.trf.xlu0
          %v4657 = vpop.trf.xlu0
          %v4658 = vpop.trf.xlu0
          %v4659 = vpop.trf.xlu0
          %v4660 = vpop.trf.xlu0
          %v4661 = vpop.trf.xlu0
          %v4662 = vpop.trf.xlu0
          %v4663 = vpop.trf.xlu0
          %v4664 = vpop.trf.xlu0
          %v4665 = vpop.trf.xlu0
          %v4666 = vpop.trf.xlu0
          %v4667 = vpop.trf.xlu0
          %v4668 = vpop.trf.xlu0
          %v4669 = vpop.trf.xlu0
          %v4670 = vpop.trf.xlu0
          %v4671 = vpop.trf.xlu0
          %4672 = vxpose.xlu0.b32.start [1/16] %v4592, 128
          %4673 = vxpose.xlu0.b32.cont [2/16] %v4593, 128
          %4674 = vxpose.xlu0.b32.cont [3/16] %v4594, 128
          %4675 = vxpose.xlu0.b32.cont [4/16] %v4595, 128
          %4676 = vxpose.xlu0.b32.cont [5/16] %v4596, 128
          %4677 = vxpose.xlu0.b32.cont [6/16] %v4597, 128
          %4678 = vxpose.xlu0.b32.cont [7/16] %v4598, 128
          %4679 = vxpose.xlu0.b32.cont [8/16] %v4599, 128
          %4680 = vxpose.xlu0.b32.cont [9/16] %v4600, 128
          %4681 = vxpose.xlu0.b32.cont [10/16] %v4601, 128
          %4682 = vxpose.xlu0.b32.cont [11/16] %v4602, 128
          %4683 = vxpose.xlu0.b32.cont [12/16] %v4603, 128
          %4684 = vxpose.xlu0.b32.cont [13/16] %v4604, 128
          %4685 = vxpose.xlu0.b32.cont [14/16] %v4605, 128
          %4686 = vxpose.xlu0.b32.cont [15/16] %v4606, 128
          %4687 = vxpose.xlu0.b32.end [16/16] %v4607, 128
          %v4688 = vpop.trf.xlu0
          %v4689 = vpop.trf.xlu0
          %v4690 = vpop.trf.xlu0
          %v4691 = vpop.trf.xlu0
          %v4692 = vpop.trf.xlu0
          %v4693 = vpop.trf.xlu0
          %v4694 = vpop.trf.xlu0
          %v4695 = vpop.trf.xlu0
          %v4696 = vpop.trf.xlu0
          %v4697 = vpop.trf.xlu0
          %v4698 = vpop.trf.xlu0
          %v4699 = vpop.trf.xlu0
          %v4700 = vpop.trf.xlu0
          %v4701 = vpop.trf.xlu0
          %v4702 = vpop.trf.xlu0
          %v4703 = vpop.trf.xlu0
          %4704 = vxpose.xlu0.b32.start [1/16] %v4608, 128
          %4705 = vxpose.xlu0.b32.cont [2/16] %v4609, 128
          %4706 = vxpose.xlu0.b32.cont [3/16] %v4610, 128
          %4707 = vxpose.xlu0.b32.cont [4/16] %v4611, 128
          %4708 = vxpose.xlu0.b32.cont [5/16] %v4612, 128
          %4709 = vxpose.xlu0.b32.cont [6/16] %v4613, 128
          %4710 = vxpose.xlu0.b32.cont [7/16] %v4614, 128
          %4711 = vxpose.xlu0.b32.cont [8/16] %v4615, 128
          %4712 = vxpose.xlu0.b32.cont [9/16] %v4616, 128
          %4713 = vxpose.xlu0.b32.cont [10/16] %v4617, 128
          %4714 = vxpose.xlu0.b32.cont [11/16] %v4618, 128
          %4715 = vxpose.xlu0.b32.cont [12/16] %v4619, 128
          %4716 = vxpose.xlu0.b32.cont [13/16] %v4620, 128
          %4717 = vxpose.xlu0.b32.cont [14/16] %v4621, 128
          %4718 = vxpose.xlu0.b32.cont [15/16] %v4622, 128
          %4719 = vxpose.xlu0.b32.end [16/16] %v4623, 128
          %v4720 = vpop.trf.xlu0
          %v4721 = vpop.trf.xlu0
          %v4722 = vpop.trf.xlu0
          %v4723 = vpop.trf.xlu0
          %v4724 = vpop.trf.xlu0
          %v4725 = vpop.trf.xlu0
          %v4726 = vpop.trf.xlu0
          %v4727 = vpop.trf.xlu0
          %v4728 = vpop.trf.xlu0
          %v4729 = vpop.trf.xlu0
          %v4730 = vpop.trf.xlu0
          %v4731 = vpop.trf.xlu0
          %v4732 = vpop.trf.xlu0
          %v4733 = vpop.trf.xlu0
          %v4734 = vpop.trf.xlu0
          %v4735 = vpop.trf.xlu0
          %4736 = vxpose.xlu0.b32.start [1/16] %v4624, 128
          %4737 = vxpose.xlu0.b32.cont [2/16] %v4625, 128
          %4738 = vxpose.xlu0.b32.cont [3/16] %v4626, 128
          %4739 = vxpose.xlu0.b32.cont [4/16] %v4627, 128
          %4740 = vxpose.xlu0.b32.cont [5/16] %v4628, 128
          %4741 = vxpose.xlu0.b32.cont [6/16] %v4629, 128
          %4742 = vxpose.xlu0.b32.cont [7/16] %v4630, 128
          %4743 = vxpose.xlu0.b32.cont [8/16] %v4631, 128
          %4744 = vxpose.xlu0.b32.cont [9/16] %v4632, 128
          %4745 = vxpose.xlu0.b32.cont [10/16] %v4633, 128
          %4746 = vxpose.xlu0.b32.cont [11/16] %v4634, 128
          %4747 = vxpose.xlu0.b32.cont [12/16] %v4635, 128
          %4748 = vxpose.xlu0.b32.cont [13/16] %v4636, 128
          %4749 = vxpose.xlu0.b32.cont [14/16] %v4637, 128
          %4750 = vxpose.xlu0.b32.cont [15/16] %v4638, 128
          %4751 = vxpose.xlu0.b32.end [16/16] %v4639, 128
          %v4752 = vpop.trf.xlu0
          %v4753 = vpop.trf.xlu0
          %v4754 = vpop.trf.xlu0
          %v4755 = vpop.trf.xlu0
          %v4756 = vpop.trf.xlu0
          %v4757 = vpop.trf.xlu0
          %v4758 = vpop.trf.xlu0
          %v4759 = vpop.trf.xlu0
          %v4760 = vpop.trf.xlu0
          %v4761 = vpop.trf.xlu0
          %v4762 = vpop.trf.xlu0
          %v4763 = vpop.trf.xlu0
          %v4764 = vpop.trf.xlu0
          %v4765 = vpop.trf.xlu0
          %v4766 = vpop.trf.xlu0
          %v4767 = vpop.trf.xlu0
          %v4768 = vsel %vm881, %v4656, 0.0
          %v4769 = vsel %vm881, %v4688, 0.0
          %v4770 = vsel %vm881, %v4720, 0.0
          %v4771 = vsel %vm881, %v4752, 0.0
          %s4772 = smul.u32 %s4575, 4
          %s4773 = smul.addr %s4772, 8
          %s4774 = scalar_lea.vmem [#allocation3], %s4773
          %4775 = vst [vmem:[%s4774] sm:$0xff] %v4768
          %4776 = vst [vmem:[%s4774 + $0x8] sm:$0xff] %v4769
          %4777 = vst [vmem:[%s4774 + $0x10] sm:$0xff] %v4770
          %4778 = vst [vmem:[%s4774 + $0x18] sm:$0xff] %v4771
          %s4779 = sadd.s32 %s1709, 4
          %s4780 = smul.u32 %s4779, 5
          %s4781 = sadd.s32 64, %s687
          %s4782 = scalar_lea.vmem [#allocation2], %s4781
          %v4783 = vld [vmem:[%s4782] sm:$0xff]
          %v4784 = vld [vmem:[%s4782 + $0x10] sm:$0xff]
          %v4785 = vld [vmem:[%s4782 + $0x20] sm:$0xff]
          %v4786 = vld [vmem:[%s4782 + $0x30] sm:$0xff]
          %v4787 = vld [vmem:[%s4782 + $0x40] sm:$0xff]
          %v4788 = vld [vmem:[%s4782 + $0x50] sm:$0xff]
          %v4789 = vld [vmem:[%s4782 + $0x60] sm:$0xff]
          %v4790 = vld [vmem:[%s4782 + $0x70] sm:$0xff]
          %v4791 = vld [vmem:[%s4782 + $0xc0] sm:$0xff]
          %v4792 = vld [vmem:[%s4782 + $0xd0] sm:$0xff]
          %v4793 = vld [vmem:[%s4782 + $0xe0] sm:$0xff]
          %v4794 = vld [vmem:[%s4782 + $0xf0] sm:$0xff]
          %v4795 = vld [vmem:[%s4782 + $0x100] sm:$0xff]
          %v4796 = vld [vmem:[%s4782 + $0x110] sm:$0xff]
          %v4797 = vld [vmem:[%s4782 + $0x120] sm:$0xff]
          %v4798 = vld [vmem:[%s4782 + $0x130] sm:$0xff]
          %v4799 = vld [vmem:[%s4782 + $0x180] sm:$0xff]
          %v4800 = vld [vmem:[%s4782 + $0x190] sm:$0xff]
          %v4801 = vld [vmem:[%s4782 + $0x1a0] sm:$0xff]
          %v4802 = vld [vmem:[%s4782 + $0x1b0] sm:$0xff]
          %v4803 = vld [vmem:[%s4782 + $0x1c0] sm:$0xff]
          %v4804 = vld [vmem:[%s4782 + $0x1d0] sm:$0xff]
          %v4805 = vld [vmem:[%s4782 + $0x1e0] sm:$0xff]
          %v4806 = vld [vmem:[%s4782 + $0x1f0] sm:$0xff]
          %v4807 = vld [vmem:[%s4782 + $0x240] sm:$0xff]
          %v4808 = vld [vmem:[%s4782 + $0x250] sm:$0xff]
          %v4809 = vld [vmem:[%s4782 + $0x260] sm:$0xff]
          %v4810 = vld [vmem:[%s4782 + $0x270] sm:$0xff]
          %v4811 = vld [vmem:[%s4782 + $0x280] sm:$0xff]
          %v4812 = vld [vmem:[%s4782 + $0x290] sm:$0xff]
          %v4813 = vld [vmem:[%s4782 + $0x2a0] sm:$0xff]
          %v4814 = vld [vmem:[%s4782 + $0x2b0] sm:$0xff]
          %v4815 = vld [vmem:[%s4782 + $0x300] sm:$0xff]
          %v4816 = vld [vmem:[%s4782 + $0x310] sm:$0xff]
          %v4817 = vld [vmem:[%s4782 + $0x320] sm:$0xff]
          %v4818 = vld [vmem:[%s4782 + $0x330] sm:$0xff]
          %v4819 = vld [vmem:[%s4782 + $0x340] sm:$0xff]
          %v4820 = vld [vmem:[%s4782 + $0x350] sm:$0xff]
          %v4821 = vld [vmem:[%s4782 + $0x360] sm:$0xff]
          %v4822 = vld [vmem:[%s4782 + $0x370] sm:$0xff]
          %v4823 = vld [vmem:[%s4782 + $0x3c0] sm:$0xff]
          %v4824 = vld [vmem:[%s4782 + $0x3d0] sm:$0xff]
          %v4825 = vld [vmem:[%s4782 + $0x3e0] sm:$0xff]
          %v4826 = vld [vmem:[%s4782 + $0x3f0] sm:$0xff]
          %v4827 = vld [vmem:[%s4782 + $0x400] sm:$0xff]
          %v4828 = vld [vmem:[%s4782 + $0x410] sm:$0xff]
          %v4829 = vld [vmem:[%s4782 + $0x420] sm:$0xff]
          %v4830 = vld [vmem:[%s4782 + $0x430] sm:$0xff]
          %v4831 = vld [vmem:[%s4782 + $0x480] sm:$0xff]
          %v4832 = vld [vmem:[%s4782 + $0x490] sm:$0xff]
          %v4833 = vld [vmem:[%s4782 + $0x4a0] sm:$0xff]
          %v4834 = vld [vmem:[%s4782 + $0x4b0] sm:$0xff]
          %v4835 = vld [vmem:[%s4782 + $0x4c0] sm:$0xff]
          %v4836 = vld [vmem:[%s4782 + $0x4d0] sm:$0xff]
          %v4837 = vld [vmem:[%s4782 + $0x4e0] sm:$0xff]
          %v4838 = vld [vmem:[%s4782 + $0x4f0] sm:$0xff]
          %v4839 = vld [vmem:[%s4782 + $0x540] sm:$0xff]
          %v4840 = vld [vmem:[%s4782 + $0x550] sm:$0xff]
          %v4841 = vld [vmem:[%s4782 + $0x560] sm:$0xff]
          %v4842 = vld [vmem:[%s4782 + $0x570] sm:$0xff]
          %v4843 = vld [vmem:[%s4782 + $0x580] sm:$0xff]
          %v4844 = vld [vmem:[%s4782 + $0x590] sm:$0xff]
          %v4845 = vld [vmem:[%s4782 + $0x5a0] sm:$0xff]
          %v4846 = vld [vmem:[%s4782 + $0x5b0] sm:$0xff]
          %4847 = vxpose.xlu0.b32.start [1/16] %v4783, 128
          %4848 = vxpose.xlu0.b32.cont [2/16] %v4784, 128
          %4849 = vxpose.xlu0.b32.cont [3/16] %v4785, 128
          %4850 = vxpose.xlu0.b32.cont [4/16] %v4786, 128
          %4851 = vxpose.xlu0.b32.cont [5/16] %v4787, 128
          %4852 = vxpose.xlu0.b32.cont [6/16] %v4788, 128
          %4853 = vxpose.xlu0.b32.cont [7/16] %v4789, 128
          %4854 = vxpose.xlu0.b32.cont [8/16] %v4790, 128
          %4855 = vxpose.xlu0.b32.cont [9/16] %v4791, 128
          %4856 = vxpose.xlu0.b32.cont [10/16] %v4792, 128
          %4857 = vxpose.xlu0.b32.cont [11/16] %v4793, 128
          %4858 = vxpose.xlu0.b32.cont [12/16] %v4794, 128
          %4859 = vxpose.xlu0.b32.cont [13/16] %v4795, 128
          %4860 = vxpose.xlu0.b32.cont [14/16] %v4796, 128
          %4861 = vxpose.xlu0.b32.cont [15/16] %v4797, 128
          %4862 = vxpose.xlu0.b32.end [16/16] %v4798, 128
          %v4863 = vpop.trf.xlu0
          %v4864 = vpop.trf.xlu0
          %v4865 = vpop.trf.xlu0
          %v4866 = vpop.trf.xlu0
          %v4867 = vpop.trf.xlu0
          %v4868 = vpop.trf.xlu0
          %v4869 = vpop.trf.xlu0
          %v4870 = vpop.trf.xlu0
          %v4871 = vpop.trf.xlu0
          %v4872 = vpop.trf.xlu0
          %v4873 = vpop.trf.xlu0
          %v4874 = vpop.trf.xlu0
          %v4875 = vpop.trf.xlu0
          %v4876 = vpop.trf.xlu0
          %v4877 = vpop.trf.xlu0
          %v4878 = vpop.trf.xlu0
          %4879 = vxpose.xlu0.b32.start [1/16] %v4799, 128
          %4880 = vxpose.xlu0.b32.cont [2/16] %v4800, 128
          %4881 = vxpose.xlu0.b32.cont [3/16] %v4801, 128
          %4882 = vxpose.xlu0.b32.cont [4/16] %v4802, 128
          %4883 = vxpose.xlu0.b32.cont [5/16] %v4803, 128
          %4884 = vxpose.xlu0.b32.cont [6/16] %v4804, 128
          %4885 = vxpose.xlu0.b32.cont [7/16] %v4805, 128
          %4886 = vxpose.xlu0.b32.cont [8/16] %v4806, 128
          %4887 = vxpose.xlu0.b32.cont [9/16] %v4807, 128
          %4888 = vxpose.xlu0.b32.cont [10/16] %v4808, 128
          %4889 = vxpose.xlu0.b32.cont [11/16] %v4809, 128
          %4890 = vxpose.xlu0.b32.cont [12/16] %v4810, 128
          %4891 = vxpose.xlu0.b32.cont [13/16] %v4811, 128
          %4892 = vxpose.xlu0.b32.cont [14/16] %v4812, 128
          %4893 = vxpose.xlu0.b32.cont [15/16] %v4813, 128
          %4894 = vxpose.xlu0.b32.end [16/16] %v4814, 128
          %v4895 = vpop.trf.xlu0
          %v4896 = vpop.trf.xlu0
          %v4897 = vpop.trf.xlu0
          %v4898 = vpop.trf.xlu0
          %v4899 = vpop.trf.xlu0
          %v4900 = vpop.trf.xlu0
          %v4901 = vpop.trf.xlu0
          %v4902 = vpop.trf.xlu0
          %v4903 = vpop.trf.xlu0
          %v4904 = vpop.trf.xlu0
          %v4905 = vpop.trf.xlu0
          %v4906 = vpop.trf.xlu0
          %v4907 = vpop.trf.xlu0
          %v4908 = vpop.trf.xlu0
          %v4909 = vpop.trf.xlu0
          %v4910 = vpop.trf.xlu0
          %4911 = vxpose.xlu0.b32.start [1/16] %v4815, 128
          %4912 = vxpose.xlu0.b32.cont [2/16] %v4816, 128
          %4913 = vxpose.xlu0.b32.cont [3/16] %v4817, 128
          %4914 = vxpose.xlu0.b32.cont [4/16] %v4818, 128
          %4915 = vxpose.xlu0.b32.cont [5/16] %v4819, 128
          %4916 = vxpose.xlu0.b32.cont [6/16] %v4820, 128
          %4917 = vxpose.xlu0.b32.cont [7/16] %v4821, 128
          %4918 = vxpose.xlu0.b32.cont [8/16] %v4822, 128
          %4919 = vxpose.xlu0.b32.cont [9/16] %v4823, 128
          %4920 = vxpose.xlu0.b32.cont [10/16] %v4824, 128
          %4921 = vxpose.xlu0.b32.cont [11/16] %v4825, 128
          %4922 = vxpose.xlu0.b32.cont [12/16] %v4826, 128
          %4923 = vxpose.xlu0.b32.cont [13/16] %v4827, 128
          %4924 = vxpose.xlu0.b32.cont [14/16] %v4828, 128
          %4925 = vxpose.xlu0.b32.cont [15/16] %v4829, 128
          %4926 = vxpose.xlu0.b32.end [16/16] %v4830, 128
          %v4927 = vpop.trf.xlu0
          %v4928 = vpop.trf.xlu0
          %v4929 = vpop.trf.xlu0
          %v4930 = vpop.trf.xlu0
          %v4931 = vpop.trf.xlu0
          %v4932 = vpop.trf.xlu0
          %v4933 = vpop.trf.xlu0
          %v4934 = vpop.trf.xlu0
          %v4935 = vpop.trf.xlu0
          %v4936 = vpop.trf.xlu0
          %v4937 = vpop.trf.xlu0
          %v4938 = vpop.trf.xlu0
          %v4939 = vpop.trf.xlu0
          %v4940 = vpop.trf.xlu0
          %v4941 = vpop.trf.xlu0
          %v4942 = vpop.trf.xlu0
          %4943 = vxpose.xlu0.b32.start [1/16] %v4831, 128
          %4944 = vxpose.xlu0.b32.cont [2/16] %v4832, 128
          %4945 = vxpose.xlu0.b32.cont [3/16] %v4833, 128
          %4946 = vxpose.xlu0.b32.cont [4/16] %v4834, 128
          %4947 = vxpose.xlu0.b32.cont [5/16] %v4835, 128
          %4948 = vxpose.xlu0.b32.cont [6/16] %v4836, 128
          %4949 = vxpose.xlu0.b32.cont [7/16] %v4837, 128
          %4950 = vxpose.xlu0.b32.cont [8/16] %v4838, 128
          %4951 = vxpose.xlu0.b32.cont [9/16] %v4839, 128
          %4952 = vxpose.xlu0.b32.cont [10/16] %v4840, 128
          %4953 = vxpose.xlu0.b32.cont [11/16] %v4841, 128
          %4954 = vxpose.xlu0.b32.cont [12/16] %v4842, 128
          %4955 = vxpose.xlu0.b32.cont [13/16] %v4843, 128
          %4956 = vxpose.xlu0.b32.cont [14/16] %v4844, 128
          %4957 = vxpose.xlu0.b32.cont [15/16] %v4845, 128
          %4958 = vxpose.xlu0.b32.end [16/16] %v4846, 128
          %v4959 = vpop.trf.xlu0
          %v4960 = vpop.trf.xlu0
          %v4961 = vpop.trf.xlu0
          %v4962 = vpop.trf.xlu0
          %v4963 = vpop.trf.xlu0
          %v4964 = vpop.trf.xlu0
          %v4965 = vpop.trf.xlu0
          %v4966 = vpop.trf.xlu0
          %v4967 = vpop.trf.xlu0
          %v4968 = vpop.trf.xlu0
          %v4969 = vpop.trf.xlu0
          %v4970 = vpop.trf.xlu0
          %v4971 = vpop.trf.xlu0
          %v4972 = vpop.trf.xlu0
          %v4973 = vpop.trf.xlu0
          %v4974 = vpop.trf.xlu0
          %v4975 = vsel %vm881, %v4863, 0.0
          %v4976 = vsel %vm881, %v4895, 0.0
          %v4977 = vsel %vm881, %v4927, 0.0
          %v4978 = vsel %vm881, %v4959, 0.0
          %s4979 = smul.u32 %s4780, 4
          %s4980 = smul.addr %s4979, 8
          %s4981 = scalar_lea.vmem [#allocation3], %s4980
          %4982 = vst [vmem:[%s4981] sm:$0xff] %v4975
          %4983 = vst [vmem:[%s4981 + $0x8] sm:$0xff] %v4976
          %4984 = vst [vmem:[%s4981 + $0x10] sm:$0xff] %v4977
          %4985 = vst [vmem:[%s4981 + $0x18] sm:$0xff] %v4978
          %s4986 = sadd.s32 %s4780, 1
          %v4987 = vld [vmem:[%s4782 + $0x1] sm:$0xff]
          %v4988 = vld [vmem:[%s4782 + $0x11] sm:$0xff]
          %v4989 = vld [vmem:[%s4782 + $0x21] sm:$0xff]
          %v4990 = vld [vmem:[%s4782 + $0x31] sm:$0xff]
          %v4991 = vld [vmem:[%s4782 + $0x41] sm:$0xff]
          %v4992 = vld [vmem:[%s4782 + $0x51] sm:$0xff]
          %v4993 = vld [vmem:[%s4782 + $0x61] sm:$0xff]
          %v4994 = vld [vmem:[%s4782 + $0x71] sm:$0xff]
          %v4995 = vld [vmem:[%s4782 + $0xc1] sm:$0xff]
          %v4996 = vld [vmem:[%s4782 + $0xd1] sm:$0xff]
          %v4997 = vld [vmem:[%s4782 + $0xe1] sm:$0xff]
          %v4998 = vld [vmem:[%s4782 + $0xf1] sm:$0xff]
          %v4999 = vld [vmem:[%s4782 + $0x101] sm:$0xff]
          %v5000 = vld [vmem:[%s4782 + $0x111] sm:$0xff]
          %v5001 = vld [vmem:[%s4782 + $0x121] sm:$0xff]
          %v5002 = vld [vmem:[%s4782 + $0x131] sm:$0xff]
          %v5003 = vld [vmem:[%s4782 + $0x181] sm:$0xff]
          %v5004 = vld [vmem:[%s4782 + $0x191] sm:$0xff]
          %v5005 = vld [vmem:[%s4782 + $0x1a1] sm:$0xff]
          %v5006 = vld [vmem:[%s4782 + $0x1b1] sm:$0xff]
          %v5007 = vld [vmem:[%s4782 + $0x1c1] sm:$0xff]
          %v5008 = vld [vmem:[%s4782 + $0x1d1] sm:$0xff]
          %v5009 = vld [vmem:[%s4782 + $0x1e1] sm:$0xff]
          %v5010 = vld [vmem:[%s4782 + $0x1f1] sm:$0xff]
          %v5011 = vld [vmem:[%s4782 + $0x241] sm:$0xff]
          %v5012 = vld [vmem:[%s4782 + $0x251] sm:$0xff]
          %v5013 = vld [vmem:[%s4782 + $0x261] sm:$0xff]
          %v5014 = vld [vmem:[%s4782 + $0x271] sm:$0xff]
          %v5015 = vld [vmem:[%s4782 + $0x281] sm:$0xff]
          %v5016 = vld [vmem:[%s4782 + $0x291] sm:$0xff]
          %v5017 = vld [vmem:[%s4782 + $0x2a1] sm:$0xff]
          %v5018 = vld [vmem:[%s4782 + $0x2b1] sm:$0xff]
          %v5019 = vld [vmem:[%s4782 + $0x301] sm:$0xff]
          %v5020 = vld [vmem:[%s4782 + $0x311] sm:$0xff]
          %v5021 = vld [vmem:[%s4782 + $0x321] sm:$0xff]
          %v5022 = vld [vmem:[%s4782 + $0x331] sm:$0xff]
          %v5023 = vld [vmem:[%s4782 + $0x341] sm:$0xff]
          %v5024 = vld [vmem:[%s4782 + $0x351] sm:$0xff]
          %v5025 = vld [vmem:[%s4782 + $0x361] sm:$0xff]
          %v5026 = vld [vmem:[%s4782 + $0x371] sm:$0xff]
          %v5027 = vld [vmem:[%s4782 + $0x3c1] sm:$0xff]
          %v5028 = vld [vmem:[%s4782 + $0x3d1] sm:$0xff]
          %v5029 = vld [vmem:[%s4782 + $0x3e1] sm:$0xff]
          %v5030 = vld [vmem:[%s4782 + $0x3f1] sm:$0xff]
          %v5031 = vld [vmem:[%s4782 + $0x401] sm:$0xff]
          %v5032 = vld [vmem:[%s4782 + $0x411] sm:$0xff]
          %v5033 = vld [vmem:[%s4782 + $0x421] sm:$0xff]
          %v5034 = vld [vmem:[%s4782 + $0x431] sm:$0xff]
          %v5035 = vld [vmem:[%s4782 + $0x481] sm:$0xff]
          %v5036 = vld [vmem:[%s4782 + $0x491] sm:$0xff]
          %v5037 = vld [vmem:[%s4782 + $0x4a1] sm:$0xff]
          %v5038 = vld [vmem:[%s4782 + $0x4b1] sm:$0xff]
          %v5039 = vld [vmem:[%s4782 + $0x4c1] sm:$0xff]
          %v5040 = vld [vmem:[%s4782 + $0x4d1] sm:$0xff]
          %v5041 = vld [vmem:[%s4782 + $0x4e1] sm:$0xff]
          %v5042 = vld [vmem:[%s4782 + $0x4f1] sm:$0xff]
          %v5043 = vld [vmem:[%s4782 + $0x541] sm:$0xff]
          %v5044 = vld [vmem:[%s4782 + $0x551] sm:$0xff]
          %v5045 = vld [vmem:[%s4782 + $0x561] sm:$0xff]
          %v5046 = vld [vmem:[%s4782 + $0x571] sm:$0xff]
          %v5047 = vld [vmem:[%s4782 + $0x581] sm:$0xff]
          %v5048 = vld [vmem:[%s4782 + $0x591] sm:$0xff]
          %v5049 = vld [vmem:[%s4782 + $0x5a1] sm:$0xff]
          %v5050 = vld [vmem:[%s4782 + $0x5b1] sm:$0xff]
          %5051 = vxpose.xlu0.b32.start [1/16] %v4987, 128
          %5052 = vxpose.xlu0.b32.cont [2/16] %v4988, 128
          %5053 = vxpose.xlu0.b32.cont [3/16] %v4989, 128
          %5054 = vxpose.xlu0.b32.cont [4/16] %v4990, 128
          %5055 = vxpose.xlu0.b32.cont [5/16] %v4991, 128
          %5056 = vxpose.xlu0.b32.cont [6/16] %v4992, 128
          %5057 = vxpose.xlu0.b32.cont [7/16] %v4993, 128
          %5058 = vxpose.xlu0.b32.cont [8/16] %v4994, 128
          %5059 = vxpose.xlu0.b32.cont [9/16] %v4995, 128
          %5060 = vxpose.xlu0.b32.cont [10/16] %v4996, 128
          %5061 = vxpose.xlu0.b32.cont [11/16] %v4997, 128
          %5062 = vxpose.xlu0.b32.cont [12/16] %v4998, 128
          %5063 = vxpose.xlu0.b32.cont [13/16] %v4999, 128
          %5064 = vxpose.xlu0.b32.cont [14/16] %v5000, 128
          %5065 = vxpose.xlu0.b32.cont [15/16] %v5001, 128
          %5066 = vxpose.xlu0.b32.end [16/16] %v5002, 128
          %v5067 = vpop.trf.xlu0
          %v5068 = vpop.trf.xlu0
          %v5069 = vpop.trf.xlu0
          %v5070 = vpop.trf.xlu0
          %v5071 = vpop.trf.xlu0
          %v5072 = vpop.trf.xlu0
          %v5073 = vpop.trf.xlu0
          %v5074 = vpop.trf.xlu0
          %v5075 = vpop.trf.xlu0
          %v5076 = vpop.trf.xlu0
          %v5077 = vpop.trf.xlu0
          %v5078 = vpop.trf.xlu0
          %v5079 = vpop.trf.xlu0
          %v5080 = vpop.trf.xlu0
          %v5081 = vpop.trf.xlu0
          %v5082 = vpop.trf.xlu0
          %5083 = vxpose.xlu0.b32.start [1/16] %v5003, 128
          %5084 = vxpose.xlu0.b32.cont [2/16] %v5004, 128
          %5085 = vxpose.xlu0.b32.cont [3/16] %v5005, 128
          %5086 = vxpose.xlu0.b32.cont [4/16] %v5006, 128
          %5087 = vxpose.xlu0.b32.cont [5/16] %v5007, 128
          %5088 = vxpose.xlu0.b32.cont [6/16] %v5008, 128
          %5089 = vxpose.xlu0.b32.cont [7/16] %v5009, 128
          %5090 = vxpose.xlu0.b32.cont [8/16] %v5010, 128
          %5091 = vxpose.xlu0.b32.cont [9/16] %v5011, 128
          %5092 = vxpose.xlu0.b32.cont [10/16] %v5012, 128
          %5093 = vxpose.xlu0.b32.cont [11/16] %v5013, 128
          %5094 = vxpose.xlu0.b32.cont [12/16] %v5014, 128
          %5095 = vxpose.xlu0.b32.cont [13/16] %v5015, 128
          %5096 = vxpose.xlu0.b32.cont [14/16] %v5016, 128
          %5097 = vxpose.xlu0.b32.cont [15/16] %v5017, 128
          %5098 = vxpose.xlu0.b32.end [16/16] %v5018, 128
          %v5099 = vpop.trf.xlu0
          %v5100 = vpop.trf.xlu0
          %v5101 = vpop.trf.xlu0
          %v5102 = vpop.trf.xlu0
          %v5103 = vpop.trf.xlu0
          %v5104 = vpop.trf.xlu0
          %v5105 = vpop.trf.xlu0
          %v5106 = vpop.trf.xlu0
          %v5107 = vpop.trf.xlu0
          %v5108 = vpop.trf.xlu0
          %v5109 = vpop.trf.xlu0
          %v5110 = vpop.trf.xlu0
          %v5111 = vpop.trf.xlu0
          %v5112 = vpop.trf.xlu0
          %v5113 = vpop.trf.xlu0
          %v5114 = vpop.trf.xlu0
          %5115 = vxpose.xlu0.b32.start [1/16] %v5019, 128
          %5116 = vxpose.xlu0.b32.cont [2/16] %v5020, 128
          %5117 = vxpose.xlu0.b32.cont [3/16] %v5021, 128
          %5118 = vxpose.xlu0.b32.cont [4/16] %v5022, 128
          %5119 = vxpose.xlu0.b32.cont [5/16] %v5023, 128
          %5120 = vxpose.xlu0.b32.cont [6/16] %v5024, 128
          %5121 = vxpose.xlu0.b32.cont [7/16] %v5025, 128
          %5122 = vxpose.xlu0.b32.cont [8/16] %v5026, 128
          %5123 = vxpose.xlu0.b32.cont [9/16] %v5027, 128
          %5124 = vxpose.xlu0.b32.cont [10/16] %v5028, 128
          %5125 = vxpose.xlu0.b32.cont [11/16] %v5029, 128
          %5126 = vxpose.xlu0.b32.cont [12/16] %v5030, 128
          %5127 = vxpose.xlu0.b32.cont [13/16] %v5031, 128
          %5128 = vxpose.xlu0.b32.cont [14/16] %v5032, 128
          %5129 = vxpose.xlu0.b32.cont [15/16] %v5033, 128
          %5130 = vxpose.xlu0.b32.end [16/16] %v5034, 128
          %v5131 = vpop.trf.xlu0
          %v5132 = vpop.trf.xlu0
          %v5133 = vpop.trf.xlu0
          %v5134 = vpop.trf.xlu0
          %v5135 = vpop.trf.xlu0
          %v5136 = vpop.trf.xlu0
          %v5137 = vpop.trf.xlu0
          %v5138 = vpop.trf.xlu0
          %v5139 = vpop.trf.xlu0
          %v5140 = vpop.trf.xlu0
          %v5141 = vpop.trf.xlu0
          %v5142 = vpop.trf.xlu0
          %v5143 = vpop.trf.xlu0
          %v5144 = vpop.trf.xlu0
          %v5145 = vpop.trf.xlu0
          %v5146 = vpop.trf.xlu0
          %5147 = vxpose.xlu0.b32.start [1/16] %v5035, 128
          %5148 = vxpose.xlu0.b32.cont [2/16] %v5036, 128
          %5149 = vxpose.xlu0.b32.cont [3/16] %v5037, 128
          %5150 = vxpose.xlu0.b32.cont [4/16] %v5038, 128
          %5151 = vxpose.xlu0.b32.cont [5/16] %v5039, 128
          %5152 = vxpose.xlu0.b32.cont [6/16] %v5040, 128
          %5153 = vxpose.xlu0.b32.cont [7/16] %v5041, 128
          %5154 = vxpose.xlu0.b32.cont [8/16] %v5042, 128
          %5155 = vxpose.xlu0.b32.cont [9/16] %v5043, 128
          %5156 = vxpose.xlu0.b32.cont [10/16] %v5044, 128
          %5157 = vxpose.xlu0.b32.cont [11/16] %v5045, 128
          %5158 = vxpose.xlu0.b32.cont [12/16] %v5046, 128
          %5159 = vxpose.xlu0.b32.cont [13/16] %v5047, 128
          %5160 = vxpose.xlu0.b32.cont [14/16] %v5048, 128
          %5161 = vxpose.xlu0.b32.cont [15/16] %v5049, 128
          %5162 = vxpose.xlu0.b32.end [16/16] %v5050, 128
          %v5163 = vpop.trf.xlu0
          %v5164 = vpop.trf.xlu0
          %v5165 = vpop.trf.xlu0
          %v5166 = vpop.trf.xlu0
          %v5167 = vpop.trf.xlu0
          %v5168 = vpop.trf.xlu0
          %v5169 = vpop.trf.xlu0
          %v5170 = vpop.trf.xlu0
          %v5171 = vpop.trf.xlu0
          %v5172 = vpop.trf.xlu0
          %v5173 = vpop.trf.xlu0
          %v5174 = vpop.trf.xlu0
          %v5175 = vpop.trf.xlu0
          %v5176 = vpop.trf.xlu0
          %v5177 = vpop.trf.xlu0
          %v5178 = vpop.trf.xlu0
          %v5179 = vsel %vm881, %v5067, 0.0
          %v5180 = vsel %vm881, %v5099, 0.0
          %v5181 = vsel %vm881, %v5131, 0.0
          %v5182 = vsel %vm881, %v5163, 0.0
          %s5183 = smul.u32 %s4986, 4
          %s5184 = smul.addr %s5183, 8
          %s5185 = scalar_lea.vmem [#allocation3], %s5184
          %5186 = vst [vmem:[%s5185] sm:$0xff] %v5179
          %5187 = vst [vmem:[%s5185 + $0x8] sm:$0xff] %v5180
          %5188 = vst [vmem:[%s5185 + $0x10] sm:$0xff] %v5181
          %5189 = vst [vmem:[%s5185 + $0x18] sm:$0xff] %v5182
          %s5190 = sadd.s32 %s4780, 2
          %v5191 = vld [vmem:[%s4782 + $0x2] sm:$0xff]
          %v5192 = vld [vmem:[%s4782 + $0x12] sm:$0xff]
          %v5193 = vld [vmem:[%s4782 + $0x22] sm:$0xff]
          %v5194 = vld [vmem:[%s4782 + $0x32] sm:$0xff]
          %v5195 = vld [vmem:[%s4782 + $0x42] sm:$0xff]
          %v5196 = vld [vmem:[%s4782 + $0x52] sm:$0xff]
          %v5197 = vld [vmem:[%s4782 + $0x62] sm:$0xff]
          %v5198 = vld [vmem:[%s4782 + $0x72] sm:$0xff]
          %v5199 = vld [vmem:[%s4782 + $0xc2] sm:$0xff]
          %v5200 = vld [vmem:[%s4782 + $0xd2] sm:$0xff]
          %v5201 = vld [vmem:[%s4782 + $0xe2] sm:$0xff]
          %v5202 = vld [vmem:[%s4782 + $0xf2] sm:$0xff]
          %v5203 = vld [vmem:[%s4782 + $0x102] sm:$0xff]
          %v5204 = vld [vmem:[%s4782 + $0x112] sm:$0xff]
          %v5205 = vld [vmem:[%s4782 + $0x122] sm:$0xff]
          %v5206 = vld [vmem:[%s4782 + $0x132] sm:$0xff]
          %v5207 = vld [vmem:[%s4782 + $0x182] sm:$0xff]
          %v5208 = vld [vmem:[%s4782 + $0x192] sm:$0xff]
          %v5209 = vld [vmem:[%s4782 + $0x1a2] sm:$0xff]
          %v5210 = vld [vmem:[%s4782 + $0x1b2] sm:$0xff]
          %v5211 = vld [vmem:[%s4782 + $0x1c2] sm:$0xff]
          %v5212 = vld [vmem:[%s4782 + $0x1d2] sm:$0xff]
          %v5213 = vld [vmem:[%s4782 + $0x1e2] sm:$0xff]
          %v5214 = vld [vmem:[%s4782 + $0x1f2] sm:$0xff]
          %v5215 = vld [vmem:[%s4782 + $0x242] sm:$0xff]
          %v5216 = vld [vmem:[%s4782 + $0x252] sm:$0xff]
          %v5217 = vld [vmem:[%s4782 + $0x262] sm:$0xff]
          %v5218 = vld [vmem:[%s4782 + $0x272] sm:$0xff]
          %v5219 = vld [vmem:[%s4782 + $0x282] sm:$0xff]
          %v5220 = vld [vmem:[%s4782 + $0x292] sm:$0xff]
          %v5221 = vld [vmem:[%s4782 + $0x2a2] sm:$0xff]
          %v5222 = vld [vmem:[%s4782 + $0x2b2] sm:$0xff]
          %v5223 = vld [vmem:[%s4782 + $0x302] sm:$0xff]
          %v5224 = vld [vmem:[%s4782 + $0x312] sm:$0xff]
          %v5225 = vld [vmem:[%s4782 + $0x322] sm:$0xff]
          %v5226 = vld [vmem:[%s4782 + $0x332] sm:$0xff]
          %v5227 = vld [vmem:[%s4782 + $0x342] sm:$0xff]
          %v5228 = vld [vmem:[%s4782 + $0x352] sm:$0xff]
          %v5229 = vld [vmem:[%s4782 + $0x362] sm:$0xff]
          %v5230 = vld [vmem:[%s4782 + $0x372] sm:$0xff]
          %v5231 = vld [vmem:[%s4782 + $0x3c2] sm:$0xff]
          %v5232 = vld [vmem:[%s4782 + $0x3d2] sm:$0xff]
          %v5233 = vld [vmem:[%s4782 + $0x3e2] sm:$0xff]
          %v5234 = vld [vmem:[%s4782 + $0x3f2] sm:$0xff]
          %v5235 = vld [vmem:[%s4782 + $0x402] sm:$0xff]
          %v5236 = vld [vmem:[%s4782 + $0x412] sm:$0xff]
          %v5237 = vld [vmem:[%s4782 + $0x422] sm:$0xff]
          %v5238 = vld [vmem:[%s4782 + $0x432] sm:$0xff]
          %v5239 = vld [vmem:[%s4782 + $0x482] sm:$0xff]
          %v5240 = vld [vmem:[%s4782 + $0x492] sm:$0xff]
          %v5241 = vld [vmem:[%s4782 + $0x4a2] sm:$0xff]
          %v5242 = vld [vmem:[%s4782 + $0x4b2] sm:$0xff]
          %v5243 = vld [vmem:[%s4782 + $0x4c2] sm:$0xff]
          %v5244 = vld [vmem:[%s4782 + $0x4d2] sm:$0xff]
          %v5245 = vld [vmem:[%s4782 + $0x4e2] sm:$0xff]
          %v5246 = vld [vmem:[%s4782 + $0x4f2] sm:$0xff]
          %v5247 = vld [vmem:[%s4782 + $0x542] sm:$0xff]
          %v5248 = vld [vmem:[%s4782 + $0x552] sm:$0xff]
          %v5249 = vld [vmem:[%s4782 + $0x562] sm:$0xff]
          %v5250 = vld [vmem:[%s4782 + $0x572] sm:$0xff]
          %v5251 = vld [vmem:[%s4782 + $0x582] sm:$0xff]
          %v5252 = vld [vmem:[%s4782 + $0x592] sm:$0xff]
          %v5253 = vld [vmem:[%s4782 + $0x5a2] sm:$0xff]
          %v5254 = vld [vmem:[%s4782 + $0x5b2] sm:$0xff]
          %5255 = vxpose.xlu0.b32.start [1/16] %v5191, 128
          %5256 = vxpose.xlu0.b32.cont [2/16] %v5192, 128
          %5257 = vxpose.xlu0.b32.cont [3/16] %v5193, 128
          %5258 = vxpose.xlu0.b32.cont [4/16] %v5194, 128
          %5259 = vxpose.xlu0.b32.cont [5/16] %v5195, 128
          %5260 = vxpose.xlu0.b32.cont [6/16] %v5196, 128
          %5261 = vxpose.xlu0.b32.cont [7/16] %v5197, 128
          %5262 = vxpose.xlu0.b32.cont [8/16] %v5198, 128
          %5263 = vxpose.xlu0.b32.cont [9/16] %v5199, 128
          %5264 = vxpose.xlu0.b32.cont [10/16] %v5200, 128
          %5265 = vxpose.xlu0.b32.cont [11/16] %v5201, 128
          %5266 = vxpose.xlu0.b32.cont [12/16] %v5202, 128
          %5267 = vxpose.xlu0.b32.cont [13/16] %v5203, 128
          %5268 = vxpose.xlu0.b32.cont [14/16] %v5204, 128
          %5269 = vxpose.xlu0.b32.cont [15/16] %v5205, 128
          %5270 = vxpose.xlu0.b32.end [16/16] %v5206, 128
          %v5271 = vpop.trf.xlu0
          %v5272 = vpop.trf.xlu0
          %v5273 = vpop.trf.xlu0
          %v5274 = vpop.trf.xlu0
          %v5275 = vpop.trf.xlu0
          %v5276 = vpop.trf.xlu0
          %v5277 = vpop.trf.xlu0
          %v5278 = vpop.trf.xlu0
          %v5279 = vpop.trf.xlu0
          %v5280 = vpop.trf.xlu0
          %v5281 = vpop.trf.xlu0
          %v5282 = vpop.trf.xlu0
          %v5283 = vpop.trf.xlu0
          %v5284 = vpop.trf.xlu0
          %v5285 = vpop.trf.xlu0
          %v5286 = vpop.trf.xlu0
          %5287 = vxpose.xlu0.b32.start [1/16] %v5207, 128
          %5288 = vxpose.xlu0.b32.cont [2/16] %v5208, 128
          %5289 = vxpose.xlu0.b32.cont [3/16] %v5209, 128
          %5290 = vxpose.xlu0.b32.cont [4/16] %v5210, 128
          %5291 = vxpose.xlu0.b32.cont [5/16] %v5211, 128
          %5292 = vxpose.xlu0.b32.cont [6/16] %v5212, 128
          %5293 = vxpose.xlu0.b32.cont [7/16] %v5213, 128
          %5294 = vxpose.xlu0.b32.cont [8/16] %v5214, 128
          %5295 = vxpose.xlu0.b32.cont [9/16] %v5215, 128
          %5296 = vxpose.xlu0.b32.cont [10/16] %v5216, 128
          %5297 = vxpose.xlu0.b32.cont [11/16] %v5217, 128
          %5298 = vxpose.xlu0.b32.cont [12/16] %v5218, 128
          %5299 = vxpose.xlu0.b32.cont [13/16] %v5219, 128
          %5300 = vxpose.xlu0.b32.cont [14/16] %v5220, 128
          %5301 = vxpose.xlu0.b32.cont [15/16] %v5221, 128
          %5302 = vxpose.xlu0.b32.end [16/16] %v5222, 128
          %v5303 = vpop.trf.xlu0
          %v5304 = vpop.trf.xlu0
          %v5305 = vpop.trf.xlu0
          %v5306 = vpop.trf.xlu0
          %v5307 = vpop.trf.xlu0
          %v5308 = vpop.trf.xlu0
          %v5309 = vpop.trf.xlu0
          %v5310 = vpop.trf.xlu0
          %v5311 = vpop.trf.xlu0
          %v5312 = vpop.trf.xlu0
          %v5313 = vpop.trf.xlu0
          %v5314 = vpop.trf.xlu0
          %v5315 = vpop.trf.xlu0
          %v5316 = vpop.trf.xlu0
          %v5317 = vpop.trf.xlu0
          %v5318 = vpop.trf.xlu0
          %5319 = vxpose.xlu0.b32.start [1/16] %v5223, 128
          %5320 = vxpose.xlu0.b32.cont [2/16] %v5224, 128
          %5321 = vxpose.xlu0.b32.cont [3/16] %v5225, 128
          %5322 = vxpose.xlu0.b32.cont [4/16] %v5226, 128
          %5323 = vxpose.xlu0.b32.cont [5/16] %v5227, 128
          %5324 = vxpose.xlu0.b32.cont [6/16] %v5228, 128
          %5325 = vxpose.xlu0.b32.cont [7/16] %v5229, 128
          %5326 = vxpose.xlu0.b32.cont [8/16] %v5230, 128
          %5327 = vxpose.xlu0.b32.cont [9/16] %v5231, 128
          %5328 = vxpose.xlu0.b32.cont [10/16] %v5232, 128
          %5329 = vxpose.xlu0.b32.cont [11/16] %v5233, 128
          %5330 = vxpose.xlu0.b32.cont [12/16] %v5234, 128
          %5331 = vxpose.xlu0.b32.cont [13/16] %v5235, 128
          %5332 = vxpose.xlu0.b32.cont [14/16] %v5236, 128
          %5333 = vxpose.xlu0.b32.cont [15/16] %v5237, 128
          %5334 = vxpose.xlu0.b32.end [16/16] %v5238, 128
          %v5335 = vpop.trf.xlu0
          %v5336 = vpop.trf.xlu0
          %v5337 = vpop.trf.xlu0
          %v5338 = vpop.trf.xlu0
          %v5339 = vpop.trf.xlu0
          %v5340 = vpop.trf.xlu0
          %v5341 = vpop.trf.xlu0
          %v5342 = vpop.trf.xlu0
          %v5343 = vpop.trf.xlu0
          %v5344 = vpop.trf.xlu0
          %v5345 = vpop.trf.xlu0
          %v5346 = vpop.trf.xlu0
          %v5347 = vpop.trf.xlu0
          %v5348 = vpop.trf.xlu0
          %v5349 = vpop.trf.xlu0
          %v5350 = vpop.trf.xlu0
          %5351 = vxpose.xlu0.b32.start [1/16] %v5239, 128
          %5352 = vxpose.xlu0.b32.cont [2/16] %v5240, 128
          %5353 = vxpose.xlu0.b32.cont [3/16] %v5241, 128
          %5354 = vxpose.xlu0.b32.cont [4/16] %v5242, 128
          %5355 = vxpose.xlu0.b32.cont [5/16] %v5243, 128
          %5356 = vxpose.xlu0.b32.cont [6/16] %v5244, 128
          %5357 = vxpose.xlu0.b32.cont [7/16] %v5245, 128
          %5358 = vxpose.xlu0.b32.cont [8/16] %v5246, 128
          %5359 = vxpose.xlu0.b32.cont [9/16] %v5247, 128
          %5360 = vxpose.xlu0.b32.cont [10/16] %v5248, 128
          %5361 = vxpose.xlu0.b32.cont [11/16] %v5249, 128
          %5362 = vxpose.xlu0.b32.cont [12/16] %v5250, 128
          %5363 = vxpose.xlu0.b32.cont [13/16] %v5251, 128
          %5364 = vxpose.xlu0.b32.cont [14/16] %v5252, 128
          %5365 = vxpose.xlu0.b32.cont [15/16] %v5253, 128
          %5366 = vxpose.xlu0.b32.end [16/16] %v5254, 128
          %v5367 = vpop.trf.xlu0
          %v5368 = vpop.trf.xlu0
          %v5369 = vpop.trf.xlu0
          %v5370 = vpop.trf.xlu0
          %v5371 = vpop.trf.xlu0
          %v5372 = vpop.trf.xlu0
          %v5373 = vpop.trf.xlu0
          %v5374 = vpop.trf.xlu0
          %v5375 = vpop.trf.xlu0
          %v5376 = vpop.trf.xlu0
          %v5377 = vpop.trf.xlu0
          %v5378 = vpop.trf.xlu0
          %v5379 = vpop.trf.xlu0
          %v5380 = vpop.trf.xlu0
          %v5381 = vpop.trf.xlu0
          %v5382 = vpop.trf.xlu0
          %v5383 = vsel %vm881, %v5271, 0.0
          %v5384 = vsel %vm881, %v5303, 0.0
          %v5385 = vsel %vm881, %v5335, 0.0
          %v5386 = vsel %vm881, %v5367, 0.0
          %s5387 = smul.u32 %s5190, 4
          %s5388 = smul.addr %s5387, 8
          %s5389 = scalar_lea.vmem [#allocation3], %s5388
          %5390 = vst [vmem:[%s5389] sm:$0xff] %v5383
          %5391 = vst [vmem:[%s5389 + $0x8] sm:$0xff] %v5384
          %5392 = vst [vmem:[%s5389 + $0x10] sm:$0xff] %v5385
          %5393 = vst [vmem:[%s5389 + $0x18] sm:$0xff] %v5386
          %s5394 = sadd.s32 %s4780, 3
          %v5395 = vld [vmem:[%s4782 + $0x3] sm:$0xff]
          %v5396 = vld [vmem:[%s4782 + $0x13] sm:$0xff]
          %v5397 = vld [vmem:[%s4782 + $0x23] sm:$0xff]
          %v5398 = vld [vmem:[%s4782 + $0x33] sm:$0xff]
          %v5399 = vld [vmem:[%s4782 + $0x43] sm:$0xff]
          %v5400 = vld [vmem:[%s4782 + $0x53] sm:$0xff]
          %v5401 = vld [vmem:[%s4782 + $0x63] sm:$0xff]
          %v5402 = vld [vmem:[%s4782 + $0x73] sm:$0xff]
          %v5403 = vld [vmem:[%s4782 + $0xc3] sm:$0xff]
          %v5404 = vld [vmem:[%s4782 + $0xd3] sm:$0xff]
          %v5405 = vld [vmem:[%s4782 + $0xe3] sm:$0xff]
          %v5406 = vld [vmem:[%s4782 + $0xf3] sm:$0xff]
          %v5407 = vld [vmem:[%s4782 + $0x103] sm:$0xff]
          %v5408 = vld [vmem:[%s4782 + $0x113] sm:$0xff]
          %v5409 = vld [vmem:[%s4782 + $0x123] sm:$0xff]
          %v5410 = vld [vmem:[%s4782 + $0x133] sm:$0xff]
          %v5411 = vld [vmem:[%s4782 + $0x183] sm:$0xff]
          %v5412 = vld [vmem:[%s4782 + $0x193] sm:$0xff]
          %v5413 = vld [vmem:[%s4782 + $0x1a3] sm:$0xff]
          %v5414 = vld [vmem:[%s4782 + $0x1b3] sm:$0xff]
          %v5415 = vld [vmem:[%s4782 + $0x1c3] sm:$0xff]
          %v5416 = vld [vmem:[%s4782 + $0x1d3] sm:$0xff]
          %v5417 = vld [vmem:[%s4782 + $0x1e3] sm:$0xff]
          %v5418 = vld [vmem:[%s4782 + $0x1f3] sm:$0xff]
          %v5419 = vld [vmem:[%s4782 + $0x243] sm:$0xff]
          %v5420 = vld [vmem:[%s4782 + $0x253] sm:$0xff]
          %v5421 = vld [vmem:[%s4782 + $0x263] sm:$0xff]
          %v5422 = vld [vmem:[%s4782 + $0x273] sm:$0xff]
          %v5423 = vld [vmem:[%s4782 + $0x283] sm:$0xff]
          %v5424 = vld [vmem:[%s4782 + $0x293] sm:$0xff]
          %v5425 = vld [vmem:[%s4782 + $0x2a3] sm:$0xff]
          %v5426 = vld [vmem:[%s4782 + $0x2b3] sm:$0xff]
          %v5427 = vld [vmem:[%s4782 + $0x303] sm:$0xff]
          %v5428 = vld [vmem:[%s4782 + $0x313] sm:$0xff]
          %v5429 = vld [vmem:[%s4782 + $0x323] sm:$0xff]
          %v5430 = vld [vmem:[%s4782 + $0x333] sm:$0xff]
          %v5431 = vld [vmem:[%s4782 + $0x343] sm:$0xff]
          %v5432 = vld [vmem:[%s4782 + $0x353] sm:$0xff]
          %v5433 = vld [vmem:[%s4782 + $0x363] sm:$0xff]
          %v5434 = vld [vmem:[%s4782 + $0x373] sm:$0xff]
          %v5435 = vld [vmem:[%s4782 + $0x3c3] sm:$0xff]
          %v5436 = vld [vmem:[%s4782 + $0x3d3] sm:$0xff]
          %v5437 = vld [vmem:[%s4782 + $0x3e3] sm:$0xff]
          %v5438 = vld [vmem:[%s4782 + $0x3f3] sm:$0xff]
          %v5439 = vld [vmem:[%s4782 + $0x403] sm:$0xff]
          %v5440 = vld [vmem:[%s4782 + $0x413] sm:$0xff]
          %v5441 = vld [vmem:[%s4782 + $0x423] sm:$0xff]
          %v5442 = vld [vmem:[%s4782 + $0x433] sm:$0xff]
          %v5443 = vld [vmem:[%s4782 + $0x483] sm:$0xff]
          %v5444 = vld [vmem:[%s4782 + $0x493] sm:$0xff]
          %v5445 = vld [vmem:[%s4782 + $0x4a3] sm:$0xff]
          %v5446 = vld [vmem:[%s4782 + $0x4b3] sm:$0xff]
          %v5447 = vld [vmem:[%s4782 + $0x4c3] sm:$0xff]
          %v5448 = vld [vmem:[%s4782 + $0x4d3] sm:$0xff]
          %v5449 = vld [vmem:[%s4782 + $0x4e3] sm:$0xff]
          %v5450 = vld [vmem:[%s4782 + $0x4f3] sm:$0xff]
          %v5451 = vld [vmem:[%s4782 + $0x543] sm:$0xff]
          %v5452 = vld [vmem:[%s4782 + $0x553] sm:$0xff]
          %v5453 = vld [vmem:[%s4782 + $0x563] sm:$0xff]
          %v5454 = vld [vmem:[%s4782 + $0x573] sm:$0xff]
          %v5455 = vld [vmem:[%s4782 + $0x583] sm:$0xff]
          %v5456 = vld [vmem:[%s4782 + $0x593] sm:$0xff]
          %v5457 = vld [vmem:[%s4782 + $0x5a3] sm:$0xff]
          %v5458 = vld [vmem:[%s4782 + $0x5b3] sm:$0xff]
          %5459 = vxpose.xlu0.b32.start [1/16] %v5395, 128
          %5460 = vxpose.xlu0.b32.cont [2/16] %v5396, 128
          %5461 = vxpose.xlu0.b32.cont [3/16] %v5397, 128
          %5462 = vxpose.xlu0.b32.cont [4/16] %v5398, 128
          %5463 = vxpose.xlu0.b32.cont [5/16] %v5399, 128
          %5464 = vxpose.xlu0.b32.cont [6/16] %v5400, 128
          %5465 = vxpose.xlu0.b32.cont [7/16] %v5401, 128
          %5466 = vxpose.xlu0.b32.cont [8/16] %v5402, 128
          %5467 = vxpose.xlu0.b32.cont [9/16] %v5403, 128
          %5468 = vxpose.xlu0.b32.cont [10/16] %v5404, 128
          %5469 = vxpose.xlu0.b32.cont [11/16] %v5405, 128
          %5470 = vxpose.xlu0.b32.cont [12/16] %v5406, 128
          %5471 = vxpose.xlu0.b32.cont [13/16] %v5407, 128
          %5472 = vxpose.xlu0.b32.cont [14/16] %v5408, 128
          %5473 = vxpose.xlu0.b32.cont [15/16] %v5409, 128
          %5474 = vxpose.xlu0.b32.end [16/16] %v5410, 128
          %v5475 = vpop.trf.xlu0
          %v5476 = vpop.trf.xlu0
          %v5477 = vpop.trf.xlu0
          %v5478 = vpop.trf.xlu0
          %v5479 = vpop.trf.xlu0
          %v5480 = vpop.trf.xlu0
          %v5481 = vpop.trf.xlu0
          %v5482 = vpop.trf.xlu0
          %v5483 = vpop.trf.xlu0
          %v5484 = vpop.trf.xlu0
          %v5485 = vpop.trf.xlu0
          %v5486 = vpop.trf.xlu0
          %v5487 = vpop.trf.xlu0
          %v5488 = vpop.trf.xlu0
          %v5489 = vpop.trf.xlu0
          %v5490 = vpop.trf.xlu0
          %5491 = vxpose.xlu0.b32.start [1/16] %v5411, 128
          %5492 = vxpose.xlu0.b32.cont [2/16] %v5412, 128
          %5493 = vxpose.xlu0.b32.cont [3/16] %v5413, 128
          %5494 = vxpose.xlu0.b32.cont [4/16] %v5414, 128
          %5495 = vxpose.xlu0.b32.cont [5/16] %v5415, 128
          %5496 = vxpose.xlu0.b32.cont [6/16] %v5416, 128
          %5497 = vxpose.xlu0.b32.cont [7/16] %v5417, 128
          %5498 = vxpose.xlu0.b32.cont [8/16] %v5418, 128
          %5499 = vxpose.xlu0.b32.cont [9/16] %v5419, 128
          %5500 = vxpose.xlu0.b32.cont [10/16] %v5420, 128
          %5501 = vxpose.xlu0.b32.cont [11/16] %v5421, 128
          %5502 = vxpose.xlu0.b32.cont [12/16] %v5422, 128
          %5503 = vxpose.xlu0.b32.cont [13/16] %v5423, 128
          %5504 = vxpose.xlu0.b32.cont [14/16] %v5424, 128
          %5505 = vxpose.xlu0.b32.cont [15/16] %v5425, 128
          %5506 = vxpose.xlu0.b32.end [16/16] %v5426, 128
          %v5507 = vpop.trf.xlu0
          %v5508 = vpop.trf.xlu0
          %v5509 = vpop.trf.xlu0
          %v5510 = vpop.trf.xlu0
          %v5511 = vpop.trf.xlu0
          %v5512 = vpop.trf.xlu0
          %v5513 = vpop.trf.xlu0
          %v5514 = vpop.trf.xlu0
          %v5515 = vpop.trf.xlu0
          %v5516 = vpop.trf.xlu0
          %v5517 = vpop.trf.xlu0
          %v5518 = vpop.trf.xlu0
          %v5519 = vpop.trf.xlu0
          %v5520 = vpop.trf.xlu0
          %v5521 = vpop.trf.xlu0
          %v5522 = vpop.trf.xlu0
          %5523 = vxpose.xlu0.b32.start [1/16] %v5427, 128
          %5524 = vxpose.xlu0.b32.cont [2/16] %v5428, 128
          %5525 = vxpose.xlu0.b32.cont [3/16] %v5429, 128
          %5526 = vxpose.xlu0.b32.cont [4/16] %v5430, 128
          %5527 = vxpose.xlu0.b32.cont [5/16] %v5431, 128
          %5528 = vxpose.xlu0.b32.cont [6/16] %v5432, 128
          %5529 = vxpose.xlu0.b32.cont [7/16] %v5433, 128
          %5530 = vxpose.xlu0.b32.cont [8/16] %v5434, 128
          %5531 = vxpose.xlu0.b32.cont [9/16] %v5435, 128
          %5532 = vxpose.xlu0.b32.cont [10/16] %v5436, 128
          %5533 = vxpose.xlu0.b32.cont [11/16] %v5437, 128
          %5534 = vxpose.xlu0.b32.cont [12/16] %v5438, 128
          %5535 = vxpose.xlu0.b32.cont [13/16] %v5439, 128
          %5536 = vxpose.xlu0.b32.cont [14/16] %v5440, 128
          %5537 = vxpose.xlu0.b32.cont [15/16] %v5441, 128
          %5538 = vxpose.xlu0.b32.end [16/16] %v5442, 128
          %v5539 = vpop.trf.xlu0
          %v5540 = vpop.trf.xlu0
          %v5541 = vpop.trf.xlu0
          %v5542 = vpop.trf.xlu0
          %v5543 = vpop.trf.xlu0
          %v5544 = vpop.trf.xlu0
          %v5545 = vpop.trf.xlu0
          %v5546 = vpop.trf.xlu0
          %v5547 = vpop.trf.xlu0
          %v5548 = vpop.trf.xlu0
          %v5549 = vpop.trf.xlu0
          %v5550 = vpop.trf.xlu0
          %v5551 = vpop.trf.xlu0
          %v5552 = vpop.trf.xlu0
          %v5553 = vpop.trf.xlu0
          %v5554 = vpop.trf.xlu0
          %5555 = vxpose.xlu0.b32.start [1/16] %v5443, 128
          %5556 = vxpose.xlu0.b32.cont [2/16] %v5444, 128
          %5557 = vxpose.xlu0.b32.cont [3/16] %v5445, 128
          %5558 = vxpose.xlu0.b32.cont [4/16] %v5446, 128
          %5559 = vxpose.xlu0.b32.cont [5/16] %v5447, 128
          %5560 = vxpose.xlu0.b32.cont [6/16] %v5448, 128
          %5561 = vxpose.xlu0.b32.cont [7/16] %v5449, 128
          %5562 = vxpose.xlu0.b32.cont [8/16] %v5450, 128
          %5563 = vxpose.xlu0.b32.cont [9/16] %v5451, 128
          %5564 = vxpose.xlu0.b32.cont [10/16] %v5452, 128
          %5565 = vxpose.xlu0.b32.cont [11/16] %v5453, 128
          %5566 = vxpose.xlu0.b32.cont [12/16] %v5454, 128
          %5567 = vxpose.xlu0.b32.cont [13/16] %v5455, 128
          %5568 = vxpose.xlu0.b32.cont [14/16] %v5456, 128
          %5569 = vxpose.xlu0.b32.cont [15/16] %v5457, 128
          %5570 = vxpose.xlu0.b32.end [16/16] %v5458, 128
          %v5571 = vpop.trf.xlu0
          %v5572 = vpop.trf.xlu0
          %v5573 = vpop.trf.xlu0
          %v5574 = vpop.trf.xlu0
          %v5575 = vpop.trf.xlu0
          %v5576 = vpop.trf.xlu0
          %v5577 = vpop.trf.xlu0
          %v5578 = vpop.trf.xlu0
          %v5579 = vpop.trf.xlu0
          %v5580 = vpop.trf.xlu0
          %v5581 = vpop.trf.xlu0
          %v5582 = vpop.trf.xlu0
          %v5583 = vpop.trf.xlu0
          %v5584 = vpop.trf.xlu0
          %v5585 = vpop.trf.xlu0
          %v5586 = vpop.trf.xlu0
          %v5587 = vsel %vm881, %v5475, 0.0
          %v5588 = vsel %vm881, %v5507, 0.0
          %v5589 = vsel %vm881, %v5539, 0.0
          %v5590 = vsel %vm881, %v5571, 0.0
          %s5591 = smul.u32 %s5394, 4
          %s5592 = smul.addr %s5591, 8
          %s5593 = scalar_lea.vmem [#allocation3], %s5592
          %5594 = vst [vmem:[%s5593] sm:$0xff] %v5587
          %5595 = vst [vmem:[%s5593 + $0x8] sm:$0xff] %v5588
          %5596 = vst [vmem:[%s5593 + $0x10] sm:$0xff] %v5589
          %5597 = vst [vmem:[%s5593 + $0x18] sm:$0xff] %v5590
          %s5598 = sadd.s32 %s4780, 4
          %v5599 = vld [vmem:[%s4782 + $0x4] sm:$0xff]
          %v5600 = vld [vmem:[%s4782 + $0x14] sm:$0xff]
          %v5601 = vld [vmem:[%s4782 + $0x24] sm:$0xff]
          %v5602 = vld [vmem:[%s4782 + $0x34] sm:$0xff]
          %v5603 = vld [vmem:[%s4782 + $0x44] sm:$0xff]
          %v5604 = vld [vmem:[%s4782 + $0x54] sm:$0xff]
          %v5605 = vld [vmem:[%s4782 + $0x64] sm:$0xff]
          %v5606 = vld [vmem:[%s4782 + $0x74] sm:$0xff]
          %v5607 = vld [vmem:[%s4782 + $0xc4] sm:$0xff]
          %v5608 = vld [vmem:[%s4782 + $0xd4] sm:$0xff]
          %v5609 = vld [vmem:[%s4782 + $0xe4] sm:$0xff]
          %v5610 = vld [vmem:[%s4782 + $0xf4] sm:$0xff]
          %v5611 = vld [vmem:[%s4782 + $0x104] sm:$0xff]
          %v5612 = vld [vmem:[%s4782 + $0x114] sm:$0xff]
          %v5613 = vld [vmem:[%s4782 + $0x124] sm:$0xff]
          %v5614 = vld [vmem:[%s4782 + $0x134] sm:$0xff]
          %v5615 = vld [vmem:[%s4782 + $0x184] sm:$0xff]
          %v5616 = vld [vmem:[%s4782 + $0x194] sm:$0xff]
          %v5617 = vld [vmem:[%s4782 + $0x1a4] sm:$0xff]
          %v5618 = vld [vmem:[%s4782 + $0x1b4] sm:$0xff]
          %v5619 = vld [vmem:[%s4782 + $0x1c4] sm:$0xff]
          %v5620 = vld [vmem:[%s4782 + $0x1d4] sm:$0xff]
          %v5621 = vld [vmem:[%s4782 + $0x1e4] sm:$0xff]
          %v5622 = vld [vmem:[%s4782 + $0x1f4] sm:$0xff]
          %v5623 = vld [vmem:[%s4782 + $0x244] sm:$0xff]
          %v5624 = vld [vmem:[%s4782 + $0x254] sm:$0xff]
          %v5625 = vld [vmem:[%s4782 + $0x264] sm:$0xff]
          %v5626 = vld [vmem:[%s4782 + $0x274] sm:$0xff]
          %v5627 = vld [vmem:[%s4782 + $0x284] sm:$0xff]
          %v5628 = vld [vmem:[%s4782 + $0x294] sm:$0xff]
          %v5629 = vld [vmem:[%s4782 + $0x2a4] sm:$0xff]
          %v5630 = vld [vmem:[%s4782 + $0x2b4] sm:$0xff]
          %v5631 = vld [vmem:[%s4782 + $0x304] sm:$0xff]
          %v5632 = vld [vmem:[%s4782 + $0x314] sm:$0xff]
          %v5633 = vld [vmem:[%s4782 + $0x324] sm:$0xff]
          %v5634 = vld [vmem:[%s4782 + $0x334] sm:$0xff]
          %v5635 = vld [vmem:[%s4782 + $0x344] sm:$0xff]
          %v5636 = vld [vmem:[%s4782 + $0x354] sm:$0xff]
          %v5637 = vld [vmem:[%s4782 + $0x364] sm:$0xff]
          %v5638 = vld [vmem:[%s4782 + $0x374] sm:$0xff]
          %v5639 = vld [vmem:[%s4782 + $0x3c4] sm:$0xff]
          %v5640 = vld [vmem:[%s4782 + $0x3d4] sm:$0xff]
          %v5641 = vld [vmem:[%s4782 + $0x3e4] sm:$0xff]
          %v5642 = vld [vmem:[%s4782 + $0x3f4] sm:$0xff]
          %v5643 = vld [vmem:[%s4782 + $0x404] sm:$0xff]
          %v5644 = vld [vmem:[%s4782 + $0x414] sm:$0xff]
          %v5645 = vld [vmem:[%s4782 + $0x424] sm:$0xff]
          %v5646 = vld [vmem:[%s4782 + $0x434] sm:$0xff]
          %v5647 = vld [vmem:[%s4782 + $0x484] sm:$0xff]
          %v5648 = vld [vmem:[%s4782 + $0x494] sm:$0xff]
          %v5649 = vld [vmem:[%s4782 + $0x4a4] sm:$0xff]
          %v5650 = vld [vmem:[%s4782 + $0x4b4] sm:$0xff]
          %v5651 = vld [vmem:[%s4782 + $0x4c4] sm:$0xff]
          %v5652 = vld [vmem:[%s4782 + $0x4d4] sm:$0xff]
          %v5653 = vld [vmem:[%s4782 + $0x4e4] sm:$0xff]
          %v5654 = vld [vmem:[%s4782 + $0x4f4] sm:$0xff]
          %v5655 = vld [vmem:[%s4782 + $0x544] sm:$0xff]
          %v5656 = vld [vmem:[%s4782 + $0x554] sm:$0xff]
          %v5657 = vld [vmem:[%s4782 + $0x564] sm:$0xff]
          %v5658 = vld [vmem:[%s4782 + $0x574] sm:$0xff]
          %v5659 = vld [vmem:[%s4782 + $0x584] sm:$0xff]
          %v5660 = vld [vmem:[%s4782 + $0x594] sm:$0xff]
          %v5661 = vld [vmem:[%s4782 + $0x5a4] sm:$0xff]
          %v5662 = vld [vmem:[%s4782 + $0x5b4] sm:$0xff]
          %5663 = vxpose.xlu0.b32.start [1/16] %v5599, 128
          %5664 = vxpose.xlu0.b32.cont [2/16] %v5600, 128
          %5665 = vxpose.xlu0.b32.cont [3/16] %v5601, 128
          %5666 = vxpose.xlu0.b32.cont [4/16] %v5602, 128
          %5667 = vxpose.xlu0.b32.cont [5/16] %v5603, 128
          %5668 = vxpose.xlu0.b32.cont [6/16] %v5604, 128
          %5669 = vxpose.xlu0.b32.cont [7/16] %v5605, 128
          %5670 = vxpose.xlu0.b32.cont [8/16] %v5606, 128
          %5671 = vxpose.xlu0.b32.cont [9/16] %v5607, 128
          %5672 = vxpose.xlu0.b32.cont [10/16] %v5608, 128
          %5673 = vxpose.xlu0.b32.cont [11/16] %v5609, 128
          %5674 = vxpose.xlu0.b32.cont [12/16] %v5610, 128
          %5675 = vxpose.xlu0.b32.cont [13/16] %v5611, 128
          %5676 = vxpose.xlu0.b32.cont [14/16] %v5612, 128
          %5677 = vxpose.xlu0.b32.cont [15/16] %v5613, 128
          %5678 = vxpose.xlu0.b32.end [16/16] %v5614, 128
          %v5679 = vpop.trf.xlu0
          %v5680 = vpop.trf.xlu0
          %v5681 = vpop.trf.xlu0
          %v5682 = vpop.trf.xlu0
          %v5683 = vpop.trf.xlu0
          %v5684 = vpop.trf.xlu0
          %v5685 = vpop.trf.xlu0
          %v5686 = vpop.trf.xlu0
          %v5687 = vpop.trf.xlu0
          %v5688 = vpop.trf.xlu0
          %v5689 = vpop.trf.xlu0
          %v5690 = vpop.trf.xlu0
          %v5691 = vpop.trf.xlu0
          %v5692 = vpop.trf.xlu0
          %v5693 = vpop.trf.xlu0
          %v5694 = vpop.trf.xlu0
          %5695 = vxpose.xlu0.b32.start [1/16] %v5615, 128
          %5696 = vxpose.xlu0.b32.cont [2/16] %v5616, 128
          %5697 = vxpose.xlu0.b32.cont [3/16] %v5617, 128
          %5698 = vxpose.xlu0.b32.cont [4/16] %v5618, 128
          %5699 = vxpose.xlu0.b32.cont [5/16] %v5619, 128
          %5700 = vxpose.xlu0.b32.cont [6/16] %v5620, 128
          %5701 = vxpose.xlu0.b32.cont [7/16] %v5621, 128
          %5702 = vxpose.xlu0.b32.cont [8/16] %v5622, 128
          %5703 = vxpose.xlu0.b32.cont [9/16] %v5623, 128
          %5704 = vxpose.xlu0.b32.cont [10/16] %v5624, 128
          %5705 = vxpose.xlu0.b32.cont [11/16] %v5625, 128
          %5706 = vxpose.xlu0.b32.cont [12/16] %v5626, 128
          %5707 = vxpose.xlu0.b32.cont [13/16] %v5627, 128
          %5708 = vxpose.xlu0.b32.cont [14/16] %v5628, 128
          %5709 = vxpose.xlu0.b32.cont [15/16] %v5629, 128
          %5710 = vxpose.xlu0.b32.end [16/16] %v5630, 128
          %v5711 = vpop.trf.xlu0
          %v5712 = vpop.trf.xlu0
          %v5713 = vpop.trf.xlu0
          %v5714 = vpop.trf.xlu0
          %v5715 = vpop.trf.xlu0
          %v5716 = vpop.trf.xlu0
          %v5717 = vpop.trf.xlu0
          %v5718 = vpop.trf.xlu0
          %v5719 = vpop.trf.xlu0
          %v5720 = vpop.trf.xlu0
          %v5721 = vpop.trf.xlu0
          %v5722 = vpop.trf.xlu0
          %v5723 = vpop.trf.xlu0
          %v5724 = vpop.trf.xlu0
          %v5725 = vpop.trf.xlu0
          %v5726 = vpop.trf.xlu0
          %5727 = vxpose.xlu0.b32.start [1/16] %v5631, 128
          %5728 = vxpose.xlu0.b32.cont [2/16] %v5632, 128
          %5729 = vxpose.xlu0.b32.cont [3/16] %v5633, 128
          %5730 = vxpose.xlu0.b32.cont [4/16] %v5634, 128
          %5731 = vxpose.xlu0.b32.cont [5/16] %v5635, 128
          %5732 = vxpose.xlu0.b32.cont [6/16] %v5636, 128
          %5733 = vxpose.xlu0.b32.cont [7/16] %v5637, 128
          %5734 = vxpose.xlu0.b32.cont [8/16] %v5638, 128
          %5735 = vxpose.xlu0.b32.cont [9/16] %v5639, 128
          %5736 = vxpose.xlu0.b32.cont [10/16] %v5640, 128
          %5737 = vxpose.xlu0.b32.cont [11/16] %v5641, 128
          %5738 = vxpose.xlu0.b32.cont [12/16] %v5642, 128
          %5739 = vxpose.xlu0.b32.cont [13/16] %v5643, 128
          %5740 = vxpose.xlu0.b32.cont [14/16] %v5644, 128
          %5741 = vxpose.xlu0.b32.cont [15/16] %v5645, 128
          %5742 = vxpose.xlu0.b32.end [16/16] %v5646, 128
          %v5743 = vpop.trf.xlu0
          %v5744 = vpop.trf.xlu0
          %v5745 = vpop.trf.xlu0
          %v5746 = vpop.trf.xlu0
          %v5747 = vpop.trf.xlu0
          %v5748 = vpop.trf.xlu0
          %v5749 = vpop.trf.xlu0
          %v5750 = vpop.trf.xlu0
          %v5751 = vpop.trf.xlu0
          %v5752 = vpop.trf.xlu0
          %v5753 = vpop.trf.xlu0
          %v5754 = vpop.trf.xlu0
          %v5755 = vpop.trf.xlu0
          %v5756 = vpop.trf.xlu0
          %v5757 = vpop.trf.xlu0
          %v5758 = vpop.trf.xlu0
          %5759 = vxpose.xlu0.b32.start [1/16] %v5647, 128
          %5760 = vxpose.xlu0.b32.cont [2/16] %v5648, 128
          %5761 = vxpose.xlu0.b32.cont [3/16] %v5649, 128
          %5762 = vxpose.xlu0.b32.cont [4/16] %v5650, 128
          %5763 = vxpose.xlu0.b32.cont [5/16] %v5651, 128
          %5764 = vxpose.xlu0.b32.cont [6/16] %v5652, 128
          %5765 = vxpose.xlu0.b32.cont [7/16] %v5653, 128
          %5766 = vxpose.xlu0.b32.cont [8/16] %v5654, 128
          %5767 = vxpose.xlu0.b32.cont [9/16] %v5655, 128
          %5768 = vxpose.xlu0.b32.cont [10/16] %v5656, 128
          %5769 = vxpose.xlu0.b32.cont [11/16] %v5657, 128
          %5770 = vxpose.xlu0.b32.cont [12/16] %v5658, 128
          %5771 = vxpose.xlu0.b32.cont [13/16] %v5659, 128
          %5772 = vxpose.xlu0.b32.cont [14/16] %v5660, 128
          %5773 = vxpose.xlu0.b32.cont [15/16] %v5661, 128
          %5774 = vxpose.xlu0.b32.end [16/16] %v5662, 128
          %v5775 = vpop.trf.xlu0
          %v5776 = vpop.trf.xlu0
          %v5777 = vpop.trf.xlu0
          %v5778 = vpop.trf.xlu0
          %v5779 = vpop.trf.xlu0
          %v5780 = vpop.trf.xlu0
          %v5781 = vpop.trf.xlu0
          %v5782 = vpop.trf.xlu0
          %v5783 = vpop.trf.xlu0
          %v5784 = vpop.trf.xlu0
          %v5785 = vpop.trf.xlu0
          %v5786 = vpop.trf.xlu0
          %v5787 = vpop.trf.xlu0
          %v5788 = vpop.trf.xlu0
          %v5789 = vpop.trf.xlu0
          %v5790 = vpop.trf.xlu0
          %v5791 = vsel %vm881, %v5679, 0.0
          %v5792 = vsel %vm881, %v5711, 0.0
          %v5793 = vsel %vm881, %v5743, 0.0
          %v5794 = vsel %vm881, %v5775, 0.0
          %s5795 = smul.u32 %s5598, 4
          %s5796 = smul.addr %s5795, 8
          %s5797 = scalar_lea.vmem [#allocation3], %s5796
          %5798 = vst [vmem:[%s5797] sm:$0xff] %v5791
          %5799 = vst [vmem:[%s5797 + $0x8] sm:$0xff] %v5792
          %5800 = vst [vmem:[%s5797 + $0x10] sm:$0xff] %v5793
          %5801 = vst [vmem:[%s5797 + $0x18] sm:$0xff] %v5794
        $region45: #{tpu_custom_call.1} parent=39 // loop_footer
          %s685 = sadd.s32 1, %s681
        $region46: #{tpu_custom_call.1} parent=39 // loop_footer_branch
          %680 = sbr.rel target = $region42
        $region47: #{tpu_custom_call.1} parent=39 // loop_exit
          _
        %v5802 = vld [vmem:[#allocation3] sm:$0xff]
        %v5803 = vld [vmem:[#allocation3 + $0x8] sm:$0xff]
        %v5804 = vld [vmem:[#allocation3 + $0x10] sm:$0xff]
        %v5805 = vld [vmem:[#allocation3 + $0x18] sm:$0xff]
        %v5806 = vld [vmem:[#allocation3 + $0x20] sm:$0xff]
        %v5807 = vld [vmem:[#allocation3 + $0x28] sm:$0xff]
        %v5808 = vld [vmem:[#allocation3 + $0x30] sm:$0xff]
        %v5809 = vld [vmem:[#allocation3 + $0x38] sm:$0xff]
        %v5810 = vld [vmem:[#allocation3 + $0x40] sm:$0xff]
        %v5811 = vld [vmem:[#allocation3 + $0x48] sm:$0xff]
        %v5812 = vld [vmem:[#allocation3 + $0x50] sm:$0xff]
        %v5813 = vld [vmem:[#allocation3 + $0x58] sm:$0xff]
        %v5814 = vld [vmem:[#allocation3 + $0x60] sm:$0xff]
        %v5815 = vld [vmem:[#allocation3 + $0x68] sm:$0xff]
        %v5816 = vld [vmem:[#allocation3 + $0x70] sm:$0xff]
        %v5817 = vld [vmem:[#allocation3 + $0x78] sm:$0xff]
        %v5818 = vld [vmem:[#allocation3 + $0x80] sm:$0xff]
        %v5819 = vld [vmem:[#allocation3 + $0x88] sm:$0xff]
        %v5820 = vld [vmem:[#allocation3 + $0x90] sm:$0xff]
        %v5821 = vld [vmem:[#allocation3 + $0x98] sm:$0xff]
        %v5822 = vld [vmem:[#allocation3 + $0xa0] sm:$0xff]
        %v5823 = vld [vmem:[#allocation3 + $0xa8] sm:$0xff]
        %v5824 = vld [vmem:[#allocation3 + $0xb0] sm:$0xff]
        %v5825 = vld [vmem:[#allocation3 + $0xb8] sm:$0xff]
        %v5826 = vld [vmem:[#allocation3 + $0xc0] sm:$0xff]
        %v5827 = vld [vmem:[#allocation3 + $0xc8] sm:$0xff]
        %v5828 = vld [vmem:[#allocation3 + $0xd0] sm:$0xff]
        %v5829 = vld [vmem:[#allocation3 + $0xd8] sm:$0xff]
        %v5830 = vld [vmem:[#allocation3 + $0xe0] sm:$0xff]
        %v5831 = vld [vmem:[#allocation3 + $0xe8] sm:$0xff]
        %v5832 = vld [vmem:[#allocation3 + $0xf0] sm:$0xff]
        %v5833 = vld [vmem:[#allocation3 + $0xf8] sm:$0xff]
        %v5834 = vld [vmem:[#allocation3 + $0x100] sm:$0xff]
        %v5835 = vld [vmem:[#allocation3 + $0x108] sm:$0xff]
        %v5836 = vld [vmem:[#allocation3 + $0x110] sm:$0xff]
        %v5837 = vld [vmem:[#allocation3 + $0x118] sm:$0xff]
        %v5838 = vld [vmem:[#allocation3 + $0x120] sm:$0xff]
        %v5839 = vld [vmem:[#allocation3 + $0x128] sm:$0xff]
        %v5840 = vld [vmem:[#allocation3 + $0x130] sm:$0xff]
        %v5841 = vld [vmem:[#allocation3 + $0x138] sm:$0xff]
        %v5842 = vld [vmem:[#allocation3 + $0x140] sm:$0xff]
        %v5843 = vld [vmem:[#allocation3 + $0x148] sm:$0xff]
        %v5844 = vld [vmem:[#allocation3 + $0x150] sm:$0xff]
        %v5845 = vld [vmem:[#allocation3 + $0x158] sm:$0xff]
        %v5846 = vld [vmem:[#allocation3 + $0x160] sm:$0xff]
        %v5847 = vld [vmem:[#allocation3 + $0x168] sm:$0xff]
        %v5848 = vld [vmem:[#allocation3 + $0x170] sm:$0xff]
        %v5849 = vld [vmem:[#allocation3 + $0x178] sm:$0xff]
        %v5850 = vld [vmem:[#allocation3 + $0x180] sm:$0xff]
        %v5851 = vld [vmem:[#allocation3 + $0x188] sm:$0xff]
        %v5852 = vld [vmem:[#allocation3 + $0x190] sm:$0xff]
        %v5853 = vld [vmem:[#allocation3 + $0x198] sm:$0xff]
        %v5854 = vld [vmem:[#allocation3 + $0x1a0] sm:$0xff]
        %v5855 = vld [vmem:[#allocation3 + $0x1a8] sm:$0xff]
        %v5856 = vld [vmem:[#allocation3 + $0x1b0] sm:$0xff]
        %v5857 = vld [vmem:[#allocation3 + $0x1b8] sm:$0xff]
        %v5858 = vld [vmem:[#allocation3 + $0x1c0] sm:$0xff]
        %v5859 = vld [vmem:[#allocation3 + $0x1c8] sm:$0xff]
        %v5860 = vld [vmem:[#allocation3 + $0x1d0] sm:$0xff]
        %v5861 = vld [vmem:[#allocation3 + $0x1d8] sm:$0xff]
        %v5862 = vld [vmem:[#allocation3 + $0x1e0] sm:$0xff]
        %v5863 = vld [vmem:[#allocation3 + $0x1e8] sm:$0xff]
        %v5864 = vld [vmem:[#allocation3 + $0x1f0] sm:$0xff]
        %v5865 = vld [vmem:[#allocation3 + $0x1f8] sm:$0xff]
        %v5866 = vld [vmem:[#allocation3 + $0x200] sm:$0xff]
        %v5867 = vld [vmem:[#allocation3 + $0x208] sm:$0xff]
        %v5868 = vld [vmem:[#allocation3 + $0x210] sm:$0xff]
        %v5869 = vld [vmem:[#allocation3 + $0x218] sm:$0xff]
        %v5870 = vld [vmem:[#allocation3 + $0x220] sm:$0xff]
        %v5871 = vld [vmem:[#allocation3 + $0x228] sm:$0xff]
        %v5872 = vld [vmem:[#allocation3 + $0x230] sm:$0xff]
        %v5873 = vld [vmem:[#allocation3 + $0x238] sm:$0xff]
        %v5874 = vld [vmem:[#allocation3 + $0x240] sm:$0xff]
        %v5875 = vld [vmem:[#allocation3 + $0x248] sm:$0xff]
        %v5876 = vld [vmem:[#allocation3 + $0x250] sm:$0xff]
        %v5877 = vld [vmem:[#allocation3 + $0x258] sm:$0xff]
        %v5878 = vld [vmem:[#allocation3 + $0x260] sm:$0xff]
        %v5879 = vld [vmem:[#allocation3 + $0x268] sm:$0xff]
        %v5880 = vld [vmem:[#allocation3 + $0x270] sm:$0xff]
        %v5881 = vld [vmem:[#allocation3 + $0x278] sm:$0xff]
        %v5882 = vld [vmem:[#allocation3 + $0x280] sm:$0xff]
        %v5883 = vld [vmem:[#allocation3 + $0x288] sm:$0xff]
        %v5884 = vld [vmem:[#allocation3 + $0x290] sm:$0xff]
        %v5885 = vld [vmem:[#allocation3 + $0x298] sm:$0xff]
        %v5886 = vld [vmem:[#allocation3 + $0x2a0] sm:$0xff]
        %v5887 = vld [vmem:[#allocation3 + $0x2a8] sm:$0xff]
        %v5888 = vld [vmem:[#allocation3 + $0x2b0] sm:$0xff]
        %v5889 = vld [vmem:[#allocation3 + $0x2b8] sm:$0xff]
        %v5890 = vld [vmem:[#allocation3 + $0x2c0] sm:$0xff]
        %v5891 = vld [vmem:[#allocation3 + $0x2c8] sm:$0xff]
        %v5892 = vld [vmem:[#allocation3 + $0x2d0] sm:$0xff]
        %v5893 = vld [vmem:[#allocation3 + $0x2d8] sm:$0xff]
        %v5894 = vld [vmem:[#allocation3 + $0x2e0] sm:$0xff]
        %v5895 = vld [vmem:[#allocation3 + $0x2e8] sm:$0xff]
        %v5896 = vld [vmem:[#allocation3 + $0x2f0] sm:$0xff]
        %v5897 = vld [vmem:[#allocation3 + $0x2f8] sm:$0xff]
        %v5898 = vld [vmem:[#allocation3 + $0x300] sm:$0xff]
        %v5899 = vld [vmem:[#allocation3 + $0x308] sm:$0xff]
        %v5900 = vld [vmem:[#allocation3 + $0x310] sm:$0xff]
        %v5901 = vld [vmem:[#allocation3 + $0x318] sm:$0xff]
        %v5902 = vld [vmem:[#allocation3 + $0x320] sm:$0xff]
        %v5903 = vld [vmem:[#allocation3 + $0x328] sm:$0xff]
        %v5904 = vld [vmem:[#allocation3 + $0x330] sm:$0xff]
        %v5905 = vld [vmem:[#allocation3 + $0x338] sm:$0xff]
        %v5906 = vld [vmem:[#allocation3 + $0x340] sm:$0xff]
        %v5907 = vld [vmem:[#allocation3 + $0x348] sm:$0xff]
        %v5908 = vld [vmem:[#allocation3 + $0x350] sm:$0xff]
        %v5909 = vld [vmem:[#allocation3 + $0x358] sm:$0xff]
        %v5910 = vld [vmem:[#allocation3 + $0x360] sm:$0xff]
        %v5911 = vld [vmem:[#allocation3 + $0x368] sm:$0xff]
        %v5912 = vld [vmem:[#allocation3 + $0x370] sm:$0xff]
        %v5913 = vld [vmem:[#allocation3 + $0x378] sm:$0xff]
        %v5914 = vld [vmem:[#allocation3 + $0x380] sm:$0xff]
        %v5915 = vld [vmem:[#allocation3 + $0x388] sm:$0xff]
        %v5916 = vld [vmem:[#allocation3 + $0x390] sm:$0xff]
        %v5917 = vld [vmem:[#allocation3 + $0x398] sm:$0xff]
        %v5918 = vld [vmem:[#allocation3 + $0x3a0] sm:$0xff]
        %v5919 = vld [vmem:[#allocation3 + $0x3a8] sm:$0xff]
        %v5920 = vld [vmem:[#allocation3 + $0x3b0] sm:$0xff]
        %v5921 = vld [vmem:[#allocation3 + $0x3b8] sm:$0xff]
        %v5922 = vld [vmem:[#allocation3 + $0x3c0] sm:$0xff]
        %v5923 = vld [vmem:[#allocation3 + $0x3c8] sm:$0xff]
        %v5924 = vld [vmem:[#allocation3 + $0x3d0] sm:$0xff]
        %v5925 = vld [vmem:[#allocation3 + $0x3d8] sm:$0xff]
        %v5926 = vld [vmem:[#allocation3 + $0x3e0] sm:$0xff]
        %v5927 = vld [vmem:[#allocation3 + $0x3e8] sm:$0xff]
        %v5928 = vld [vmem:[#allocation3 + $0x3f0] sm:$0xff]
        %v5929 = vld [vmem:[#allocation3 + $0x3f8] sm:$0xff]
        %v5930 = vld [vmem:[#allocation3 + $0x400] sm:$0xff]
        %v5931 = vld [vmem:[#allocation3 + $0x408] sm:$0xff]
        %v5932 = vld [vmem:[#allocation3 + $0x410] sm:$0xff]
        %v5933 = vld [vmem:[#allocation3 + $0x418] sm:$0xff]
        %v5934 = vld [vmem:[#allocation3 + $0x420] sm:$0xff]
        %v5935 = vld [vmem:[#allocation3 + $0x428] sm:$0xff]
        %v5936 = vld [vmem:[#allocation3 + $0x430] sm:$0xff]
        %v5937 = vld [vmem:[#allocation3 + $0x438] sm:$0xff]
        %v5938 = vld [vmem:[#allocation3 + $0x440] sm:$0xff]
        %v5939 = vld [vmem:[#allocation3 + $0x448] sm:$0xff]
        %v5940 = vld [vmem:[#allocation3 + $0x450] sm:$0xff]
        %v5941 = vld [vmem:[#allocation3 + $0x458] sm:$0xff]
        %v5942 = vld [vmem:[#allocation3 + $0x460] sm:$0xff]
        %v5943 = vld [vmem:[#allocation3 + $0x468] sm:$0xff]
        %v5944 = vld [vmem:[#allocation3 + $0x470] sm:$0xff]
        %v5945 = vld [vmem:[#allocation3 + $0x478] sm:$0xff]
        %v5946 = vld [vmem:[#allocation3 + $0x480] sm:$0xff]
        %v5947 = vld [vmem:[#allocation3 + $0x488] sm:$0xff]
        %v5948 = vld [vmem:[#allocation3 + $0x490] sm:$0xff]
        %v5949 = vld [vmem:[#allocation3 + $0x498] sm:$0xff]
        %v5950 = vld [vmem:[#allocation3 + $0x4a0] sm:$0xff]
        %v5951 = vld [vmem:[#allocation3 + $0x4a8] sm:$0xff]
        %v5952 = vld [vmem:[#allocation3 + $0x4b0] sm:$0xff]
        %v5953 = vld [vmem:[#allocation3 + $0x4b8] sm:$0xff]
        %v5954 = vld [vmem:[#allocation3 + $0x4c0] sm:$0xff]
        %v5955 = vld [vmem:[#allocation3 + $0x4c8] sm:$0xff]
        %v5956 = vld [vmem:[#allocation3 + $0x4d0] sm:$0xff]
        %v5957 = vld [vmem:[#allocation3 + $0x4d8] sm:$0xff]
        %v5958 = vld [vmem:[#allocation3 + $0x4e0] sm:$0xff]
        %v5959 = vld [vmem:[#allocation3 + $0x4e8] sm:$0xff]
        %v5960 = vld [vmem:[#allocation3 + $0x4f0] sm:$0xff]
        %v5961 = vld [vmem:[#allocation3 + $0x4f8] sm:$0xff]
        %v5962 = vld [vmem:[#allocation3 + $0x500] sm:$0xff]
        %v5963 = vld [vmem:[#allocation3 + $0x508] sm:$0xff]
        %v5964 = vld [vmem:[#allocation3 + $0x510] sm:$0xff]
        %v5965 = vld [vmem:[#allocation3 + $0x518] sm:$0xff]
        %v5966 = vld [vmem:[#allocation3 + $0x520] sm:$0xff]
        %v5967 = vld [vmem:[#allocation3 + $0x528] sm:$0xff]
        %v5968 = vld [vmem:[#allocation3 + $0x530] sm:$0xff]
        %v5969 = vld [vmem:[#allocation3 + $0x538] sm:$0xff]
        %v5970 = vld [vmem:[#allocation3 + $0x540] sm:$0xff]
        %v5971 = vld [vmem:[#allocation3 + $0x548] sm:$0xff]
        %v5972 = vld [vmem:[#allocation3 + $0x550] sm:$0xff]
        %v5973 = vld [vmem:[#allocation3 + $0x558] sm:$0xff]
        %v5974 = vld [vmem:[#allocation3 + $0x560] sm:$0xff]
        %v5975 = vld [vmem:[#allocation3 + $0x568] sm:$0xff]
        %v5976 = vld [vmem:[#allocation3 + $0x570] sm:$0xff]
        %v5977 = vld [vmem:[#allocation3 + $0x578] sm:$0xff]
        %v5978 = vld [vmem:[#allocation3 + $0x580] sm:$0xff]
        %v5979 = vld [vmem:[#allocation3 + $0x588] sm:$0xff]
        %v5980 = vld [vmem:[#allocation3 + $0x590] sm:$0xff]
        %v5981 = vld [vmem:[#allocation3 + $0x598] sm:$0xff]
        %v5982 = vld [vmem:[#allocation3 + $0x5a0] sm:$0xff]
        %v5983 = vld [vmem:[#allocation3 + $0x5a8] sm:$0xff]
        %v5984 = vld [vmem:[#allocation3 + $0x5b0] sm:$0xff]
        %v5985 = vld [vmem:[#allocation3 + $0x5b8] sm:$0xff]
        %v5986 = vld [vmem:[#allocation3 + $0x5c0] sm:$0xff]
        %v5987 = vld [vmem:[#allocation3 + $0x5c8] sm:$0xff]
        %v5988 = vld [vmem:[#allocation3 + $0x5d0] sm:$0xff]
        %v5989 = vld [vmem:[#allocation3 + $0x5d8] sm:$0xff]
        %v5990 = vld [vmem:[#allocation3 + $0x5e0] sm:$0xff]
        %v5991 = vld [vmem:[#allocation3 + $0x5e8] sm:$0xff]
        %v5992 = vld [vmem:[#allocation3 + $0x5f0] sm:$0xff]
        %v5993 = vld [vmem:[#allocation3 + $0x5f8] sm:$0xff]
        %v5994 = vld [vmem:[#allocation3 + $0x600] sm:$0xff]
        %v5995 = vld [vmem:[#allocation3 + $0x608] sm:$0xff]
        %v5996 = vld [vmem:[#allocation3 + $0x610] sm:$0xff]
        %v5997 = vld [vmem:[#allocation3 + $0x618] sm:$0xff]
        %v5998 = vld [vmem:[#allocation3 + $0x620] sm:$0xff]
        %v5999 = vld [vmem:[#allocation3 + $0x628] sm:$0xff]
        %v6000 = vld [vmem:[#allocation3 + $0x630] sm:$0xff]
        %v6001 = vld [vmem:[#allocation3 + $0x638] sm:$0xff]
        %v6002 = vld [vmem:[#allocation3 + $0x640] sm:$0xff]
        %v6003 = vld [vmem:[#allocation3 + $0x648] sm:$0xff]
        %v6004 = vld [vmem:[#allocation3 + $0x650] sm:$0xff]
        %v6005 = vld [vmem:[#allocation3 + $0x658] sm:$0xff]
        %v6006 = vld [vmem:[#allocation3 + $0x660] sm:$0xff]
        %v6007 = vld [vmem:[#allocation3 + $0x668] sm:$0xff]
        %v6008 = vld [vmem:[#allocation3 + $0x670] sm:$0xff]
        %v6009 = vld [vmem:[#allocation3 + $0x678] sm:$0xff]
        %v6010 = vld [vmem:[#allocation3 + $0x680] sm:$0xff]
        %v6011 = vld [vmem:[#allocation3 + $0x688] sm:$0xff]
        %v6012 = vld [vmem:[#allocation3 + $0x690] sm:$0xff]
        %v6013 = vld [vmem:[#allocation3 + $0x698] sm:$0xff]
        %v6014 = vld [vmem:[#allocation3 + $0x6a0] sm:$0xff]
        %v6015 = vld [vmem:[#allocation3 + $0x6a8] sm:$0xff]
        %v6016 = vld [vmem:[#allocation3 + $0x6b0] sm:$0xff]
        %v6017 = vld [vmem:[#allocation3 + $0x6b8] sm:$0xff]
        %v6018 = vld [vmem:[#allocation3 + $0x6c0] sm:$0xff]
        %v6019 = vld [vmem:[#allocation3 + $0x6c8] sm:$0xff]
        %v6020 = vld [vmem:[#allocation3 + $0x6d0] sm:$0xff]
        %v6021 = vld [vmem:[#allocation3 + $0x6d8] sm:$0xff]
        %v6022 = vld [vmem:[#allocation3 + $0x6e0] sm:$0xff]
        %v6023 = vld [vmem:[#allocation3 + $0x6e8] sm:$0xff]
        %v6024 = vld [vmem:[#allocation3 + $0x6f0] sm:$0xff]
        %v6025 = vld [vmem:[#allocation3 + $0x6f8] sm:$0xff]
        %v6026 = vld [vmem:[#allocation3 + $0x700] sm:$0xff]
        %v6027 = vld [vmem:[#allocation3 + $0x708] sm:$0xff]
        %v6028 = vld [vmem:[#allocation3 + $0x710] sm:$0xff]
        %v6029 = vld [vmem:[#allocation3 + $0x718] sm:$0xff]
        %v6030 = vld [vmem:[#allocation3 + $0x720] sm:$0xff]
        %v6031 = vld [vmem:[#allocation3 + $0x728] sm:$0xff]
        %v6032 = vld [vmem:[#allocation3 + $0x730] sm:$0xff]
        %v6033 = vld [vmem:[#allocation3 + $0x738] sm:$0xff]
        %v6034 = vld [vmem:[#allocation3 + $0x740] sm:$0xff]
        %v6035 = vld [vmem:[#allocation3 + $0x748] sm:$0xff]
        %v6036 = vld [vmem:[#allocation3 + $0x750] sm:$0xff]
        %v6037 = vld [vmem:[#allocation3 + $0x758] sm:$0xff]
        %v6038 = vld [vmem:[#allocation3 + $0x760] sm:$0xff]
        %v6039 = vld [vmem:[#allocation3 + $0x768] sm:$0xff]
        %v6040 = vld [vmem:[#allocation3 + $0x770] sm:$0xff]
        %v6041 = vld [vmem:[#allocation3 + $0x778] sm:$0xff]
        %v6042 = vld [vmem:[#allocation3 + $0x780] sm:$0xff]
        %v6043 = vld [vmem:[#allocation3 + $0x788] sm:$0xff]
        %v6044 = vld [vmem:[#allocation3 + $0x790] sm:$0xff]
        %v6045 = vld [vmem:[#allocation3 + $0x798] sm:$0xff]
        %v6046 = vld [vmem:[#allocation3 + $0x7a0] sm:$0xff]
        %v6047 = vld [vmem:[#allocation3 + $0x7a8] sm:$0xff]
        %v6048 = vld [vmem:[#allocation3 + $0x7b0] sm:$0xff]
        %v6049 = vld [vmem:[#allocation3 + $0x7b8] sm:$0xff]
        %v6050 = vld [vmem:[#allocation3 + $0x7c0] sm:$0xff]
        %v6051 = vld [vmem:[#allocation3 + $0x7c8] sm:$0xff]
        %v6052 = vld [vmem:[#allocation3 + $0x7d0] sm:$0xff]
        %v6053 = vld [vmem:[#allocation3 + $0x7d8] sm:$0xff]
        %v6054 = vld [vmem:[#allocation3 + $0x7e0] sm:$0xff]
        %v6055 = vld [vmem:[#allocation3 + $0x7e8] sm:$0xff]
        %v6056 = vld [vmem:[#allocation3 + $0x7f0] sm:$0xff]
        %v6057 = vld [vmem:[#allocation3 + $0x7f8] sm:$0xff]
        %v6058 = vld [vmem:[#allocation3 + $0x800] sm:$0xff]
        %v6059 = vld [vmem:[#allocation3 + $0x808] sm:$0xff]
        %v6060 = vld [vmem:[#allocation3 + $0x810] sm:$0xff]
        %v6061 = vld [vmem:[#allocation3 + $0x818] sm:$0xff]
        %v6062 = vld [vmem:[#allocation3 + $0x820] sm:$0xff]
        %v6063 = vld [vmem:[#allocation3 + $0x828] sm:$0xff]
        %v6064 = vld [vmem:[#allocation3 + $0x830] sm:$0xff]
        %v6065 = vld [vmem:[#allocation3 + $0x838] sm:$0xff]
        %v6066 = vld [vmem:[#allocation3 + $0x840] sm:$0xff]
        %v6067 = vld [vmem:[#allocation3 + $0x848] sm:$0xff]
        %v6068 = vld [vmem:[#allocation3 + $0x850] sm:$0xff]
        %v6069 = vld [vmem:[#allocation3 + $0x858] sm:$0xff]
        %v6070 = vld [vmem:[#allocation3 + $0x860] sm:$0xff]
        %v6071 = vld [vmem:[#allocation3 + $0x868] sm:$0xff]
        %v6072 = vld [vmem:[#allocation3 + $0x870] sm:$0xff]
        %v6073 = vld [vmem:[#allocation3 + $0x878] sm:$0xff]
        %v6074 = vld [vmem:[#allocation3 + $0x880] sm:$0xff]
        %v6075 = vld [vmem:[#allocation3 + $0x888] sm:$0xff]
        %v6076 = vld [vmem:[#allocation3 + $0x890] sm:$0xff]
        %v6077 = vld [vmem:[#allocation3 + $0x898] sm:$0xff]
        %v6078 = vld [vmem:[#allocation3 + $0x8a0] sm:$0xff]
        %v6079 = vld [vmem:[#allocation3 + $0x8a8] sm:$0xff]
        %v6080 = vld [vmem:[#allocation3 + $0x8b0] sm:$0xff]
        %v6081 = vld [vmem:[#allocation3 + $0x8b8] sm:$0xff]
        %v6082 = vld [vmem:[#allocation3 + $0x8c0] sm:$0xff]
        %v6083 = vld [vmem:[#allocation3 + $0x8c8] sm:$0xff]
        %v6084 = vld [vmem:[#allocation3 + $0x8d0] sm:$0xff]
        %v6085 = vld [vmem:[#allocation3 + $0x8d8] sm:$0xff]
        %v6086 = vld [vmem:[#allocation3 + $0x8e0] sm:$0xff]
        %v6087 = vld [vmem:[#allocation3 + $0x8e8] sm:$0xff]
        %v6088 = vld [vmem:[#allocation3 + $0x8f0] sm:$0xff]
        %v6089 = vld [vmem:[#allocation3 + $0x8f8] sm:$0xff]
        %v6090 = vld [vmem:[#allocation3 + $0x900] sm:$0xff]
        %v6091 = vld [vmem:[#allocation3 + $0x908] sm:$0xff]
        %v6092 = vld [vmem:[#allocation3 + $0x910] sm:$0xff]
        %v6093 = vld [vmem:[#allocation3 + $0x918] sm:$0xff]
        %v6094 = vld [vmem:[#allocation3 + $0x920] sm:$0xff]
        %v6095 = vld [vmem:[#allocation3 + $0x928] sm:$0xff]
        %v6096 = vld [vmem:[#allocation3 + $0x930] sm:$0xff]
        %v6097 = vld [vmem:[#allocation3 + $0x938] sm:$0xff]
        %v6098 = vld [vmem:[#allocation3 + $0x940] sm:$0xff]
        %v6099 = vld [vmem:[#allocation3 + $0x948] sm:$0xff]
        %v6100 = vld [vmem:[#allocation3 + $0x950] sm:$0xff]
        %v6101 = vld [vmem:[#allocation3 + $0x958] sm:$0xff]
        %v6102 = vld [vmem:[#allocation3 + $0x960] sm:$0xff]
        %v6103 = vld [vmem:[#allocation3 + $0x968] sm:$0xff]
        %v6104 = vld [vmem:[#allocation3 + $0x970] sm:$0xff]
        %v6105 = vld [vmem:[#allocation3 + $0x978] sm:$0xff]
        %v6106 = vld [vmem:[#allocation3 + $0x980] sm:$0xff]
        %v6107 = vld [vmem:[#allocation3 + $0x988] sm:$0xff]
        %v6108 = vld [vmem:[#allocation3 + $0x990] sm:$0xff]
        %v6109 = vld [vmem:[#allocation3 + $0x998] sm:$0xff]
        %v6110 = vld [vmem:[#allocation3 + $0x9a0] sm:$0xff]
        %v6111 = vld [vmem:[#allocation3 + $0x9a8] sm:$0xff]
        %v6112 = vld [vmem:[#allocation3 + $0x9b0] sm:$0xff]
        %v6113 = vld [vmem:[#allocation3 + $0x9b8] sm:$0xff]
        %v6114 = vld [vmem:[#allocation3 + $0x9c0] sm:$0xff]
        %v6115 = vld [vmem:[#allocation3 + $0x9c8] sm:$0xff]
        %v6116 = vld [vmem:[#allocation3 + $0x9d0] sm:$0xff]
        %v6117 = vld [vmem:[#allocation3 + $0x9d8] sm:$0xff]
        %v6118 = vld [vmem:[#allocation3 + $0x9e0] sm:$0xff]
        %v6119 = vld [vmem:[#allocation3 + $0x9e8] sm:$0xff]
        %v6120 = vld [vmem:[#allocation3 + $0x9f0] sm:$0xff]
        %v6121 = vld [vmem:[#allocation3 + $0x9f8] sm:$0xff]
        %v6122 = vld [vmem:[#allocation3 + $0xa00] sm:$0xff]
        %v6123 = vld [vmem:[#allocation3 + $0xa08] sm:$0xff]
        %v6124 = vld [vmem:[#allocation3 + $0xa10] sm:$0xff]
        %v6125 = vld [vmem:[#allocation3 + $0xa18] sm:$0xff]
        %v6126 = vld [vmem:[#allocation3 + $0xa20] sm:$0xff]
        %v6127 = vld [vmem:[#allocation3 + $0xa28] sm:$0xff]
        %v6128 = vld [vmem:[#allocation3 + $0xa30] sm:$0xff]
        %v6129 = vld [vmem:[#allocation3 + $0xa38] sm:$0xff]
        %v6130 = vld [vmem:[#allocation3 + $0xa40] sm:$0xff]
        %v6131 = vld [vmem:[#allocation3 + $0xa48] sm:$0xff]
        %v6132 = vld [vmem:[#allocation3 + $0xa50] sm:$0xff]
        %v6133 = vld [vmem:[#allocation3 + $0xa58] sm:$0xff]
        %v6134 = vld [vmem:[#allocation3 + $0xa60] sm:$0xff]
        %v6135 = vld [vmem:[#allocation3 + $0xa68] sm:$0xff]
        %v6136 = vld [vmem:[#allocation3 + $0xa70] sm:$0xff]
        %v6137 = vld [vmem:[#allocation3 + $0xa78] sm:$0xff]
        %v6138 = vld [vmem:[#allocation3 + $0xa80] sm:$0xff]
        %v6139 = vld [vmem:[#allocation3 + $0xa88] sm:$0xff]
        %v6140 = vld [vmem:[#allocation3 + $0xa90] sm:$0xff]
        %v6141 = vld [vmem:[#allocation3 + $0xa98] sm:$0xff]
        %v6142 = vld [vmem:[#allocation3 + $0xaa0] sm:$0xff]
        %v6143 = vld [vmem:[#allocation3 + $0xaa8] sm:$0xff]
        %v6144 = vld [vmem:[#allocation3 + $0xab0] sm:$0xff]
        %v6145 = vld [vmem:[#allocation3 + $0xab8] sm:$0xff]
        %v6146 = vld [vmem:[#allocation3 + $0xac0] sm:$0xff]
        %v6147 = vld [vmem:[#allocation3 + $0xac8] sm:$0xff]
        %v6148 = vld [vmem:[#allocation3 + $0xad0] sm:$0xff]
        %v6149 = vld [vmem:[#allocation3 + $0xad8] sm:$0xff]
        %v6150 = vld [vmem:[#allocation3 + $0xae0] sm:$0xff]
        %v6151 = vld [vmem:[#allocation3 + $0xae8] sm:$0xff]
        %v6152 = vld [vmem:[#allocation3 + $0xaf0] sm:$0xff]
        %v6153 = vld [vmem:[#allocation3 + $0xaf8] sm:$0xff]
        %v6154 = vld [vmem:[#allocation3 + $0xb00] sm:$0xff]
        %v6155 = vld [vmem:[#allocation3 + $0xb08] sm:$0xff]
        %v6156 = vld [vmem:[#allocation3 + $0xb10] sm:$0xff]
        %v6157 = vld [vmem:[#allocation3 + $0xb18] sm:$0xff]
        %v6158 = vld [vmem:[#allocation3 + $0xb20] sm:$0xff]
        %v6159 = vld [vmem:[#allocation3 + $0xb28] sm:$0xff]
        %v6160 = vld [vmem:[#allocation3 + $0xb30] sm:$0xff]
        %v6161 = vld [vmem:[#allocation3 + $0xb38] sm:$0xff]
        %v6162 = vld [vmem:[#allocation3 + $0xb40] sm:$0xff]
        %v6163 = vld [vmem:[#allocation3 + $0xb48] sm:$0xff]
        %v6164 = vld [vmem:[#allocation3 + $0xb50] sm:$0xff]
        %v6165 = vld [vmem:[#allocation3 + $0xb58] sm:$0xff]
        %v6166 = vld [vmem:[#allocation3 + $0xb60] sm:$0xff]
        %v6167 = vld [vmem:[#allocation3 + $0xb68] sm:$0xff]
        %v6168 = vld [vmem:[#allocation3 + $0xb70] sm:$0xff]
        %v6169 = vld [vmem:[#allocation3 + $0xb78] sm:$0xff]
        %v6170 = vld [vmem:[#allocation3 + $0xb80] sm:$0xff]
        %v6171 = vld [vmem:[#allocation3 + $0xb88] sm:$0xff]
        %v6172 = vld [vmem:[#allocation3 + $0xb90] sm:$0xff]
        %v6173 = vld [vmem:[#allocation3 + $0xb98] sm:$0xff]
        %v6174 = vld [vmem:[#allocation3 + $0xba0] sm:$0xff]
        %v6175 = vld [vmem:[#allocation3 + $0xba8] sm:$0xff]
        %v6176 = vld [vmem:[#allocation3 + $0xbb0] sm:$0xff]
        %v6177 = vld [vmem:[#allocation3 + $0xbb8] sm:$0xff]
        %v6178 = vld [vmem:[#allocation3 + $0xbc0] sm:$0xff]
        %v6179 = vld [vmem:[#allocation3 + $0xbc8] sm:$0xff]
        %v6180 = vld [vmem:[#allocation3 + $0xbd0] sm:$0xff]
        %v6181 = vld [vmem:[#allocation3 + $0xbd8] sm:$0xff]
        %v6182 = vld [vmem:[#allocation3 + $0xbe0] sm:$0xff]
        %v6183 = vld [vmem:[#allocation3 + $0xbe8] sm:$0xff]
        %v6184 = vld [vmem:[#allocation3 + $0xbf0] sm:$0xff]
        %v6185 = vld [vmem:[#allocation3 + $0xbf8] sm:$0xff]
        %v6186 = vld [vmem:[#allocation3 + $0xc00] sm:$0xff]
        %v6187 = vld [vmem:[#allocation3 + $0xc08] sm:$0xff]
        %v6188 = vld [vmem:[#allocation3 + $0xc10] sm:$0xff]
        %v6189 = vld [vmem:[#allocation3 + $0xc18] sm:$0xff]
        %v6190 = vld [vmem:[#allocation3 + $0xc20] sm:$0xff]
        %v6191 = vld [vmem:[#allocation3 + $0xc28] sm:$0xff]
        %v6192 = vld [vmem:[#allocation3 + $0xc30] sm:$0xff]
        %v6193 = vld [vmem:[#allocation3 + $0xc38] sm:$0xff]
        %v6194 = vld [vmem:[#allocation3 + $0xc40] sm:$0xff]
        %v6195 = vld [vmem:[#allocation3 + $0xc48] sm:$0xff]
        %v6196 = vld [vmem:[#allocation3 + $0xc50] sm:$0xff]
        %v6197 = vld [vmem:[#allocation3 + $0xc58] sm:$0xff]
        %v6198 = vld [vmem:[#allocation3 + $0xc60] sm:$0xff]
        %v6199 = vld [vmem:[#allocation3 + $0xc68] sm:$0xff]
        %v6200 = vld [vmem:[#allocation3 + $0xc70] sm:$0xff]
        %v6201 = vld [vmem:[#allocation3 + $0xc78] sm:$0xff]
        %v6202 = vld [vmem:[#allocation3 + $0xc80] sm:$0xff]
        %v6203 = vld [vmem:[#allocation3 + $0xc88] sm:$0xff]
        %v6204 = vld [vmem:[#allocation3 + $0xc90] sm:$0xff]
        %v6205 = vld [vmem:[#allocation3 + $0xc98] sm:$0xff]
        %v6206 = vld [vmem:[#allocation3 + $0xca0] sm:$0xff]
        %v6207 = vld [vmem:[#allocation3 + $0xca8] sm:$0xff]
        %v6208 = vld [vmem:[#allocation3 + $0xcb0] sm:$0xff]
        %v6209 = vld [vmem:[#allocation3 + $0xcb8] sm:$0xff]
        %v6210 = vld [vmem:[#allocation3 + $0xcc0] sm:$0xff]
        %v6211 = vld [vmem:[#allocation3 + $0xcc8] sm:$0xff]
        %v6212 = vld [vmem:[#allocation3 + $0xcd0] sm:$0xff]
        %v6213 = vld [vmem:[#allocation3 + $0xcd8] sm:$0xff]
        %v6214 = vld [vmem:[#allocation3 + $0xce0] sm:$0xff]
        %v6215 = vld [vmem:[#allocation3 + $0xce8] sm:$0xff]
        %v6216 = vld [vmem:[#allocation3 + $0xcf0] sm:$0xff]
        %v6217 = vld [vmem:[#allocation3 + $0xcf8] sm:$0xff]
        %v6218 = vld [vmem:[#allocation3 + $0xd00] sm:$0xff]
        %v6219 = vld [vmem:[#allocation3 + $0xd08] sm:$0xff]
        %v6220 = vld [vmem:[#allocation3 + $0xd10] sm:$0xff]
        %v6221 = vld [vmem:[#allocation3 + $0xd18] sm:$0xff]
        %v6222 = vld [vmem:[#allocation3 + $0xd20] sm:$0xff]
        %v6223 = vld [vmem:[#allocation3 + $0xd28] sm:$0xff]
        %v6224 = vld [vmem:[#allocation3 + $0xd30] sm:$0xff]
        %v6225 = vld [vmem:[#allocation3 + $0xd38] sm:$0xff]
        %v6226 = vld [vmem:[#allocation3 + $0xd40] sm:$0xff]
        %v6227 = vld [vmem:[#allocation3 + $0xd48] sm:$0xff]
        %v6228 = vld [vmem:[#allocation3 + $0xd50] sm:$0xff]
        %v6229 = vld [vmem:[#allocation3 + $0xd58] sm:$0xff]
        %v6230 = vld [vmem:[#allocation3 + $0xd60] sm:$0xff]
        %v6231 = vld [vmem:[#allocation3 + $0xd68] sm:$0xff]
        %v6232 = vld [vmem:[#allocation3 + $0xd70] sm:$0xff]
        %v6233 = vld [vmem:[#allocation3 + $0xd78] sm:$0xff]
        %v6234 = vld [vmem:[#allocation3 + $0xd80] sm:$0xff]
        %v6235 = vld [vmem:[#allocation3 + $0xd88] sm:$0xff]
        %v6236 = vld [vmem:[#allocation3 + $0xd90] sm:$0xff]
        %v6237 = vld [vmem:[#allocation3 + $0xd98] sm:$0xff]
        %v6238 = vld [vmem:[#allocation3 + $0xda0] sm:$0xff]
        %v6239 = vld [vmem:[#allocation3 + $0xda8] sm:$0xff]
        %v6240 = vld [vmem:[#allocation3 + $0xdb0] sm:$0xff]
        %v6241 = vld [vmem:[#allocation3 + $0xdb8] sm:$0xff]
        %v6242 = vld [vmem:[#allocation3 + $0xdc0] sm:$0xff]
        %v6243 = vld [vmem:[#allocation3 + $0xdc8] sm:$0xff]
        %v6244 = vld [vmem:[#allocation3 + $0xdd0] sm:$0xff]
        %v6245 = vld [vmem:[#allocation3 + $0xdd8] sm:$0xff]
        %v6246 = vld [vmem:[#allocation3 + $0xde0] sm:$0xff]
        %v6247 = vld [vmem:[#allocation3 + $0xde8] sm:$0xff]
        %v6248 = vld [vmem:[#allocation3 + $0xdf0] sm:$0xff]
        %v6249 = vld [vmem:[#allocation3 + $0xdf8] sm:$0xff]
        %v6250 = vld [vmem:[#allocation3 + $0xe00] sm:$0xff]
        %v6251 = vld [vmem:[#allocation3 + $0xe08] sm:$0xff]
        %v6252 = vld [vmem:[#allocation3 + $0xe10] sm:$0xff]
        %v6253 = vld [vmem:[#allocation3 + $0xe18] sm:$0xff]
        %v6254 = vld [vmem:[#allocation3 + $0xe20] sm:$0xff]
        %v6255 = vld [vmem:[#allocation3 + $0xe28] sm:$0xff]
        %v6256 = vld [vmem:[#allocation3 + $0xe30] sm:$0xff]
        %v6257 = vld [vmem:[#allocation3 + $0xe38] sm:$0xff]
        %v6258 = vld [vmem:[#allocation3 + $0xe40] sm:$0xff]
        %v6259 = vld [vmem:[#allocation3 + $0xe48] sm:$0xff]
        %v6260 = vld [vmem:[#allocation3 + $0xe50] sm:$0xff]
        %v6261 = vld [vmem:[#allocation3 + $0xe58] sm:$0xff]
        %v6262 = vld [vmem:[#allocation3 + $0xe60] sm:$0xff]
        %v6263 = vld [vmem:[#allocation3 + $0xe68] sm:$0xff]
        %v6264 = vld [vmem:[#allocation3 + $0xe70] sm:$0xff]
        %v6265 = vld [vmem:[#allocation3 + $0xe78] sm:$0xff]
        %v6266 = vld [vmem:[#allocation3 + $0xe80] sm:$0xff]
        %v6267 = vld [vmem:[#allocation3 + $0xe88] sm:$0xff]
        %v6268 = vld [vmem:[#allocation3 + $0xe90] sm:$0xff]
        %v6269 = vld [vmem:[#allocation3 + $0xe98] sm:$0xff]
        %v6270 = vld [vmem:[#allocation3 + $0xea0] sm:$0xff]
        %v6271 = vld [vmem:[#allocation3 + $0xea8] sm:$0xff]
        %v6272 = vld [vmem:[#allocation3 + $0xeb0] sm:$0xff]
        %v6273 = vld [vmem:[#allocation3 + $0xeb8] sm:$0xff]
        %v6274 = vld [vmem:[#allocation3 + $0xec0] sm:$0xff]
        %v6275 = vld [vmem:[#allocation3 + $0xec8] sm:$0xff]
        %v6276 = vld [vmem:[#allocation3 + $0xed0] sm:$0xff]
        %v6277 = vld [vmem:[#allocation3 + $0xed8] sm:$0xff]
        %v6278 = vld [vmem:[#allocation3 + $0xee0] sm:$0xff]
        %v6279 = vld [vmem:[#allocation3 + $0xee8] sm:$0xff]
        %v6280 = vld [vmem:[#allocation3 + $0xef0] sm:$0xff]
        %v6281 = vld [vmem:[#allocation3 + $0xef8] sm:$0xff]
        %v6282 = vld [vmem:[#allocation3 + $0xf00] sm:$0xff]
        %v6283 = vld [vmem:[#allocation3 + $0xf08] sm:$0xff]
        %v6284 = vld [vmem:[#allocation3 + $0xf10] sm:$0xff]
        %v6285 = vld [vmem:[#allocation3 + $0xf18] sm:$0xff]
        %v6286 = vld [vmem:[#allocation3 + $0xf20] sm:$0xff]
        %v6287 = vld [vmem:[#allocation3 + $0xf28] sm:$0xff]
        %v6288 = vld [vmem:[#allocation3 + $0xf30] sm:$0xff]
        %v6289 = vld [vmem:[#allocation3 + $0xf38] sm:$0xff]
        %v6290 = vld [vmem:[#allocation3 + $0xf40] sm:$0xff]
        %v6291 = vld [vmem:[#allocation3 + $0xf48] sm:$0xff]
        %v6292 = vld [vmem:[#allocation3 + $0xf50] sm:$0xff]
        %v6293 = vld [vmem:[#allocation3 + $0xf58] sm:$0xff]
        %v6294 = vld [vmem:[#allocation3 + $0xf60] sm:$0xff]
        %v6295 = vld [vmem:[#allocation3 + $0xf68] sm:$0xff]
        %v6296 = vld [vmem:[#allocation3 + $0xf70] sm:$0xff]
        %v6297 = vld [vmem:[#allocation3 + $0xf78] sm:$0xff]
        %v6298 = vld [vmem:[#allocation3 + $0xf80] sm:$0xff]
        %v6299 = vld [vmem:[#allocation3 + $0xf88] sm:$0xff]
        %v6300 = vld [vmem:[#allocation3 + $0xf90] sm:$0xff]
        %v6301 = vld [vmem:[#allocation3 + $0xf98] sm:$0xff]
        %v6302 = vld [vmem:[%s1] sm:$0xff]
        %v6303 = vld [vmem:[%s1 + $0x8] sm:$0xff]
        %v6304 = vld [vmem:[%s1 + $0x10] sm:$0xff]
        %v6305 = vld [vmem:[%s1 + $0x18] sm:$0xff]
        %v6306 = vld [vmem:[%s2] sm:$0xf]
        %6308 = vset.pattern.permute.xlu0 0
        %6309 = vperm.xlu0 %6308, %v6306
        %v6310 = vpop.permute.xlu0 %6309
        %v6316 = vcombine.high %v6302, %v6302
        %v6317 = vcombine.high %v6303, %v6303
        %v6318 = vcombine.high %v6304, %v6304
        %v6319 = vcombine.high %v6305, %v6305
        %vm6323 = vcmask 850944
        %v6324 = vsel %vm6323, %v6319, 0
        %6326 = vmatprep.subr.mxu0 %v5803
        %6327 = vmatpush1.msra.mxu0 %v5802
        %6328 = vmatprep.subr.mxu0 %v5807
        %6329 = vmatpush1.msra.mxu0 %v5806
        %6330 = vmatprep.subr.mxu0 %v5811
        %6331 = vmatpush1.msra.mxu0 %v5810
        %6332 = vmatprep.subr.mxu0 %v5815
        %6333 = vmatpush1.msra.mxu0 %v5814
        %6334 = vmatprep.subr.mxu0 %v5819
        %6335 = vmatpush1.msra.mxu0 %v5818
        %6336 = vmatprep.subr.mxu0 %v5823
        %6337 = vmatpush1.msra.mxu0 %v5822
        %6338 = vmatprep.subr.mxu0 %v5827
        %6339 = vmatpush1.msra.mxu0 %v5826
        %6340 = vmatprep.subr.mxu0 %v5831
        %6341 = vmatpush1.msra.mxu0 %v5830
        %6342 = vmatprep.subr.mxu0 %v5835
        %6343 = vmatpush1.msra.mxu0 %v5834
        %6344 = vmatprep.subr.mxu0 %v5839
        %6345 = vmatpush1.msra.mxu0 %v5838
        %6346 = vmatprep.subr.mxu0 %v5843
        %6347 = vmatpush1.msra.mxu0 %v5842
        %6348 = vmatprep.subr.mxu0 %v5847
        %6349 = vmatpush1.msra.mxu0 %v5846
        %6350 = vmatprep.subr.mxu0 %v5851
        %6351 = vmatpush1.msra.mxu0 %v5850
        %6352 = vmatprep.subr.mxu0 %v5855
        %6353 = vmatpush1.msra.mxu0 %v5854
        %6354 = vmatprep.subr.mxu0 %v5859
        %6355 = vmatpush1.msra.mxu0 %v5858
        %6356 = vmatprep.subr.mxu0 %v5863
        %6357 = vmatpush1.msra.mxu0 %v5862
        %6358 = vmatprep.subr.mxu0 %v5867
        %6359 = vmatpush1.msra.mxu0 %v5866
        %6360 = vmatprep.subr.mxu0 %v5871
        %6361 = vmatpush1.msra.mxu0 %v5870
        %6362 = vmatprep.subr.mxu0 %v5875
        %6363 = vmatpush1.msra.mxu0 %v5874
        %6364 = vmatprep.subr.mxu0 %v5879
        %6365 = vmatpush1.msra.mxu0 %v5878
        %6366 = vmatprep.subr.mxu0 %v5883
        %6367 = vmatpush1.msra.mxu0 %v5882
        %6368 = vmatprep.subr.mxu0 %v5887
        %6369 = vmatpush1.msra.mxu0 %v5886
        %6370 = vmatprep.subr.mxu0 %v5891
        %6371 = vmatpush1.msra.mxu0 %v5890
        %6372 = vmatprep.subr.mxu0 %v5895
        %6373 = vmatpush1.msra.mxu0 %v5894
        %6374 = vmatprep.subr.mxu0 %v5899
        %6375 = vmatpush1.msra.mxu0 %v5898
        %6376 = vmatprep.subr.mxu0 %v5903
        %6377 = vmatpush1.msra.mxu0 %v5902
        %6378 = vmatprep.subr.mxu0 %v5907
        %6379 = vmatpush1.msra.mxu0 %v5906
        %6380 = vmatprep.subr.mxu0 %v5911
        %6381 = vmatpush1.msra.mxu0 %v5910
        %6382 = vmatprep.subr.mxu0 %v5915
        %6383 = vmatpush1.msra.mxu0 %v5914
        %6384 = vmatprep.subr.mxu0 %v5919
        %6385 = vmatpush1.msra.mxu0 %v5918
        %6386 = vmatprep.subr.mxu0 %v5923
        %6387 = vmatpush1.msra.mxu0 %v5922
        %6388 = vmatprep.subr.mxu0 %v5927
        %6389 = vmatpush1.msra.mxu0 %v5926
        %6390 = vmatprep.mubr.f32.mxu0 %v6316
        %6391 = vmatmul.mubr.f32.gmra.mrb[0].mxu0 %v6302
        %v6392 = vpop.f32.mrb[0].mxu0
        %v6393 = vadd.f32 %v6310, %v6392
        %v6394 = vpop.f32.mrb[0].mxu0
        %v6395 = vadd.f32 %v6310, %v6394
        %6396 = vdwg.mxu0
        %6397 = vmatprep.subr.mxu0 %v5931
        %6398 = vmatpush1.msra.mxu0 %v5930
        %6399 = vmatprep.subr.mxu0 %v5935
        %6400 = vmatpush1.msra.mxu0 %v5934
        %6401 = vmatprep.subr.mxu0 %v5939
        %6402 = vmatpush1.msra.mxu0 %v5938
        %6403 = vmatprep.subr.mxu0 %v5943
        %6404 = vmatpush1.msra.mxu0 %v5942
        %6405 = vmatprep.subr.mxu0 %v5947
        %6406 = vmatpush1.msra.mxu0 %v5946
        %6407 = vmatprep.subr.mxu0 %v5951
        %6408 = vmatpush1.msra.mxu0 %v5950
        %6409 = vmatprep.subr.mxu0 %v5955
        %6410 = vmatpush1.msra.mxu0 %v5954
        %6411 = vmatprep.subr.mxu0 %v5959
        %6412 = vmatpush1.msra.mxu0 %v5958
        %6413 = vmatprep.subr.mxu0 %v5963
        %6414 = vmatpush1.msra.mxu0 %v5962
        %6415 = vmatprep.subr.mxu0 %v5967
        %6416 = vmatpush1.msra.mxu0 %v5966
        %6417 = vmatprep.subr.mxu0 %v5971
        %6418 = vmatpush1.msra.mxu0 %v5970
        %6419 = vmatprep.subr.mxu0 %v5975
        %6420 = vmatpush1.msra.mxu0 %v5974
        %6421 = vmatprep.subr.mxu0 %v5979
        %6422 = vmatpush1.msra.mxu0 %v5978
        %6423 = vmatprep.subr.mxu0 %v5983
        %6424 = vmatpush1.msra.mxu0 %v5982
        %6425 = vmatprep.subr.mxu0 %v5987
        %6426 = vmatpush1.msra.mxu0 %v5986
        %6427 = vmatprep.subr.mxu0 %v5991
        %6428 = vmatpush1.msra.mxu0 %v5990
        %6429 = vmatprep.subr.mxu0 %v5995
        %6430 = vmatpush1.msra.mxu0 %v5994
        %6431 = vmatprep.subr.mxu0 %v5999
        %6432 = vmatpush1.msra.mxu0 %v5998
        %6433 = vmatprep.subr.mxu0 %v6003
        %6434 = vmatpush1.msra.mxu0 %v6002
        %6435 = vmatprep.subr.mxu0 %v6007
        %6436 = vmatpush1.msra.mxu0 %v6006
        %6437 = vmatprep.subr.mxu0 %v6011
        %6438 = vmatpush1.msra.mxu0 %v6010
        %6439 = vmatprep.subr.mxu0 %v6015
        %6440 = vmatpush1.msra.mxu0 %v6014
        %6441 = vmatprep.subr.mxu0 %v6019
        %6442 = vmatpush1.msra.mxu0 %v6018
        %6443 = vmatprep.subr.mxu0 %v6023
        %6444 = vmatpush1.msra.mxu0 %v6022
        %6445 = vmatprep.subr.mxu0 %v6027
        %6446 = vmatpush1.msra.mxu0 %v6026
        %6447 = vmatprep.subr.mxu0 %v6031
        %6448 = vmatpush1.msra.mxu0 %v6030
        %6449 = vmatprep.subr.mxu0 %v6035
        %6450 = vmatpush1.msra.mxu0 %v6034
        %6451 = vmatprep.subr.mxu0 %v6039
        %6452 = vmatpush1.msra.mxu0 %v6038
        %6453 = vmatprep.subr.mxu0 %v6043
        %6454 = vmatpush1.msra.mxu0 %v6042
        %6455 = vmatprep.subr.mxu0 %v6047
        %6456 = vmatpush1.msra.mxu0 %v6046
        %6457 = vmatprep.subr.mxu0 %v6051
        %6458 = vmatpush1.msra.mxu0 %v6050
        %6459 = vmatprep.subr.mxu0 %v6055
        %6460 = vmatpush1.msra.mxu0 %v6054
        %6461 = vmatprep.mubr.f32.mxu0 %v6317
        %6462 = vmatmul.mubr.f32.gmra.mrb[0].mxu0 %v6303
        %v6463 = vpop.f32.mrb[0].mxu0
        %v6464 = vadd.f32 %v6393, %v6463
        %v6465 = vpop.f32.mrb[0].mxu0
        %v6466 = vadd.f32 %v6395, %v6465
        %6467 = vdwg.mxu0
        %6468 = vmatprep.subr.mxu0 %v6059
        %6469 = vmatpush1.msra.mxu0 %v6058
        %6470 = vmatprep.subr.mxu0 %v6063
        %6471 = vmatpush1.msra.mxu0 %v6062
        %6472 = vmatprep.subr.mxu0 %v6067
        %6473 = vmatpush1.msra.mxu0 %v6066
        %6474 = vmatprep.subr.mxu0 %v6071
        %6475 = vmatpush1.msra.mxu0 %v6070
        %6476 = vmatprep.subr.mxu0 %v6075
        %6477 = vmatpush1.msra.mxu0 %v6074
        %6478 = vmatprep.subr.mxu0 %v6079
        %6479 = vmatpush1.msra.mxu0 %v6078
        %6480 = vmatprep.subr.mxu0 %v6083
        %6481 = vmatpush1.msra.mxu0 %v6082
        %6482 = vmatprep.subr.mxu0 %v6087
        %6483 = vmatpush1.msra.mxu0 %v6086
        %6484 = vmatprep.subr.mxu0 %v6091
        %6485 = vmatpush1.msra.mxu0 %v6090
        %6486 = vmatprep.subr.mxu0 %v6095
        %6487 = vmatpush1.msra.mxu0 %v6094
        %6488 = vmatprep.subr.mxu0 %v6099
        %6489 = vmatpush1.msra.mxu0 %v6098
        %6490 = vmatprep.subr.mxu0 %v6103
        %6491 = vmatpush1.msra.mxu0 %v6102
        %6492 = vmatprep.subr.mxu0 %v6107
        %6493 = vmatpush1.msra.mxu0 %v6106
        %6494 = vmatprep.subr.mxu0 %v6111
        %6495 = vmatpush1.msra.mxu0 %v6110
        %6496 = vmatprep.subr.mxu0 %v6115
        %6497 = vmatpush1.msra.mxu0 %v6114
        %6498 = vmatprep.subr.mxu0 %v6119
        %6499 = vmatpush1.msra.mxu0 %v6118
        %6500 = vmatprep.subr.mxu0 %v6123
        %6501 = vmatpush1.msra.mxu0 %v6122
        %6502 = vmatprep.subr.mxu0 %v6127
        %6503 = vmatpush1.msra.mxu0 %v6126
        %6504 = vmatprep.subr.mxu0 %v6131
        %6505 = vmatpush1.msra.mxu0 %v6130
        %6506 = vmatprep.subr.mxu0 %v6135
        %6507 = vmatpush1.msra.mxu0 %v6134
        %6508 = vmatprep.subr.mxu0 %v6139
        %6509 = vmatpush1.msra.mxu0 %v6138
        %6510 = vmatprep.subr.mxu0 %v6143
        %6511 = vmatpush1.msra.mxu0 %v6142
        %6512 = vmatprep.subr.mxu0 %v6147
        %6513 = vmatpush1.msra.mxu0 %v6146
        %6514 = vmatprep.subr.mxu0 %v6151
        %6515 = vmatpush1.msra.mxu0 %v6150
        %6516 = vmatprep.subr.mxu0 %v6155
        %6517 = vmatpush1.msra.mxu0 %v6154
        %6518 = vmatprep.subr.mxu0 %v6159
        %6519 = vmatpush1.msra.mxu0 %v6158
        %6520 = vmatprep.subr.mxu0 %v6163
        %6521 = vmatpush1.msra.mxu0 %v6162
        %6522 = vmatprep.subr.mxu0 %v6167
        %6523 = vmatpush1.msra.mxu0 %v6166
        %6524 = vmatprep.subr.mxu0 %v6171
        %6525 = vmatpush1.msra.mxu0 %v6170
        %6526 = vmatprep.subr.mxu0 %v6175
        %6527 = vmatpush1.msra.mxu0 %v6174
        %6528 = vmatprep.subr.mxu0 %v6179
        %6529 = vmatpush1.msra.mxu0 %v6178
        %6530 = vmatprep.subr.mxu0 %v6183
        %6531 = vmatpush1.msra.mxu0 %v6182
        %6532 = vmatprep.mubr.f32.mxu0 %v6318
        %6533 = vmatmul.mubr.f32.gmra.mrb[0].mxu0 %v6304
        %v6534 = vpop.f32.mrb[0].mxu0
        %v6535 = vadd.f32 %v6464, %v6534
        %v6536 = vpop.f32.mrb[0].mxu0
        %v6537 = vadd.f32 %v6466, %v6536
        %6538 = vdwg.mxu0
        %6539 = vmatprep.subr.mxu0 %v6187
        %6540 = vmatpush1.msra.mxu0 %v6186
        %6541 = vmatprep.subr.mxu0 %v6191
        %6542 = vmatpush1.msra.mxu0 %v6190
        %6543 = vmatprep.subr.mxu0 %v6195
        %6544 = vmatpush1.msra.mxu0 %v6194
        %6545 = vmatprep.subr.mxu0 %v6199
        %6546 = vmatpush1.msra.mxu0 %v6198
        %6547 = vmatprep.subr.mxu0 %v6203
        %6548 = vmatpush1.msra.mxu0 %v6202
        %6549 = vmatprep.subr.mxu0 %v6207
        %6550 = vmatpush1.msra.mxu0 %v6206
        %6551 = vmatprep.subr.mxu0 %v6211
        %6552 = vmatpush1.msra.mxu0 %v6210
        %6553 = vmatprep.subr.mxu0 %v6215
        %6554 = vmatpush1.msra.mxu0 %v6214
        %6555 = vmatprep.subr.mxu0 %v6219
        %6556 = vmatpush1.msra.mxu0 %v6218
        %6557 = vmatprep.subr.mxu0 %v6223
        %6558 = vmatpush1.msra.mxu0 %v6222
        %6559 = vmatprep.subr.mxu0 %v6227
        %6560 = vmatpush1.msra.mxu0 %v6226
        %6561 = vmatprep.subr.mxu0 %v6231
        %6562 = vmatpush1.msra.mxu0 %v6230
        %6563 = vmatprep.subr.mxu0 %v6235
        %6564 = vmatpush1.msra.mxu0 %v6234
        %6565 = vmatprep.subr.mxu0 %v6239
        %6566 = vmatpush1.msra.mxu0 %v6238
        %6567 = vmatprep.subr.mxu0 %v6243
        %6568 = vmatpush1.msra.mxu0 %v6242
        %6569 = vmatprep.subr.mxu0 %v6247
        %6570 = vmatpush1.msra.mxu0 %v6246
        %6571 = vmatprep.subr.mxu0 %v6251
        %6572 = vmatpush1.msra.mxu0 %v6250
        %6573 = vmatprep.subr.mxu0 %v6255
        %6574 = vmatpush1.msra.mxu0 %v6254
        %6575 = vmatprep.subr.mxu0 %v6259
        %6576 = vmatpush1.msra.mxu0 %v6258
        %6577 = vmatprep.subr.mxu0 %v6263
        %6578 = vmatpush1.msra.mxu0 %v6262
        %6579 = vmatprep.subr.mxu0 %v6267
        %6580 = vmatpush1.msra.mxu0 %v6266
        %6581 = vmatprep.subr.mxu0 %v6271
        %6582 = vmatpush1.msra.mxu0 %v6270
        %6583 = vmatprep.subr.mxu0 %v6275
        %6584 = vmatpush1.msra.mxu0 %v6274
        %6585 = vmatprep.subr.mxu0 %v6279
        %6586 = vmatpush1.msra.mxu0 %v6278
        %6587 = vmatprep.subr.mxu0 %v6283
        %6588 = vmatpush1.msra.mxu0 %v6282
        %6589 = vmatprep.subr.mxu0 %v6287
        %6590 = vmatpush1.msra.mxu0 %v6286
        %6591 = vmatprep.subr.mxu0 %v6291
        %6592 = vmatpush1.msra.mxu0 %v6290
        %6593 = vmatprep.subr.mxu0 %v6295
        %6594 = vmatpush1.msra.mxu0 %v6294
        %6595 = vmatprep.subr.mxu0 %v6299
        %6596 = vmatpush1.msra.mxu0 %v6298
        %6597 = vmatprep.subr.mxu0 0.0
        %6598 = vmatpush1.msra.mxu0 0.0
        %6599 = vmatprep.subr.mxu0 0.0
        %6600 = vmatpush1.msra.mxu0 0.0
        %6601 = vmatprep.subr.mxu0 0.0
        %6602 = vmatpush1.msra.mxu0 0.0
        %6603 = vmatprep.mubr.f32.mxu0 %v6324
        %6604 = vmatmul.mubr.f32.gmra.mrb[0].mxu0 %v6305
        %v6605 = vpop.f32.mrb[0].mxu0
        %v6606 = vadd.f32 %v6535, %v6605
        %v6607 = vpop.f32.mrb[0].mxu0
        %v6608 = vadd.f32 %v6537, %v6607
        %6609 = vdwg.mxu0
        %6610 = vmatprep.subr.mxu0 %v5805
        %6611 = vmatpush1.msra.mxu0 %v5804
        %6612 = vmatprep.subr.mxu0 %v5809
        %6613 = vmatpush1.msra.mxu0 %v5808
        %6614 = vmatprep.subr.mxu0 %v5813
        %6615 = vmatpush1.msra.mxu0 %v5812
        %6616 = vmatprep.subr.mxu0 %v5817
        %6617 = vmatpush1.msra.mxu0 %v5816
        %6618 = vmatprep.subr.mxu0 %v5821
        %6619 = vmatpush1.msra.mxu0 %v5820
        %6620 = vmatprep.subr.mxu0 %v5825
        %6621 = vmatpush1.msra.mxu0 %v5824
        %6622 = vmatprep.subr.mxu0 %v5829
        %6623 = vmatpush1.msra.mxu0 %v5828
        %6624 = vmatprep.subr.mxu0 %v5833
        %6625 = vmatpush1.msra.mxu0 %v5832
        %6626 = vmatprep.subr.mxu0 %v5837
        %6627 = vmatpush1.msra.mxu0 %v5836
        %6628 = vmatprep.subr.mxu0 %v5841
        %6629 = vmatpush1.msra.mxu0 %v5840
        %6630 = vmatprep.subr.mxu0 %v5845
        %6631 = vmatpush1.msra.mxu0 %v5844
        %6632 = vmatprep.subr.mxu0 %v5849
        %6633 = vmatpush1.msra.mxu0 %v5848
        %6634 = vmatprep.subr.mxu0 %v5853
        %6635 = vmatpush1.msra.mxu0 %v5852
        %6636 = vmatprep.subr.mxu0 %v5857
        %6637 = vmatpush1.msra.mxu0 %v5856
        %6638 = vmatprep.subr.mxu0 %v5861
        %6639 = vmatpush1.msra.mxu0 %v5860
        %6640 = vmatprep.subr.mxu0 %v5865
        %6641 = vmatpush1.msra.mxu0 %v5864
        %6642 = vmatprep.subr.mxu0 %v5869
        %6643 = vmatpush1.msra.mxu0 %v5868
        %6644 = vmatprep.subr.mxu0 %v5873
        %6645 = vmatpush1.msra.mxu0 %v5872
        %6646 = vmatprep.subr.mxu0 %v5877
        %6647 = vmatpush1.msra.mxu0 %v5876
        %6648 = vmatprep.subr.mxu0 %v5881
        %6649 = vmatpush1.msra.mxu0 %v5880
        %6650 = vmatprep.subr.mxu0 %v5885
        %6651 = vmatpush1.msra.mxu0 %v5884
        %6652 = vmatprep.subr.mxu0 %v5889
        %6653 = vmatpush1.msra.mxu0 %v5888
        %6654 = vmatprep.subr.mxu0 %v5893
        %6655 = vmatpush1.msra.mxu0 %v5892
        %6656 = vmatprep.subr.mxu0 %v5897
        %6657 = vmatpush1.msra.mxu0 %v5896
        %6658 = vmatprep.subr.mxu0 %v5901
        %6659 = vmatpush1.msra.mxu0 %v5900
        %6660 = vmatprep.subr.mxu0 %v5905
        %6661 = vmatpush1.msra.mxu0 %v5904
        %6662 = vmatprep.subr.mxu0 %v5909
        %6663 = vmatpush1.msra.mxu0 %v5908
        %6664 = vmatprep.subr.mxu0 %v5913
        %6665 = vmatpush1.msra.mxu0 %v5912
        %6666 = vmatprep.subr.mxu0 %v5917
        %6667 = vmatpush1.msra.mxu0 %v5916
        %6668 = vmatprep.subr.mxu0 %v5921
        %6669 = vmatpush1.msra.mxu0 %v5920
        %6670 = vmatprep.subr.mxu0 %v5925
        %6671 = vmatpush1.msra.mxu0 %v5924
        %6672 = vmatprep.subr.mxu0 %v5929
        %6673 = vmatpush1.msra.mxu0 %v5928
        %6674 = vmatprep.mubr.f32.mxu0 %v6316
        %6675 = vmatmul.mubr.f32.gmra.mrb[0].mxu0 %v6302
        %v6676 = vpop.f32.mrb[0].mxu0
        %v6677 = vadd.f32 %v6310, %v6676
        %v6678 = vpop.f32.mrb[0].mxu0
        %v6679 = vadd.f32 %v6310, %v6678
        %6680 = vdwg.mxu0
        %6681 = vmatprep.subr.mxu0 %v5933
        %6682 = vmatpush1.msra.mxu0 %v5932
        %6683 = vmatprep.subr.mxu0 %v5937
        %6684 = vmatpush1.msra.mxu0 %v5936
        %6685 = vmatprep.subr.mxu0 %v5941
        %6686 = vmatpush1.msra.mxu0 %v5940
        %6687 = vmatprep.subr.mxu0 %v5945
        %6688 = vmatpush1.msra.mxu0 %v5944
        %6689 = vmatprep.subr.mxu0 %v5949
        %6690 = vmatpush1.msra.mxu0 %v5948
        %6691 = vmatprep.subr.mxu0 %v5953
        %6692 = vmatpush1.msra.mxu0 %v5952
        %6693 = vmatprep.subr.mxu0 %v5957
        %6694 = vmatpush1.msra.mxu0 %v5956
        %6695 = vmatprep.subr.mxu0 %v5961
        %6696 = vmatpush1.msra.mxu0 %v5960
        %6697 = vmatprep.subr.mxu0 %v5965
        %6698 = vmatpush1.msra.mxu0 %v5964
        %6699 = vmatprep.subr.mxu0 %v5969
        %6700 = vmatpush1.msra.mxu0 %v5968
        %6701 = vmatprep.subr.mxu0 %v5973
        %6702 = vmatpush1.msra.mxu0 %v5972
        %6703 = vmatprep.subr.mxu0 %v5977
        %6704 = vmatpush1.msra.mxu0 %v5976
        %6705 = vmatprep.subr.mxu0 %v5981
        %6706 = vmatpush1.msra.mxu0 %v5980
        %6707 = vmatprep.subr.mxu0 %v5985
        %6708 = vmatpush1.msra.mxu0 %v5984
        %6709 = vmatprep.subr.mxu0 %v5989
        %6710 = vmatpush1.msra.mxu0 %v5988
        %6711 = vmatprep.subr.mxu0 %v5993
        %6712 = vmatpush1.msra.mxu0 %v5992
        %6713 = vmatprep.subr.mxu0 %v5997
        %6714 = vmatpush1.msra.mxu0 %v5996
        %6715 = vmatprep.subr.mxu0 %v6001
        %6716 = vmatpush1.msra.mxu0 %v6000
        %6717 = vmatprep.subr.mxu0 %v6005
        %6718 = vmatpush1.msra.mxu0 %v6004
        %6719 = vmatprep.subr.mxu0 %v6009
        %6720 = vmatpush1.msra.mxu0 %v6008
        %6721 = vmatprep.subr.mxu0 %v6013
        %6722 = vmatpush1.msra.mxu0 %v6012
        %6723 = vmatprep.subr.mxu0 %v6017
        %6724 = vmatpush1.msra.mxu0 %v6016
        %6725 = vmatprep.subr.mxu0 %v6021
        %6726 = vmatpush1.msra.mxu0 %v6020
        %6727 = vmatprep.subr.mxu0 %v6025
        %6728 = vmatpush1.msra.mxu0 %v6024
        %6729 = vmatprep.subr.mxu0 %v6029
        %6730 = vmatpush1.msra.mxu0 %v6028
        %6731 = vmatprep.subr.mxu0 %v6033
        %6732 = vmatpush1.msra.mxu0 %v6032
        %6733 = vmatprep.subr.mxu0 %v6037
        %6734 = vmatpush1.msra.mxu0 %v6036
        %6735 = vmatprep.subr.mxu0 %v6041
        %6736 = vmatpush1.msra.mxu0 %v6040
        %6737 = vmatprep.subr.mxu0 %v6045
        %6738 = vmatpush1.msra.mxu0 %v6044
        %6739 = vmatprep.subr.mxu0 %v6049
        %6740 = vmatpush1.msra.mxu0 %v6048
        %6741 = vmatprep.subr.mxu0 %v6053
        %6742 = vmatpush1.msra.mxu0 %v6052
        %6743 = vmatprep.subr.mxu0 %v6057
        %6744 = vmatpush1.msra.mxu0 %v6056
        %6745 = vmatprep.mubr.f32.mxu0 %v6317
        %6746 = vmatmul.mubr.f32.gmra.mrb[0].mxu0 %v6303
        %v6747 = vpop.f32.mrb[0].mxu0
        %v6748 = vadd.f32 %v6677, %v6747
        %v6749 = vpop.f32.mrb[0].mxu0
        %v6750 = vadd.f32 %v6679, %v6749
        %6751 = vdwg.mxu0
        %6752 = vmatprep.subr.mxu0 %v6061
        %6753 = vmatpush1.msra.mxu0 %v6060
        %6754 = vmatprep.subr.mxu0 %v6065
        %6755 = vmatpush1.msra.mxu0 %v6064
        %6756 = vmatprep.subr.mxu0 %v6069
        %6757 = vmatpush1.msra.mxu0 %v6068
        %6758 = vmatprep.subr.mxu0 %v6073
        %6759 = vmatpush1.msra.mxu0 %v6072
        %6760 = vmatprep.subr.mxu0 %v6077
        %6761 = vmatpush1.msra.mxu0 %v6076
        %6762 = vmatprep.subr.mxu0 %v6081
        %6763 = vmatpush1.msra.mxu0 %v6080
        %6764 = vmatprep.subr.mxu0 %v6085
        %6765 = vmatpush1.msra.mxu0 %v6084
        %6766 = vmatprep.subr.mxu0 %v6089
        %6767 = vmatpush1.msra.mxu0 %v6088
        %6768 = vmatprep.subr.mxu0 %v6093
        %6769 = vmatpush1.msra.mxu0 %v6092
        %6770 = vmatprep.subr.mxu0 %v6097
        %6771 = vmatpush1.msra.mxu0 %v6096
        %6772 = vmatprep.subr.mxu0 %v6101
        %6773 = vmatpush1.msra.mxu0 %v6100
        %6774 = vmatprep.subr.mxu0 %v6105
        %6775 = vmatpush1.msra.mxu0 %v6104
        %6776 = vmatprep.subr.mxu0 %v6109
        %6777 = vmatpush1.msra.mxu0 %v6108
        %6778 = vmatprep.subr.mxu0 %v6113
        %6779 = vmatpush1.msra.mxu0 %v6112
        %6780 = vmatprep.subr.mxu0 %v6117
        %6781 = vmatpush1.msra.mxu0 %v6116
        %6782 = vmatprep.subr.mxu0 %v6121
        %6783 = vmatpush1.msra.mxu0 %v6120
        %6784 = vmatprep.subr.mxu0 %v6125
        %6785 = vmatpush1.msra.mxu0 %v6124
        %6786 = vmatprep.subr.mxu0 %v6129
        %6787 = vmatpush1.msra.mxu0 %v6128
        %6788 = vmatprep.subr.mxu0 %v6133
        %6789 = vmatpush1.msra.mxu0 %v6132
        %6790 = vmatprep.subr.mxu0 %v6137
        %6791 = vmatpush1.msra.mxu0 %v6136
        %6792 = vmatprep.subr.mxu0 %v6141
        %6793 = vmatpush1.msra.mxu0 %v6140
        %6794 = vmatprep.subr.mxu0 %v6145
        %6795 = vmatpush1.msra.mxu0 %v6144
        %6796 = vmatprep.subr.mxu0 %v6149
        %6797 = vmatpush1.msra.mxu0 %v6148
        %6798 = vmatprep.subr.mxu0 %v6153
        %6799 = vmatpush1.msra.mxu0 %v6152
        %6800 = vmatprep.subr.mxu0 %v6157
        %6801 = vmatpush1.msra.mxu0 %v6156
        %6802 = vmatprep.subr.mxu0 %v6161
        %6803 = vmatpush1.msra.mxu0 %v6160
        %6804 = vmatprep.subr.mxu0 %v6165
        %6805 = vmatpush1.msra.mxu0 %v6164
        %6806 = vmatprep.subr.mxu0 %v6169
        %6807 = vmatpush1.msra.mxu0 %v6168
        %6808 = vmatprep.subr.mxu0 %v6173
        %6809 = vmatpush1.msra.mxu0 %v6172
        %6810 = vmatprep.subr.mxu0 %v6177
        %6811 = vmatpush1.msra.mxu0 %v6176
        %6812 = vmatprep.subr.mxu0 %v6181
        %6813 = vmatpush1.msra.mxu0 %v6180
        %6814 = vmatprep.subr.mxu0 %v6185
        %6815 = vmatpush1.msra.mxu0 %v6184
        %6816 = vmatprep.mubr.f32.mxu0 %v6318
        %6817 = vmatmul.mubr.f32.gmra.mrb[0].mxu0 %v6304
        %v6818 = vpop.f32.mrb[0].mxu0
        %v6819 = vadd.f32 %v6748, %v6818
        %v6820 = vpop.f32.mrb[0].mxu0
        %v6821 = vadd.f32 %v6750, %v6820
        %6822 = vdwg.mxu0
        %6823 = vmatprep.subr.mxu0 %v6189
        %6824 = vmatpush1.msra.mxu0 %v6188
        %6825 = vmatprep.subr.mxu0 %v6193
        %6826 = vmatpush1.msra.mxu0 %v6192
        %6827 = vmatprep.subr.mxu0 %v6197
        %6828 = vmatpush1.msra.mxu0 %v6196
        %6829 = vmatprep.subr.mxu0 %v6201
        %6830 = vmatpush1.msra.mxu0 %v6200
        %6831 = vmatprep.subr.mxu0 %v6205
        %6832 = vmatpush1.msra.mxu0 %v6204
        %6833 = vmatprep.subr.mxu0 %v6209
        %6834 = vmatpush1.msra.mxu0 %v6208
        %6835 = vmatprep.subr.mxu0 %v6213
        %6836 = vmatpush1.msra.mxu0 %v6212
        %6837 = vmatprep.subr.mxu0 %v6217
        %6838 = vmatpush1.msra.mxu0 %v6216
        %6839 = vmatprep.subr.mxu0 %v6221
        %6840 = vmatpush1.msra.mxu0 %v6220
        %6841 = vmatprep.subr.mxu0 %v6225
        %6842 = vmatpush1.msra.mxu0 %v6224
        %6843 = vmatprep.subr.mxu0 %v6229
        %6844 = vmatpush1.msra.mxu0 %v6228
        %6845 = vmatprep.subr.mxu0 %v6233
        %6846 = vmatpush1.msra.mxu0 %v6232
        %6847 = vmatprep.subr.mxu0 %v6237
        %6848 = vmatpush1.msra.mxu0 %v6236
        %6849 = vmatprep.subr.mxu0 %v6241
        %6850 = vmatpush1.msra.mxu0 %v6240
        %6851 = vmatprep.subr.mxu0 %v6245
        %6852 = vmatpush1.msra.mxu0 %v6244
        %6853 = vmatprep.subr.mxu0 %v6249
        %6854 = vmatpush1.msra.mxu0 %v6248
        %6855 = vmatprep.subr.mxu0 %v6253
        %6856 = vmatpush1.msra.mxu0 %v6252
        %6857 = vmatprep.subr.mxu0 %v6257
        %6858 = vmatpush1.msra.mxu0 %v6256
        %6859 = vmatprep.subr.mxu0 %v6261
        %6860 = vmatpush1.msra.mxu0 %v6260
        %6861 = vmatprep.subr.mxu0 %v6265
        %6862 = vmatpush1.msra.mxu0 %v6264
        %6863 = vmatprep.subr.mxu0 %v6269
        %6864 = vmatpush1.msra.mxu0 %v6268
        %6865 = vmatprep.subr.mxu0 %v6273
        %6866 = vmatpush1.msra.mxu0 %v6272
        %6867 = vmatprep.subr.mxu0 %v6277
        %6868 = vmatpush1.msra.mxu0 %v6276
        %6869 = vmatprep.subr.mxu0 %v6281
        %6870 = vmatpush1.msra.mxu0 %v6280
        %6871 = vmatprep.subr.mxu0 %v6285
        %6872 = vmatpush1.msra.mxu0 %v6284
        %6873 = vmatprep.subr.mxu0 %v6289
        %6874 = vmatpush1.msra.mxu0 %v6288
        %6875 = vmatprep.subr.mxu0 %v6293
        %6876 = vmatpush1.msra.mxu0 %v6292
        %6877 = vmatprep.subr.mxu0 %v6297
        %6878 = vmatpush1.msra.mxu0 %v6296
        %6879 = vmatprep.subr.mxu0 %v6301
        %6880 = vmatpush1.msra.mxu0 %v6300
        %6881 = vmatprep.subr.mxu0 0.0
        %6882 = vmatpush1.msra.mxu0 0.0
        %6883 = vmatprep.subr.mxu0 0.0
        %6884 = vmatpush1.msra.mxu0 0.0
        %6885 = vmatprep.subr.mxu0 0.0
        %6886 = vmatpush1.msra.mxu0 0.0
        %6887 = vmatprep.mubr.f32.mxu0 %v6324
        %6888 = vmatmul.mubr.f32.gmra.mrb[0].mxu0 %v6305
        %v6889 = vpop.f32.mrb[0].mxu0
        %v6890 = vadd.f32 %v6819, %v6889
        %v6891 = vpop.f32.mrb[0].mxu0
        %v6892 = vadd.f32 %v6821, %v6891
        %6893 = vdwg.mxu0
        %vm6894 = vcmask 1043456
        %v6895 = vsel %vm6894, %v6606, 0.0
        %v6896 = vsel %vm6894, %v6608, 0.0
        %v6897 = vadd.f32 %v6895, %v6896
        %v6898 = vsel %vm6894, %v6890, 0.0
        %v6899 = vadd.f32 %v6897, %v6898
        %v6900 = vsel %vm6894, %v6892, 0.0
        %v6901 = vadd.f32 %v6899, %v6900
        %6902 = vadd.xlane.f32.xlu0 %v6901
        %v6903 = vpop.xlane.xlu0 %6902
        %v6904 = vrcp.pop 512.0
        %v6905 = vmul.f32 %v6903, %v6904
        %v6906 = vsub.f32 %v6606, %v6905
        %v6907 = vsub.f32 %v6608, %v6905
        %v6908 = vsub.f32 %v6890, %v6905
        %v6909 = vsub.f32 %v6892, %v6905
        %v6910 = vmul.f32 %v6906, %v6906
        %v6911 = vmul.f32 %v6907, %v6907
        %v6912 = vmul.f32 %v6908, %v6908
        %v6913 = vmul.f32 %v6909, %v6909
        %v6914 = vsel %vm6894, %v6910, 0.0
        %v6915 = vsel %vm6894, %v6911, 0.0
        %v6916 = vadd.f32 %v6914, %v6915
        %v6917 = vsel %vm6894, %v6912, 0.0
        %v6918 = vadd.f32 %v6916, %v6917
        %v6919 = vsel %vm6894, %v6913, 0.0
        %v6920 = vadd.f32 %v6918, %v6919
        %6921 = vadd.xlane.f32.xlu0 %v6920
        %v6922 = vpop.xlane.xlu0 %6921
        %v6923 = vmul.f32 %v6922, %v6904
        %v6924 = vadd.f32 %v6923, 1e-05
        %v6925 = vrsqrt.pop %v6924
        %v6926 = vmul.f32 %v6906, %v6925
        %v6927 = vmul.f32 %v6907, %v6925
        %v6928 = vmul.f32 %v6908, %v6925
        %v6929 = vmul.f32 %v6909, %v6925
        %vm6930 = vcmp.gt.f32.partialorder %v6926, 0.0
        %vm6931 = vcmp.gt.f32.partialorder %v6927, 0.0
        %vm6932 = vcmp.gt.f32.partialorder %v6928, 0.0
        %vm6933 = vcmp.gt.f32.partialorder %v6929, 0.0
        %v6934 = vmin.f32 %v6926, 0.0
        %v6935 = vmin.f32 %v6927, 0.0
        %v6936 = vmin.f32 %v6928, 0.0
        %v6937 = vmin.f32 %v6929, 0.0
        %v6938 = vmul.f32 %v6934, 1.442695
        %v6939 = vpow.pop %v6938
        %v6940 = vmul.f32 %v6935, 1.442695
        %v6941 = vpow.pop %v6940
        %v6942 = vmul.f32 %v6936, 1.442695
        %v6943 = vpow.pop %v6942
        %v6944 = vmul.f32 %v6937, 1.442695
        %v6945 = vpow.pop %v6944
        %v6946 = vsub.f32 %v6939, 1.0
        %v6947 = vsub.f32 %v6941, 1.0
        %v6948 = vsub.f32 %v6943, 1.0
        %v6949 = vsub.f32 %v6945, 1.0
        %v6950 = vsel %vm6930, %v6926, %v6946
        %v6951 = vsel %vm6931, %v6927, %v6947
        %v6952 = vsel %vm6932, %v6928, %v6948
        %v6953 = vsel %vm6933, %v6929, %v6949
        %v6954 = vld [vmem:[%s3] sm:$0xf]
        %v6955 = vld [vmem:[%s4] sm:$0xf]
        %6957 = vset.pattern.permute.xlu0 0
        %6958 = vperm.xlu0 %6957, %v6955
        %v6959 = vpop.permute.xlu0 %6958
        %v6962 = vsel %vm261, %v6954, 0
        %v6965 = vsel %vm6894, %v6950, 0
        %v6968 = vsel %vm6894, %v6951, 0
        %v6971 = vsel %vm6894, %v6952, 0
        %v6974 = vsel %vm6894, %v6953, 0
        %6976 = vmatprep.subr.mxu0 %v6968
        %6977 = vmatpush1.msra.mxu0 %v6965
        %6978 = vmatprep.subr.mxu0 0.0
        %6979 = vmatpush1.msra.mxu0 0.0
        %6980 = vmatprep.subr.mxu0 0.0
        %6981 = vmatpush1.msra.mxu0 0.0
        %6982 = vmatprep.subr.mxu0 0.0
        %6983 = vmatpush1.msra.mxu0 0.0
        %6984 = vmatprep.subr.mxu0 0.0
        %6985 = vmatpush1.msra.mxu0 0.0
        %6986 = vmatprep.subr.mxu0 0.0
        %6987 = vmatpush1.msra.mxu0 0.0
        %6988 = vmatprep.subr.mxu0 0.0
        %6989 = vmatpush1.msra.mxu0 0.0
        %6990 = vmatprep.subr.mxu0 0.0
        %6991 = vmatpush1.msra.mxu0 0.0
        %6992 = vmatprep.subr.mxu0 0.0
        %6993 = vmatpush1.msra.mxu0 0.0
        %6994 = vmatprep.subr.mxu0 0.0
        %6995 = vmatpush1.msra.mxu0 0.0
        %6996 = vmatprep.subr.mxu0 0.0
        %6997 = vmatpush1.msra.mxu0 0.0
        %6998 = vmatprep.subr.mxu0 0.0
        %6999 = vmatpush1.msra.mxu0 0.0
        %7000 = vmatprep.subr.mxu0 0.0
        %7001 = vmatpush1.msra.mxu0 0.0
        %7002 = vmatprep.subr.mxu0 0.0
        %7003 = vmatpush1.msra.mxu0 0.0
        %7004 = vmatprep.subr.mxu0 0.0
        %7005 = vmatpush1.msra.mxu0 0.0
        %7006 = vmatprep.subr.mxu0 0.0
        %7007 = vmatpush1.msra.mxu0 0.0
        %7008 = vmatprep.subr.mxu0 0.0
        %7009 = vmatpush1.msra.mxu0 0.0
        %7010 = vmatprep.subr.mxu0 0.0
        %7011 = vmatpush1.msra.mxu0 0.0
        %7012 = vmatprep.subr.mxu0 0.0
        %7013 = vmatpush1.msra.mxu0 0.0
        %7014 = vmatprep.subr.mxu0 0.0
        %7015 = vmatpush1.msra.mxu0 0.0
        %7016 = vmatprep.subr.mxu0 0.0
        %7017 = vmatpush1.msra.mxu0 0.0
        %7018 = vmatprep.subr.mxu0 0.0
        %7019 = vmatpush1.msra.mxu0 0.0
        %7020 = vmatprep.subr.mxu0 0.0
        %7021 = vmatpush1.msra.mxu0 0.0
        %7022 = vmatprep.subr.mxu0 0.0
        %7023 = vmatpush1.msra.mxu0 0.0
        %7024 = vmatprep.subr.mxu0 0.0
        %7025 = vmatpush1.msra.mxu0 0.0
        %7026 = vmatprep.subr.mxu0 0.0
        %7027 = vmatpush1.msra.mxu0 0.0
        %7028 = vmatprep.subr.mxu0 0.0
        %7029 = vmatpush1.msra.mxu0 0.0
        %7030 = vmatprep.subr.mxu0 0.0
        %7031 = vmatpush1.msra.mxu0 0.0
        %7032 = vmatprep.subr.mxu0 0.0
        %7033 = vmatpush1.msra.mxu0 0.0
        %7034 = vmatprep.subr.mxu0 0.0
        %7035 = vmatpush1.msra.mxu0 0.0
        %7036 = vmatprep.subr.mxu0 0.0
        %7037 = vmatpush1.msra.mxu0 0.0
        %7038 = vmatprep.subr.mxu0 0.0
        %7039 = vmatpush1.msra.mxu0 0.0
        %7040 = vmatprep.mubr.f32.mxu0 0.0
        %7041 = vmatmul.mubr.f32.gmra.mrb[0].mxu0 %v6962
        %v7042 = vpop.f32.mrb[0].mxu0
        %v7043 = vadd.f32 %v6959, %v7042
        %v7044 = vpop.f32.mrb[0].mxu0
        %v7045 = vadd.f32 %v6959, %v7044
        %7046 = vdwg.mxu0
        %7047 = vmatprep.subr.mxu0 %v6974
        %7048 = vmatpush1.msra.mxu0 %v6971
        %7049 = vmatprep.subr.mxu0 0.0
        %7050 = vmatpush1.msra.mxu0 0.0
        %7051 = vmatprep.subr.mxu0 0.0
        %7052 = vmatpush1.msra.mxu0 0.0
        %7053 = vmatprep.subr.mxu0 0.0
        %7054 = vmatpush1.msra.mxu0 0.0
        %7055 = vmatprep.subr.mxu0 0.0
        %7056 = vmatpush1.msra.mxu0 0.0
        %7057 = vmatprep.subr.mxu0 0.0
        %7058 = vmatpush1.msra.mxu0 0.0
        %7059 = vmatprep.subr.mxu0 0.0
        %7060 = vmatpush1.msra.mxu0 0.0
        %7061 = vmatprep.subr.mxu0 0.0
        %7062 = vmatpush1.msra.mxu0 0.0
        %7063 = vmatprep.subr.mxu0 0.0
        %7064 = vmatpush1.msra.mxu0 0.0
        %7065 = vmatprep.subr.mxu0 0.0
        %7066 = vmatpush1.msra.mxu0 0.0
        %7067 = vmatprep.subr.mxu0 0.0
        %7068 = vmatpush1.msra.mxu0 0.0
        %7069 = vmatprep.subr.mxu0 0.0
        %7070 = vmatpush1.msra.mxu0 0.0
        %7071 = vmatprep.subr.mxu0 0.0
        %7072 = vmatpush1.msra.mxu0 0.0
        %7073 = vmatprep.subr.mxu0 0.0
        %7074 = vmatpush1.msra.mxu0 0.0
        %7075 = vmatprep.subr.mxu0 0.0
        %7076 = vmatpush1.msra.mxu0 0.0
        %7077 = vmatprep.subr.mxu0 0.0
        %7078 = vmatpush1.msra.mxu0 0.0
        %7079 = vmatprep.subr.mxu0 0.0
        %7080 = vmatpush1.msra.mxu0 0.0
        %7081 = vmatprep.subr.mxu0 0.0
        %7082 = vmatpush1.msra.mxu0 0.0
        %7083 = vmatprep.subr.mxu0 0.0
        %7084 = vmatpush1.msra.mxu0 0.0
        %7085 = vmatprep.subr.mxu0 0.0
        %7086 = vmatpush1.msra.mxu0 0.0
        %7087 = vmatprep.subr.mxu0 0.0
        %7088 = vmatpush1.msra.mxu0 0.0
        %7089 = vmatprep.subr.mxu0 0.0
        %7090 = vmatpush1.msra.mxu0 0.0
        %7091 = vmatprep.subr.mxu0 0.0
        %7092 = vmatpush1.msra.mxu0 0.0
        %7093 = vmatprep.subr.mxu0 0.0
        %7094 = vmatpush1.msra.mxu0 0.0
        %7095 = vmatprep.subr.mxu0 0.0
        %7096 = vmatpush1.msra.mxu0 0.0
        %7097 = vmatprep.subr.mxu0 0.0
        %7098 = vmatpush1.msra.mxu0 0.0
        %7099 = vmatprep.subr.mxu0 0.0
        %7100 = vmatpush1.msra.mxu0 0.0
        %7101 = vmatprep.subr.mxu0 0.0
        %7102 = vmatpush1.msra.mxu0 0.0
        %7103 = vmatprep.subr.mxu0 0.0
        %7104 = vmatpush1.msra.mxu0 0.0
        %7105 = vmatprep.subr.mxu0 0.0
        %7106 = vmatpush1.msra.mxu0 0.0
        %7107 = vmatprep.subr.mxu0 0.0
        %7108 = vmatpush1.msra.mxu0 0.0
        %7109 = vmatprep.subr.mxu0 0.0
        %7110 = vmatpush1.msra.mxu0 0.0
        %7111 = vmatprep.mubr.f32.mxu0 0.0
        %7112 = vmatmul.mubr.f32.gmra.mrb[0].mxu0 %v6962
        %v7113 = vpop.f32.mrb[0].mxu0
        %v7114 = vadd.f32 %v6959, %v7113
        %v7115 = vpop.f32.mrb[0].mxu0
        %v7116 = vadd.f32 %v6959, %v7115
        %7117 = vdwg.mxu0
        %v7122 = vcombine.low %v7043, %v7045
        %v7123 = vcombine.low %v7114, %v7116
        %7126 = vst [vmem:[%s248] sm:$0xff] %v7122
        %7127 = vst [vmem:[%s248 + $0x8] sm:$0xff] %v7123
        %v7128 = vsel %vm6894, %v7043, -inf
        %v7129 = vrot.slane %v7128, 4
        %v7130 = vmax.f32 %v7128, %v7129
        %v7131 = vrot.slane %v7130, 2
        %v7132 = vmax.f32 %v7130, %v7131
        %v7133 = vrot.slane %v7132, 1
        %v7134 = vmax.f32 %v7132, %v7133
        %v7135 = vsel %vm6894, %v7045, -inf
        %v7136 = vrot.slane %v7135, 4
        %v7137 = vmax.f32 %v7135, %v7136
        %v7138 = vrot.slane %v7137, 2
        %v7139 = vmax.f32 %v7137, %v7138
        %v7140 = vrot.slane %v7139, 1
        %v7141 = vmax.f32 %v7139, %v7140
        %v7142 = vsel %vm6894, %v7114, -inf
        %v7143 = vrot.slane %v7142, 4
        %v7144 = vmax.f32 %v7142, %v7143
        %v7145 = vrot.slane %v7144, 2
        %v7146 = vmax.f32 %v7144, %v7145
        %v7147 = vrot.slane %v7146, 1
        %v7148 = vmax.f32 %v7146, %v7147
        %v7149 = vsel %vm6894, %v7116, -inf
        %v7150 = vrot.slane %v7149, 4
        %v7151 = vmax.f32 %v7149, %v7150
        %v7152 = vrot.slane %v7151, 2
        %v7153 = vmax.f32 %v7151, %v7152
        %v7154 = vrot.slane %v7153, 1
        %v7155 = vmax.f32 %v7153, %v7154
        %v7156 = vsub.f32 %v7043, %v7134
        %v7157 = vsub.f32 %v7045, %v7141
        %v7158 = vsub.f32 %v7114, %v7148
        %v7159 = vsub.f32 %v7116, %v7155
        %v7160 = vmul.f32 %v7156, 1.442695
        %v7161 = vpow.pop %v7160
        %v7162 = vmul.f32 %v7157, 1.442695
        %v7163 = vpow.pop %v7162
        %v7164 = vmul.f32 %v7158, 1.442695
        %v7165 = vpow.pop %v7164
        %v7166 = vmul.f32 %v7159, 1.442695
        %v7167 = vpow.pop %v7166
        %v7168 = vsel %vm6894, %v7161, 0.0
        %v7169 = vrot.slane %v7168, 4
        %v7170 = vadd.f32 %v7168, %v7169
        %v7171 = vrot.slane %v7170, 2
        %v7172 = vadd.f32 %v7170, %v7171
        %v7173 = vrot.slane %v7172, 1
        %v7174 = vadd.f32 %v7172, %v7173
        %v7175 = vsel %vm6894, %v7163, 0.0
        %v7176 = vrot.slane %v7175, 4
        %v7177 = vadd.f32 %v7175, %v7176
        %v7178 = vrot.slane %v7177, 2
        %v7179 = vadd.f32 %v7177, %v7178
        %v7180 = vrot.slane %v7179, 1
        %v7181 = vadd.f32 %v7179, %v7180
        %v7182 = vsel %vm6894, %v7165, 0.0
        %v7183 = vrot.slane %v7182, 4
        %v7184 = vadd.f32 %v7182, %v7183
        %v7185 = vrot.slane %v7184, 2
        %v7186 = vadd.f32 %v7184, %v7185
        %v7187 = vrot.slane %v7186, 1
        %v7188 = vadd.f32 %v7186, %v7187
        %v7189 = vsel %vm6894, %v7167, 0.0
        %v7190 = vrot.slane %v7189, 4
        %v7191 = vadd.f32 %v7189, %v7190
        %v7192 = vrot.slane %v7191, 2
        %v7193 = vadd.f32 %v7191, %v7192
        %v7194 = vrot.slane %v7193, 1
        %v7195 = vadd.f32 %v7193, %v7194
        %v7196 = vrcp.pop %v7174
        %v7197 = vrcp.pop %v7181
        %v7198 = vrcp.pop %v7188
        %v7199 = vrcp.pop %v7195
        %v7200 = vmul.f32 %v7174, %v7196
        %v7201 = vmul.f32 %v7181, %v7197
        %v7202 = vmul.f32 %v7188, %v7198
        %v7203 = vmul.f32 %v7195, %v7199
        %v7204 = vsub.f32 2.0, %v7200
        %v7205 = vsub.f32 2.0, %v7201
        %v7206 = vsub.f32 2.0, %v7202
        %v7207 = vsub.f32 2.0, %v7203
        %v7208 = vmul.f32 %v7196, %v7204
        %v7209 = vmul.f32 %v7197, %v7205
        %v7210 = vmul.f32 %v7198, %v7206
        %v7211 = vmul.f32 %v7199, %v7207
        %v7212 = vmul.f32 %v7161, %v7208
        %v7213 = vmul.f32 %v7163, %v7209
        %v7214 = vmul.f32 %v7165, %v7210
        %v7215 = vmul.f32 %v7167, %v7211
        %v7220 = vcombine.low %v7212, %v7213
        %v7221 = vcombine.low %v7214, %v7215
        %7224 = vst [vmem:[%s255] sm:$0xff] %v7220
        %7225 = vst [vmem:[%s255 + $0x8] sm:$0xff] %v7221
        %s7226 = sand.u32 %s142, 1
        %s7227 = scalar_lea.sflag [#allocation5], %s7226
        %s7228 = sand.u32 %s142, 1
        %s7229 = smul.addr %s7228, 16
        %s7230 = scalar_lea.vmem [#allocation4], %s7229
        %s7231 = sand.u32 %s168, 1
        %s7232 = scalar_lea.sflag [#allocation7], %s7231
        %s7233 = sand.u32 %s168, 1
        %s7234 = smul.addr %s7233, 16
        %s7235 = scalar_lea.vmem [#allocation6], %s7234
        // Predicated region
        $region48: #{tpu_custom_call.1} parent=39 // pred_check
          %p7236 = pneg %p152
        $region49: #{tpu_custom_call.1} parent=39 // pred_check_branch
          %7238 = sbr.rel (%p7236) target = $region51
        $region50: #{tpu_custom_call.1} parent=39 // pred_region
          %s7240 = ssub.s32 256, 256
          %7241 = vsyncadd %s7227, %s7240
          %s7242 = smul.addr %s24, 4
          %s7243 = smul.addr %s7242, 64
          %s7244 = scalar_lea.hbm %s5, %s7243
          %s7246 = sshll.u32 %s7230, 4
          %s7247 = int_to_ptr.vmem [resolvable:$true] %s7246
          %7249 = dma.vmem_to_hbm [thread:$0]  %s7247, 256, %s7244, %s7227
        $region51: #{tpu_custom_call.1} parent=39 // pred_fallthru
          _
        // Predicated region
        $region52: #{tpu_custom_call.1} parent=39 // pred_check
          %p7250 = pneg %p178
        $region53: #{tpu_custom_call.1} parent=39 // pred_check_branch
          %7252 = sbr.rel (%p7250) target = $region55
        $region54: #{tpu_custom_call.1} parent=39 // pred_region
          %s7254 = ssub.s32 256, 256
          %7255 = vsyncadd %s7232, %s7254
          %s7256 = smul.addr %s24, 4
          %s7257 = smul.addr %s7256, 64
          %s7258 = scalar_lea.hbm %s6, %s7257
          %s7260 = sshll.u32 %s7235, 4
          %s7261 = int_to_ptr.vmem [resolvable:$true] %s7260
          %7263 = dma.vmem_to_hbm [thread:$0]  %s7261, 256, %s7258, %s7232
        $region55: #{tpu_custom_call.1} parent=39 // pred_fallthru
          _
      $region40: #{tpu_custom_call.1} parent=5 // pred_fallthru
        _
      %p7264 = scmp.le.s32.totalorder 2, %s19
      // Predicated region
      $region56: #{tpu_custom_call.1} parent=5 // pred_check
        %p7265 = pneg %p7264
      $region57: #{tpu_custom_call.1} parent=5 // pred_check_branch
        %7267 = sbr.rel (%p7265) target = $region59
      $region58: #{tpu_custom_call.1} parent=5 // pred_region
        %s7268 = ssub.s32 %s19, 2
        // Predicated region
        $region60: #{tpu_custom_call.1} parent=58 // pred_check
          %p7269 = pneg %p158
        $region61: #{tpu_custom_call.1} parent=58 // pred_check_branch
          %7271 = sbr.rel (%p7269) target = $region63
        $region62: #{tpu_custom_call.1} parent=58 // pred_region
          %s7272 = sand.u32 %s143, 1
          %s7273 = scalar_lea.sflag [#allocation5], %s7272
          %s7274 = sand.u32 %s143, 1
          %s7275 = smul.addr %s7274, 16
          %s7276 = scalar_lea.vmem [#allocation4], %s7275
          %7277 = dma.done %s7273, 256
        $region63: #{tpu_custom_call.1} parent=58 // pred_fallthru
          _
        // Predicated region
        $region64: #{tpu_custom_call.1} parent=58 // pred_check
          %p7278 = pneg %p184
        $region65: #{tpu_custom_call.1} parent=58 // pred_check_branch
          %7280 = sbr.rel (%p7278) target = $region67
        $region66: #{tpu_custom_call.1} parent=58 // pred_region
          %s7281 = sand.u32 %s169, 1
          %s7282 = scalar_lea.sflag [#allocation7], %s7281
          %s7283 = sand.u32 %s169, 1
          %s7284 = smul.addr %s7283, 16
          %s7285 = scalar_lea.vmem [#allocation6], %s7284
          %7286 = dma.done %s7282, 256
        $region67: #{tpu_custom_call.1} parent=58 // pred_fallthru
          _
      $region59: #{tpu_custom_call.1} parent=5 // pred_fallthru
        _
    $region6: #{tpu_custom_call.1} parent=1 // loop_footer
      %s23 = sadd.s32 1, %s19
    $region7: #{tpu_custom_call.1} parent=1 // loop_footer_branch
      %18 = sbr.rel target = $region3
    $region8: #{tpu_custom_call.1} parent=1 // loop_exit
      _
    %7287 = vsyncpa [#allocation5], 1
    %s7288 = scalar_lea.sflag [#allocation5], 1
    %7289 = vsyncpa %s7288, 1
    %7290 = vsyncpa [#allocation7], 1
    %s7291 = scalar_lea.sflag [#allocation7], 1
    %7292 = vsyncpa %s7291, 1

</llo_original>
